<compile_context>
chip_gen: v7x
topology: tpu7x:2x2x1
jax: 0.10.0
libtpu: 0.0.40
codegen_flags: <defaults>
</compile_context>

<pallas_src>
import math

import jax
import jax.numpy as jnp
from jax.experimental import pallas as pl
from jax.experimental.pallas import tpu as pltpu

# ----------------------------- model config ---------------------------------
D_MODEL = 32
VOCAB_SIZE = 50
MAX_LENGTH = 16
PAD_TOKEN_ID = 0
TOKEN_TYPE_VOCAB_SIZE = 2
N_HEADS = 4
DIM_FEEDFORWARD = 64
NUM_LAYERS = 2
LN_EPS = 1e-12
HEAD_DIM = D_MODEL // N_HEADS
MASK_NEG = -10000.0  # additive mask value used by create_attention_mask

# -------- packed-weight slab layout (lane offsets, all tile-aligned) ----------
# w_slab: [L, D, 512]
_W_QKV, _W_SO = 0, 96
_W_C1Q, _W_C1K, _W_C1V, _W_C1O = 128, 160, 192, 224
_W_C2Q, _W_C2K, _W_C2V, _W_C2O = 256, 288, 320, 352
_W_FF1, _W_FF2T = 384, 448          # ffn2 stored transposed: [D, F]
W_SLAB_COLS = 512
# b_slab: [L, 640]
_B_QKV, _B_SO = 0, 96
_B_LN1G, _B_LN1B = 128, 160
_B_C1Q, _B_C1K, _B_C1V = 192, 224, 256
_B_C2Q, _B_C2K, _B_C2V = 288, 320, 352
_B_MRG, _B_LN2G, _B_LN2B, _B_FF2 = 384, 416, 448, 480
_B_FF1, _B_LN3G, _B_LN3B = 512, 576, 608
B_SLAB_COLS = 640

_NT_DIMS = (((1,), (1,)), ((), ()))   # contract last axes (A @ B.T, no transpose op)


# ----------------------------- fused decoder kernel --------------------------
def _decoder_kernel(hid_ref, e1k_ref, e1v_ref, e2k_ref, e2v_ref,
                    sm_ref, m1_ref, m2_ref, w_ref, b_ref, out_ref):
    D = D_MODEL
    F = DIM_FEEDFORWARD

    def dot_nt(a, b):   # a:[M,K] x b:[N,K] -> [M,N]  (MXU takes the transposed operand)
        return jax.lax.dot_general(a, b, _NT_DIMS, preferred_element_type=jnp.float32)

    def wsl(l, off, n):
        return w_ref[l, :, off:off + n]          # [D, n]   static slice of the weight slab

    def bsl(l, off, n):
        return b_ref[l:l + 1, off:off + n]       # [1, n]   broadcasts against [S, n]

    def mha(q, k, v, mask_t, o_w):
        # q:[Sq,D] (1/sqrt(d) pre-folded), k/v:[Sk,D], mask_t:[H*Sq,Sk] additive.
        Sq = q.shape[0]
        # per-head scores, no explicit transpose; stack heads along sublanes
        scores = [dot_nt(q[:, h * HEAD_DIM:(h + 1) * HEAD_DIM],
                         k[:, h * HEAD_DIM:(h + 1) * HEAD_DIM])
                  for h in range(N_HEADS)]
        s = jnp.concatenate(scores, axis=0) + mask_t            # [H*Sq, Sk]
        s = s - jnp.max(s, axis=-1, keepdims=True)              # one softmax for all heads
        p = jnp.exp(s)
        p = p * pl.reciprocal(jnp.sum(p, axis=-1, keepdims=True), approx=True)
        # per-head context, lane-concatenated -> single output projection
        ctx = jnp.concatenate(
            [jnp.dot(p[h * Sq:(h + 1) * Sq, :],
                     v[:, h * HEAD_DIM:(h + 1) * HEAD_DIM],
                     preferred_element_type=jnp.float32)
             for h in range(N_HEADS)], axis=-1)                 # [Sq, D]
        return jnp.dot(ctx, o_w, preferred_element_type=jnp.float32)

    def add_ln(x, res, g, be):
        # post-LN residual add; biased variance, as torch.nn.LayerNorm
        y = x + res
        mu = jnp.mean(y, axis=-1, keepdims=True)
        var = jnp.mean((y - mu) ** 2, axis=-1, keepdims=True)
        return (y - mu) * jax.lax.rsqrt(var + LN_EPS) * g + be

    def lin(x, w, b):
        return jnp.dot(x, w, preferred_element_type=jnp.float32) + b

    BB = hid_ref.shape[0]     # 1 on the multi-TC path, B on the collapsed path
    for bi in range(BB):
        h = hid_ref[bi]                       # [S, D]
        e1k, e1v = e1k_ref[bi], e1v_ref[bi]   # [S1, D]
        e2k, e2v = e2k_ref[bi], e2v_ref[bi]   # [S2, D]
        # head-tile the additive masks once per batch element (hoisted out of the layer loop)
        smT = jnp.concatenate([sm_ref[bi]] * N_HEADS, axis=0)   # [H*S, S]
        m1T = jnp.concatenate([m1_ref[bi]] * N_HEADS, axis=0)   # [H*S, S1]
        m2T = jnp.concatenate([m2_ref[bi]] * N_HEADS, axis=0)   # [H*S, S2]

        for l in range(NUM_LAYERS):   # layerdrop_threshold=0.0 -> keep all layers
            # ---- self attention (fused QKV projection) + residual + LN ------
            qkv = lin(h, wsl(l, _W_QKV, 3 * D), bsl(l, _B_QKV, 3 * D))
            sa = mha(qkv[:, :D], qkv[:, D:2 * D], qkv[:, 2 * D:],
                     smT, wsl(l, _W_SO, D)) + bsl(l, _B_SO, D)
            h = add_ln(h, sa, bsl(l, _B_LN1G, D), bsl(l, _B_LN1B, D))

            # ---- two cross attentions; merge matrix pre-folded into o-proj --
            q1 = lin(h,   wsl(l, _W_C1Q, D), bsl(l, _B_C1Q, D))
            k1 = lin(e1k, wsl(l, _W_C1K, D), bsl(l, _B_C1K, D))
            v1 = lin(e1v, wsl(l, _W_C1V, D), bsl(l, _B_C1V, D))
            ca1 = mha(q1, k1, v1, m1T, wsl(l, _W_C1O, D))

            q2 = lin(h,   wsl(l, _W_C2Q, D), bsl(l, _B_C2Q, D))
            k2 = lin(e2k, wsl(l, _W_C2K, D), bsl(l, _B_C2K, D))
            v2 = lin(e2v, wsl(l, _W_C2V, D), bsl(l, _B_C2V, D))
            ca2 = mha(q2, k2, v2, m2T, wsl(l, _W_C2O, D))

            merged = ca1 + ca2 + bsl(l, _B_MRG, D)
            h = add_ln(h, merged, bsl(l, _B_LN2G, D), bsl(l, _B_LN2B, D))

            # ---- feed forward (GELU) + residual + LN ------------------------
            ff = lin(h, wsl(l, _W_FF1, F), bsl(l, _B_FF1, F))
            # TODO(synk): PyTorch nn.GELU default is the exact erf formulation;
            # tanh approximation used here for guaranteed Mosaic lowering.
            ff = jax.nn.gelu(ff, approximate=True)
            ff = dot_nt(ff, wsl(l, _W_FF2T, F)) + bsl(l, _B_FF2, D)   # ffn2 stored transposed
            h = add_ln(h, ff, bsl(l, _B_LN3G, D), bsl(l, _B_LN3B, D))

        out_ref[bi] = h.astype(out_ref.dtype)


# ----------------------------- masks (glue) ----------------------------------
def create_self_attention_mask(attention_mask, batch, seq):
    # Decoder self-attention: causal + padding, additive (0 / -10000) mask.
    if attention_mask is None:
        attention_mask = jnp.ones((batch, seq), jnp.float32)
    causal = jnp.tril(jnp.ones((seq, seq), jnp.float32))
    ext = attention_mask.astype(jnp.float32)[:, None, :] * causal[None, :, :]
    return (1.0 - ext) * MASK_NEG  # [B, S, S]


def create_cross_attention_mask(attention_mask, batch, enc_len, src_size):
    # Encoder padding mask broadcast over decoder positions.
    if attention_mask is None:
        attention_mask = jnp.ones((batch, enc_len), jnp.float32)
    ext = jnp.broadcast_to(attention_mask.astype(jnp.float32)[:, None, :],
                           (batch, src_size, enc_len))
    return (1.0 - ext) * MASK_NEG  # [B, src_size, enc_len]


# ----------------------------- parameters ------------------------------------
def init_params(key):
    L, D, F = NUM_LAYERS, D_MODEL, DIM_FEEDFORWARD
    keys = jax.random.split(key, 16)

    def nrm(k, shape):
        return 0.02 * jax.random.normal(k, shape, jnp.float32)

    # padding token row zeroed, as nn.Embedding(padding_idx=pad_token_id) does.
    word_emb = nrm(keys[0], (VOCAB_SIZE, D)).at[PAD_TOKEN_ID].set(0.0)

    layers = {
        "qkv_w": nrm(keys[3], (L, D, 3 * D)), "qkv_b": jnp.zeros((L, 3 * D), jnp.float32),
        "self_o_w": nrm(keys[4], (L, D, D)), "self_o_b": jnp.zeros((L, D), jnp.float32),
        "ln1_g": jnp.ones((L, D), jnp.float32), "ln1_b": jnp.zeros((L, D), jnp.float32),
        "c1_q_w": nrm(keys[5], (L, D, D)), "c1_q_b": jnp.zeros((L, D), jnp.float32),
        "c1_k_w": nrm(keys[6], (L, D, D)), "c1_k_b": jnp.zeros((L, D), jnp.float32),
        "c1_v_w": nrm(keys[7], (L, D, D)), "c1_v_b": jnp.zeros((L, D), jnp.float32),
        "c1_o_w": nrm(keys[8], (L, D, D)), "c1_o_b": jnp.zeros((L, D), jnp.float32),
        "c2_q_w": nrm(keys[9], (L, D, D)), "c2_q_b": jnp.zeros((L, D), jnp.float32),
        "c2_k_w": nrm(keys[10], (L, D, D)), "c2_k_b": jnp.zeros((L, D), jnp.float32),
        "c2_v_w": nrm(keys[11], (L, D, D)), "c2_v_b": jnp.zeros((L, D), jnp.float32),
        "c2_o_w": nrm(keys[12], (L, D, D)), "c2_o_b": jnp.zeros((L, D), jnp.float32),
        "merge_w": nrm(keys[13], (L, 2 * D, D)), "merge_b": jnp.zeros((L, D), jnp.float32),
        "ln2_g": jnp.ones((L, D), jnp.float32), "ln2_b": jnp.zeros((L, D), jnp.float32),
        "ffn1_w": nrm(keys[14], (L, D, F)), "ffn1_b": jnp.zeros((L, F), jnp.float32),
        "ffn2_w": nrm(keys[15], (L, F, D)), "ffn2_b": jnp.zeros((L, D), jnp.float32),
        "ln3_g": jnp.ones((L, D), jnp.float32), "ln3_b": jnp.zeros((L, D), jnp.float32),
    }
    return {
        "word_emb": word_emb,
        "pos_emb": nrm(keys[1], (MAX_LENGTH, D)),
        "type_emb": nrm(keys[2], (TOKEN_TYPE_VOCAB_SIZE, D)),
        "layers": layers,
    }


# ------------------- one-time weight folding & slab packing ------------------
def _pack_layer_params(ly):
    """Fold 1/sqrt(d) into Q projections and the merge matrix into the cross-attn
    output projections, then pack everything into 2 lane-dense slabs."""
    D = D_MODEL
    scale = 1.0 / math.sqrt(HEAD_DIM)

    qkv_w = ly["qkv_w"].at[:, :, :D].multiply(scale)      # scale Q output columns
    qkv_b = ly["qkv_b"].at[:, :D].multiply(scale)
    c1_q_w, c1_q_b = ly["c1_q_w"] * scale, ly["c1_q_b"] * scale
    c2_q_w, c2_q_b = ly["c2_q_w"] * scale, ly["c2_q_b"] * scale

    mw1 = ly["merge_w"][:, :D, :]                         # [L, D, D]
    mw2 = ly["merge_w"][:, D:, :]
    c1_o_w = jnp.einsum("lij,ljk->lik", ly["c1_o_w"], mw1)
    c2_o_w = jnp.einsum("lij,ljk->lik", ly["c2_o_w"], mw2)
    merged_b = (jnp.einsum("lj,ljk->lk", ly["c1_o_b"], mw1)
                + jnp.einsum("lj,ljk->lk", ly["c2_o_b"], mw2)
                + ly["merge_b"])

    ffn2T = jnp.swapaxes(ly["ffn2_w"], 1, 2)              # [L, D, F] (applied as nt-dot)

    w_slab = jnp.concatenate(
        [qkv_w, ly["self_o_w"],
         c1_q_w, ly["c1_k_w"], ly["c1_v_w"], c1_o_w,
         c2_q_w, ly["c2_k_w"], ly["c2_v_w"], c2_o_w,
         ly["ffn1_w"], ffn2T], axis=-1)                   # [L, D, 512]

    b_slab = jnp.concatenate(
        [qkv_b, ly["self_o_b"],
         ly["ln1_g"], ly["ln1_b"],
         c1_q_b, ly["c1_k_b"], ly["c1_v_b"],
         c2_q_b, ly["c2_k_b"], ly["c2_v_b"],
         merged_b, ly["ln2_g"], ly["ln2_b"], ly["ffn2_b"],
         ly["ffn1_b"], ly["ln3_g"], ly["ln3_b"]], axis=-1)  # [L, 640]

    assert w_slab.shape[-1] == W_SLAB_COLS and b_slab.shape[-1] == B_SLAB_COLS
    return w_slab, b_slab


def _multi_tensorcore():
    """True -> keep grid=(B,) 'parallel' (multi-TC chips, e.g. v7x / megacore).
    False -> collapse the batch grid into one step (single-TC v5e / v6e)."""
    try:
        kind = jax.devices()[0].device_kind.lower()
    except Exception:
        return True
    single_tc = any(t in kind for t in
                    ("v5e", "v5 lite", "v5lite", "v6e", "v6 lite", "v6lite"))
    return not single_tc


# ----------------------------- forward pass ----------------------------------
def multimodal_transformer_decoder_forward(
    params, input_ids, first_encoder_hidden_state, second_encoder_hidden_state,
    attention_mask=None, first_encoder_attention_mask=None,
    second_encoder_attention_mask=None,
):
    B, S = input_ids.shape
    S1 = first_encoder_hidden_state["key"].shape[1]
    S2 = second_encoder_hidden_state["key"].shape[1]
    assert S <= MAX_LENGTH, "sequence longer than learned positional embedding"

    self_mask = create_self_attention_mask(attention_mask, B, S)                  # [B,S,S]
    mask1 = create_cross_attention_mask(first_encoder_attention_mask, B, S1, S)   # [B,S,S1]
    mask2 = create_cross_attention_mask(second_encoder_attention_mask, B, S2, S)  # [B,S,S2]

    # TransformerEmbedding: word + learned positional + token-type(=0) embeddings
    # (use_embedding_layer_norm=False; dropout in eval mode -> identity)
    # TODO(synk): token_type_ids hard-coded to 0 (reference forward has no such arg).
    positions = jnp.arange(S)
    emb = (jnp.take(params["word_emb"], input_ids, axis=0)
           + params["pos_emb"][positions][None, :, :]
           + params["type_emb"][0][None, None, :])

    w_slab, b_slab = _pack_layer_params(params["layers"])

    # Batch tiling: 1 element / grid step on multi-TC chips, whole batch in one
    # step on single-TC chips (both paths numerically identical).
    bb = 1 if (_multi_tensorcore() and B > 1) else B
    grid = (B // bb,)

    batch_inputs = [
        emb,
        first_encoder_hidden_state["key"], first_encoder_hidden_state["value"],
        second_encoder_hidden_state["key"], second_encoder_hidden_state["value"],
        self_mask, mask1, mask2,
    ]

    def _bspec(a):   # sliced along the (parallel) batch grid axis
        nd = a.ndim
        return pl.BlockSpec((bb,) + tuple(a.shape[1:]),
                            lambda i, _n=nd: (i,) + (0,) * (_n - 1))

    def _fspec(a):   # whole slab resident; same block every grid step (fetched once)
        nd = a.ndim
        return pl.BlockSpec(tuple(a.shape), lambda i, _n=nd: (0,) * _n)

    in_specs = [_bspec(a) for a in batch_inputs] + [_fspec(w_slab), _fspec(b_slab)]
    # NOTE: output last dim D=32 (<128) -> masked stores; negligible at this size.
    out_spec = pl.BlockSpec((bb, S, D_MODEL), lambda i: (i, 0, 0))

    return pl.pallas_call(
        _decoder_kernel,
        out_shape=jax.ShapeDtypeStruct((B, S, D_MODEL), jnp.float32),
        grid=grid,
        in_specs=in_specs,
        out_specs=out_spec,
        compiler_params=pltpu.CompilerParams(
            dimension_semantics=("parallel",)),
    )(*batch_inputs, w_slab, b_slab)  # (get_attention_scores=False path)


# ----------------------------- main -------------------------------------------
if __name__ == "__main__":
    key = jax.random.PRNGKey(0)
    k_param, k_ids, k_e1, k_e2 = jax.random.split(key, 4)

    params = init_params(k_param)

    B, S = 2, 8
    S_ENC1, S_ENC2 = 8, 16

    input_ids = jax.random.randint(k_ids, (B, S), 1, VOCAB_SIZE, dtype=jnp.int32)
    k_e1a, k_e1b = jax.random.split(k_e1)
    k_e2a, k_e2b = jax.random.split(k_e2)
    first_encoder_hidden_state = {
        "key": jax.random.normal(k_e1a, (B, S_ENC1, D_MODEL), jnp.float32),
        "value": jax.random.normal(k_e1b, (B, S_ENC1, D_MODEL), jnp.float32),
    }
    second_encoder_hidden_state = {
        "key": jax.random.normal(k_e2a, (B, S_ENC2, D_MODEL), jnp.float32),
        "value": jax.random.normal(k_e2b, (B, S_ENC2, D_MODEL), jnp.float32),
    }

    fwd = jax.jit(multimodal_transformer_decoder_forward)
    out = fwd(params, input_ids, first_encoder_hidden_state, second_encoder_hidden_state)
    out = jax.block_until_ready(out)
    assert out.shape == (B, S, D_MODEL)
    assert jnp.all(jnp.isfinite(out))
    print("KERNEL_OK")
</pallas_src>

<mosaic_0001>
module attributes {stable_mosaic.version = 11 : i64} {
  func.func @_decoder_kernel(%arg0: i32, %arg1: memref<1x8x32xf32, #tpu.memory_space<vmem>>, %arg2: memref<1x8x32xf32, #tpu.memory_space<vmem>>, %arg3: memref<1x8x32xf32, #tpu.memory_space<vmem>>, %arg4: memref<1x16x32xf32, #tpu.memory_space<vmem>>, %arg5: memref<1x16x32xf32, #tpu.memory_space<vmem>>, %arg6: memref<1x8x8xf32, #tpu.memory_space<vmem>>, %arg7: memref<1x8x8xf32, #tpu.memory_space<vmem>>, %arg8: memref<1x8x16xf32, #tpu.memory_space<vmem>>, %arg9: memref<2x32x512xf32, #tpu.memory_space<vmem>>, %arg10: memref<2x640xf32, #tpu.memory_space<vmem>>, %arg11: memref<1x8x32xf32, #tpu.memory_space<vmem>>) attributes {dimension_semantics = [#tpu.dimension_semantics<parallel>], iteration_bounds = array<i64: 2>, scalar_prefetch = 0 : i64, scratch_operands = 0 : i64, tpu.core_type = #tpu.core_type<tc>, window_params = [{transform_indices = @transform_0, window_bounds = array<i64: 1, 8, 32>}, {transform_indices = @transform_1, window_bounds = array<i64: 1, 8, 32>}, {transform_indices = @transform_2, window_bounds = array<i64: 1, 8, 32>}, {transform_indices = @transform_3, window_bounds = array<i64: 1, 16, 32>}, {transform_indices = @transform_4, window_bounds = array<i64: 1, 16, 32>}, {transform_indices = @transform_5, window_bounds = array<i64: 1, 8, 8>}, {transform_indices = @transform_6, window_bounds = array<i64: 1, 8, 8>}, {transform_indices = @transform_7, window_bounds = array<i64: 1, 8, 16>}, {pipeline_mode = #tpu.pipeline_mode<synchronous>, transform_indices = @transform_8, window_bounds = array<i64: 2, 32, 512>}, {pipeline_mode = #tpu.pipeline_mode<synchronous>, transform_indices = @transform_9, window_bounds = array<i64: 2, 640>}, {transform_indices = @transform_10, window_bounds = array<i64: 1, 8, 32>}]} {
    %c0 = arith.constant 0 : index
    %c0_0 = arith.constant 0 : index
    %c0_1 = arith.constant 0 : index
    %0 = vector.load %arg1[%c0, %c0_0, %c0_1] : memref<1x8x32xf32, #tpu.memory_space<vmem>>, vector<1x8x32xf32>
    %1 = vector.shape_cast %0 : vector<1x8x32xf32> to vector<8x32xf32>
    %c0_2 = arith.constant 0 : index
    %c0_3 = arith.constant 0 : index
    %c0_4 = arith.constant 0 : index
    %2 = vector.load %arg2[%c0_2, %c0_3, %c0_4] : memref<1x8x32xf32, #tpu.memory_space<vmem>>, vector<1x8x32xf32>
    %3 = vector.shape_cast %2 : vector<1x8x32xf32> to vector<8x32xf32>
    %c0_5 = arith.constant 0 : index
    %c0_6 = arith.constant 0 : index
    %c0_7 = arith.constant 0 : index
    %4 = vector.load %arg3[%c0_5, %c0_6, %c0_7] : memref<1x8x32xf32, #tpu.memory_space<vmem>>, vector<1x8x32xf32>
    %5 = vector.shape_cast %4 : vector<1x8x32xf32> to vector<8x32xf32>
    %c0_8 = arith.constant 0 : index
    %c0_9 = arith.constant 0 : index
    %c0_10 = arith.constant 0 : index
    %6 = vector.load %arg4[%c0_8, %c0_9, %c0_10] : memref<1x16x32xf32, #tpu.memory_space<vmem>>, vector<1x16x32xf32>
    %7 = vector.shape_cast %6 : vector<1x16x32xf32> to vector<16x32xf32>
    %c0_11 = arith.constant 0 : index
    %c0_12 = arith.constant 0 : index
    %c0_13 = arith.constant 0 : index
    %8 = vector.load %arg5[%c0_11, %c0_12, %c0_13] : memref<1x16x32xf32, #tpu.memory_space<vmem>>, vector<1x16x32xf32>
    %9 = vector.shape_cast %8 : vector<1x16x32xf32> to vector<16x32xf32>
    %c0_14 = arith.constant 0 : index
    %c0_15 = arith.constant 0 : index
    %c0_16 = arith.constant 0 : index
    %10 = vector.load %arg6[%c0_14, %c0_15, %c0_16] : memref<1x8x8xf32, #tpu.memory_space<vmem>>, vector<1x8x8xf32>
    %11 = vector.shape_cast %10 : vector<1x8x8xf32> to vector<8x8xf32>
    %12 = tpu.concatenate %11, %11, %11, %11 in 0 : vector<8x8xf32>, vector<8x8xf32>, vector<8x8xf32>, vector<8x8xf32> -> vector<32x8xf32>
    %c0_17 = arith.constant 0 : index
    %c0_18 = arith.constant 0 : index
    %c0_19 = arith.constant 0 : index
    %13 = vector.load %arg7[%c0_17, %c0_18, %c0_19] : memref<1x8x8xf32, #tpu.memory_space<vmem>>, vector<1x8x8xf32>
    %14 = vector.shape_cast %13 : vector<1x8x8xf32> to vector<8x8xf32>
    %15 = tpu.concatenate %14, %14, %14, %14 in 0 : vector<8x8xf32>, vector<8x8xf32>, vector<8x8xf32>, vector<8x8xf32> -> vector<32x8xf32>
    %c0_20 = arith.constant 0 : index
    %c0_21 = arith.constant 0 : index
    %c0_22 = arith.constant 0 : index
    %16 = vector.load %arg8[%c0_20, %c0_21, %c0_22] : memref<1x8x16xf32, #tpu.memory_space<vmem>>, vector<1x8x16xf32>
    %17 = vector.shape_cast %16 : vector<1x8x16xf32> to vector<8x16xf32>
    %18 = tpu.concatenate %17, %17, %17, %17 in 0 : vector<8x16xf32>, vector<8x16xf32>, vector<8x16xf32>, vector<8x16xf32> -> vector<32x16xf32>
    %c0_23 = arith.constant 0 : index
    %c0_24 = arith.constant 0 : index
    %c0_25 = arith.constant 0 : index
    %19 = vector.load %arg9[%c0_23, %c0_24, %c0_25] : memref<2x32x512xf32, #tpu.memory_space<vmem>>, vector<1x32x96xf32>
    %20 = vector.shape_cast %19 : vector<1x32x96xf32> to vector<32x96xf32>
    %c0_26 = arith.constant 0 : index
    %c0_27 = arith.constant 0 : index
    %21 = vector.load %arg10[%c0_26, %c0_27] : memref<2x640xf32, #tpu.memory_space<vmem>>, vector<1x96xf32>
    %cst = arith.constant dense<0.000000e+00> : vector<8x96xf32>
    %22 = tpu.matmul %1, %20, %cst {dimension_numbers = #tpu.dot_dimension_numbers<[1], [0], [0], [1], [0, 0, 1, 1], [], []>} : vector<8x32xf32>, vector<32x96xf32>, vector<8x96xf32> -> vector<8x96xf32>
    %23 = vector.broadcast %21 : vector<1x96xf32> to vector<8x96xf32>
    %24 = arith.addf %22, %23 : vector<8x96xf32>
    %25 = vector.extract_strided_slice %24 {offsets = [0, 0], sizes = [8, 32], strides = [1, 1]} : vector<8x96xf32> to vector<8x32xf32>
    %26 = vector.extract_strided_slice %24 {offsets = [0, 32], sizes = [8, 32], strides = [1, 1]} : vector<8x96xf32> to vector<8x32xf32>
    %27 = vector.extract_strided_slice %24 {offsets = [0, 64], sizes = [8, 32], strides = [1, 1]} : vector<8x96xf32> to vector<8x32xf32>
    %c0_28 = arith.constant 0 : index
    %c0_29 = arith.constant 0 : index
    %c96 = arith.constant 96 : index
    %28 = vector.load %arg9[%c0_28, %c0_29, %c96] : memref<2x32x512xf32, #tpu.memory_space<vmem>>, vector<1x32x32xf32>
    %29 = vector.shape_cast %28 : vector<1x32x32xf32> to vector<32x32xf32>
    %30 = vector.extract_strided_slice %25 {offsets = [0, 0], sizes = [8, 8], strides = [1, 1]} : vector<8x32xf32> to vector<8x8xf32>
    %31 = vector.extract_strided_slice %26 {offsets = [0, 0], sizes = [8, 8], strides = [1, 1]} : vector<8x32xf32> to vector<8x8xf32>
    %cst_30 = arith.constant dense<0.000000e+00> : vector<8x8xf32>
    %32 = tpu.matmul %30, %31, %cst_30 {dimension_numbers = #tpu.dot_dimension_numbers<[1], [1], [0], [0], [0, 0, 1, 0], [], []>} : vector<8x8xf32>, vector<8x8xf32>, vector<8x8xf32> -> vector<8x8xf32>
    %33 = vector.extract_strided_slice %25 {offsets = [0, 8], sizes = [8, 8], strides = [1, 1]} : vector<8x32xf32> to vector<8x8xf32>
    %34 = vector.extract_strided_slice %26 {offsets = [0, 8], sizes = [8, 8], strides = [1, 1]} : vector<8x32xf32> to vector<8x8xf32>
    %cst_31 = arith.constant dense<0.000000e+00> : vector<8x8xf32>
    %35 = tpu.matmul %33, %34, %cst_31 {dimension_numbers = #tpu.dot_dimension_numbers<[1], [1], [0], [0], [0, 0, 1, 0], [], []>} : vector<8x8xf32>, vector<8x8xf32>, vector<8x8xf32> -> vector<8x8xf32>
    %36 = vector.extract_strided_slice %25 {offsets = [0, 16], sizes = [8, 8], strides = [1, 1]} : vector<8x32xf32> to vector<8x8xf32>
    %37 = vector.extract_strided_slice %26 {offsets = [0, 16], sizes = [8, 8], strides = [1, 1]} : vector<8x32xf32> to vector<8x8xf32>
    %cst_32 = arith.constant dense<0.000000e+00> : vector<8x8xf32>
    %38 = tpu.matmul %36, %37, %cst_32 {dimension_numbers = #tpu.dot_dimension_numbers<[1], [1], [0], [0], [0, 0, 1, 0], [], []>} : vector<8x8xf32>, vector<8x8xf32>, vector<8x8xf32> -> vector<8x8xf32>
    %39 = vector.extract_strided_slice %25 {offsets = [0, 24], sizes = [8, 8], strides = [1, 1]} : vector<8x32xf32> to vector<8x8xf32>
    %40 = vector.extract_strided_slice %26 {offsets = [0, 24], sizes = [8, 8], strides = [1, 1]} : vector<8x32xf32> to vector<8x8xf32>
    %cst_33 = arith.constant dense<0.000000e+00> : vector<8x8xf32>
    %41 = tpu.matmul %39, %40, %cst_33 {dimension_numbers = #tpu.dot_dimension_numbers<[1], [1], [0], [0], [0, 0, 1, 0], [], []>} : vector<8x8xf32>, vector<8x8xf32>, vector<8x8xf32> -> vector<8x8xf32>
    %42 = tpu.concatenate %32, %35, %38, %41 in 0 : vector<8x8xf32>, vector<8x8xf32>, vector<8x8xf32>, vector<8x8xf32> -> vector<32x8xf32>
    %43 = arith.addf %42, %12 : vector<32x8xf32>
    %cst_34 = arith.constant dense<0xFF800000> : vector<32xf32>
    %44 = vector.multi_reduction <maximumf>, %43, %cst_34 [1] : vector<32x8xf32> to vector<32xf32>
    %45 = vector.shape_cast %44 : vector<32xf32> to vector<32x1xf32>
    %46 = vector.broadcast %45 : vector<32x1xf32> to vector<32x8xf32>
    %47 = arith.subf %43, %46 : vector<32x8xf32>
    %48 = math.exp %47 : vector<32x8xf32>
    %cst_35 = arith.constant dense<0.000000e+00> : vector<32xf32>
    %49 = vector.multi_reduction <add>, %48, %cst_35 [1] : vector<32x8xf32> to vector<32xf32>
    %50 = vector.shape_cast %49 : vector<32xf32> to vector<32x1xf32>
    %51 = tpu.reciprocal %50 {approx = true} : vector<32x1xf32> -> vector<32x1xf32>
    %52 = vector.broadcast %51 : vector<32x1xf32> to vector<32x8xf32>
    %53 = arith.mulf %48, %52 : vector<32x8xf32>
    %54 = vector.extract_strided_slice %53 {offsets = [0, 0], sizes = [8, 8], strides = [1, 1]} : vector<32x8xf32> to vector<8x8xf32>
    %55 = vector.extract_strided_slice %27 {offsets = [0, 0], sizes = [8, 8], strides = [1, 1]} : vector<8x32xf32> to vector<8x8xf32>
    %cst_36 = arith.constant dense<0.000000e+00> : vector<8x8xf32>
    %56 = tpu.matmul %54, %55, %cst_36 {dimension_numbers = #tpu.dot_dimension_numbers<[1], [0], [0], [1], [0, 0, 1, 1], [], []>} : vector<8x8xf32>, vector<8x8xf32>, vector<8x8xf32> -> vector<8x8xf32>
    %57 = vector.extract_strided_slice %53 {offsets = [8, 0], sizes = [8, 8], strides = [1, 1]} : vector<32x8xf32> to vector<8x8xf32>
    %58 = vector.extract_strided_slice %27 {offsets = [0, 8], sizes = [8, 8], strides = [1, 1]} : vector<8x32xf32> to vector<8x8xf32>
    %cst_37 = arith.constant dense<0.000000e+00> : vector<8x8xf32>
    %59 = tpu.matmul %57, %58, %cst_37 {dimension_numbers = #tpu.dot_dimension_numbers<[1], [0], [0], [1], [0, 0, 1, 1], [], []>} : vector<8x8xf32>, vector<8x8xf32>, vector<8x8xf32> -> vector<8x8xf32>
    %60 = vector.extract_strided_slice %53 {offsets = [16, 0], sizes = [8, 8], strides = [1, 1]} : vector<32x8xf32> to vector<8x8xf32>
    %61 = vector.extract_strided_slice %27 {offsets = [0, 16], sizes = [8, 8], strides = [1, 1]} : vector<8x32xf32> to vector<8x8xf32>
    %cst_38 = arith.constant dense<0.000000e+00> : vector<8x8xf32>
    %62 = tpu.matmul %60, %61, %cst_38 {dimension_numbers = #tpu.dot_dimension_numbers<[1], [0], [0], [1], [0, 0, 1, 1], [], []>} : vector<8x8xf32>, vector<8x8xf32>, vector<8x8xf32> -> vector<8x8xf32>
    %63 = vector.extract_strided_slice %53 {offsets = [24, 0], sizes = [8, 8], strides = [1, 1]} : vector<32x8xf32> to vector<8x8xf32>
    %64 = vector.extract_strided_slice %27 {offsets = [0, 24], sizes = [8, 8], strides = [1, 1]} : vector<8x32xf32> to vector<8x8xf32>
    %cst_39 = arith.constant dense<0.000000e+00> : vector<8x8xf32>
    %65 = tpu.matmul %63, %64, %cst_39 {dimension_numbers = #tpu.dot_dimension_numbers<[1], [0], [0], [1], [0, 0, 1, 1], [], []>} : vector<8x8xf32>, vector<8x8xf32>, vector<8x8xf32> -> vector<8x8xf32>
    %66 = tpu.concatenate %56, %59, %62, %65 in 1 : vector<8x8xf32>, vector<8x8xf32>, vector<8x8xf32>, vector<8x8xf32> -> vector<8x32xf32>
    %cst_40 = arith.constant dense<0.000000e+00> : vector<8x32xf32>
    %67 = tpu.matmul %66, %29, %cst_40 {dimension_numbers = #tpu.dot_dimension_numbers<[1], [0], [0], [1], [0, 0, 1, 1], [], []>} : vector<8x32xf32>, vector<32x32xf32>, vector<8x32xf32> -> vector<8x32xf32>
    %c0_41 = arith.constant 0 : index
    %c96_42 = arith.constant 96 : index
    %68 = vector.load %arg10[%c0_41, %c96_42] : memref<2x640xf32, #tpu.memory_space<vmem>>, vector<1x32xf32>
    %69 = vector.broadcast %68 : vector<1x32xf32> to vector<8x32xf32>
    %70 = arith.addf %67, %69 : vector<8x32xf32>
    %c0_43 = arith.constant 0 : index
    %c128 = arith.constant 128 : index
    %71 = vector.load %arg10[%c0_43, %c128] : memref<2x640xf32, #tpu.memory_space<vmem>>, vector<1x32xf32>
    %c0_44 = arith.constant 0 : index
    %c160 = arith.constant 160 : index
    %72 = vector.load %arg10[%c0_44, %c160] : memref<2x640xf32, #tpu.memory_space<vmem>>, vector<1x32xf32>
    %73 = arith.addf %1, %70 : vector<8x32xf32>
    %cst_45 = arith.constant dense<0.000000e+00> : vector<8xf32>
    %74 = vector.multi_reduction <add>, %73, %cst_45 [1] : vector<8x32xf32> to vector<8xf32>
    %75 = vector.shape_cast %74 : vector<8xf32> to vector<8x1xf32>
    %cst_46 = arith.constant 3.200000e+01 : f32
    %76 = vector.broadcast %cst_46 : f32 to vector<8x1xf32>
    %77 = arith.divf %75, %76 : vector<8x1xf32>
    %78 = vector.broadcast %77 : vector<8x1xf32> to vector<8x32xf32>
    %79 = arith.subf %73, %78 : vector<8x32xf32>
    %80 = arith.mulf %79, %79 : vector<8x32xf32>
    %cst_47 = arith.constant dense<0.000000e+00> : vector<8xf32>
    %81 = vector.multi_reduction <add>, %80, %cst_47 [1] : vector<8x32xf32> to vector<8xf32>
    %82 = vector.shape_cast %81 : vector<8xf32> to vector<8x1xf32>
    %cst_48 = arith.constant 3.200000e+01 : f32
    %83 = vector.broadcast %cst_48 : f32 to vector<8x1xf32>
    %84 = arith.divf %82, %83 : vector<8x1xf32>
    %85 = vector.broadcast %77 : vector<8x1xf32> to vector<8x32xf32>
    %86 = arith.subf %73, %85 : vector<8x32xf32>
    %cst_49 = arith.constant 9.99999996E-13 : f32
    %87 = vector.broadcast %cst_49 : f32 to vector<8x1xf32>
    %88 = arith.addf %84, %87 : vector<8x1xf32>
    %89 = math.rsqrt %88 : vector<8x1xf32>
    %90 = vector.broadcast %89 : vector<8x1xf32> to vector<8x32xf32>
    %91 = arith.mulf %86, %90 : vector<8x32xf32>
    %92 = vector.broadcast %71 : vector<1x32xf32> to vector<8x32xf32>
    %93 = arith.mulf %91, %92 : vector<8x32xf32>
    %94 = vector.broadcast %72 : vector<1x32xf32> to vector<8x32xf32>
    %95 = arith.addf %93, %94 : vector<8x32xf32>
    %c0_50 = arith.constant 0 : index
    %c0_51 = arith.constant 0 : index
    %c128_52 = arith.constant 128 : index
    %96 = vector.load %arg9[%c0_50, %c0_51, %c128_52] : memref<2x32x512xf32, #tpu.memory_space<vmem>>, vector<1x32x32xf32>
    %97 = vector.shape_cast %96 : vector<1x32x32xf32> to vector<32x32xf32>
    %c0_53 = arith.constant 0 : index
    %c192 = arith.constant 192 : index
    %98 = vector.load %arg10[%c0_53, %c192] : memref<2x640xf32, #tpu.memory_space<vmem>>, vector<1x32xf32>
    %cst_54 = arith.constant dense<0.000000e+00> : vector<8x32xf32>
    %99 = tpu.matmul %95, %97, %cst_54 {dimension_numbers = #tpu.dot_dimension_numbers<[1], [0], [0], [1], [0, 0, 1, 1], [], []>} : vector<8x32xf32>, vector<32x32xf32>, vector<8x32xf32> -> vector<8x32xf32>
    %100 = vector.broadcast %98 : vector<1x32xf32> to vector<8x32xf32>
    %101 = arith.addf %99, %100 : vector<8x32xf32>
    %c0_55 = arith.constant 0 : index
    %c0_56 = arith.constant 0 : index
    %c160_57 = arith.constant 160 : index
    %102 = vector.load %arg9[%c0_55, %c0_56, %c160_57] : memref<2x32x512xf32, #tpu.memory_space<vmem>>, vector<1x32x32xf32>
    %103 = vector.shape_cast %102 : vector<1x32x32xf32> to vector<32x32xf32>
    %c0_58 = arith.constant 0 : index
    %c224 = arith.constant 224 : index
    %104 = vector.load %arg10[%c0_58, %c224] : memref<2x640xf32, #tpu.memory_space<vmem>>, vector<1x32xf32>
    %cst_59 = arith.constant dense<0.000000e+00> : vector<8x32xf32>
    %105 = tpu.matmul %3, %103, %cst_59 {dimension_numbers = #tpu.dot_dimension_numbers<[1], [0], [0], [1], [0, 0, 1, 1], [], []>} : vector<8x32xf32>, vector<32x32xf32>, vector<8x32xf32> -> vector<8x32xf32>
    %106 = vector.broadcast %104 : vector<1x32xf32> to vector<8x32xf32>
    %107 = arith.addf %105, %106 : vector<8x32xf32>
    %c0_60 = arith.constant 0 : index
    %c0_61 = arith.constant 0 : index
    %c192_62 = arith.constant 192 : index
    %108 = vector.load %arg9[%c0_60, %c0_61, %c192_62] : memref<2x32x512xf32, #tpu.memory_space<vmem>>, vector<1x32x32xf32>
    %109 = vector.shape_cast %108 : vector<1x32x32xf32> to vector<32x32xf32>
    %c0_63 = arith.constant 0 : index
    %c256 = arith.constant 256 : index
    %110 = vector.load %arg10[%c0_63, %c256] : memref<2x640xf32, #tpu.memory_space<vmem>>, vector<1x32xf32>
    %cst_64 = arith.constant dense<0.000000e+00> : vector<8x32xf32>
    %111 = tpu.matmul %5, %109, %cst_64 {dimension_numbers = #tpu.dot_dimension_numbers<[1], [0], [0], [1], [0, 0, 1, 1], [], []>} : vector<8x32xf32>, vector<32x32xf32>, vector<8x32xf32> -> vector<8x32xf32>
    %112 = vector.broadcast %110 : vector<1x32xf32> to vector<8x32xf32>
    %113 = arith.addf %111, %112 : vector<8x32xf32>
    %c0_65 = arith.constant 0 : index
    %c0_66 = arith.constant 0 : index
    %c224_67 = arith.constant 224 : index
    %114 = vector.load %arg9[%c0_65, %c0_66, %c224_67] : memref<2x32x512xf32, #tpu.memory_space<vmem>>, vector<1x32x32xf32>
    %115 = vector.shape_cast %114 : vector<1x32x32xf32> to vector<32x32xf32>
    %116 = vector.extract_strided_slice %101 {offsets = [0, 0], sizes = [8, 8], strides = [1, 1]} : vector<8x32xf32> to vector<8x8xf32>
    %117 = vector.extract_strided_slice %107 {offsets = [0, 0], sizes = [8, 8], strides = [1, 1]} : vector<8x32xf32> to vector<8x8xf32>
    %cst_68 = arith.constant dense<0.000000e+00> : vector<8x8xf32>
    %118 = tpu.matmul %116, %117, %cst_68 {dimension_numbers = #tpu.dot_dimension_numbers<[1], [1], [0], [0], [0, 0, 1, 0], [], []>} : vector<8x8xf32>, vector<8x8xf32>, vector<8x8xf32> -> vector<8x8xf32>
    %119 = vector.extract_strided_slice %101 {offsets = [0, 8], sizes = [8, 8], strides = [1, 1]} : vector<8x32xf32> to vector<8x8xf32>
    %120 = vector.extract_strided_slice %107 {offsets = [0, 8], sizes = [8, 8], strides = [1, 1]} : vector<8x32xf32> to vector<8x8xf32>
    %cst_69 = arith.constant dense<0.000000e+00> : vector<8x8xf32>
    %121 = tpu.matmul %119, %120, %cst_69 {dimension_numbers = #tpu.dot_dimension_numbers<[1], [1], [0], [0], [0, 0, 1, 0], [], []>} : vector<8x8xf32>, vector<8x8xf32>, vector<8x8xf32> -> vector<8x8xf32>
    %122 = vector.extract_strided_slice %101 {offsets = [0, 16], sizes = [8, 8], strides = [1, 1]} : vector<8x32xf32> to vector<8x8xf32>
    %123 = vector.extract_strided_slice %107 {offsets = [0, 16], sizes = [8, 8], strides = [1, 1]} : vector<8x32xf32> to vector<8x8xf32>
    %cst_70 = arith.constant dense<0.000000e+00> : vector<8x8xf32>
    %124 = tpu.matmul %122, %123, %cst_70 {dimension_numbers = #tpu.dot_dimension_numbers<[1], [1], [0], [0], [0, 0, 1, 0], [], []>} : vector<8x8xf32>, vector<8x8xf32>, vector<8x8xf32> -> vector<8x8xf32>
    %125 = vector.extract_strided_slice %101 {offsets = [0, 24], sizes = [8, 8], strides = [1, 1]} : vector<8x32xf32> to vector<8x8xf32>
    %126 = vector.extract_strided_slice %107 {offsets = [0, 24], sizes = [8, 8], strides = [1, 1]} : vector<8x32xf32> to vector<8x8xf32>
    %cst_71 = arith.constant dense<0.000000e+00> : vector<8x8xf32>
    %127 = tpu.matmul %125, %126, %cst_71 {dimension_numbers = #tpu.dot_dimension_numbers<[1], [1], [0], [0], [0, 0, 1, 0], [], []>} : vector<8x8xf32>, vector<8x8xf32>, vector<8x8xf32> -> vector<8x8xf32>
    %128 = tpu.concatenate %118, %121, %124, %127 in 0 : vector<8x8xf32>, vector<8x8xf32>, vector<8x8xf32>, vector<8x8xf32> -> vector<32x8xf32>
    %129 = arith.addf %128, %15 : vector<32x8xf32>
    %cst_72 = arith.constant dense<0xFF800000> : vector<32xf32>
    %130 = vector.multi_reduction <maximumf>, %129, %cst_72 [1] : vector<32x8xf32> to vector<32xf32>
    %131 = vector.shape_cast %130 : vector<32xf32> to vector<32x1xf32>
    %132 = vector.broadcast %131 : vector<32x1xf32> to vector<32x8xf32>
    %133 = arith.subf %129, %132 : vector<32x8xf32>
    %134 = math.exp %133 : vector<32x8xf32>
    %cst_73 = arith.constant dense<0.000000e+00> : vector<32xf32>
    %135 = vector.multi_reduction <add>, %134, %cst_73 [1] : vector<32x8xf32> to vector<32xf32>
    %136 = vector.shape_cast %135 : vector<32xf32> to vector<32x1xf32>
    %137 = tpu.reciprocal %136 {approx = true} : vector<32x1xf32> -> vector<32x1xf32>
    %138 = vector.broadcast %137 : vector<32x1xf32> to vector<32x8xf32>
    %139 = arith.mulf %134, %138 : vector<32x8xf32>
    %140 = vector.extract_strided_slice %139 {offsets = [0, 0], sizes = [8, 8], strides = [1, 1]} : vector<32x8xf32> to vector<8x8xf32>
    %141 = vector.extract_strided_slice %113 {offsets = [0, 0], sizes = [8, 8], strides = [1, 1]} : vector<8x32xf32> to vector<8x8xf32>
    %cst_74 = arith.constant dense<0.000000e+00> : vector<8x8xf32>
    %142 = tpu.matmul %140, %141, %cst_74 {dimension_numbers = #tpu.dot_dimension_numbers<[1], [0], [0], [1], [0, 0, 1, 1], [], []>} : vector<8x8xf32>, vector<8x8xf32>, vector<8x8xf32> -> vector<8x8xf32>
    %143 = vector.extract_strided_slice %139 {offsets = [8, 0], sizes = [8, 8], strides = [1, 1]} : vector<32x8xf32> to vector<8x8xf32>
    %144 = vector.extract_strided_slice %113 {offsets = [0, 8], sizes = [8, 8], strides = [1, 1]} : vector<8x32xf32> to vector<8x8xf32>
    %cst_75 = arith.constant dense<0.000000e+00> : vector<8x8xf32>
    %145 = tpu.matmul %143, %144, %cst_75 {dimension_numbers = #tpu.dot_dimension_numbers<[1], [0], [0], [1], [0, 0, 1, 1], [], []>} : vector<8x8xf32>, vector<8x8xf32>, vector<8x8xf32> -> vector<8x8xf32>
    %146 = vector.extract_strided_slice %139 {offsets = [16, 0], sizes = [8, 8], strides = [1, 1]} : vector<32x8xf32> to vector<8x8xf32>
    %147 = vector.extract_strided_slice %113 {offsets = [0, 16], sizes = [8, 8], strides = [1, 1]} : vector<8x32xf32> to vector<8x8xf32>
    %cst_76 = arith.constant dense<0.000000e+00> : vector<8x8xf32>
    %148 = tpu.matmul %146, %147, %cst_76 {dimension_numbers = #tpu.dot_dimension_numbers<[1], [0], [0], [1], [0, 0, 1, 1], [], []>} : vector<8x8xf32>, vector<8x8xf32>, vector<8x8xf32> -> vector<8x8xf32>
    %149 = vector.extract_strided_slice %139 {offsets = [24, 0], sizes = [8, 8], strides = [1, 1]} : vector<32x8xf32> to vector<8x8xf32>
    %150 = vector.extract_strided_slice %113 {offsets = [0, 24], sizes = [8, 8], strides = [1, 1]} : vector<8x32xf32> to vector<8x8xf32>
    %cst_77 = arith.constant dense<0.000000e+00> : vector<8x8xf32>
    %151 = tpu.matmul %149, %150, %cst_77 {dimension_numbers = #tpu.dot_dimension_numbers<[1], [0], [0], [1], [0, 0, 1, 1], [], []>} : vector<8x8xf32>, vector<8x8xf32>, vector<8x8xf32> -> vector<8x8xf32>
    %152 = tpu.concatenate %142, %145, %148, %151 in 1 : vector<8x8xf32>, vector<8x8xf32>, vector<8x8xf32>, vector<8x8xf32> -> vector<8x32xf32>
    %cst_78 = arith.constant dense<0.000000e+00> : vector<8x32xf32>
    %153 = tpu.matmul %152, %115, %cst_78 {dimension_numbers = #tpu.dot_dimension_numbers<[1], [0], [0], [1], [0, 0, 1, 1], [], []>} : vector<8x32xf32>, vector<32x32xf32>, vector<8x32xf32> -> vector<8x32xf32>
    %c0_79 = arith.constant 0 : index
    %c0_80 = arith.constant 0 : index
    %c256_81 = arith.constant 256 : index
    %154 = vector.load %arg9[%c0_79, %c0_80, %c256_81] : memref<2x32x512xf32, #tpu.memory_space<vmem>>, vector<1x32x32xf32>
    %155 = vector.shape_cast %154 : vector<1x32x32xf32> to vector<32x32xf32>
    %c0_82 = arith.constant 0 : index
    %c288 = arith.constant 288 : index
    %156 = vector.load %arg10[%c0_82, %c288] : memref<2x640xf32, #tpu.memory_space<vmem>>, vector<1x32xf32>
    %cst_83 = arith.constant dense<0.000000e+00> : vector<8x32xf32>
    %157 = tpu.matmul %95, %155, %cst_83 {dimension_numbers = #tpu.dot_dimension_numbers<[1], [0], [0], [1], [0, 0, 1, 1], [], []>} : vector<8x32xf32>, vector<32x32xf32>, vector<8x32xf32> -> vector<8x32xf32>
    %158 = vector.broadcast %156 : vector<1x32xf32> to vector<8x32xf32>
    %159 = arith.addf %157, %158 : vector<8x32xf32>
    %c0_84 = arith.constant 0 : index
    %c0_85 = arith.constant 0 : index
    %c288_86 = arith.constant 288 : index
    %160 = vector.load %arg9[%c0_84, %c0_85, %c288_86] : memref<2x32x512xf32, #tpu.memory_space<vmem>>, vector<1x32x32xf32>
    %161 = vector.shape_cast %160 : vector<1x32x32xf32> to vector<32x32xf32>
    %c0_87 = arith.constant 0 : index
    %c320 = arith.constant 320 : index
    %162 = vector.load %arg10[%c0_87, %c320] : memref<2x640xf32, #tpu.memory_space<vmem>>, vector<1x32xf32>
    %cst_88 = arith.constant dense<0.000000e+00> : vector<16x32xf32>
    %163 = tpu.matmul %7, %161, %cst_88 {dimension_numbers = #tpu.dot_dimension_numbers<[1], [0], [0], [1], [0, 0, 1, 1], [], []>} : vector<16x32xf32>, vector<32x32xf32>, vector<16x32xf32> -> vector<16x32xf32>
    %164 = vector.broadcast %162 : vector<1x32xf32> to vector<16x32xf32>
    %165 = arith.addf %163, %164 : vector<16x32xf32>
    %c0_89 = arith.constant 0 : index
    %c0_90 = arith.constant 0 : index
    %c320_91 = arith.constant 320 : index
    %166 = vector.load %arg9[%c0_89, %c0_90, %c320_91] : memref<2x32x512xf32, #tpu.memory_space<vmem>>, vector<1x32x32xf32>
    %167 = vector.shape_cast %166 : vector<1x32x32xf32> to vector<32x32xf32>
    %c0_92 = arith.constant 0 : index
    %c352 = arith.constant 352 : index
    %168 = vector.load %arg10[%c0_92, %c352] : memref<2x640xf32, #tpu.memory_space<vmem>>, vector<1x32xf32>
    %cst_93 = arith.constant dense<0.000000e+00> : vector<16x32xf32>
    %169 = tpu.matmul %9, %167, %cst_93 {dimension_numbers = #tpu.dot_dimension_numbers<[1], [0], [0], [1], [0, 0, 1, 1], [], []>} : vector<16x32xf32>, vector<32x32xf32>, vector<16x32xf32> -> vector<16x32xf32>
    %170 = vector.broadcast %168 : vector<1x32xf32> to vector<16x32xf32>
    %171 = arith.addf %169, %170 : vector<16x32xf32>
    %c0_94 = arith.constant 0 : index
    %c0_95 = arith.constant 0 : index
    %c352_96 = arith.constant 352 : index
    %172 = vector.load %arg9[%c0_94, %c0_95, %c352_96] : memref<2x32x512xf32, #tpu.memory_space<vmem>>, vector<1x32x32xf32>
    %173 = vector.shape_cast %172 : vector<1x32x32xf32> to vector<32x32xf32>
    %174 = vector.extract_strided_slice %159 {offsets = [0, 0], sizes = [8, 8], strides = [1, 1]} : vector<8x32xf32> to vector<8x8xf32>
    %175 = vector.extract_strided_slice %165 {offsets = [0, 0], sizes = [16, 8], strides = [1, 1]} : vector<16x32xf32> to vector<16x8xf32>
    %cst_97 = arith.constant dense<0.000000e+00> : vector<8x16xf32>
    %176 = tpu.matmul %174, %175, %cst_97 {dimension_numbers = #tpu.dot_dimension_numbers<[1], [1], [0], [0], [0, 0, 1, 0], [], []>} : vector<8x8xf32>, vector<16x8xf32>, vector<8x16xf32> -> vector<8x16xf32>
    %177 = vector.extract_strided_slice %159 {offsets = [0, 8], sizes = [8, 8], strides = [1, 1]} : vector<8x32xf32> to vector<8x8xf32>
    %178 = vector.extract_strided_slice %165 {offsets = [0, 8], sizes = [16, 8], strides = [1, 1]} : vector<16x32xf32> to vector<16x8xf32>
    %cst_98 = arith.constant dense<0.000000e+00> : vector<8x16xf32>
    %179 = tpu.matmul %177, %178, %cst_98 {dimension_numbers = #tpu.dot_dimension_numbers<[1], [1], [0], [0], [0, 0, 1, 0], [], []>} : vector<8x8xf32>, vector<16x8xf32>, vector<8x16xf32> -> vector<8x16xf32>
    %180 = vector.extract_strided_slice %159 {offsets = [0, 16], sizes = [8, 8], strides = [1, 1]} : vector<8x32xf32> to vector<8x8xf32>
    %181 = vector.extract_strided_slice %165 {offsets = [0, 16], sizes = [16, 8], strides = [1, 1]} : vector<16x32xf32> to vector<16x8xf32>
    %cst_99 = arith.constant dense<0.000000e+00> : vector<8x16xf32>
    %182 = tpu.matmul %180, %181, %cst_99 {dimension_numbers = #tpu.dot_dimension_numbers<[1], [1], [0], [0], [0, 0, 1, 0], [], []>} : vector<8x8xf32>, vector<16x8xf32>, vector<8x16xf32> -> vector<8x16xf32>
    %183 = vector.extract_strided_slice %159 {offsets = [0, 24], sizes = [8, 8], strides = [1, 1]} : vector<8x32xf32> to vector<8x8xf32>
    %184 = vector.extract_strided_slice %165 {offsets = [0, 24], sizes = [16, 8], strides = [1, 1]} : vector<16x32xf32> to vector<16x8xf32>
    %cst_100 = arith.constant dense<0.000000e+00> : vector<8x16xf32>
    %185 = tpu.matmul %183, %184, %cst_100 {dimension_numbers = #tpu.dot_dimension_numbers<[1], [1], [0], [0], [0, 0, 1, 0], [], []>} : vector<8x8xf32>, vector<16x8xf32>, vector<8x16xf32> -> vector<8x16xf32>
    %186 = tpu.concatenate %176, %179, %182, %185 in 0 : vector<8x16xf32>, vector<8x16xf32>, vector<8x16xf32>, vector<8x16xf32> -> vector<32x16xf32>
    %187 = arith.addf %186, %18 : vector<32x16xf32>
    %cst_101 = arith.constant dense<0xFF800000> : vector<32xf32>
    %188 = vector.multi_reduction <maximumf>, %187, %cst_101 [1] : vector<32x16xf32> to vector<32xf32>
    %189 = vector.shape_cast %188 : vector<32xf32> to vector<32x1xf32>
    %190 = vector.broadcast %189 : vector<32x1xf32> to vector<32x16xf32>
    %191 = arith.subf %187, %190 : vector<32x16xf32>
    %192 = math.exp %191 : vector<32x16xf32>
    %cst_102 = arith.constant dense<0.000000e+00> : vector<32xf32>
    %193 = vector.multi_reduction <add>, %192, %cst_102 [1] : vector<32x16xf32> to vector<32xf32>
    %194 = vector.shape_cast %193 : vector<32xf32> to vector<32x1xf32>
    %195 = tpu.reciprocal %194 {approx = true} : vector<32x1xf32> -> vector<32x1xf32>
    %196 = vector.broadcast %195 : vector<32x1xf32> to vector<32x16xf32>
    %197 = arith.mulf %192, %196 : vector<32x16xf32>
    %198 = vector.extract_strided_slice %197 {offsets = [0, 0], sizes = [8, 16], strides = [1, 1]} : vector<32x16xf32> to vector<8x16xf32>
    %199 = vector.extract_strided_slice %171 {offsets = [0, 0], sizes = [16, 8], strides = [1, 1]} : vector<16x32xf32> to vector<16x8xf32>
    %cst_103 = arith.constant dense<0.000000e+00> : vector<8x8xf32>
    %200 = tpu.matmul %198, %199, %cst_103 {dimension_numbers = #tpu.dot_dimension_numbers<[1], [0], [0], [1], [0, 0, 1, 1], [], []>} : vector<8x16xf32>, vector<16x8xf32>, vector<8x8xf32> -> vector<8x8xf32>
    %201 = vector.extract_strided_slice %197 {offsets = [8, 0], sizes = [8, 16], strides = [1, 1]} : vector<32x16xf32> to vector<8x16xf32>
    %202 = vector.extract_strided_slice %171 {offsets = [0, 8], sizes = [16, 8], strides = [1, 1]} : vector<16x32xf32> to vector<16x8xf32>
    %cst_104 = arith.constant dense<0.000000e+00> : vector<8x8xf32>
    %203 = tpu.matmul %201, %202, %cst_104 {dimension_numbers = #tpu.dot_dimension_numbers<[1], [0], [0], [1], [0, 0, 1, 1], [], []>} : vector<8x16xf32>, vector<16x8xf32>, vector<8x8xf32> -> vector<8x8xf32>
    %204 = vector.extract_strided_slice %197 {offsets = [16, 0], sizes = [8, 16], strides = [1, 1]} : vector<32x16xf32> to vector<8x16xf32>
    %205 = vector.extract_strided_slice %171 {offsets = [0, 16], sizes = [16, 8], strides = [1, 1]} : vector<16x32xf32> to vector<16x8xf32>
    %cst_105 = arith.constant dense<0.000000e+00> : vector<8x8xf32>
    %206 = tpu.matmul %204, %205, %cst_105 {dimension_numbers = #tpu.dot_dimension_numbers<[1], [0], [0], [1], [0, 0, 1, 1], [], []>} : vector<8x16xf32>, vector<16x8xf32>, vector<8x8xf32> -> vector<8x8xf32>
    %207 = vector.extract_strided_slice %197 {offsets = [24, 0], sizes = [8, 16], strides = [1, 1]} : vector<32x16xf32> to vector<8x16xf32>
    %208 = vector.extract_strided_slice %171 {offsets = [0, 24], sizes = [16, 8], strides = [1, 1]} : vector<16x32xf32> to vector<16x8xf32>
    %cst_106 = arith.constant dense<0.000000e+00> : vector<8x8xf32>
    %209 = tpu.matmul %207, %208, %cst_106 {dimension_numbers = #tpu.dot_dimension_numbers<[1], [0], [0], [1], [0, 0, 1, 1], [], []>} : vector<8x16xf32>, vector<16x8xf32>, vector<8x8xf32> -> vector<8x8xf32>
    %210 = tpu.concatenate %200, %203, %206, %209 in 1 : vector<8x8xf32>, vector<8x8xf32>, vector<8x8xf32>, vector<8x8xf32> -> vector<8x32xf32>
    %cst_107 = arith.constant dense<0.000000e+00> : vector<8x32xf32>
    %211 = tpu.matmul %210, %173, %cst_107 {dimension_numbers = #tpu.dot_dimension_numbers<[1], [0], [0], [1], [0, 0, 1, 1], [], []>} : vector<8x32xf32>, vector<32x32xf32>, vector<8x32xf32> -> vector<8x32xf32>
    %212 = arith.addf %153, %211 : vector<8x32xf32>
    %c0_108 = arith.constant 0 : index
    %c384 = arith.constant 384 : index
    %213 = vector.load %arg10[%c0_108, %c384] : memref<2x640xf32, #tpu.memory_space<vmem>>, vector<1x32xf32>
    %214 = vector.broadcast %213 : vector<1x32xf32> to vector<8x32xf32>
    %215 = arith.addf %212, %214 : vector<8x32xf32>
    %c0_109 = arith.constant 0 : index
    %c416 = arith.constant 416 : index
    %216 = vector.load %arg10[%c0_109, %c416] : memref<2x640xf32, #tpu.memory_space<vmem>>, vector<1x32xf32>
    %c0_110 = arith.constant 0 : index
    %c448 = arith.constant 448 : index
    %217 = vector.load %arg10[%c0_110, %c448] : memref<2x640xf32, #tpu.memory_space<vmem>>, vector<1x32xf32>
    %218 = arith.addf %95, %215 : vector<8x32xf32>
    %cst_111 = arith.constant dense<0.000000e+00> : vector<8xf32>
    %219 = vector.multi_reduction <add>, %218, %cst_111 [1] : vector<8x32xf32> to vector<8xf32>
    %220 = vector.shape_cast %219 : vector<8xf32> to vector<8x1xf32>
    %cst_112 = arith.constant 3.200000e+01 : f32
    %221 = vector.broadcast %cst_112 : f32 to vector<8x1xf32>
    %222 = arith.divf %220, %221 : vector<8x1xf32>
    %223 = vector.broadcast %222 : vector<8x1xf32> to vector<8x32xf32>
    %224 = arith.subf %218, %223 : vector<8x32xf32>
    %225 = arith.mulf %224, %224 : vector<8x32xf32>
    %cst_113 = arith.constant dense<0.000000e+00> : vector<8xf32>
    %226 = vector.multi_reduction <add>, %225, %cst_113 [1] : vector<8x32xf32> to vector<8xf32>
    %227 = vector.shape_cast %226 : vector<8xf32> to vector<8x1xf32>
    %cst_114 = arith.constant 3.200000e+01 : f32
    %228 = vector.broadcast %cst_114 : f32 to vector<8x1xf32>
    %229 = arith.divf %227, %228 : vector<8x1xf32>
    %230 = vector.broadcast %222 : vector<8x1xf32> to vector<8x32xf32>
    %231 = arith.subf %218, %230 : vector<8x32xf32>
    %cst_115 = arith.constant 9.99999996E-13 : f32
    %232 = vector.broadcast %cst_115 : f32 to vector<8x1xf32>
    %233 = arith.addf %229, %232 : vector<8x1xf32>
    %234 = math.rsqrt %233 : vector<8x1xf32>
    %235 = vector.broadcast %234 : vector<8x1xf32> to vector<8x32xf32>
    %236 = arith.mulf %231, %235 : vector<8x32xf32>
    %237 = vector.broadcast %216 : vector<1x32xf32> to vector<8x32xf32>
    %238 = arith.mulf %236, %237 : vector<8x32xf32>
    %239 = vector.broadcast %217 : vector<1x32xf32> to vector<8x32xf32>
    %240 = arith.addf %238, %239 : vector<8x32xf32>
    %c0_116 = arith.constant 0 : index
    %c0_117 = arith.constant 0 : index
    %c384_118 = arith.constant 384 : index
    %241 = vector.load %arg9[%c0_116, %c0_117, %c384_118] : memref<2x32x512xf32, #tpu.memory_space<vmem>>, vector<1x32x64xf32>
    %242 = vector.shape_cast %241 : vector<1x32x64xf32> to vector<32x64xf32>
    %c0_119 = arith.constant 0 : index
    %c512 = arith.constant 512 : index
    %243 = vector.load %arg10[%c0_119, %c512] : memref<2x640xf32, #tpu.memory_space<vmem>>, vector<1x64xf32>
    %cst_120 = arith.constant dense<0.000000e+00> : vector<8x64xf32>
    %244 = tpu.matmul %240, %242, %cst_120 {dimension_numbers = #tpu.dot_dimension_numbers<[1], [0], [0], [1], [0, 0, 1, 1], [], []>} : vector<8x32xf32>, vector<32x64xf32>, vector<8x64xf32> -> vector<8x64xf32>
    %245 = vector.broadcast %243 : vector<1x64xf32> to vector<8x64xf32>
    %246 = arith.addf %244, %245 : vector<8x64xf32>
    %247 = arith.mulf %246, %246 : vector<8x64xf32>
    %248 = arith.mulf %246, %247 : vector<8x64xf32>
    %cst_121 = arith.constant 4.471500e-02 : f32
    %249 = vector.broadcast %cst_121 : f32 to vector<8x64xf32>
    %250 = arith.mulf %249, %248 : vector<8x64xf32>
    %251 = arith.addf %246, %250 : vector<8x64xf32>
    %cst_122 = arith.constant 0.797884583 : f32
    %252 = vector.broadcast %cst_122 : f32 to vector<8x64xf32>
    %253 = arith.mulf %252, %251 : vector<8x64xf32>
    %254 = math.tanh %253 : vector<8x64xf32>
    %cst_123 = arith.constant 1.000000e+00 : f32
    %255 = vector.broadcast %cst_123 : f32 to vector<8x64xf32>
    %256 = arith.addf %255, %254 : vector<8x64xf32>
    %cst_124 = arith.constant 5.000000e-01 : f32
    %257 = vector.broadcast %cst_124 : f32 to vector<8x64xf32>
    %258 = arith.mulf %257, %256 : vector<8x64xf32>
    %259 = arith.mulf %246, %258 : vector<8x64xf32>
    %c0_125 = arith.constant 0 : index
    %c0_126 = arith.constant 0 : index
    %c448_127 = arith.constant 448 : index
    %260 = vector.load %arg9[%c0_125, %c0_126, %c448_127] : memref<2x32x512xf32, #tpu.memory_space<vmem>>, vector<1x32x64xf32>
    %261 = vector.shape_cast %260 : vector<1x32x64xf32> to vector<32x64xf32>
    %cst_128 = arith.constant dense<0.000000e+00> : vector<8x32xf32>
    %262 = tpu.matmul %259, %261, %cst_128 {dimension_numbers = #tpu.dot_dimension_numbers<[1], [1], [0], [0], [0, 0, 1, 0], [], []>} : vector<8x64xf32>, vector<32x64xf32>, vector<8x32xf32> -> vector<8x32xf32>
    %c0_129 = arith.constant 0 : index
    %c480 = arith.constant 480 : index
    %263 = vector.load %arg10[%c0_129, %c480] : memref<2x640xf32, #tpu.memory_space<vmem>>, vector<1x32xf32>
    %264 = vector.broadcast %263 : vector<1x32xf32> to vector<8x32xf32>
    %265 = arith.addf %262, %264 : vector<8x32xf32>
    %c0_130 = arith.constant 0 : index
    %c576 = arith.constant 576 : index
    %266 = vector.load %arg10[%c0_130, %c576] : memref<2x640xf32, #tpu.memory_space<vmem>>, vector<1x32xf32>
    %c0_131 = arith.constant 0 : index
    %c608 = arith.constant 608 : index
    %267 = vector.load %arg10[%c0_131, %c608] : memref<2x640xf32, #tpu.memory_space<vmem>>, vector<1x32xf32>
    %268 = arith.addf %240, %265 : vector<8x32xf32>
    %cst_132 = arith.constant dense<0.000000e+00> : vector<8xf32>
    %269 = vector.multi_reduction <add>, %268, %cst_132 [1] : vector<8x32xf32> to vector<8xf32>
    %270 = vector.shape_cast %269 : vector<8xf32> to vector<8x1xf32>
    %cst_133 = arith.constant 3.200000e+01 : f32
    %271 = vector.broadcast %cst_133 : f32 to vector<8x1xf32>
    %272 = arith.divf %270, %271 : vector<8x1xf32>
    %273 = vector.broadcast %272 : vector<8x1xf32> to vector<8x32xf32>
    %274 = arith.subf %268, %273 : vector<8x32xf32>
    %275 = arith.mulf %274, %274 : vector<8x32xf32>
    %cst_134 = arith.constant dense<0.000000e+00> : vector<8xf32>
    %276 = vector.multi_reduction <add>, %275, %cst_134 [1] : vector<8x32xf32> to vector<8xf32>
    %277 = vector.shape_cast %276 : vector<8xf32> to vector<8x1xf32>
    %cst_135 = arith.constant 3.200000e+01 : f32
    %278 = vector.broadcast %cst_135 : f32 to vector<8x1xf32>
    %279 = arith.divf %277, %278 : vector<8x1xf32>
    %280 = vector.broadcast %272 : vector<8x1xf32> to vector<8x32xf32>
    %281 = arith.subf %268, %280 : vector<8x32xf32>
    %cst_136 = arith.constant 9.99999996E-13 : f32
    %282 = vector.broadcast %cst_136 : f32 to vector<8x1xf32>
    %283 = arith.addf %279, %282 : vector<8x1xf32>
    %284 = math.rsqrt %283 : vector<8x1xf32>
    %285 = vector.broadcast %284 : vector<8x1xf32> to vector<8x32xf32>
    %286 = arith.mulf %281, %285 : vector<8x32xf32>
    %287 = vector.broadcast %266 : vector<1x32xf32> to vector<8x32xf32>
    %288 = arith.mulf %286, %287 : vector<8x32xf32>
    %289 = vector.broadcast %267 : vector<1x32xf32> to vector<8x32xf32>
    %290 = arith.addf %288, %289 : vector<8x32xf32>
    %c1 = arith.constant 1 : index
    %c0_137 = arith.constant 0 : index
    %c0_138 = arith.constant 0 : index
    %291 = vector.load %arg9[%c1, %c0_137, %c0_138] : memref<2x32x512xf32, #tpu.memory_space<vmem>>, vector<1x32x96xf32>
    %292 = vector.shape_cast %291 : vector<1x32x96xf32> to vector<32x96xf32>
    %c1_139 = arith.constant 1 : index
    %c0_140 = arith.constant 0 : index
    %293 = vector.load %arg10[%c1_139, %c0_140] : memref<2x640xf32, #tpu.memory_space<vmem>>, vector<1x96xf32>
    %cst_141 = arith.constant dense<0.000000e+00> : vector<8x96xf32>
    %294 = tpu.matmul %290, %292, %cst_141 {dimension_numbers = #tpu.dot_dimension_numbers<[1], [0], [0], [1], [0, 0, 1, 1], [], []>} : vector<8x32xf32>, vector<32x96xf32>, vector<8x96xf32> -> vector<8x96xf32>
    %295 = vector.broadcast %293 : vector<1x96xf32> to vector<8x96xf32>
    %296 = arith.addf %294, %295 : vector<8x96xf32>
    %297 = vector.extract_strided_slice %296 {offsets = [0, 0], sizes = [8, 32], strides = [1, 1]} : vector<8x96xf32> to vector<8x32xf32>
    %298 = vector.extract_strided_slice %296 {offsets = [0, 32], sizes = [8, 32], strides = [1, 1]} : vector<8x96xf32> to vector<8x32xf32>
    %299 = vector.extract_strided_slice %296 {offsets = [0, 64], sizes = [8, 32], strides = [1, 1]} : vector<8x96xf32> to vector<8x32xf32>
    %c1_142 = arith.constant 1 : index
    %c0_143 = arith.constant 0 : index
    %c96_144 = arith.constant 96 : index
    %300 = vector.load %arg9[%c1_142, %c0_143, %c96_144] : memref<2x32x512xf32, #tpu.memory_space<vmem>>, vector<1x32x32xf32>
    %301 = vector.shape_cast %300 : vector<1x32x32xf32> to vector<32x32xf32>
    %302 = vector.extract_strided_slice %297 {offsets = [0, 0], sizes = [8, 8], strides = [1, 1]} : vector<8x32xf32> to vector<8x8xf32>
    %303 = vector.extract_strided_slice %298 {offsets = [0, 0], sizes = [8, 8], strides = [1, 1]} : vector<8x32xf32> to vector<8x8xf32>
    %cst_145 = arith.constant dense<0.000000e+00> : vector<8x8xf32>
    %304 = tpu.matmul %302, %303, %cst_145 {dimension_numbers = #tpu.dot_dimension_numbers<[1], [1], [0], [0], [0, 0, 1, 0], [], []>} : vector<8x8xf32>, vector<8x8xf32>, vector<8x8xf32> -> vector<8x8xf32>
    %305 = vector.extract_strided_slice %297 {offsets = [0, 8], sizes = [8, 8], strides = [1, 1]} : vector<8x32xf32> to vector<8x8xf32>
    %306 = vector.extract_strided_slice %298 {offsets = [0, 8], sizes = [8, 8], strides = [1, 1]} : vector<8x32xf32> to vector<8x8xf32>
    %cst_146 = arith.constant dense<0.000000e+00> : vector<8x8xf32>
    %307 = tpu.matmul %305, %306, %cst_146 {dimension_numbers = #tpu.dot_dimension_numbers<[1], [1], [0], [0], [0, 0, 1, 0], [], []>} : vector<8x8xf32>, vector<8x8xf32>, vector<8x8xf32> -> vector<8x8xf32>
    %308 = vector.extract_strided_slice %297 {offsets = [0, 16], sizes = [8, 8], strides = [1, 1]} : vector<8x32xf32> to vector<8x8xf32>
    %309 = vector.extract_strided_slice %298 {offsets = [0, 16], sizes = [8, 8], strides = [1, 1]} : vector<8x32xf32> to vector<8x8xf32>
    %cst_147 = arith.constant dense<0.000000e+00> : vector<8x8xf32>
    %310 = tpu.matmul %308, %309, %cst_147 {dimension_numbers = #tpu.dot_dimension_numbers<[1], [1], [0], [0], [0, 0, 1, 0], [], []>} : vector<8x8xf32>, vector<8x8xf32>, vector<8x8xf32> -> vector<8x8xf32>
    %311 = vector.extract_strided_slice %297 {offsets = [0, 24], sizes = [8, 8], strides = [1, 1]} : vector<8x32xf32> to vector<8x8xf32>
    %312 = vector.extract_strided_slice %298 {offsets = [0, 24], sizes = [8, 8], strides = [1, 1]} : vector<8x32xf32> to vector<8x8xf32>
    %cst_148 = arith.constant dense<0.000000e+00> : vector<8x8xf32>
    %313 = tpu.matmul %311, %312, %cst_148 {dimension_numbers = #tpu.dot_dimension_numbers<[1], [1], [0], [0], [0, 0, 1, 0], [], []>} : vector<8x8xf32>, vector<8x8xf32>, vector<8x8xf32> -> vector<8x8xf32>
    %314 = tpu.concatenate %304, %307, %310, %313 in 0 : vector<8x8xf32>, vector<8x8xf32>, vector<8x8xf32>, vector<8x8xf32> -> vector<32x8xf32>
    %315 = arith.addf %314, %12 : vector<32x8xf32>
    %cst_149 = arith.constant dense<0xFF800000> : vector<32xf32>
    %316 = vector.multi_reduction <maximumf>, %315, %cst_149 [1] : vector<32x8xf32> to vector<32xf32>
    %317 = vector.shape_cast %316 : vector<32xf32> to vector<32x1xf32>
    %318 = vector.broadcast %317 : vector<32x1xf32> to vector<32x8xf32>
    %319 = arith.subf %315, %318 : vector<32x8xf32>
    %320 = math.exp %319 : vector<32x8xf32>
    %cst_150 = arith.constant dense<0.000000e+00> : vector<32xf32>
    %321 = vector.multi_reduction <add>, %320, %cst_150 [1] : vector<32x8xf32> to vector<32xf32>
    %322 = vector.shape_cast %321 : vector<32xf32> to vector<32x1xf32>
    %323 = tpu.reciprocal %322 {approx = true} : vector<32x1xf32> -> vector<32x1xf32>
    %324 = vector.broadcast %323 : vector<32x1xf32> to vector<32x8xf32>
    %325 = arith.mulf %320, %324 : vector<32x8xf32>
    %326 = vector.extract_strided_slice %325 {offsets = [0, 0], sizes = [8, 8], strides = [1, 1]} : vector<32x8xf32> to vector<8x8xf32>
    %327 = vector.extract_strided_slice %299 {offsets = [0, 0], sizes = [8, 8], strides = [1, 1]} : vector<8x32xf32> to vector<8x8xf32>
    %cst_151 = arith.constant dense<0.000000e+00> : vector<8x8xf32>
    %328 = tpu.matmul %326, %327, %cst_151 {dimension_numbers = #tpu.dot_dimension_numbers<[1], [0], [0], [1], [0, 0, 1, 1], [], []>} : vector<8x8xf32>, vector<8x8xf32>, vector<8x8xf32> -> vector<8x8xf32>
    %329 = vector.extract_strided_slice %325 {offsets = [8, 0], sizes = [8, 8], strides = [1, 1]} : vector<32x8xf32> to vector<8x8xf32>
    %330 = vector.extract_strided_slice %299 {offsets = [0, 8], sizes = [8, 8], strides = [1, 1]} : vector<8x32xf32> to vector<8x8xf32>
    %cst_152 = arith.constant dense<0.000000e+00> : vector<8x8xf32>
    %331 = tpu.matmul %329, %330, %cst_152 {dimension_numbers = #tpu.dot_dimension_numbers<[1], [0], [0], [1], [0, 0, 1, 1], [], []>} : vector<8x8xf32>, vector<8x8xf32>, vector<8x8xf32> -> vector<8x8xf32>
    %332 = vector.extract_strided_slice %325 {offsets = [16, 0], sizes = [8, 8], strides = [1, 1]} : vector<32x8xf32> to vector<8x8xf32>
    %333 = vector.extract_strided_slice %299 {offsets = [0, 16], sizes = [8, 8], strides = [1, 1]} : vector<8x32xf32> to vector<8x8xf32>
    %cst_153 = arith.constant dense<0.000000e+00> : vector<8x8xf32>
    %334 = tpu.matmul %332, %333, %cst_153 {dimension_numbers = #tpu.dot_dimension_numbers<[1], [0], [0], [1], [0, 0, 1, 1], [], []>} : vector<8x8xf32>, vector<8x8xf32>, vector<8x8xf32> -> vector<8x8xf32>
    %335 = vector.extract_strided_slice %325 {offsets = [24, 0], sizes = [8, 8], strides = [1, 1]} : vector<32x8xf32> to vector<8x8xf32>
    %336 = vector.extract_strided_slice %299 {offsets = [0, 24], sizes = [8, 8], strides = [1, 1]} : vector<8x32xf32> to vector<8x8xf32>
    %cst_154 = arith.constant dense<0.000000e+00> : vector<8x8xf32>
    %337 = tpu.matmul %335, %336, %cst_154 {dimension_numbers = #tpu.dot_dimension_numbers<[1], [0], [0], [1], [0, 0, 1, 1], [], []>} : vector<8x8xf32>, vector<8x8xf32>, vector<8x8xf32> -> vector<8x8xf32>
    %338 = tpu.concatenate %328, %331, %334, %337 in 1 : vector<8x8xf32>, vector<8x8xf32>, vector<8x8xf32>, vector<8x8xf32> -> vector<8x32xf32>
    %cst_155 = arith.constant dense<0.000000e+00> : vector<8x32xf32>
    %339 = tpu.matmul %338, %301, %cst_155 {dimension_numbers = #tpu.dot_dimension_numbers<[1], [0], [0], [1], [0, 0, 1, 1], [], []>} : vector<8x32xf32>, vector<32x32xf32>, vector<8x32xf32> -> vector<8x32xf32>
    %c1_156 = arith.constant 1 : index
    %c96_157 = arith.constant 96 : index
    %340 = vector.load %arg10[%c1_156, %c96_157] : memref<2x640xf32, #tpu.memory_space<vmem>>, vector<1x32xf32>
    %341 = vector.broadcast %340 : vector<1x32xf32> to vector<8x32xf32>
    %342 = arith.addf %339, %341 : vector<8x32xf32>
    %c1_158 = arith.constant 1 : index
    %c128_159 = arith.constant 128 : index
    %343 = vector.load %arg10[%c1_158, %c128_159] : memref<2x640xf32, #tpu.memory_space<vmem>>, vector<1x32xf32>
    %c1_160 = arith.constant 1 : index
    %c160_161 = arith.constant 160 : index
    %344 = vector.load %arg10[%c1_160, %c160_161] : memref<2x640xf32, #tpu.memory_space<vmem>>, vector<1x32xf32>
    %345 = arith.addf %290, %342 : vector<8x32xf32>
    %cst_162 = arith.constant dense<0.000000e+00> : vector<8xf32>
    %346 = vector.multi_reduction <add>, %345, %cst_162 [1] : vector<8x32xf32> to vector<8xf32>
    %347 = vector.shape_cast %346 : vector<8xf32> to vector<8x1xf32>
    %cst_163 = arith.constant 3.200000e+01 : f32
    %348 = vector.broadcast %cst_163 : f32 to vector<8x1xf32>
    %349 = arith.divf %347, %348 : vector<8x1xf32>
    %350 = vector.broadcast %349 : vector<8x1xf32> to vector<8x32xf32>
    %351 = arith.subf %345, %350 : vector<8x32xf32>
    %352 = arith.mulf %351, %351 : vector<8x32xf32>
    %cst_164 = arith.constant dense<0.000000e+00> : vector<8xf32>
    %353 = vector.multi_reduction <add>, %352, %cst_164 [1] : vector<8x32xf32> to vector<8xf32>
    %354 = vector.shape_cast %353 : vector<8xf32> to vector<8x1xf32>
    %cst_165 = arith.constant 3.200000e+01 : f32
    %355 = vector.broadcast %cst_165 : f32 to vector<8x1xf32>
    %356 = arith.divf %354, %355 : vector<8x1xf32>
    %357 = vector.broadcast %349 : vector<8x1xf32> to vector<8x32xf32>
    %358 = arith.subf %345, %357 : vector<8x32xf32>
    %cst_166 = arith.constant 9.99999996E-13 : f32
    %359 = vector.broadcast %cst_166 : f32 to vector<8x1xf32>
    %360 = arith.addf %356, %359 : vector<8x1xf32>
    %361 = math.rsqrt %360 : vector<8x1xf32>
    %362 = vector.broadcast %361 : vector<8x1xf32> to vector<8x32xf32>
    %363 = arith.mulf %358, %362 : vector<8x32xf32>
    %364 = vector.broadcast %343 : vector<1x32xf32> to vector<8x32xf32>
    %365 = arith.mulf %363, %364 : vector<8x32xf32>
    %366 = vector.broadcast %344 : vector<1x32xf32> to vector<8x32xf32>
    %367 = arith.addf %365, %366 : vector<8x32xf32>
    %c1_167 = arith.constant 1 : index
    %c0_168 = arith.constant 0 : index
    %c128_169 = arith.constant 128 : index
    %368 = vector.load %arg9[%c1_167, %c0_168, %c128_169] : memref<2x32x512xf32, #tpu.memory_space<vmem>>, vector<1x32x32xf32>
    %369 = vector.shape_cast %368 : vector<1x32x32xf32> to vector<32x32xf32>
    %c1_170 = arith.constant 1 : index
    %c192_171 = arith.constant 192 : index
    %370 = vector.load %arg10[%c1_170, %c192_171] : memref<2x640xf32, #tpu.memory_space<vmem>>, vector<1x32xf32>
    %cst_172 = arith.constant dense<0.000000e+00> : vector<8x32xf32>
    %371 = tpu.matmul %367, %369, %cst_172 {dimension_numbers = #tpu.dot_dimension_numbers<[1], [0], [0], [1], [0, 0, 1, 1], [], []>} : vector<8x32xf32>, vector<32x32xf32>, vector<8x32xf32> -> vector<8x32xf32>
    %372 = vector.broadcast %370 : vector<1x32xf32> to vector<8x32xf32>
    %373 = arith.addf %371, %372 : vector<8x32xf32>
    %c1_173 = arith.constant 1 : index
    %c0_174 = arith.constant 0 : index
    %c160_175 = arith.constant 160 : index
    %374 = vector.load %arg9[%c1_173, %c0_174, %c160_175] : memref<2x32x512xf32, #tpu.memory_space<vmem>>, vector<1x32x32xf32>
    %375 = vector.shape_cast %374 : vector<1x32x32xf32> to vector<32x32xf32>
    %c1_176 = arith.constant 1 : index
    %c224_177 = arith.constant 224 : index
    %376 = vector.load %arg10[%c1_176, %c224_177] : memref<2x640xf32, #tpu.memory_space<vmem>>, vector<1x32xf32>
    %cst_178 = arith.constant dense<0.000000e+00> : vector<8x32xf32>
    %377 = tpu.matmul %3, %375, %cst_178 {dimension_numbers = #tpu.dot_dimension_numbers<[1], [0], [0], [1], [0, 0, 1, 1], [], []>} : vector<8x32xf32>, vector<32x32xf32>, vector<8x32xf32> -> vector<8x32xf32>
    %378 = vector.broadcast %376 : vector<1x32xf32> to vector<8x32xf32>
    %379 = arith.addf %377, %378 : vector<8x32xf32>
    %c1_179 = arith.constant 1 : index
    %c0_180 = arith.constant 0 : index
    %c192_181 = arith.constant 192 : index
    %380 = vector.load %arg9[%c1_179, %c0_180, %c192_181] : memref<2x32x512xf32, #tpu.memory_space<vmem>>, vector<1x32x32xf32>
    %381 = vector.shape_cast %380 : vector<1x32x32xf32> to vector<32x32xf32>
    %c1_182 = arith.constant 1 : index
    %c256_183 = arith.constant 256 : index
    %382 = vector.load %arg10[%c1_182, %c256_183] : memref<2x640xf32, #tpu.memory_space<vmem>>, vector<1x32xf32>
    %cst_184 = arith.constant dense<0.000000e+00> : vector<8x32xf32>
    %383 = tpu.matmul %5, %381, %cst_184 {dimension_numbers = #tpu.dot_dimension_numbers<[1], [0], [0], [1], [0, 0, 1, 1], [], []>} : vector<8x32xf32>, vector<32x32xf32>, vector<8x32xf32> -> vector<8x32xf32>
    %384 = vector.broadcast %382 : vector<1x32xf32> to vector<8x32xf32>
    %385 = arith.addf %383, %384 : vector<8x32xf32>
    %c1_185 = arith.constant 1 : index
    %c0_186 = arith.constant 0 : index
    %c224_187 = arith.constant 224 : index
    %386 = vector.load %arg9[%c1_185, %c0_186, %c224_187] : memref<2x32x512xf32, #tpu.memory_space<vmem>>, vector<1x32x32xf32>
    %387 = vector.shape_cast %386 : vector<1x32x32xf32> to vector<32x32xf32>
    %388 = vector.extract_strided_slice %373 {offsets = [0, 0], sizes = [8, 8], strides = [1, 1]} : vector<8x32xf32> to vector<8x8xf32>
    %389 = vector.extract_strided_slice %379 {offsets = [0, 0], sizes = [8, 8], strides = [1, 1]} : vector<8x32xf32> to vector<8x8xf32>
    %cst_188 = arith.constant dense<0.000000e+00> : vector<8x8xf32>
    %390 = tpu.matmul %388, %389, %cst_188 {dimension_numbers = #tpu.dot_dimension_numbers<[1], [1], [0], [0], [0, 0, 1, 0], [], []>} : vector<8x8xf32>, vector<8x8xf32>, vector<8x8xf32> -> vector<8x8xf32>
    %391 = vector.extract_strided_slice %373 {offsets = [0, 8], sizes = [8, 8], strides = [1, 1]} : vector<8x32xf32> to vector<8x8xf32>
    %392 = vector.extract_strided_slice %379 {offsets = [0, 8], sizes = [8, 8], strides = [1, 1]} : vector<8x32xf32> to vector<8x8xf32>
    %cst_189 = arith.constant dense<0.000000e+00> : vector<8x8xf32>
    %393 = tpu.matmul %391, %392, %cst_189 {dimension_numbers = #tpu.dot_dimension_numbers<[1], [1], [0], [0], [0, 0, 1, 0], [], []>} : vector<8x8xf32>, vector<8x8xf32>, vector<8x8xf32> -> vector<8x8xf32>
    %394 = vector.extract_strided_slice %373 {offsets = [0, 16], sizes = [8, 8], strides = [1, 1]} : vector<8x32xf32> to vector<8x8xf32>
    %395 = vector.extract_strided_slice %379 {offsets = [0, 16], sizes = [8, 8], strides = [1, 1]} : vector<8x32xf32> to vector<8x8xf32>
    %cst_190 = arith.constant dense<0.000000e+00> : vector<8x8xf32>
    %396 = tpu.matmul %394, %395, %cst_190 {dimension_numbers = #tpu.dot_dimension_numbers<[1], [1], [0], [0], [0, 0, 1, 0], [], []>} : vector<8x8xf32>, vector<8x8xf32>, vector<8x8xf32> -> vector<8x8xf32>
    %397 = vector.extract_strided_slice %373 {offsets = [0, 24], sizes = [8, 8], strides = [1, 1]} : vector<8x32xf32> to vector<8x8xf32>
    %398 = vector.extract_strided_slice %379 {offsets = [0, 24], sizes = [8, 8], strides = [1, 1]} : vector<8x32xf32> to vector<8x8xf32>
    %cst_191 = arith.constant dense<0.000000e+00> : vector<8x8xf32>
    %399 = tpu.matmul %397, %398, %cst_191 {dimension_numbers = #tpu.dot_dimension_numbers<[1], [1], [0], [0], [0, 0, 1, 0], [], []>} : vector<8x8xf32>, vector<8x8xf32>, vector<8x8xf32> -> vector<8x8xf32>
    %400 = tpu.concatenate %390, %393, %396, %399 in 0 : vector<8x8xf32>, vector<8x8xf32>, vector<8x8xf32>, vector<8x8xf32> -> vector<32x8xf32>
    %401 = arith.addf %400, %15 : vector<32x8xf32>
    %cst_192 = arith.constant dense<0xFF800000> : vector<32xf32>
    %402 = vector.multi_reduction <maximumf>, %401, %cst_192 [1] : vector<32x8xf32> to vector<32xf32>
    %403 = vector.shape_cast %402 : vector<32xf32> to vector<32x1xf32>
    %404 = vector.broadcast %403 : vector<32x1xf32> to vector<32x8xf32>
    %405 = arith.subf %401, %404 : vector<32x8xf32>
    %406 = math.exp %405 : vector<32x8xf32>
    %cst_193 = arith.constant dense<0.000000e+00> : vector<32xf32>
    %407 = vector.multi_reduction <add>, %406, %cst_193 [1] : vector<32x8xf32> to vector<32xf32>
    %408 = vector.shape_cast %407 : vector<32xf32> to vector<32x1xf32>
    %409 = tpu.reciprocal %408 {approx = true} : vector<32x1xf32> -> vector<32x1xf32>
    %410 = vector.broadcast %409 : vector<32x1xf32> to vector<32x8xf32>
    %411 = arith.mulf %406, %410 : vector<32x8xf32>
    %412 = vector.extract_strided_slice %411 {offsets = [0, 0], sizes = [8, 8], strides = [1, 1]} : vector<32x8xf32> to vector<8x8xf32>
    %413 = vector.extract_strided_slice %385 {offsets = [0, 0], sizes = [8, 8], strides = [1, 1]} : vector<8x32xf32> to vector<8x8xf32>
    %cst_194 = arith.constant dense<0.000000e+00> : vector<8x8xf32>
    %414 = tpu.matmul %412, %413, %cst_194 {dimension_numbers = #tpu.dot_dimension_numbers<[1], [0], [0], [1], [0, 0, 1, 1], [], []>} : vector<8x8xf32>, vector<8x8xf32>, vector<8x8xf32> -> vector<8x8xf32>
    %415 = vector.extract_strided_slice %411 {offsets = [8, 0], sizes = [8, 8], strides = [1, 1]} : vector<32x8xf32> to vector<8x8xf32>
    %416 = vector.extract_strided_slice %385 {offsets = [0, 8], sizes = [8, 8], strides = [1, 1]} : vector<8x32xf32> to vector<8x8xf32>
    %cst_195 = arith.constant dense<0.000000e+00> : vector<8x8xf32>
    %417 = tpu.matmul %415, %416, %cst_195 {dimension_numbers = #tpu.dot_dimension_numbers<[1], [0], [0], [1], [0, 0, 1, 1], [], []>} : vector<8x8xf32>, vector<8x8xf32>, vector<8x8xf32> -> vector<8x8xf32>
    %418 = vector.extract_strided_slice %411 {offsets = [16, 0], sizes = [8, 8], strides = [1, 1]} : vector<32x8xf32> to vector<8x8xf32>
    %419 = vector.extract_strided_slice %385 {offsets = [0, 16], sizes = [8, 8], strides = [1, 1]} : vector<8x32xf32> to vector<8x8xf32>
    %cst_196 = arith.constant dense<0.000000e+00> : vector<8x8xf32>
    %420 = tpu.matmul %418, %419, %cst_196 {dimension_numbers = #tpu.dot_dimension_numbers<[1], [0], [0], [1], [0, 0, 1, 1], [], []>} : vector<8x8xf32>, vector<8x8xf32>, vector<8x8xf32> -> vector<8x8xf32>
    %421 = vector.extract_strided_slice %411 {offsets = [24, 0], sizes = [8, 8], strides = [1, 1]} : vector<32x8xf32> to vector<8x8xf32>
    %422 = vector.extract_strided_slice %385 {offsets = [0, 24], sizes = [8, 8], strides = [1, 1]} : vector<8x32xf32> to vector<8x8xf32>
    %cst_197 = arith.constant dense<0.000000e+00> : vector<8x8xf32>
    %423 = tpu.matmul %421, %422, %cst_197 {dimension_numbers = #tpu.dot_dimension_numbers<[1], [0], [0], [1], [0, 0, 1, 1], [], []>} : vector<8x8xf32>, vector<8x8xf32>, vector<8x8xf32> -> vector<8x8xf32>
    %424 = tpu.concatenate %414, %417, %420, %423 in 1 : vector<8x8xf32>, vector<8x8xf32>, vector<8x8xf32>, vector<8x8xf32> -> vector<8x32xf32>
    %cst_198 = arith.constant dense<0.000000e+00> : vector<8x32xf32>
    %425 = tpu.matmul %424, %387, %cst_198 {dimension_numbers = #tpu.dot_dimension_numbers<[1], [0], [0], [1], [0, 0, 1, 1], [], []>} : vector<8x32xf32>, vector<32x32xf32>, vector<8x32xf32> -> vector<8x32xf32>
    %c1_199 = arith.constant 1 : index
    %c0_200 = arith.constant 0 : index
    %c256_201 = arith.constant 256 : index
    %426 = vector.load %arg9[%c1_199, %c0_200, %c256_201] : memref<2x32x512xf32, #tpu.memory_space<vmem>>, vector<1x32x32xf32>
    %427 = vector.shape_cast %426 : vector<1x32x32xf32> to vector<32x32xf32>
    %c1_202 = arith.constant 1 : index
    %c288_203 = arith.constant 288 : index
    %428 = vector.load %arg10[%c1_202, %c288_203] : memref<2x640xf32, #tpu.memory_space<vmem>>, vector<1x32xf32>
    %cst_204 = arith.constant dense<0.000000e+00> : vector<8x32xf32>
    %429 = tpu.matmul %367, %427, %cst_204 {dimension_numbers = #tpu.dot_dimension_numbers<[1], [0], [0], [1], [0, 0, 1, 1], [], []>} : vector<8x32xf32>, vector<32x32xf32>, vector<8x32xf32> -> vector<8x32xf32>
    %430 = vector.broadcast %428 : vector<1x32xf32> to vector<8x32xf32>
    %431 = arith.addf %429, %430 : vector<8x32xf32>
    %c1_205 = arith.constant 1 : index
    %c0_206 = arith.constant 0 : index
    %c288_207 = arith.constant 288 : index
    %432 = vector.load %arg9[%c1_205, %c0_206, %c288_207] : memref<2x32x512xf32, #tpu.memory_space<vmem>>, vector<1x32x32xf32>
    %433 = vector.shape_cast %432 : vector<1x32x32xf32> to vector<32x32xf32>
    %c1_208 = arith.constant 1 : index
    %c320_209 = arith.constant 320 : index
    %434 = vector.load %arg10[%c1_208, %c320_209] : memref<2x640xf32, #tpu.memory_space<vmem>>, vector<1x32xf32>
    %cst_210 = arith.constant dense<0.000000e+00> : vector<16x32xf32>
    %435 = tpu.matmul %7, %433, %cst_210 {dimension_numbers = #tpu.dot_dimension_numbers<[1], [0], [0], [1], [0, 0, 1, 1], [], []>} : vector<16x32xf32>, vector<32x32xf32>, vector<16x32xf32> -> vector<16x32xf32>
    %436 = vector.broadcast %434 : vector<1x32xf32> to vector<16x32xf32>
    %437 = arith.addf %435, %436 : vector<16x32xf32>
    %c1_211 = arith.constant 1 : index
    %c0_212 = arith.constant 0 : index
    %c320_213 = arith.constant 320 : index
    %438 = vector.load %arg9[%c1_211, %c0_212, %c320_213] : memref<2x32x512xf32, #tpu.memory_space<vmem>>, vector<1x32x32xf32>
    %439 = vector.shape_cast %438 : vector<1x32x32xf32> to vector<32x32xf32>
    %c1_214 = arith.constant 1 : index
    %c352_215 = arith.constant 352 : index
    %440 = vector.load %arg10[%c1_214, %c352_215] : memref<2x640xf32, #tpu.memory_space<vmem>>, vector<1x32xf32>
    %cst_216 = arith.constant dense<0.000000e+00> : vector<16x32xf32>
    %441 = tpu.matmul %9, %439, %cst_216 {dimension_numbers = #tpu.dot_dimension_numbers<[1], [0], [0], [1], [0, 0, 1, 1], [], []>} : vector<16x32xf32>, vector<32x32xf32>, vector<16x32xf32> -> vector<16x32xf32>
    %442 = vector.broadcast %440 : vector<1x32xf32> to vector<16x32xf32>
    %443 = arith.addf %441, %442 : vector<16x32xf32>
    %c1_217 = arith.constant 1 : index
    %c0_218 = arith.constant 0 : index
    %c352_219 = arith.constant 352 : index
    %444 = vector.load %arg9[%c1_217, %c0_218, %c352_219] : memref<2x32x512xf32, #tpu.memory_space<vmem>>, vector<1x32x32xf32>
    %445 = vector.shape_cast %444 : vector<1x32x32xf32> to vector<32x32xf32>
    %446 = vector.extract_strided_slice %431 {offsets = [0, 0], sizes = [8, 8], strides = [1, 1]} : vector<8x32xf32> to vector<8x8xf32>
    %447 = vector.extract_strided_slice %437 {offsets = [0, 0], sizes = [16, 8], strides = [1, 1]} : vector<16x32xf32> to vector<16x8xf32>
    %cst_220 = arith.constant dense<0.000000e+00> : vector<8x16xf32>
    %448 = tpu.matmul %446, %447, %cst_220 {dimension_numbers = #tpu.dot_dimension_numbers<[1], [1], [0], [0], [0, 0, 1, 0], [], []>} : vector<8x8xf32>, vector<16x8xf32>, vector<8x16xf32> -> vector<8x16xf32>
    %449 = vector.extract_strided_slice %431 {offsets = [0, 8], sizes = [8, 8], strides = [1, 1]} : vector<8x32xf32> to vector<8x8xf32>
    %450 = vector.extract_strided_slice %437 {offsets = [0, 8], sizes = [16, 8], strides = [1, 1]} : vector<16x32xf32> to vector<16x8xf32>
    %cst_221 = arith.constant dense<0.000000e+00> : vector<8x16xf32>
    %451 = tpu.matmul %449, %450, %cst_221 {dimension_numbers = #tpu.dot_dimension_numbers<[1], [1], [0], [0], [0, 0, 1, 0], [], []>} : vector<8x8xf32>, vector<16x8xf32>, vector<8x16xf32> -> vector<8x16xf32>
    %452 = vector.extract_strided_slice %431 {offsets = [0, 16], sizes = [8, 8], strides = [1, 1]} : vector<8x32xf32> to vector<8x8xf32>
    %453 = vector.extract_strided_slice %437 {offsets = [0, 16], sizes = [16, 8], strides = [1, 1]} : vector<16x32xf32> to vector<16x8xf32>
    %cst_222 = arith.constant dense<0.000000e+00> : vector<8x16xf32>
    %454 = tpu.matmul %452, %453, %cst_222 {dimension_numbers = #tpu.dot_dimension_numbers<[1], [1], [0], [0], [0, 0, 1, 0], [], []>} : vector<8x8xf32>, vector<16x8xf32>, vector<8x16xf32> -> vector<8x16xf32>
    %455 = vector.extract_strided_slice %431 {offsets = [0, 24], sizes = [8, 8], strides = [1, 1]} : vector<8x32xf32> to vector<8x8xf32>
    %456 = vector.extract_strided_slice %437 {offsets = [0, 24], sizes = [16, 8], strides = [1, 1]} : vector<16x32xf32> to vector<16x8xf32>
    %cst_223 = arith.constant dense<0.000000e+00> : vector<8x16xf32>
    %457 = tpu.matmul %455, %456, %cst_223 {dimension_numbers = #tpu.dot_dimension_numbers<[1], [1], [0], [0], [0, 0, 1, 0], [], []>} : vector<8x8xf32>, vector<16x8xf32>, vector<8x16xf32> -> vector<8x16xf32>
    %458 = tpu.concatenate %448, %451, %454, %457 in 0 : vector<8x16xf32>, vector<8x16xf32>, vector<8x16xf32>, vector<8x16xf32> -> vector<32x16xf32>
    %459 = arith.addf %458, %18 : vector<32x16xf32>
    %cst_224 = arith.constant dense<0xFF800000> : vector<32xf32>
    %460 = vector.multi_reduction <maximumf>, %459, %cst_224 [1] : vector<32x16xf32> to vector<32xf32>
    %461 = vector.shape_cast %460 : vector<32xf32> to vector<32x1xf32>
    %462 = vector.broadcast %461 : vector<32x1xf32> to vector<32x16xf32>
    %463 = arith.subf %459, %462 : vector<32x16xf32>
    %464 = math.exp %463 : vector<32x16xf32>
    %cst_225 = arith.constant dense<0.000000e+00> : vector<32xf32>
    %465 = vector.multi_reduction <add>, %464, %cst_225 [1] : vector<32x16xf32> to vector<32xf32>
    %466 = vector.shape_cast %465 : vector<32xf32> to vector<32x1xf32>
    %467 = tpu.reciprocal %466 {approx = true} : vector<32x1xf32> -> vector<32x1xf32>
    %468 = vector.broadcast %467 : vector<32x1xf32> to vector<32x16xf32>
    %469 = arith.mulf %464, %468 : vector<32x16xf32>
    %470 = vector.extract_strided_slice %469 {offsets = [0, 0], sizes = [8, 16], strides = [1, 1]} : vector<32x16xf32> to vector<8x16xf32>
    %471 = vector.extract_strided_slice %443 {offsets = [0, 0], sizes = [16, 8], strides = [1, 1]} : vector<16x32xf32> to vector<16x8xf32>
    %cst_226 = arith.constant dense<0.000000e+00> : vector<8x8xf32>
    %472 = tpu.matmul %470, %471, %cst_226 {dimension_numbers = #tpu.dot_dimension_numbers<[1], [0], [0], [1], [0, 0, 1, 1], [], []>} : vector<8x16xf32>, vector<16x8xf32>, vector<8x8xf32> -> vector<8x8xf32>
    %473 = vector.extract_strided_slice %469 {offsets = [8, 0], sizes = [8, 16], strides = [1, 1]} : vector<32x16xf32> to vector<8x16xf32>
    %474 = vector.extract_strided_slice %443 {offsets = [0, 8], sizes = [16, 8], strides = [1, 1]} : vector<16x32xf32> to vector<16x8xf32>
    %cst_227 = arith.constant dense<0.000000e+00> : vector<8x8xf32>
    %475 = tpu.matmul %473, %474, %cst_227 {dimension_numbers = #tpu.dot_dimension_numbers<[1], [0], [0], [1], [0, 0, 1, 1], [], []>} : vector<8x16xf32>, vector<16x8xf32>, vector<8x8xf32> -> vector<8x8xf32>
    %476 = vector.extract_strided_slice %469 {offsets = [16, 0], sizes = [8, 16], strides = [1, 1]} : vector<32x16xf32> to vector<8x16xf32>
    %477 = vector.extract_strided_slice %443 {offsets = [0, 16], sizes = [16, 8], strides = [1, 1]} : vector<16x32xf32> to vector<16x8xf32>
    %cst_228 = arith.constant dense<0.000000e+00> : vector<8x8xf32>
    %478 = tpu.matmul %476, %477, %cst_228 {dimension_numbers = #tpu.dot_dimension_numbers<[1], [0], [0], [1], [0, 0, 1, 1], [], []>} : vector<8x16xf32>, vector<16x8xf32>, vector<8x8xf32> -> vector<8x8xf32>
    %479 = vector.extract_strided_slice %469 {offsets = [24, 0], sizes = [8, 16], strides = [1, 1]} : vector<32x16xf32> to vector<8x16xf32>
    %480 = vector.extract_strided_slice %443 {offsets = [0, 24], sizes = [16, 8], strides = [1, 1]} : vector<16x32xf32> to vector<16x8xf32>
    %cst_229 = arith.constant dense<0.000000e+00> : vector<8x8xf32>
    %481 = tpu.matmul %479, %480, %cst_229 {dimension_numbers = #tpu.dot_dimension_numbers<[1], [0], [0], [1], [0, 0, 1, 1], [], []>} : vector<8x16xf32>, vector<16x8xf32>, vector<8x8xf32> -> vector<8x8xf32>
    %482 = tpu.concatenate %472, %475, %478, %481 in 1 : vector<8x8xf32>, vector<8x8xf32>, vector<8x8xf32>, vector<8x8xf32> -> vector<8x32xf32>
    %cst_230 = arith.constant dense<0.000000e+00> : vector<8x32xf32>
    %483 = tpu.matmul %482, %445, %cst_230 {dimension_numbers = #tpu.dot_dimension_numbers<[1], [0], [0], [1], [0, 0, 1, 1], [], []>} : vector<8x32xf32>, vector<32x32xf32>, vector<8x32xf32> -> vector<8x32xf32>
    %484 = arith.addf %425, %483 : vector<8x32xf32>
    %c1_231 = arith.constant 1 : index
    %c384_232 = arith.constant 384 : index
    %485 = vector.load %arg10[%c1_231, %c384_232] : memref<2x640xf32, #tpu.memory_space<vmem>>, vector<1x32xf32>
    %486 = vector.broadcast %485 : vector<1x32xf32> to vector<8x32xf32>
    %487 = arith.addf %484, %486 : vector<8x32xf32>
    %c1_233 = arith.constant 1 : index
    %c416_234 = arith.constant 416 : index
    %488 = vector.load %arg10[%c1_233, %c416_234] : memref<2x640xf32, #tpu.memory_space<vmem>>, vector<1x32xf32>
    %c1_235 = arith.constant 1 : index
    %c448_236 = arith.constant 448 : index
    %489 = vector.load %arg10[%c1_235, %c448_236] : memref<2x640xf32, #tpu.memory_space<vmem>>, vector<1x32xf32>
    %490 = arith.addf %367, %487 : vector<8x32xf32>
    %cst_237 = arith.constant dense<0.000000e+00> : vector<8xf32>
    %491 = vector.multi_reduction <add>, %490, %cst_237 [1] : vector<8x32xf32> to vector<8xf32>
    %492 = vector.shape_cast %491 : vector<8xf32> to vector<8x1xf32>
    %cst_238 = arith.constant 3.200000e+01 : f32
    %493 = vector.broadcast %cst_238 : f32 to vector<8x1xf32>
    %494 = arith.divf %492, %493 : vector<8x1xf32>
    %495 = vector.broadcast %494 : vector<8x1xf32> to vector<8x32xf32>
    %496 = arith.subf %490, %495 : vector<8x32xf32>
    %497 = arith.mulf %496, %496 : vector<8x32xf32>
    %cst_239 = arith.constant dense<0.000000e+00> : vector<8xf32>
    %498 = vector.multi_reduction <add>, %497, %cst_239 [1] : vector<8x32xf32> to vector<8xf32>
    %499 = vector.shape_cast %498 : vector<8xf32> to vector<8x1xf32>
    %cst_240 = arith.constant 3.200000e+01 : f32
    %500 = vector.broadcast %cst_240 : f32 to vector<8x1xf32>
    %501 = arith.divf %499, %500 : vector<8x1xf32>
    %502 = vector.broadcast %494 : vector<8x1xf32> to vector<8x32xf32>
    %503 = arith.subf %490, %502 : vector<8x32xf32>
    %cst_241 = arith.constant 9.99999996E-13 : f32
    %504 = vector.broadcast %cst_241 : f32 to vector<8x1xf32>
    %505 = arith.addf %501, %504 : vector<8x1xf32>
    %506 = math.rsqrt %505 : vector<8x1xf32>
    %507 = vector.broadcast %506 : vector<8x1xf32> to vector<8x32xf32>
    %508 = arith.mulf %503, %507 : vector<8x32xf32>
    %509 = vector.broadcast %488 : vector<1x32xf32> to vector<8x32xf32>
    %510 = arith.mulf %508, %509 : vector<8x32xf32>
    %511 = vector.broadcast %489 : vector<1x32xf32> to vector<8x32xf32>
    %512 = arith.addf %510, %511 : vector<8x32xf32>
    %c1_242 = arith.constant 1 : index
    %c0_243 = arith.constant 0 : index
    %c384_244 = arith.constant 384 : index
    %513 = vector.load %arg9[%c1_242, %c0_243, %c384_244] : memref<2x32x512xf32, #tpu.memory_space<vmem>>, vector<1x32x64xf32>
    %514 = vector.shape_cast %513 : vector<1x32x64xf32> to vector<32x64xf32>
    %c1_245 = arith.constant 1 : index
    %c512_246 = arith.constant 512 : index
    %515 = vector.load %arg10[%c1_245, %c512_246] : memref<2x640xf32, #tpu.memory_space<vmem>>, vector<1x64xf32>
    %cst_247 = arith.constant dense<0.000000e+00> : vector<8x64xf32>
    %516 = tpu.matmul %512, %514, %cst_247 {dimension_numbers = #tpu.dot_dimension_numbers<[1], [0], [0], [1], [0, 0, 1, 1], [], []>} : vector<8x32xf32>, vector<32x64xf32>, vector<8x64xf32> -> vector<8x64xf32>
    %517 = vector.broadcast %515 : vector<1x64xf32> to vector<8x64xf32>
    %518 = arith.addf %516, %517 : vector<8x64xf32>
    %519 = arith.mulf %518, %518 : vector<8x64xf32>
    %520 = arith.mulf %518, %519 : vector<8x64xf32>
    %cst_248 = arith.constant 4.471500e-02 : f32
    %521 = vector.broadcast %cst_248 : f32 to vector<8x64xf32>
    %522 = arith.mulf %521, %520 : vector<8x64xf32>
    %523 = arith.addf %518, %522 : vector<8x64xf32>
    %cst_249 = arith.constant 0.797884583 : f32
    %524 = vector.broadcast %cst_249 : f32 to vector<8x64xf32>
    %525 = arith.mulf %524, %523 : vector<8x64xf32>
    %526 = math.tanh %525 : vector<8x64xf32>
    %cst_250 = arith.constant 1.000000e+00 : f32
    %527 = vector.broadcast %cst_250 : f32 to vector<8x64xf32>
    %528 = arith.addf %527, %526 : vector<8x64xf32>
    %cst_251 = arith.constant 5.000000e-01 : f32
    %529 = vector.broadcast %cst_251 : f32 to vector<8x64xf32>
    %530 = arith.mulf %529, %528 : vector<8x64xf32>
    %531 = arith.mulf %518, %530 : vector<8x64xf32>
    %c1_252 = arith.constant 1 : index
    %c0_253 = arith.constant 0 : index
    %c448_254 = arith.constant 448 : index
    %532 = vector.load %arg9[%c1_252, %c0_253, %c448_254] : memref<2x32x512xf32, #tpu.memory_space<vmem>>, vector<1x32x64xf32>
    %533 = vector.shape_cast %532 : vector<1x32x64xf32> to vector<32x64xf32>
    %cst_255 = arith.constant dense<0.000000e+00> : vector<8x32xf32>
    %534 = tpu.matmul %531, %533, %cst_255 {dimension_numbers = #tpu.dot_dimension_numbers<[1], [1], [0], [0], [0, 0, 1, 0], [], []>} : vector<8x64xf32>, vector<32x64xf32>, vector<8x32xf32> -> vector<8x32xf32>
    %c1_256 = arith.constant 1 : index
    %c480_257 = arith.constant 480 : index
    %535 = vector.load %arg10[%c1_256, %c480_257] : memref<2x640xf32, #tpu.memory_space<vmem>>, vector<1x32xf32>
    %536 = vector.broadcast %535 : vector<1x32xf32> to vector<8x32xf32>
    %537 = arith.addf %534, %536 : vector<8x32xf32>
    %c1_258 = arith.constant 1 : index
    %c576_259 = arith.constant 576 : index
    %538 = vector.load %arg10[%c1_258, %c576_259] : memref<2x640xf32, #tpu.memory_space<vmem>>, vector<1x32xf32>
    %c1_260 = arith.constant 1 : index
    %c608_261 = arith.constant 608 : index
    %539 = vector.load %arg10[%c1_260, %c608_261] : memref<2x640xf32, #tpu.memory_space<vmem>>, vector<1x32xf32>
    %540 = arith.addf %512, %537 : vector<8x32xf32>
    %cst_262 = arith.constant dense<0.000000e+00> : vector<8xf32>
    %541 = vector.multi_reduction <add>, %540, %cst_262 [1] : vector<8x32xf32> to vector<8xf32>
    %542 = vector.shape_cast %541 : vector<8xf32> to vector<8x1xf32>
    %cst_263 = arith.constant 3.200000e+01 : f32
    %543 = vector.broadcast %cst_263 : f32 to vector<8x1xf32>
    %544 = arith.divf %542, %543 : vector<8x1xf32>
    %545 = vector.broadcast %544 : vector<8x1xf32> to vector<8x32xf32>
    %546 = arith.subf %540, %545 : vector<8x32xf32>
    %547 = arith.mulf %546, %546 : vector<8x32xf32>
    %cst_264 = arith.constant dense<0.000000e+00> : vector<8xf32>
    %548 = vector.multi_reduction <add>, %547, %cst_264 [1] : vector<8x32xf32> to vector<8xf32>
    %549 = vector.shape_cast %548 : vector<8xf32> to vector<8x1xf32>
    %cst_265 = arith.constant 3.200000e+01 : f32
    %550 = vector.broadcast %cst_265 : f32 to vector<8x1xf32>
    %551 = arith.divf %549, %550 : vector<8x1xf32>
    %552 = vector.broadcast %544 : vector<8x1xf32> to vector<8x32xf32>
    %553 = arith.subf %540, %552 : vector<8x32xf32>
    %cst_266 = arith.constant 9.99999996E-13 : f32
    %554 = vector.broadcast %cst_266 : f32 to vector<8x1xf32>
    %555 = arith.addf %551, %554 : vector<8x1xf32>
    %556 = math.rsqrt %555 : vector<8x1xf32>
    %557 = vector.broadcast %556 : vector<8x1xf32> to vector<8x32xf32>
    %558 = arith.mulf %553, %557 : vector<8x32xf32>
    %559 = vector.broadcast %538 : vector<1x32xf32> to vector<8x32xf32>
    %560 = arith.mulf %558, %559 : vector<8x32xf32>
    %561 = vector.broadcast %539 : vector<1x32xf32> to vector<8x32xf32>
    %562 = arith.addf %560, %561 : vector<8x32xf32>
    %c0_267 = arith.constant 0 : index
    %c0_268 = arith.constant 0 : index
    %c0_269 = arith.constant 0 : index
    %563 = vector.load %arg11[%c0_267, %c0_268, %c0_269] : memref<1x8x32xf32, #tpu.memory_space<vmem>>, vector<1x8x32xf32>
    %564 = vector.shape_cast %563 : vector<1x8x32xf32> to vector<8x32xf32>
    %565 = vector.shape_cast %562 : vector<8x32xf32> to vector<1x8x32xf32>
    tpu.vector_store %arg11[%c0_267, %c0_268, %c0_269], %565 {strides = array<i32>} : memref<1x8x32xf32, #tpu.memory_space<vmem>>, vector<1x8x32xf32>,
    return
  }
  func.func @transform_0(%arg0: i32) -> (i32, i32, i32) {
    %c0_i32 = arith.constant 0 : i32
    %c0_i32_0 = arith.constant 0 : i32
    %c0_i32_1 = arith.constant 0 : i32
    return %arg0, %c0_i32, %c0_i32_0 : i32, i32, i32
  }
  func.func @transform_1(%arg0: i32) -> (i32, i32, i32) {
    %c0_i32 = arith.constant 0 : i32
    %c0_i32_0 = arith.constant 0 : i32
    %c0_i32_1 = arith.constant 0 : i32
    return %arg0, %c0_i32, %c0_i32_0 : i32, i32, i32
  }
  func.func @transform_2(%arg0: i32) -> (i32, i32, i32) {
    %c0_i32 = arith.constant 0 : i32
    %c0_i32_0 = arith.constant 0 : i32
    %c0_i32_1 = arith.constant 0 : i32
    return %arg0, %c0_i32, %c0_i32_0 : i32, i32, i32
  }
  func.func @transform_3(%arg0: i32) -> (i32, i32, i32) {
    %c0_i32 = arith.constant 0 : i32
    %c0_i32_0 = arith.constant 0 : i32
    %c0_i32_1 = arith.constant 0 : i32
    return %arg0, %c0_i32, %c0_i32_0 : i32, i32, i32
  }
  func.func @transform_4(%arg0: i32) -> (i32, i32, i32) {
    %c0_i32 = arith.constant 0 : i32
    %c0_i32_0 = arith.constant 0 : i32
    %c0_i32_1 = arith.constant 0 : i32
    return %arg0, %c0_i32, %c0_i32_0 : i32, i32, i32
  }
  func.func @transform_5(%arg0: i32) -> (i32, i32, i32) {
    %c0_i32 = arith.constant 0 : i32
    %c0_i32_0 = arith.constant 0 : i32
    %c0_i32_1 = arith.constant 0 : i32
    return %arg0, %c0_i32, %c0_i32_0 : i32, i32, i32
  }
  func.func @transform_6(%arg0: i32) -> (i32, i32, i32) {
    %c0_i32 = arith.constant 0 : i32
    %c0_i32_0 = arith.constant 0 : i32
    %c0_i32_1 = arith.constant 0 : i32
    return %arg0, %c0_i32, %c0_i32_0 : i32, i32, i32
  }
  func.func @transform_7(%arg0: i32) -> (i32, i32, i32) {
    %c0_i32 = arith.constant 0 : i32
    %c0_i32_0 = arith.constant 0 : i32
    %c0_i32_1 = arith.constant 0 : i32
    return %arg0, %c0_i32, %c0_i32_0 : i32, i32, i32
  }
  func.func @transform_8(%arg0: i32) -> (i32, i32, i32) {
    %c0_i32 = arith.constant 0 : i32
    %c0_i32_0 = arith.constant 0 : i32
    %c0_i32_1 = arith.constant 0 : i32
    %c0_i32_2 = arith.constant 0 : i32
    return %c0_i32, %c0_i32_0, %c0_i32_1 : i32, i32, i32
  }
  func.func @transform_9(%arg0: i32) -> (i32, i32) {
    %c0_i32 = arith.constant 0 : i32
    %c0_i32_0 = arith.constant 0 : i32
    %c0_i32_1 = arith.constant 0 : i32
    return %c0_i32, %c0_i32_0 : i32, i32
  }
  func.func @transform_10(%arg0: i32) -> (i32, i32, i32) {
    %c0_i32 = arith.constant 0 : i32
    %c0_i32_0 = arith.constant 0 : i32
    %c0_i32_1 = arith.constant 0 : i32
    return %arg0, %c0_i32, %c0_i32_0 : i32, i32, i32
  }
}

</mosaic_0001>

<llo_original>
// kernel: mul.15
$region0: #{mul.15}
  #allocation0 [shape = 's32[1]{0}', space=sflag, size = 0x4, scoped, tag = 'scoped memory for mul.15']
  %s0 = inlined_call_operand.<no memory space> [shape: f32[], index: 0, kind: input, shape index: {}]
  %s1 = inlined_call_operand.vmem [shape: f32[2,8,16], index: 1, kind: output, shape index: {}]
  %v2 = vstv %s0
  %3 = vst [vmem:[%s1] sm:$0xff] %v2
  %s4 = scalar_lea.vmem %s1, 8
  %5 = vst [vmem:[%s4] sm:$0xff] %v2

// kernel: mul.16
$region0: #{mul.16}
  #allocation0 [shape = 's32[1]{0}', space=sflag, size = 0x4, scoped, tag = 'scoped memory for mul.16']
  %s0 = inlined_call_operand.<no memory space> [shape: f32[], index: 0, kind: input, shape index: {}]
  %s1 = inlined_call_operand.vmem [shape: f32[2,8,8], index: 1, kind: output, shape index: {}]
  %v2 = vstv %s0
  %3 = vst [vmem:[%s1] sm:$0xff] %v2
  %s4 = scalar_lea.vmem %s1, 8
  %5 = vst [vmem:[%s4] sm:$0xff] %v2

// kernel: multimodal_transformer_decoder_forward.1
$region0: #{multimodal_transformer_decoder_forward.1}
  #allocation0 [shape = 'u32[]', space=smem, size = 0x4, offset = 0x4, fixed_abs, tag = 'smem constant byte address 0x4 - core index']
  #allocation1 [shape = 'u32[144,128]{1,0:T(1,128)}', space=vmem, size = 0x12000, scoped, tag = 'internal scratch']
  %s0 = inlined_call_operand.vmem [shape: f32[2,8,32], index: 0, kind: input, shape index: {}]
  %s1 = inlined_call_operand.vmem [shape: f32[2,8,32], index: 1, kind: input, shape index: {}]
  %s2 = inlined_call_operand.vmem [shape: f32[2,8,32], index: 2, kind: input, shape index: {}]
  %s3 = inlined_call_operand.vmem [shape: f32[2,16,32], index: 3, kind: input, shape index: {}]
  %s4 = inlined_call_operand.vmem [shape: f32[2,16,32], index: 4, kind: input, shape index: {}]
  %s5 = inlined_call_operand.vmem [shape: f32[2,8,8], index: 5, kind: input, shape index: {}]
  %s6 = inlined_call_operand.vmem [shape: f32[2,8,8], index: 6, kind: input, shape index: {}]
  %s7 = inlined_call_operand.vmem [shape: f32[2,8,16], index: 7, kind: input, shape index: {}]
  %s8 = inlined_call_operand.vmem [shape: f32[2,32,512], index: 8, kind: input, shape index: {}]
  %s9 = inlined_call_operand.vmem [shape: f32[2,640], index: 9, kind: input, shape index: {}]
  %s10 = inlined_call_operand.hbm [shape: f32[2,8,32], index: 10, kind: output, shape index: {}]
  %s11 = sld [smem:[#allocation0]]
  $region73: #{multimodal_transformer_decoder_forward.1} parent=0
    _
  %s13 = ssub.s32 1, %s11
  %s14 = scalar_select 0, %s13, %s11
  $region1: #{multimodal_transformer_decoder_forward.1} parent=0
    #allocation2 [shape = 'u8[8192]{0}', space=vmem, size = 0x2000, scoped, tag = 'output window, operand 0']
    #allocation3 [shape = 's32[2]{0}', space=sflag, size = 0x8, scoped, tag = 'scoped memory for multimodal_transformer_decoder_forward.1']
    %15 = vsyncpa [#allocation3], 0
    %s16 = scalar_lea.sflag [#allocation3], 1
    %17 = vsyncpa %s16, 0
    loop: start=0, step=1, limit=4
    $region2: #{multimodal_transformer_decoder_forward.1} parent=1 // loop_pre_header
      _
    $region3: #{multimodal_transformer_decoder_forward.1} parent=1 // loop_header
      %s19 = sphi 0, %s23
      %p20 = scmp.ge.s32.totalorder %s19, 4
      %s29 = sphi 0, %s31
      %s32 = sphi 0, %s29
      %s33 = sphi 0, %s32
      %s49 = sphi 0, %s33
      %s55 = sphi 0, %s57
      %s58 = sphi 0, %s55
      %s59 = sphi 0, %s58
      %s75 = sphi 0, %s59
      %s81 = sphi 0, %s83
      %s84 = sphi 0, %s81
      %s85 = sphi 0, %s84
      %s101 = sphi 0, %s85
      %s107 = sphi 0, %s109
      %s110 = sphi 0, %s107
      %s111 = sphi 0, %s110
      %s127 = sphi 0, %s111
      %s133 = sphi 0, %s135
      %s136 = sphi 0, %s133
      %s137 = sphi 0, %s136
      %s153 = sphi 0, %s137
      %s159 = sphi 0, %s161
      %s162 = sphi 0, %s159
      %s163 = sphi 0, %s162
      %s179 = sphi 0, %s163
      %s185 = sphi 0, %s187
      %s188 = sphi 0, %s185
      %s189 = sphi 0, %s188
      %s205 = sphi 0, %s189
      %s211 = sphi 0, %s213
      %s214 = sphi 0, %s211
      %s215 = sphi 0, %s214
      %s231 = sphi 0, %s215
      %s235 = sphi 0, %s235
      %s237 = sphi 0, %s235
      %s238 = sphi 0, %s237
      %s252 = sphi 0, %s238
      %s256 = sphi 0, %s256
      %s258 = sphi 0, %s256
      %s259 = sphi 0, %s258
      %s273 = sphi 0, %s259
      %s279 = sphi 0, %s281
      %s282 = sphi 0, %s279
      %s283 = sphi 0, %s282
      %s299 = sphi 0, %s283
    $region4: #{multimodal_transformer_decoder_forward.1} parent=1 // loop_header_branch
      %22 = sbr.rel (%p20) target = $region8
    $region5: #{multimodal_transformer_decoder_forward.1} parent=1 // loop_body
      %s24 = ssub.s32 %s19, 1
      %s25 = ssub.s32 %s19, 2
      %s26 = sadd.s32 %s19, 1
      %s27 = ssub.s32 %s19, %s26
      %p28 = scmp.eq.s32.totalorder %s27, 0
      %s30 = sadd.s32 %s29, 1
      %s31 = scalar_select %p28, %s29, %s30
      %p34 = pneg %p28
      %p35 = scmp.eq.s32.totalorder %s19, 1
      %p36 = por %p34, %p35
      %p37 = scmp.ne.s32.totalorder %s29, %s32
      %p38 = scmp.eq.s32.totalorder %s19, 0
      %p39 = por %p37, %p38
      %p40 = scmp.ne.s32.totalorder %s29, %s32
      %p41 = scmp.eq.s32.totalorder %s24, 1
      %p42 = por %p40, %p41
      %p43 = scmp.ne.s32.totalorder %s32, %s33
      %p44 = scmp.eq.s32.totalorder %s24, 0
      %p45 = por %p43, %p44
      %p46 = scmp.ne.s32.totalorder %s32, %s33
      %p47 = scmp.eq.s32.totalorder %s25, 1
      %p48 = por %p46, %p47
      %p50 = scmp.ne.s32.totalorder %s33, %s49
      %p51 = scmp.eq.s32.totalorder %s25, 0
      %p52 = por %p50, %p51
      %s53 = ssub.s32 %s19, %s26
      %p54 = scmp.eq.s32.totalorder %s53, 0
      %s56 = sadd.s32 %s55, 1
      %s57 = scalar_select %p54, %s55, %s56
      %p60 = pneg %p54
      %p61 = scmp.eq.s32.totalorder %s19, 1
      %p62 = por %p60, %p61
      %p63 = scmp.ne.s32.totalorder %s55, %s58
      %p64 = scmp.eq.s32.totalorder %s19, 0
      %p65 = por %p63, %p64
      %p66 = scmp.ne.s32.totalorder %s55, %s58
      %p67 = scmp.eq.s32.totalorder %s24, 1
      %p68 = por %p66, %p67
      %p69 = scmp.ne.s32.totalorder %s58, %s59
      %p70 = scmp.eq.s32.totalorder %s24, 0
      %p71 = por %p69, %p70
      %p72 = scmp.ne.s32.totalorder %s58, %s59
      %p73 = scmp.eq.s32.totalorder %s25, 1
      %p74 = por %p72, %p73
      %p76 = scmp.ne.s32.totalorder %s59, %s75
      %p77 = scmp.eq.s32.totalorder %s25, 0
      %p78 = por %p76, %p77
      %s79 = ssub.s32 %s19, %s26
      %p80 = scmp.eq.s32.totalorder %s79, 0
      %s82 = sadd.s32 %s81, 1
      %s83 = scalar_select %p80, %s81, %s82
      %p86 = pneg %p80
      %p87 = scmp.eq.s32.totalorder %s19, 1
      %p88 = por %p86, %p87
      %p89 = scmp.ne.s32.totalorder %s81, %s84
      %p90 = scmp.eq.s32.totalorder %s19, 0
      %p91 = por %p89, %p90
      %p92 = scmp.ne.s32.totalorder %s81, %s84
      %p93 = scmp.eq.s32.totalorder %s24, 1
      %p94 = por %p92, %p93
      %p95 = scmp.ne.s32.totalorder %s84, %s85
      %p96 = scmp.eq.s32.totalorder %s24, 0
      %p97 = por %p95, %p96
      %p98 = scmp.ne.s32.totalorder %s84, %s85
      %p99 = scmp.eq.s32.totalorder %s25, 1
      %p100 = por %p98, %p99
      %p102 = scmp.ne.s32.totalorder %s85, %s101
      %p103 = scmp.eq.s32.totalorder %s25, 0
      %p104 = por %p102, %p103
      %s105 = ssub.s32 %s19, %s26
      %p106 = scmp.eq.s32.totalorder %s105, 0
      %s108 = sadd.s32 %s107, 1
      %s109 = scalar_select %p106, %s107, %s108
      %p112 = pneg %p106
      %p113 = scmp.eq.s32.totalorder %s19, 1
      %p114 = por %p112, %p113
      %p115 = scmp.ne.s32.totalorder %s107, %s110
      %p116 = scmp.eq.s32.totalorder %s19, 0
      %p117 = por %p115, %p116
      %p118 = scmp.ne.s32.totalorder %s107, %s110
      %p119 = scmp.eq.s32.totalorder %s24, 1
      %p120 = por %p118, %p119
      %p121 = scmp.ne.s32.totalorder %s110, %s111
      %p122 = scmp.eq.s32.totalorder %s24, 0
      %p123 = por %p121, %p122
      %p124 = scmp.ne.s32.totalorder %s110, %s111
      %p125 = scmp.eq.s32.totalorder %s25, 1
      %p126 = por %p124, %p125
      %p128 = scmp.ne.s32.totalorder %s111, %s127
      %p129 = scmp.eq.s32.totalorder %s25, 0
      %p130 = por %p128, %p129
      %s131 = ssub.s32 %s19, %s26
      %p132 = scmp.eq.s32.totalorder %s131, 0
      %s134 = sadd.s32 %s133, 1
      %s135 = scalar_select %p132, %s133, %s134
      %p138 = pneg %p132
      %p139 = scmp.eq.s32.totalorder %s19, 1
      %p140 = por %p138, %p139
      %p141 = scmp.ne.s32.totalorder %s133, %s136
      %p142 = scmp.eq.s32.totalorder %s19, 0
      %p143 = por %p141, %p142
      %p144 = scmp.ne.s32.totalorder %s133, %s136
      %p145 = scmp.eq.s32.totalorder %s24, 1
      %p146 = por %p144, %p145
      %p147 = scmp.ne.s32.totalorder %s136, %s137
      %p148 = scmp.eq.s32.totalorder %s24, 0
      %p149 = por %p147, %p148
      %p150 = scmp.ne.s32.totalorder %s136, %s137
      %p151 = scmp.eq.s32.totalorder %s25, 1
      %p152 = por %p150, %p151
      %p154 = scmp.ne.s32.totalorder %s137, %s153
      %p155 = scmp.eq.s32.totalorder %s25, 0
      %p156 = por %p154, %p155
      %s157 = ssub.s32 %s19, %s26
      %p158 = scmp.eq.s32.totalorder %s157, 0
      %s160 = sadd.s32 %s159, 1
      %s161 = scalar_select %p158, %s159, %s160
      %p164 = pneg %p158
      %p165 = scmp.eq.s32.totalorder %s19, 1
      %p166 = por %p164, %p165
      %p167 = scmp.ne.s32.totalorder %s159, %s162
      %p168 = scmp.eq.s32.totalorder %s19, 0
      %p169 = por %p167, %p168
      %p170 = scmp.ne.s32.totalorder %s159, %s162
      %p171 = scmp.eq.s32.totalorder %s24, 1
      %p172 = por %p170, %p171
      %p173 = scmp.ne.s32.totalorder %s162, %s163
      %p174 = scmp.eq.s32.totalorder %s24, 0
      %p175 = por %p173, %p174
      %p176 = scmp.ne.s32.totalorder %s162, %s163
      %p177 = scmp.eq.s32.totalorder %s25, 1
      %p178 = por %p176, %p177
      %p180 = scmp.ne.s32.totalorder %s163, %s179
      %p181 = scmp.eq.s32.totalorder %s25, 0
      %p182 = por %p180, %p181
      %s183 = ssub.s32 %s19, %s26
      %p184 = scmp.eq.s32.totalorder %s183, 0
      %s186 = sadd.s32 %s185, 1
      %s187 = scalar_select %p184, %s185, %s186
      %p190 = pneg %p184
      %p191 = scmp.eq.s32.totalorder %s19, 1
      %p192 = por %p190, %p191
      %p193 = scmp.ne.s32.totalorder %s185, %s188
      %p194 = scmp.eq.s32.totalorder %s19, 0
      %p195 = por %p193, %p194
      %p196 = scmp.ne.s32.totalorder %s185, %s188
      %p197 = scmp.eq.s32.totalorder %s24, 1
      %p198 = por %p196, %p197
      %p199 = scmp.ne.s32.totalorder %s188, %s189
      %p200 = scmp.eq.s32.totalorder %s24, 0
      %p201 = por %p199, %p200
      %p202 = scmp.ne.s32.totalorder %s188, %s189
      %p203 = scmp.eq.s32.totalorder %s25, 1
      %p204 = por %p202, %p203
      %p206 = scmp.ne.s32.totalorder %s189, %s205
      %p207 = scmp.eq.s32.totalorder %s25, 0
      %p208 = por %p206, %p207
      %s209 = ssub.s32 %s19, %s26
      %p210 = scmp.eq.s32.totalorder %s209, 0
      %s212 = sadd.s32 %s211, 1
      %s213 = scalar_select %p210, %s211, %s212
      %p216 = pneg %p210
      %p217 = scmp.eq.s32.totalorder %s19, 1
      %p218 = por %p216, %p217
      %p219 = scmp.ne.s32.totalorder %s211, %s214
      %p220 = scmp.eq.s32.totalorder %s19, 0
      %p221 = por %p219, %p220
      %p222 = scmp.ne.s32.totalorder %s211, %s214
      %p223 = scmp.eq.s32.totalorder %s24, 1
      %p224 = por %p222, %p223
      %p225 = scmp.ne.s32.totalorder %s214, %s215
      %p226 = scmp.eq.s32.totalorder %s24, 0
      %p227 = por %p225, %p226
      %p228 = scmp.ne.s32.totalorder %s214, %s215
      %p229 = scmp.eq.s32.totalorder %s25, 1
      %p230 = por %p228, %p229
      %p232 = scmp.ne.s32.totalorder %s215, %s231
      %p233 = scmp.eq.s32.totalorder %s25, 0
      %p234 = por %p232, %p233
      %s236 = sadd.s32 %s235, 1
      %p239 = scmp.eq.s32.totalorder %s19, 1
      %p240 = scmp.ne.s32.totalorder %s235, %s237
      %p241 = scmp.eq.s32.totalorder %s19, 0
      %p242 = por %p240, %p241
      %p243 = scmp.ne.s32.totalorder %s235, %s237
      %p244 = scmp.eq.s32.totalorder %s24, 1
      %p245 = por %p243, %p244
      %p246 = scmp.ne.s32.totalorder %s237, %s238
      %p247 = scmp.eq.s32.totalorder %s24, 0
      %p248 = por %p246, %p247
      %p249 = scmp.ne.s32.totalorder %s237, %s238
      %p250 = scmp.eq.s32.totalorder %s25, 1
      %p251 = por %p249, %p250
      %p253 = scmp.ne.s32.totalorder %s238, %s252
      %p254 = scmp.eq.s32.totalorder %s25, 0
      %p255 = por %p253, %p254
      %s257 = sadd.s32 %s256, 1
      %p260 = scmp.eq.s32.totalorder %s19, 1
      %p261 = scmp.ne.s32.totalorder %s256, %s258
      %p262 = scmp.eq.s32.totalorder %s19, 0
      %p263 = por %p261, %p262
      %p264 = scmp.ne.s32.totalorder %s256, %s258
      %p265 = scmp.eq.s32.totalorder %s24, 1
      %p266 = por %p264, %p265
      %p267 = scmp.ne.s32.totalorder %s258, %s259
      %p268 = scmp.eq.s32.totalorder %s24, 0
      %p269 = por %p267, %p268
      %p270 = scmp.ne.s32.totalorder %s258, %s259
      %p271 = scmp.eq.s32.totalorder %s25, 1
      %p272 = por %p270, %p271
      %p274 = scmp.ne.s32.totalorder %s259, %s273
      %p275 = scmp.eq.s32.totalorder %s25, 0
      %p276 = por %p274, %p275
      %s277 = ssub.s32 %s19, %s26
      %p278 = scmp.eq.s32.totalorder %s277, 0
      %s280 = sadd.s32 %s279, 1
      %s281 = scalar_select %p278, %s279, %s280
      %p284 = pneg %p278
      %p285 = scmp.eq.s32.totalorder %s19, 1
      %p286 = por %p284, %p285
      %p287 = scmp.ne.s32.totalorder %s279, %s282
      %p288 = scmp.eq.s32.totalorder %s19, 0
      %p289 = por %p287, %p288
      %p290 = scmp.ne.s32.totalorder %s279, %s282
      %p291 = scmp.eq.s32.totalorder %s24, 1
      %p292 = por %p290, %p291
      %p293 = scmp.ne.s32.totalorder %s282, %s283
      %p294 = scmp.eq.s32.totalorder %s24, 0
      %p295 = por %p293, %p294
      %p296 = scmp.ne.s32.totalorder %s282, %s283
      %p297 = scmp.eq.s32.totalorder %s25, 1
      %p298 = por %p296, %p297
      %p300 = scmp.ne.s32.totalorder %s283, %s299
      %p301 = scmp.eq.s32.totalorder %s25, 0
      %p302 = por %p300, %p301
      %p303 = scmp.le.s32.totalorder 1, %s19
      %p304 = scmp.lt.s32.totalorder %s19, 3
      %p305 = pnand %p303, %p304
      %p306 = pneg %p305
      // Predicated region
      $region9: #{multimodal_transformer_decoder_forward.1} parent=5 // pred_check
        _
      $region10: #{multimodal_transformer_decoder_forward.1} parent=5 // pred_check_branch
        %308 = sbr.rel (%p305) target = $region12
      $region11: #{multimodal_transformer_decoder_forward.1} parent=5 // pred_region
        %s309 = ssub.s32 %s19, 1
        // Predicated region
        $region13: #{multimodal_transformer_decoder_forward.1} parent=11 // pred_check
          %p310 = pneg %p248
        $region14: #{multimodal_transformer_decoder_forward.1} parent=11 // pred_check_branch
          %312 = sbr.rel (%p310) target = $region16
        $region15: #{multimodal_transformer_decoder_forward.1} parent=11 // pred_region
          _
        $region16: #{multimodal_transformer_decoder_forward.1} parent=11 // pred_fallthru
          _
        // Predicated region
        $region17: #{multimodal_transformer_decoder_forward.1} parent=11 // pred_check
          %p313 = pneg %p269
        $region18: #{multimodal_transformer_decoder_forward.1} parent=11 // pred_check_branch
          %315 = sbr.rel (%p313) target = $region20
        $region19: #{multimodal_transformer_decoder_forward.1} parent=11 // pred_region
          _
        $region20: #{multimodal_transformer_decoder_forward.1} parent=11 // pred_fallthru
          _
      $region12: #{multimodal_transformer_decoder_forward.1} parent=5 // pred_fallthru
        _
      %p316 = scmp.lt.s32.totalorder %s19, 2
      // Predicated region
      $region21: #{multimodal_transformer_decoder_forward.1} parent=5 // pred_check
        %p317 = pneg %p316
      $region22: #{multimodal_transformer_decoder_forward.1} parent=5 // pred_check_branch
        %319 = sbr.rel (%p317) target = $region24
      $region23: #{multimodal_transformer_decoder_forward.1} parent=5 // pred_region
        // Predicated region
        $region25: #{multimodal_transformer_decoder_forward.1} parent=23 // pred_check
          %p320 = pneg %p39
        $region26: #{multimodal_transformer_decoder_forward.1} parent=23 // pred_check_branch
          %322 = sbr.rel (%p320) target = $region28
        $region27: #{multimodal_transformer_decoder_forward.1} parent=23 // pred_region
          %p323 = scmp.lt.s32.totalorder %s19, 1
          %s324 = scalar_select %p323, %s19, 1
          %s325 = smul.addr %s324, 8
          %s326 = scalar_lea.vmem %s0, %s325
        $region28: #{multimodal_transformer_decoder_forward.1} parent=23 // pred_fallthru
          _
        // Predicated region
        $region29: #{multimodal_transformer_decoder_forward.1} parent=23 // pred_check
          %p327 = pneg %p65
        $region30: #{multimodal_transformer_decoder_forward.1} parent=23 // pred_check_branch
          %329 = sbr.rel (%p327) target = $region32
        $region31: #{multimodal_transformer_decoder_forward.1} parent=23 // pred_region
          %p330 = scmp.lt.s32.totalorder %s19, 1
          %s331 = scalar_select %p330, %s19, 1
          %s332 = smul.addr %s331, 8
          %s333 = scalar_lea.vmem %s1, %s332
        $region32: #{multimodal_transformer_decoder_forward.1} parent=23 // pred_fallthru
          _
        // Predicated region
        $region33: #{multimodal_transformer_decoder_forward.1} parent=23 // pred_check
          %p334 = pneg %p91
        $region34: #{multimodal_transformer_decoder_forward.1} parent=23 // pred_check_branch
          %336 = sbr.rel (%p334) target = $region36
        $region35: #{multimodal_transformer_decoder_forward.1} parent=23 // pred_region
          %p337 = scmp.lt.s32.totalorder %s19, 1
          %s338 = scalar_select %p337, %s19, 1
          %s339 = smul.addr %s338, 8
          %s340 = scalar_lea.vmem %s2, %s339
        $region36: #{multimodal_transformer_decoder_forward.1} parent=23 // pred_fallthru
          _
        // Predicated region
        $region37: #{multimodal_transformer_decoder_forward.1} parent=23 // pred_check
          %p341 = pneg %p117
        $region38: #{multimodal_transformer_decoder_forward.1} parent=23 // pred_check_branch
          %343 = sbr.rel (%p341) target = $region40
        $region39: #{multimodal_transformer_decoder_forward.1} parent=23 // pred_region
          %p344 = scmp.lt.s32.totalorder %s19, 1
          %s345 = scalar_select %p344, %s19, 1
          %s346 = smul.addr %s345, 2
          %s347 = smul.addr %s346, 8
          %s348 = scalar_lea.vmem %s3, %s347
        $region40: #{multimodal_transformer_decoder_forward.1} parent=23 // pred_fallthru
          _
        // Predicated region
        $region41: #{multimodal_transformer_decoder_forward.1} parent=23 // pred_check
          %p349 = pneg %p143
        $region42: #{multimodal_transformer_decoder_forward.1} parent=23 // pred_check_branch
          %351 = sbr.rel (%p349) target = $region44
        $region43: #{multimodal_transformer_decoder_forward.1} parent=23 // pred_region
          %p352 = scmp.lt.s32.totalorder %s19, 1
          %s353 = scalar_select %p352, %s19, 1
          %s354 = smul.addr %s353, 2
          %s355 = smul.addr %s354, 8
          %s356 = scalar_lea.vmem %s4, %s355
        $region44: #{multimodal_transformer_decoder_forward.1} parent=23 // pred_fallthru
          _
        // Predicated region
        $region45: #{multimodal_transformer_decoder_forward.1} parent=23 // pred_check
          %p357 = pneg %p169
        $region46: #{multimodal_transformer_decoder_forward.1} parent=23 // pred_check_branch
          %359 = sbr.rel (%p357) target = $region48
        $region47: #{multimodal_transformer_decoder_forward.1} parent=23 // pred_region
          %p360 = scmp.lt.s32.totalorder %s19, 1
          %s361 = scalar_select %p360, %s19, 1
          %s362 = smul.addr %s361, 8
          %s363 = scalar_lea.vmem %s5, %s362
        $region48: #{multimodal_transformer_decoder_forward.1} parent=23 // pred_fallthru
          _
        // Predicated region
        $region49: #{multimodal_transformer_decoder_forward.1} parent=23 // pred_check
          %p364 = pneg %p195
        $region50: #{multimodal_transformer_decoder_forward.1} parent=23 // pred_check_branch
          %366 = sbr.rel (%p364) target = $region52
        $region51: #{multimodal_transformer_decoder_forward.1} parent=23 // pred_region
          %p367 = scmp.lt.s32.totalorder %s19, 1
          %s368 = scalar_select %p367, %s19, 1
          %s369 = smul.addr %s368, 8
          %s370 = scalar_lea.vmem %s6, %s369
        $region52: #{multimodal_transformer_decoder_forward.1} parent=23 // pred_fallthru
          _
        // Predicated region
        $region53: #{multimodal_transformer_decoder_forward.1} parent=23 // pred_check
          %p371 = pneg %p221
        $region54: #{multimodal_transformer_decoder_forward.1} parent=23 // pred_check_branch
          %373 = sbr.rel (%p371) target = $region56
        $region55: #{multimodal_transformer_decoder_forward.1} parent=23 // pred_region
          %p374 = scmp.lt.s32.totalorder %s19, 1
          %s375 = scalar_select %p374, %s19, 1
          %s376 = smul.addr %s375, 8
          %s377 = scalar_lea.vmem %s7, %s376
        $region56: #{multimodal_transformer_decoder_forward.1} parent=23 // pred_fallthru
          _
      $region24: #{multimodal_transformer_decoder_forward.1} parent=5 // pred_fallthru
        _
      %p378 = scmp.le.s32.totalorder 1, %s19
      %p379 = scmp.lt.s32.totalorder %s19, 3
      %p380 = pnand %p378, %p379
      %p381 = pneg %p380
      // Predicated region
      $region57: #{multimodal_transformer_decoder_forward.1} parent=5 // pred_check
        _
      $region58: #{multimodal_transformer_decoder_forward.1} parent=5 // pred_check_branch
        %383 = sbr.rel (%p380) target = $region60
      $region59: #{multimodal_transformer_decoder_forward.1} parent=5 // pred_region
        %s384 = ssub.s32 %s19, 1
        %p385 = scmp.lt.s32.totalorder %s24, 1
        %s386 = scalar_select %p385, %s24, 1
        %s387 = smul.addr %s386, 8
        %s388 = scalar_lea.vmem %s0, %s387
        %p389 = pneg %p45
        %p390 = pneg %p42
        %p391 = scmp.lt.s32.totalorder %s24, 1
        %s392 = scalar_select %p391, %s24, 1
        %s393 = smul.addr %s392, 8
        %s394 = scalar_lea.vmem %s1, %s393
        %p395 = pneg %p71
        %p396 = pneg %p68
        %p397 = scmp.lt.s32.totalorder %s24, 1
        %s398 = scalar_select %p397, %s24, 1
        %s399 = smul.addr %s398, 8
        %s400 = scalar_lea.vmem %s2, %s399
        %p401 = pneg %p97
        %p402 = pneg %p94
        %p403 = scmp.lt.s32.totalorder %s24, 1
        %s404 = scalar_select %p403, %s24, 1
        %s405 = smul.addr %s404, 2
        %s406 = smul.addr %s405, 8
        %s407 = scalar_lea.vmem %s3, %s406
        %p408 = pneg %p123
        %p409 = pneg %p120
        %p410 = scmp.lt.s32.totalorder %s24, 1
        %s411 = scalar_select %p410, %s24, 1
        %s412 = smul.addr %s411, 2
        %s413 = smul.addr %s412, 8
        %s414 = scalar_lea.vmem %s4, %s413
        %p415 = pneg %p149
        %p416 = pneg %p146
        %p417 = scmp.lt.s32.totalorder %s24, 1
        %s418 = scalar_select %p417, %s24, 1
        %s419 = smul.addr %s418, 8
        %s420 = scalar_lea.vmem %s5, %s419
        %p421 = pneg %p175
        %p422 = pneg %p172
        %p423 = scmp.lt.s32.totalorder %s24, 1
        %s424 = scalar_select %p423, %s24, 1
        %s425 = smul.addr %s424, 8
        %s426 = scalar_lea.vmem %s6, %s425
        %p427 = pneg %p201
        %p428 = pneg %p198
        %p429 = scmp.lt.s32.totalorder %s24, 1
        %s430 = scalar_select %p429, %s24, 1
        %s431 = smul.addr %s430, 8
        %s432 = scalar_lea.vmem %s7, %s431
        %p433 = pneg %p227
        %p434 = pneg %p224
        %p435 = pneg %p248
        %p436 = pneg %p245
        %p437 = pneg %p269
        %p438 = pneg %p266
        %p439 = pneg %p295
        %p440 = pneg %p292
        %s441 = sand.u32 %s282, 1
        %s442 = scalar_lea.sflag [#allocation3], %s441
        %s443 = sand.u32 %s282, 1
        %s444 = smul.addr %s443, 8
        %s445 = scalar_lea.vmem [#allocation2], %s444
        %p446 = scmp.lt.s32.totalorder %s24, 1
        %s447 = scalar_select %p446, %s24, 1
        %s448 = smul.addr %s447, 8
        %s449 = scalar_lea.vmem %s0, %s448
        %p450 = scmp.lt.s32.totalorder %s24, 1
        %s451 = scalar_select %p450, %s24, 1
        %s452 = smul.addr %s451, 8
        %s453 = scalar_lea.vmem %s1, %s452
        %p454 = scmp.lt.s32.totalorder %s24, 1
        %s455 = scalar_select %p454, %s24, 1
        %s456 = smul.addr %s455, 8
        %s457 = scalar_lea.vmem %s2, %s456
        %p458 = scmp.lt.s32.totalorder %s24, 1
        %s459 = scalar_select %p458, %s24, 1
        %s460 = smul.addr %s459, 2
        %s461 = smul.addr %s460, 8
        %s462 = scalar_lea.vmem %s3, %s461
        %p463 = scmp.lt.s32.totalorder %s24, 1
        %s464 = scalar_select %p463, %s24, 1
        %s465 = smul.addr %s464, 2
        %s466 = smul.addr %s465, 8
        %s467 = scalar_lea.vmem %s4, %s466
        %p468 = scmp.lt.s32.totalorder %s24, 1
        %s469 = scalar_select %p468, %s24, 1
        %s470 = smul.addr %s469, 8
        %s471 = scalar_lea.vmem %s5, %s470
        %p472 = scmp.lt.s32.totalorder %s24, 1
        %s473 = scalar_select %p472, %s24, 1
        %s474 = smul.addr %s473, 8
        %s475 = scalar_lea.vmem %s6, %s474
        %p476 = scmp.lt.s32.totalorder %s24, 1
        %s477 = scalar_select %p476, %s24, 1
        %s478 = smul.addr %s477, 8
        %s479 = scalar_lea.vmem %s7, %s478
        %v480 = vld [vmem:[%s449] sm:$0xff]
        %v481 = vld [vmem:[%s453] sm:$0xff]
        %v482 = vld [vmem:[%s457] sm:$0xff]
        %v483 = vld [vmem:[%s462] sm:$0xff]
        %v484 = vld [vmem:[%s462 + $0x8] sm:$0xff]
        %v485 = vld [vmem:[%s467] sm:$0xff]
        %v486 = vld [vmem:[%s467 + $0x8] sm:$0xff]
        %v487 = vld [vmem:[%s471] sm:$0xff]
        %v488 = vld [vmem:[%s475] sm:$0xff]
        %v489 = vld [vmem:[%s479] sm:$0xff]
        %v490 = vld [vmem:[%s8] sm:$0xff]
        %v491 = vld [vmem:[%s8 + $0x20] sm:$0xff]
        %v492 = vld [vmem:[%s8 + $0x40] sm:$0xff]
        %v493 = vld [vmem:[%s8 + $0x60] sm:$0xff]
        %v494 = vld [vmem:[%s9] sm:$0x1]
        %v495 = vlaneseq
        %v496 = vshrl.u32 %v495, 7
        %v497 = vsub.s32 0, %v496
        %v498 = vrot.slane %v494, %v497
        %vm499 = vcmask 261120
        %v501 = vsel %vm499, %v480, 0
        %503 = vmatprep.subr.mxu0 0.0
        %504 = vmatpush1.msra.mxu0 %v490
        %505 = vmatprep.subr.mxu0 0.0
        %506 = vmatpush1.msra.mxu0 %v491
        %507 = vmatprep.subr.mxu0 0.0
        %508 = vmatpush1.msra.mxu0 %v492
        %509 = vmatprep.subr.mxu0 0.0
        %510 = vmatpush1.msra.mxu0 %v493
        %511 = vmatprep.subr.mxu0 0.0
        %512 = vmatpush1.msra.mxu0 0.0
        %513 = vmatprep.subr.mxu0 0.0
        %514 = vmatpush1.msra.mxu0 0.0
        %515 = vmatprep.subr.mxu0 0.0
        %516 = vmatpush1.msra.mxu0 0.0
        %517 = vmatprep.subr.mxu0 0.0
        %518 = vmatpush1.msra.mxu0 0.0
        %519 = vmatprep.subr.mxu0 0.0
        %520 = vmatpush1.msra.mxu0 0.0
        %521 = vmatprep.subr.mxu0 0.0
        %522 = vmatpush1.msra.mxu0 0.0
        %523 = vmatprep.subr.mxu0 0.0
        %524 = vmatpush1.msra.mxu0 0.0
        %525 = vmatprep.subr.mxu0 0.0
        %526 = vmatpush1.msra.mxu0 0.0
        %527 = vmatprep.subr.mxu0 0.0
        %528 = vmatpush1.msra.mxu0 0.0
        %529 = vmatprep.subr.mxu0 0.0
        %530 = vmatpush1.msra.mxu0 0.0
        %531 = vmatprep.subr.mxu0 0.0
        %532 = vmatpush1.msra.mxu0 0.0
        %533 = vmatprep.subr.mxu0 0.0
        %534 = vmatpush1.msra.mxu0 0.0
        %535 = vmatprep.subr.mxu0 0.0
        %536 = vmatpush1.msra.mxu0 0.0
        %537 = vmatprep.subr.mxu0 0.0
        %538 = vmatpush1.msra.mxu0 0.0
        %539 = vmatprep.subr.mxu0 0.0
        %540 = vmatpush1.msra.mxu0 0.0
        %541 = vmatprep.subr.mxu0 0.0
        %542 = vmatpush1.msra.mxu0 0.0
        %543 = vmatprep.subr.mxu0 0.0
        %544 = vmatpush1.msra.mxu0 0.0
        %545 = vmatprep.subr.mxu0 0.0
        %546 = vmatpush1.msra.mxu0 0.0
        %547 = vmatprep.subr.mxu0 0.0
        %548 = vmatpush1.msra.mxu0 0.0
        %549 = vmatprep.subr.mxu0 0.0
        %550 = vmatpush1.msra.mxu0 0.0
        %551 = vmatprep.subr.mxu0 0.0
        %552 = vmatpush1.msra.mxu0 0.0
        %553 = vmatprep.subr.mxu0 0.0
        %554 = vmatpush1.msra.mxu0 0.0
        %555 = vmatprep.subr.mxu0 0.0
        %556 = vmatpush1.msra.mxu0 0.0
        %557 = vmatprep.subr.mxu0 0.0
        %558 = vmatpush1.msra.mxu0 0.0
        %559 = vmatprep.subr.mxu0 0.0
        %560 = vmatpush1.msra.mxu0 0.0
        %561 = vmatprep.subr.mxu0 0.0
        %562 = vmatpush1.msra.mxu0 0.0
        %563 = vmatprep.subr.mxu0 0.0
        %564 = vmatpush1.msra.mxu0 0.0
        %565 = vmatprep.subr.mxu0 0.0
        %566 = vmatpush1.msra.mxu0 0.0
        %567 = vmatprep.mubr.f32.mxu0 0.0
        %568 = vmatmul.mubr.f32.gmra.mrb[0].mxu0 %v501
        %v569 = vpop.f32.mrb[0].mxu0
        %v570 = vadd.f32 %v498, %v569
        %v571 = vpop.f32.mrb[0].mxu0
        %572 = vdwg.mxu0
        %574 = vrot.lane.b32.xlu0 %v570, 96
        %v575 = vpop.permute.xlu0 %574
        %vm576 = vcmask 64512
        %v577 = vsel %vm576, %v570, 0
        %v579 = vsel %vm576, %v575, 0
        %581 = vmatprep.subr.mxu0 0.0
        %582 = vmatpush1.xpose.msra.mxu0 %v579
        %583 = vmatprep.subr.mxu0 0.0
        %584 = vmatpush1.xpose.msra.mxu0 0.0
        %585 = vmatprep.subr.mxu0 0.0
        %586 = vmatpush1.xpose.msra.mxu0 0.0
        %587 = vmatprep.subr.mxu0 0.0
        %588 = vmatpush1.xpose.msra.mxu0 0.0
        %589 = vmatprep.subr.mxu0 0.0
        %590 = vmatpush1.xpose.msra.mxu0 0.0
        %591 = vmatprep.subr.mxu0 0.0
        %592 = vmatpush1.xpose.msra.mxu0 0.0
        %593 = vmatprep.subr.mxu0 0.0
        %594 = vmatpush1.xpose.msra.mxu0 0.0
        %595 = vmatprep.subr.mxu0 0.0
        %596 = vmatpush1.xpose.msra.mxu0 0.0
        %597 = vmatprep.subr.mxu0 0.0
        %598 = vmatpush1.xpose.msra.mxu0 0.0
        %599 = vmatprep.subr.mxu0 0.0
        %600 = vmatpush1.xpose.msra.mxu0 0.0
        %601 = vmatprep.subr.mxu0 0.0
        %602 = vmatpush1.xpose.msra.mxu0 0.0
        %603 = vmatprep.subr.mxu0 0.0
        %604 = vmatpush1.xpose.msra.mxu0 0.0
        %605 = vmatprep.subr.mxu0 0.0
        %606 = vmatpush1.xpose.msra.mxu0 0.0
        %607 = vmatprep.subr.mxu0 0.0
        %608 = vmatpush1.xpose.msra.mxu0 0.0
        %609 = vmatprep.subr.mxu0 0.0
        %610 = vmatpush1.xpose.msra.mxu0 0.0
        %611 = vmatprep.subr.mxu0 0.0
        %612 = vmatpush1.xpose.msra.mxu0 0.0
        %613 = vmatprep.subr.mxu0 0.0
        %614 = vmatpush1.xpose.msra.mxu0 0.0
        %615 = vmatprep.subr.mxu0 0.0
        %616 = vmatpush1.xpose.msra.mxu0 0.0
        %617 = vmatprep.subr.mxu0 0.0
        %618 = vmatpush1.xpose.msra.mxu0 0.0
        %619 = vmatprep.subr.mxu0 0.0
        %620 = vmatpush1.xpose.msra.mxu0 0.0
        %621 = vmatprep.subr.mxu0 0.0
        %622 = vmatpush1.xpose.msra.mxu0 0.0
        %623 = vmatprep.subr.mxu0 0.0
        %624 = vmatpush1.xpose.msra.mxu0 0.0
        %625 = vmatprep.subr.mxu0 0.0
        %626 = vmatpush1.xpose.msra.mxu0 0.0
        %627 = vmatprep.subr.mxu0 0.0
        %628 = vmatpush1.xpose.msra.mxu0 0.0
        %629 = vmatprep.subr.mxu0 0.0
        %630 = vmatpush1.xpose.msra.mxu0 0.0
        %631 = vmatprep.subr.mxu0 0.0
        %632 = vmatpush1.xpose.msra.mxu0 0.0
        %633 = vmatprep.subr.mxu0 0.0
        %634 = vmatpush1.xpose.msra.mxu0 0.0
        %635 = vmatprep.subr.mxu0 0.0
        %636 = vmatpush1.xpose.msra.mxu0 0.0
        %637 = vmatprep.subr.mxu0 0.0
        %638 = vmatpush1.xpose.msra.mxu0 0.0
        %639 = vmatprep.subr.mxu0 0.0
        %640 = vmatpush1.xpose.msra.mxu0 0.0
        %641 = vmatprep.subr.mxu0 0.0
        %642 = vmatpush1.xpose.msra.mxu0 0.0
        %643 = vmatprep.subr.mxu0 0.0
        %644 = vmatpush1.xpose.msra.mxu0 0.0
        %645 = vmatprep.mubr.f32.mxu0 0.0
        %646 = vmatmul.mubr.f32.gmra.mrb[0].mxu0 %v577
        %v647 = vpop.f32.mrb[0].mxu0
        %v648 = vadd.f32 0.0, %v647
        %v649 = vpop.f32.mrb[0].mxu0
        %650 = vdwg.mxu0
        %651 = vrot.lane.b32.xlu0 %v570, 120
        %v652 = vpop.permute.xlu0 %651
        %653 = vrot.lane.b32.xlu0 %v570, 88
        %v654 = vpop.permute.xlu0 %653
        %v655 = vsel %vm576, %v652, 0
        %v657 = vsel %vm576, %v654, 0
        %659 = vmatprep.subr.mxu0 0.0
        %660 = vmatpush1.xpose.msra.mxu0 %v657
        %661 = vmatprep.subr.mxu0 0.0
        %662 = vmatpush1.xpose.msra.mxu0 0.0
        %663 = vmatprep.subr.mxu0 0.0
        %664 = vmatpush1.xpose.msra.mxu0 0.0
        %665 = vmatprep.subr.mxu0 0.0
        %666 = vmatpush1.xpose.msra.mxu0 0.0
        %667 = vmatprep.subr.mxu0 0.0
        %668 = vmatpush1.xpose.msra.mxu0 0.0
        %669 = vmatprep.subr.mxu0 0.0
        %670 = vmatpush1.xpose.msra.mxu0 0.0
        %671 = vmatprep.subr.mxu0 0.0
        %672 = vmatpush1.xpose.msra.mxu0 0.0
        %673 = vmatprep.subr.mxu0 0.0
        %674 = vmatpush1.xpose.msra.mxu0 0.0
        %675 = vmatprep.subr.mxu0 0.0
        %676 = vmatpush1.xpose.msra.mxu0 0.0
        %677 = vmatprep.subr.mxu0 0.0
        %678 = vmatpush1.xpose.msra.mxu0 0.0
        %679 = vmatprep.subr.mxu0 0.0
        %680 = vmatpush1.xpose.msra.mxu0 0.0
        %681 = vmatprep.subr.mxu0 0.0
        %682 = vmatpush1.xpose.msra.mxu0 0.0
        %683 = vmatprep.subr.mxu0 0.0
        %684 = vmatpush1.xpose.msra.mxu0 0.0
        %685 = vmatprep.subr.mxu0 0.0
        %686 = vmatpush1.xpose.msra.mxu0 0.0
        %687 = vmatprep.subr.mxu0 0.0
        %688 = vmatpush1.xpose.msra.mxu0 0.0
        %689 = vmatprep.subr.mxu0 0.0
        %690 = vmatpush1.xpose.msra.mxu0 0.0
        %691 = vmatprep.subr.mxu0 0.0
        %692 = vmatpush1.xpose.msra.mxu0 0.0
        %693 = vmatprep.subr.mxu0 0.0
        %694 = vmatpush1.xpose.msra.mxu0 0.0
        %695 = vmatprep.subr.mxu0 0.0
        %696 = vmatpush1.xpose.msra.mxu0 0.0
        %697 = vmatprep.subr.mxu0 0.0
        %698 = vmatpush1.xpose.msra.mxu0 0.0
        %699 = vmatprep.subr.mxu0 0.0
        %700 = vmatpush1.xpose.msra.mxu0 0.0
        %701 = vmatprep.subr.mxu0 0.0
        %702 = vmatpush1.xpose.msra.mxu0 0.0
        %703 = vmatprep.subr.mxu0 0.0
        %704 = vmatpush1.xpose.msra.mxu0 0.0
        %705 = vmatprep.subr.mxu0 0.0
        %706 = vmatpush1.xpose.msra.mxu0 0.0
        %707 = vmatprep.subr.mxu0 0.0
        %708 = vmatpush1.xpose.msra.mxu0 0.0
        %709 = vmatprep.subr.mxu0 0.0
        %710 = vmatpush1.xpose.msra.mxu0 0.0
        %711 = vmatprep.subr.mxu0 0.0
        %712 = vmatpush1.xpose.msra.mxu0 0.0
        %713 = vmatprep.subr.mxu0 0.0
        %714 = vmatpush1.xpose.msra.mxu0 0.0
        %715 = vmatprep.subr.mxu0 0.0
        %716 = vmatpush1.xpose.msra.mxu0 0.0
        %717 = vmatprep.subr.mxu0 0.0
        %718 = vmatpush1.xpose.msra.mxu0 0.0
        %719 = vmatprep.subr.mxu0 0.0
        %720 = vmatpush1.xpose.msra.mxu0 0.0
        %721 = vmatprep.subr.mxu0 0.0
        %722 = vmatpush1.xpose.msra.mxu0 0.0
        %723 = vmatprep.mubr.f32.mxu0 0.0
        %724 = vmatmul.mubr.f32.gmra.mrb[0].mxu0 %v655
        %v725 = vpop.f32.mrb[0].mxu0
        %v726 = vadd.f32 0.0, %v725
        %v727 = vpop.f32.mrb[0].mxu0
        %728 = vdwg.mxu0
        %729 = vrot.lane.b32.xlu0 %v570, 112
        %v730 = vpop.permute.xlu0 %729
        %731 = vrot.lane.b32.xlu0 %v570, 80
        %v732 = vpop.permute.xlu0 %731
        %v733 = vsel %vm576, %v730, 0
        %v735 = vsel %vm576, %v732, 0
        %737 = vmatprep.subr.mxu0 0.0
        %738 = vmatpush1.xpose.msra.mxu0 %v735
        %739 = vmatprep.subr.mxu0 0.0
        %740 = vmatpush1.xpose.msra.mxu0 0.0
        %741 = vmatprep.subr.mxu0 0.0
        %742 = vmatpush1.xpose.msra.mxu0 0.0
        %743 = vmatprep.subr.mxu0 0.0
        %744 = vmatpush1.xpose.msra.mxu0 0.0
        %745 = vmatprep.subr.mxu0 0.0
        %746 = vmatpush1.xpose.msra.mxu0 0.0
        %747 = vmatprep.subr.mxu0 0.0
        %748 = vmatpush1.xpose.msra.mxu0 0.0
        %749 = vmatprep.subr.mxu0 0.0
        %750 = vmatpush1.xpose.msra.mxu0 0.0
        %751 = vmatprep.subr.mxu0 0.0
        %752 = vmatpush1.xpose.msra.mxu0 0.0
        %753 = vmatprep.subr.mxu0 0.0
        %754 = vmatpush1.xpose.msra.mxu0 0.0
        %755 = vmatprep.subr.mxu0 0.0
        %756 = vmatpush1.xpose.msra.mxu0 0.0
        %757 = vmatprep.subr.mxu0 0.0
        %758 = vmatpush1.xpose.msra.mxu0 0.0
        %759 = vmatprep.subr.mxu0 0.0
        %760 = vmatpush1.xpose.msra.mxu0 0.0
        %761 = vmatprep.subr.mxu0 0.0
        %762 = vmatpush1.xpose.msra.mxu0 0.0
        %763 = vmatprep.subr.mxu0 0.0
        %764 = vmatpush1.xpose.msra.mxu0 0.0
        %765 = vmatprep.subr.mxu0 0.0
        %766 = vmatpush1.xpose.msra.mxu0 0.0
        %767 = vmatprep.subr.mxu0 0.0
        %768 = vmatpush1.xpose.msra.mxu0 0.0
        %769 = vmatprep.subr.mxu0 0.0
        %770 = vmatpush1.xpose.msra.mxu0 0.0
        %771 = vmatprep.subr.mxu0 0.0
        %772 = vmatpush1.xpose.msra.mxu0 0.0
        %773 = vmatprep.subr.mxu0 0.0
        %774 = vmatpush1.xpose.msra.mxu0 0.0
        %775 = vmatprep.subr.mxu0 0.0
        %776 = vmatpush1.xpose.msra.mxu0 0.0
        %777 = vmatprep.subr.mxu0 0.0
        %778 = vmatpush1.xpose.msra.mxu0 0.0
        %779 = vmatprep.subr.mxu0 0.0
        %780 = vmatpush1.xpose.msra.mxu0 0.0
        %781 = vmatprep.subr.mxu0 0.0
        %782 = vmatpush1.xpose.msra.mxu0 0.0
        %783 = vmatprep.subr.mxu0 0.0
        %784 = vmatpush1.xpose.msra.mxu0 0.0
        %785 = vmatprep.subr.mxu0 0.0
        %786 = vmatpush1.xpose.msra.mxu0 0.0
        %787 = vmatprep.subr.mxu0 0.0
        %788 = vmatpush1.xpose.msra.mxu0 0.0
        %789 = vmatprep.subr.mxu0 0.0
        %790 = vmatpush1.xpose.msra.mxu0 0.0
        %791 = vmatprep.subr.mxu0 0.0
        %792 = vmatpush1.xpose.msra.mxu0 0.0
        %793 = vmatprep.subr.mxu0 0.0
        %794 = vmatpush1.xpose.msra.mxu0 0.0
        %795 = vmatprep.subr.mxu0 0.0
        %796 = vmatpush1.xpose.msra.mxu0 0.0
        %797 = vmatprep.subr.mxu0 0.0
        %798 = vmatpush1.xpose.msra.mxu0 0.0
        %799 = vmatprep.subr.mxu0 0.0
        %800 = vmatpush1.xpose.msra.mxu0 0.0
        %801 = vmatprep.mubr.f32.mxu0 0.0
        %802 = vmatmul.mubr.f32.gmra.mrb[0].mxu0 %v733
        %v803 = vpop.f32.mrb[0].mxu0
        %v804 = vadd.f32 0.0, %v803
        %v805 = vpop.f32.mrb[0].mxu0
        %806 = vdwg.mxu0
        %807 = vrot.lane.b32.xlu0 %v570, 104
        %v808 = vpop.permute.xlu0 %807
        %809 = vrot.lane.b32.xlu0 %v570, 72
        %v810 = vpop.permute.xlu0 %809
        %v811 = vsel %vm576, %v808, 0
        %v813 = vsel %vm576, %v810, 0
        %815 = vmatprep.subr.mxu0 0.0
        %816 = vmatpush1.xpose.msra.mxu0 %v813
        %817 = vmatprep.subr.mxu0 0.0
        %818 = vmatpush1.xpose.msra.mxu0 0.0
        %819 = vmatprep.subr.mxu0 0.0
        %820 = vmatpush1.xpose.msra.mxu0 0.0
        %821 = vmatprep.subr.mxu0 0.0
        %822 = vmatpush1.xpose.msra.mxu0 0.0
        %823 = vmatprep.subr.mxu0 0.0
        %824 = vmatpush1.xpose.msra.mxu0 0.0
        %825 = vmatprep.subr.mxu0 0.0
        %826 = vmatpush1.xpose.msra.mxu0 0.0
        %827 = vmatprep.subr.mxu0 0.0
        %828 = vmatpush1.xpose.msra.mxu0 0.0
        %829 = vmatprep.subr.mxu0 0.0
        %830 = vmatpush1.xpose.msra.mxu0 0.0
        %831 = vmatprep.subr.mxu0 0.0
        %832 = vmatpush1.xpose.msra.mxu0 0.0
        %833 = vmatprep.subr.mxu0 0.0
        %834 = vmatpush1.xpose.msra.mxu0 0.0
        %835 = vmatprep.subr.mxu0 0.0
        %836 = vmatpush1.xpose.msra.mxu0 0.0
        %837 = vmatprep.subr.mxu0 0.0
        %838 = vmatpush1.xpose.msra.mxu0 0.0
        %839 = vmatprep.subr.mxu0 0.0
        %840 = vmatpush1.xpose.msra.mxu0 0.0
        %841 = vmatprep.subr.mxu0 0.0
        %842 = vmatpush1.xpose.msra.mxu0 0.0
        %843 = vmatprep.subr.mxu0 0.0
        %844 = vmatpush1.xpose.msra.mxu0 0.0
        %845 = vmatprep.subr.mxu0 0.0
        %846 = vmatpush1.xpose.msra.mxu0 0.0
        %847 = vmatprep.subr.mxu0 0.0
        %848 = vmatpush1.xpose.msra.mxu0 0.0
        %849 = vmatprep.subr.mxu0 0.0
        %850 = vmatpush1.xpose.msra.mxu0 0.0
        %851 = vmatprep.subr.mxu0 0.0
        %852 = vmatpush1.xpose.msra.mxu0 0.0
        %853 = vmatprep.subr.mxu0 0.0
        %854 = vmatpush1.xpose.msra.mxu0 0.0
        %855 = vmatprep.subr.mxu0 0.0
        %856 = vmatpush1.xpose.msra.mxu0 0.0
        %857 = vmatprep.subr.mxu0 0.0
        %858 = vmatpush1.xpose.msra.mxu0 0.0
        %859 = vmatprep.subr.mxu0 0.0
        %860 = vmatpush1.xpose.msra.mxu0 0.0
        %861 = vmatprep.subr.mxu0 0.0
        %862 = vmatpush1.xpose.msra.mxu0 0.0
        %863 = vmatprep.subr.mxu0 0.0
        %864 = vmatpush1.xpose.msra.mxu0 0.0
        %865 = vmatprep.subr.mxu0 0.0
        %866 = vmatpush1.xpose.msra.mxu0 0.0
        %867 = vmatprep.subr.mxu0 0.0
        %868 = vmatpush1.xpose.msra.mxu0 0.0
        %869 = vmatprep.subr.mxu0 0.0
        %870 = vmatpush1.xpose.msra.mxu0 0.0
        %871 = vmatprep.subr.mxu0 0.0
        %872 = vmatpush1.xpose.msra.mxu0 0.0
        %873 = vmatprep.subr.mxu0 0.0
        %874 = vmatpush1.xpose.msra.mxu0 0.0
        %875 = vmatprep.subr.mxu0 0.0
        %876 = vmatpush1.xpose.msra.mxu0 0.0
        %877 = vmatprep.subr.mxu0 0.0
        %878 = vmatpush1.xpose.msra.mxu0 0.0
        %879 = vmatprep.mubr.f32.mxu0 0.0
        %880 = vmatmul.mubr.f32.gmra.mrb[0].mxu0 %v811
        %v881 = vpop.f32.mrb[0].mxu0
        %v882 = vadd.f32 0.0, %v881
        %v883 = vpop.f32.mrb[0].mxu0
        %884 = vdwg.mxu0
        %v885 = vadd.f32 %v648, %v487
        %v886 = vadd.f32 %v726, %v487
        %v887 = vadd.f32 %v804, %v487
        %v888 = vadd.f32 %v882, %v487
        %v889 = vsel %vm576, %v885, -inf
        %890 = vmax.xlane.f32.xlu0 %v889
        %v891 = vpop.xlane.xlu0 %890
        %v892 = vsel %vm576, %v886, -inf
        %893 = vmax.xlane.f32.xlu0 %v892
        %v894 = vpop.xlane.xlu0 %893
        %v895 = vsel %vm576, %v887, -inf
        %896 = vmax.xlane.f32.xlu0 %v895
        %v897 = vpop.xlane.xlu0 %896
        %v898 = vsel %vm576, %v888, -inf
        %899 = vmax.xlane.f32.xlu0 %v898
        %v900 = vpop.xlane.xlu0 %899
        %v901 = vsub.f32 %v885, %v891
        %v902 = vsub.f32 %v886, %v894
        %v903 = vsub.f32 %v887, %v897
        %v904 = vsub.f32 %v888, %v900
        %v905 = vmul.f32 %v901, 1.442695
        %v906 = vpow.pop %v905
        %v907 = vmul.f32 %v902, 1.442695
        %v908 = vpow.pop %v907
        %v909 = vmul.f32 %v903, 1.442695
        %v910 = vpow.pop %v909
        %v911 = vmul.f32 %v904, 1.442695
        %v912 = vpow.pop %v911
        %v913 = vsel %vm576, %v906, 0.0
        %914 = vadd.xlane.f32.xlu0 %v913
        %v915 = vpop.xlane.xlu0 %914
        %v916 = vsel %vm576, %v908, 0.0
        %917 = vadd.xlane.f32.xlu0 %v916
        %v918 = vpop.xlane.xlu0 %917
        %v919 = vsel %vm576, %v910, 0.0
        %920 = vadd.xlane.f32.xlu0 %v919
        %v921 = vpop.xlane.xlu0 %920
        %v922 = vsel %vm576, %v912, 0.0
        %923 = vadd.xlane.f32.xlu0 %v922
        %v924 = vpop.xlane.xlu0 %923
        %v925 = vrcp.pop %v915
        %v926 = vrcp.pop %v918
        %v927 = vrcp.pop %v921
        %v928 = vrcp.pop %v924
        %v929 = vmul.f32 %v906, %v925
        %v930 = vmul.f32 %v908, %v926
        %v931 = vmul.f32 %v910, %v927
        %v932 = vmul.f32 %v912, %v928
        %933 = vrot.lane.b32.xlu0 %v570, 64
        %v934 = vpop.permute.xlu0 %933
        %v937 = vsel %vm576, %v929, 0
        %939 = vmatprep.subr.mxu0 0.0
        %940 = vmatpush1.msra.mxu0 %v934
        %941 = vmatprep.subr.mxu0 0.0
        %942 = vmatpush1.msra.mxu0 0.0
        %943 = vmatprep.subr.mxu0 0.0
        %944 = vmatpush1.msra.mxu0 0.0
        %945 = vmatprep.subr.mxu0 0.0
        %946 = vmatpush1.msra.mxu0 0.0
        %947 = vmatprep.subr.mxu0 0.0
        %948 = vmatpush1.msra.mxu0 0.0
        %949 = vmatprep.subr.mxu0 0.0
        %950 = vmatpush1.msra.mxu0 0.0
        %951 = vmatprep.subr.mxu0 0.0
        %952 = vmatpush1.msra.mxu0 0.0
        %953 = vmatprep.subr.mxu0 0.0
        %954 = vmatpush1.msra.mxu0 0.0
        %955 = vmatprep.subr.mxu0 0.0
        %956 = vmatpush1.msra.mxu0 0.0
        %957 = vmatprep.subr.mxu0 0.0
        %958 = vmatpush1.msra.mxu0 0.0
        %959 = vmatprep.subr.mxu0 0.0
        %960 = vmatpush1.msra.mxu0 0.0
        %961 = vmatprep.subr.mxu0 0.0
        %962 = vmatpush1.msra.mxu0 0.0
        %963 = vmatprep.subr.mxu0 0.0
        %964 = vmatpush1.msra.mxu0 0.0
        %965 = vmatprep.subr.mxu0 0.0
        %966 = vmatpush1.msra.mxu0 0.0
        %967 = vmatprep.subr.mxu0 0.0
        %968 = vmatpush1.msra.mxu0 0.0
        %969 = vmatprep.subr.mxu0 0.0
        %970 = vmatpush1.msra.mxu0 0.0
        %971 = vmatprep.subr.mxu0 0.0
        %972 = vmatpush1.msra.mxu0 0.0
        %973 = vmatprep.subr.mxu0 0.0
        %974 = vmatpush1.msra.mxu0 0.0
        %975 = vmatprep.subr.mxu0 0.0
        %976 = vmatpush1.msra.mxu0 0.0
        %977 = vmatprep.subr.mxu0 0.0
        %978 = vmatpush1.msra.mxu0 0.0
        %979 = vmatprep.subr.mxu0 0.0
        %980 = vmatpush1.msra.mxu0 0.0
        %981 = vmatprep.subr.mxu0 0.0
        %982 = vmatpush1.msra.mxu0 0.0
        %983 = vmatprep.subr.mxu0 0.0
        %984 = vmatpush1.msra.mxu0 0.0
        %985 = vmatprep.subr.mxu0 0.0
        %986 = vmatpush1.msra.mxu0 0.0
        %987 = vmatprep.subr.mxu0 0.0
        %988 = vmatpush1.msra.mxu0 0.0
        %989 = vmatprep.subr.mxu0 0.0
        %990 = vmatpush1.msra.mxu0 0.0
        %991 = vmatprep.subr.mxu0 0.0
        %992 = vmatpush1.msra.mxu0 0.0
        %993 = vmatprep.subr.mxu0 0.0
        %994 = vmatpush1.msra.mxu0 0.0
        %995 = vmatprep.subr.mxu0 0.0
        %996 = vmatpush1.msra.mxu0 0.0
        %997 = vmatprep.subr.mxu0 0.0
        %998 = vmatpush1.msra.mxu0 0.0
        %999 = vmatprep.subr.mxu0 0.0
        %1000 = vmatpush1.msra.mxu0 0.0
        %1001 = vmatprep.subr.mxu0 0.0
        %1002 = vmatpush1.msra.mxu0 0.0
        %1003 = vmatprep.mubr.f32.mxu0 0.0
        %1004 = vmatmul.mubr.f32.gmra.mrb[0].mxu0 %v937
        %v1005 = vpop.f32.mrb[0].mxu0
        %v1006 = vadd.f32 0.0, %v1005
        %v1007 = vpop.f32.mrb[0].mxu0
        %1008 = vdwg.mxu0
        %1009 = vrot.lane.b32.xlu0 %v570, 56
        %v1010 = vpop.permute.xlu0 %1009
        %v1013 = vsel %vm576, %v930, 0
        %1015 = vmatprep.subr.mxu0 0.0
        %1016 = vmatpush1.msra.mxu0 %v1010
        %1017 = vmatprep.subr.mxu0 0.0
        %1018 = vmatpush1.msra.mxu0 0.0
        %1019 = vmatprep.subr.mxu0 0.0
        %1020 = vmatpush1.msra.mxu0 0.0
        %1021 = vmatprep.subr.mxu0 0.0
        %1022 = vmatpush1.msra.mxu0 0.0
        %1023 = vmatprep.subr.mxu0 0.0
        %1024 = vmatpush1.msra.mxu0 0.0
        %1025 = vmatprep.subr.mxu0 0.0
        %1026 = vmatpush1.msra.mxu0 0.0
        %1027 = vmatprep.subr.mxu0 0.0
        %1028 = vmatpush1.msra.mxu0 0.0
        %1029 = vmatprep.subr.mxu0 0.0
        %1030 = vmatpush1.msra.mxu0 0.0
        %1031 = vmatprep.subr.mxu0 0.0
        %1032 = vmatpush1.msra.mxu0 0.0
        %1033 = vmatprep.subr.mxu0 0.0
        %1034 = vmatpush1.msra.mxu0 0.0
        %1035 = vmatprep.subr.mxu0 0.0
        %1036 = vmatpush1.msra.mxu0 0.0
        %1037 = vmatprep.subr.mxu0 0.0
        %1038 = vmatpush1.msra.mxu0 0.0
        %1039 = vmatprep.subr.mxu0 0.0
        %1040 = vmatpush1.msra.mxu0 0.0
        %1041 = vmatprep.subr.mxu0 0.0
        %1042 = vmatpush1.msra.mxu0 0.0
        %1043 = vmatprep.subr.mxu0 0.0
        %1044 = vmatpush1.msra.mxu0 0.0
        %1045 = vmatprep.subr.mxu0 0.0
        %1046 = vmatpush1.msra.mxu0 0.0
        %1047 = vmatprep.subr.mxu0 0.0
        %1048 = vmatpush1.msra.mxu0 0.0
        %1049 = vmatprep.subr.mxu0 0.0
        %1050 = vmatpush1.msra.mxu0 0.0
        %1051 = vmatprep.subr.mxu0 0.0
        %1052 = vmatpush1.msra.mxu0 0.0
        %1053 = vmatprep.subr.mxu0 0.0
        %1054 = vmatpush1.msra.mxu0 0.0
        %1055 = vmatprep.subr.mxu0 0.0
        %1056 = vmatpush1.msra.mxu0 0.0
        %1057 = vmatprep.subr.mxu0 0.0
        %1058 = vmatpush1.msra.mxu0 0.0
        %1059 = vmatprep.subr.mxu0 0.0
        %1060 = vmatpush1.msra.mxu0 0.0
        %1061 = vmatprep.subr.mxu0 0.0
        %1062 = vmatpush1.msra.mxu0 0.0
        %1063 = vmatprep.subr.mxu0 0.0
        %1064 = vmatpush1.msra.mxu0 0.0
        %1065 = vmatprep.subr.mxu0 0.0
        %1066 = vmatpush1.msra.mxu0 0.0
        %1067 = vmatprep.subr.mxu0 0.0
        %1068 = vmatpush1.msra.mxu0 0.0
        %1069 = vmatprep.subr.mxu0 0.0
        %1070 = vmatpush1.msra.mxu0 0.0
        %1071 = vmatprep.subr.mxu0 0.0
        %1072 = vmatpush1.msra.mxu0 0.0
        %1073 = vmatprep.subr.mxu0 0.0
        %1074 = vmatpush1.msra.mxu0 0.0
        %1075 = vmatprep.subr.mxu0 0.0
        %1076 = vmatpush1.msra.mxu0 0.0
        %1077 = vmatprep.subr.mxu0 0.0
        %1078 = vmatpush1.msra.mxu0 0.0
        %1079 = vmatprep.mubr.f32.mxu0 0.0
        %1080 = vmatmul.mubr.f32.gmra.mrb[0].mxu0 %v1013
        %v1081 = vpop.f32.mrb[0].mxu0
        %v1082 = vadd.f32 0.0, %v1081
        %v1083 = vpop.f32.mrb[0].mxu0
        %1084 = vdwg.mxu0
        %1085 = vrot.lane.b32.xlu0 %v570, 48
        %v1086 = vpop.permute.xlu0 %1085
        %v1089 = vsel %vm576, %v931, 0
        %1091 = vmatprep.subr.mxu0 0.0
        %1092 = vmatpush1.msra.mxu0 %v1086
        %1093 = vmatprep.subr.mxu0 0.0
        %1094 = vmatpush1.msra.mxu0 0.0
        %1095 = vmatprep.subr.mxu0 0.0
        %1096 = vmatpush1.msra.mxu0 0.0
        %1097 = vmatprep.subr.mxu0 0.0
        %1098 = vmatpush1.msra.mxu0 0.0
        %1099 = vmatprep.subr.mxu0 0.0
        %1100 = vmatpush1.msra.mxu0 0.0
        %1101 = vmatprep.subr.mxu0 0.0
        %1102 = vmatpush1.msra.mxu0 0.0
        %1103 = vmatprep.subr.mxu0 0.0
        %1104 = vmatpush1.msra.mxu0 0.0
        %1105 = vmatprep.subr.mxu0 0.0
        %1106 = vmatpush1.msra.mxu0 0.0
        %1107 = vmatprep.subr.mxu0 0.0
        %1108 = vmatpush1.msra.mxu0 0.0
        %1109 = vmatprep.subr.mxu0 0.0
        %1110 = vmatpush1.msra.mxu0 0.0
        %1111 = vmatprep.subr.mxu0 0.0
        %1112 = vmatpush1.msra.mxu0 0.0
        %1113 = vmatprep.subr.mxu0 0.0
        %1114 = vmatpush1.msra.mxu0 0.0
        %1115 = vmatprep.subr.mxu0 0.0
        %1116 = vmatpush1.msra.mxu0 0.0
        %1117 = vmatprep.subr.mxu0 0.0
        %1118 = vmatpush1.msra.mxu0 0.0
        %1119 = vmatprep.subr.mxu0 0.0
        %1120 = vmatpush1.msra.mxu0 0.0
        %1121 = vmatprep.subr.mxu0 0.0
        %1122 = vmatpush1.msra.mxu0 0.0
        %1123 = vmatprep.subr.mxu0 0.0
        %1124 = vmatpush1.msra.mxu0 0.0
        %1125 = vmatprep.subr.mxu0 0.0
        %1126 = vmatpush1.msra.mxu0 0.0
        %1127 = vmatprep.subr.mxu0 0.0
        %1128 = vmatpush1.msra.mxu0 0.0
        %1129 = vmatprep.subr.mxu0 0.0
        %1130 = vmatpush1.msra.mxu0 0.0
        %1131 = vmatprep.subr.mxu0 0.0
        %1132 = vmatpush1.msra.mxu0 0.0
        %1133 = vmatprep.subr.mxu0 0.0
        %1134 = vmatpush1.msra.mxu0 0.0
        %1135 = vmatprep.subr.mxu0 0.0
        %1136 = vmatpush1.msra.mxu0 0.0
        %1137 = vmatprep.subr.mxu0 0.0
        %1138 = vmatpush1.msra.mxu0 0.0
        %1139 = vmatprep.subr.mxu0 0.0
        %1140 = vmatpush1.msra.mxu0 0.0
        %1141 = vmatprep.subr.mxu0 0.0
        %1142 = vmatpush1.msra.mxu0 0.0
        %1143 = vmatprep.subr.mxu0 0.0
        %1144 = vmatpush1.msra.mxu0 0.0
        %1145 = vmatprep.subr.mxu0 0.0
        %1146 = vmatpush1.msra.mxu0 0.0
        %1147 = vmatprep.subr.mxu0 0.0
        %1148 = vmatpush1.msra.mxu0 0.0
        %1149 = vmatprep.subr.mxu0 0.0
        %1150 = vmatpush1.msra.mxu0 0.0
        %1151 = vmatprep.subr.mxu0 0.0
        %1152 = vmatpush1.msra.mxu0 0.0
        %1153 = vmatprep.subr.mxu0 0.0
        %1154 = vmatpush1.msra.mxu0 0.0
        %1155 = vmatprep.mubr.f32.mxu0 0.0
        %1156 = vmatmul.mubr.f32.gmra.mrb[0].mxu0 %v1089
        %v1157 = vpop.f32.mrb[0].mxu0
        %v1158 = vadd.f32 0.0, %v1157
        %v1159 = vpop.f32.mrb[0].mxu0
        %1160 = vdwg.mxu0
        %1161 = vrot.lane.b32.xlu0 %v570, 40
        %v1162 = vpop.permute.xlu0 %1161
        %v1165 = vsel %vm576, %v932, 0
        %1167 = vmatprep.subr.mxu0 0.0
        %1168 = vmatpush1.msra.mxu0 %v1162
        %1169 = vmatprep.subr.mxu0 0.0
        %1170 = vmatpush1.msra.mxu0 0.0
        %1171 = vmatprep.subr.mxu0 0.0
        %1172 = vmatpush1.msra.mxu0 0.0
        %1173 = vmatprep.subr.mxu0 0.0
        %1174 = vmatpush1.msra.mxu0 0.0
        %1175 = vmatprep.subr.mxu0 0.0
        %1176 = vmatpush1.msra.mxu0 0.0
        %1177 = vmatprep.subr.mxu0 0.0
        %1178 = vmatpush1.msra.mxu0 0.0
        %1179 = vmatprep.subr.mxu0 0.0
        %1180 = vmatpush1.msra.mxu0 0.0
        %1181 = vmatprep.subr.mxu0 0.0
        %1182 = vmatpush1.msra.mxu0 0.0
        %1183 = vmatprep.subr.mxu0 0.0
        %1184 = vmatpush1.msra.mxu0 0.0
        %1185 = vmatprep.subr.mxu0 0.0
        %1186 = vmatpush1.msra.mxu0 0.0
        %1187 = vmatprep.subr.mxu0 0.0
        %1188 = vmatpush1.msra.mxu0 0.0
        %1189 = vmatprep.subr.mxu0 0.0
        %1190 = vmatpush1.msra.mxu0 0.0
        %1191 = vmatprep.subr.mxu0 0.0
        %1192 = vmatpush1.msra.mxu0 0.0
        %1193 = vmatprep.subr.mxu0 0.0
        %1194 = vmatpush1.msra.mxu0 0.0
        %1195 = vmatprep.subr.mxu0 0.0
        %1196 = vmatpush1.msra.mxu0 0.0
        %1197 = vmatprep.subr.mxu0 0.0
        %1198 = vmatpush1.msra.mxu0 0.0
        %1199 = vmatprep.subr.mxu0 0.0
        %1200 = vmatpush1.msra.mxu0 0.0
        %1201 = vmatprep.subr.mxu0 0.0
        %1202 = vmatpush1.msra.mxu0 0.0
        %1203 = vmatprep.subr.mxu0 0.0
        %1204 = vmatpush1.msra.mxu0 0.0
        %1205 = vmatprep.subr.mxu0 0.0
        %1206 = vmatpush1.msra.mxu0 0.0
        %1207 = vmatprep.subr.mxu0 0.0
        %1208 = vmatpush1.msra.mxu0 0.0
        %1209 = vmatprep.subr.mxu0 0.0
        %1210 = vmatpush1.msra.mxu0 0.0
        %1211 = vmatprep.subr.mxu0 0.0
        %1212 = vmatpush1.msra.mxu0 0.0
        %1213 = vmatprep.subr.mxu0 0.0
        %1214 = vmatpush1.msra.mxu0 0.0
        %1215 = vmatprep.subr.mxu0 0.0
        %1216 = vmatpush1.msra.mxu0 0.0
        %1217 = vmatprep.subr.mxu0 0.0
        %1218 = vmatpush1.msra.mxu0 0.0
        %1219 = vmatprep.subr.mxu0 0.0
        %1220 = vmatpush1.msra.mxu0 0.0
        %1221 = vmatprep.subr.mxu0 0.0
        %1222 = vmatpush1.msra.mxu0 0.0
        %1223 = vmatprep.subr.mxu0 0.0
        %1224 = vmatpush1.msra.mxu0 0.0
        %1225 = vmatprep.subr.mxu0 0.0
        %1226 = vmatpush1.msra.mxu0 0.0
        %1227 = vmatprep.subr.mxu0 0.0
        %1228 = vmatpush1.msra.mxu0 0.0
        %1229 = vmatprep.subr.mxu0 0.0
        %1230 = vmatpush1.msra.mxu0 0.0
        %1231 = vmatprep.mubr.f32.mxu0 0.0
        %1232 = vmatmul.mubr.f32.gmra.mrb[0].mxu0 %v1165
        %v1233 = vpop.f32.mrb[0].mxu0
        %v1234 = vadd.f32 0.0, %v1233
        %v1235 = vpop.f32.mrb[0].mxu0
        %1236 = vdwg.mxu0
        %1238 = vrot.lane.b32.xlu0 %v1082, 8
        %v1239 = vpop.permute.xlu0 %1238
        %1242 = vrot.lane.b32.xlu0 %v1158, 16
        %v1243 = vpop.permute.xlu0 %1242
        %1246 = vrot.lane.b32.xlu0 %v1234, 24
        %v1247 = vpop.permute.xlu0 %1246
        %v1249 = vsel %vm576, %v1006, %v1239
        %vm1250 = vcmask 130048
        %v1251 = vsel %vm1250, %v1249, %v1243
        %vm1252 = vcmask 195584
        %v1253 = vsel %vm1252, %v1251, %v1247
        %1258 = vrot.lane.b32.xlu0 %v490, 32
        %v1259 = vpop.permute.xlu0 %1258
        %1260 = vrot.lane.b32.xlu0 %v491, 32
        %v1261 = vpop.permute.xlu0 %1260
        %1262 = vrot.lane.b32.xlu0 %v492, 32
        %v1263 = vpop.permute.xlu0 %1262
        %1264 = vrot.lane.b32.xlu0 %v493, 32
        %v1265 = vpop.permute.xlu0 %1264
        %1271 = vrot.lane.b32.xlu0 %v498, 32
        %v1272 = vpop.permute.xlu0 %1271
        %v1275 = vsel %vm499, %v1253, 0
        %1277 = vmatprep.subr.mxu0 0.0
        %1278 = vmatpush1.msra.mxu0 %v1259
        %1279 = vmatprep.subr.mxu0 0.0
        %1280 = vmatpush1.msra.mxu0 %v1261
        %1281 = vmatprep.subr.mxu0 0.0
        %1282 = vmatpush1.msra.mxu0 %v1263
        %1283 = vmatprep.subr.mxu0 0.0
        %1284 = vmatpush1.msra.mxu0 %v1265
        %1285 = vmatprep.subr.mxu0 0.0
        %1286 = vmatpush1.msra.mxu0 0.0
        %1287 = vmatprep.subr.mxu0 0.0
        %1288 = vmatpush1.msra.mxu0 0.0
        %1289 = vmatprep.subr.mxu0 0.0
        %1290 = vmatpush1.msra.mxu0 0.0
        %1291 = vmatprep.subr.mxu0 0.0
        %1292 = vmatpush1.msra.mxu0 0.0
        %1293 = vmatprep.subr.mxu0 0.0
        %1294 = vmatpush1.msra.mxu0 0.0
        %1295 = vmatprep.subr.mxu0 0.0
        %1296 = vmatpush1.msra.mxu0 0.0
        %1297 = vmatprep.subr.mxu0 0.0
        %1298 = vmatpush1.msra.mxu0 0.0
        %1299 = vmatprep.subr.mxu0 0.0
        %1300 = vmatpush1.msra.mxu0 0.0
        %1301 = vmatprep.subr.mxu0 0.0
        %1302 = vmatpush1.msra.mxu0 0.0
        %1303 = vmatprep.subr.mxu0 0.0
        %1304 = vmatpush1.msra.mxu0 0.0
        %1305 = vmatprep.subr.mxu0 0.0
        %1306 = vmatpush1.msra.mxu0 0.0
        %1307 = vmatprep.subr.mxu0 0.0
        %1308 = vmatpush1.msra.mxu0 0.0
        %1309 = vmatprep.subr.mxu0 0.0
        %1310 = vmatpush1.msra.mxu0 0.0
        %1311 = vmatprep.subr.mxu0 0.0
        %1312 = vmatpush1.msra.mxu0 0.0
        %1313 = vmatprep.subr.mxu0 0.0
        %1314 = vmatpush1.msra.mxu0 0.0
        %1315 = vmatprep.subr.mxu0 0.0
        %1316 = vmatpush1.msra.mxu0 0.0
        %1317 = vmatprep.subr.mxu0 0.0
        %1318 = vmatpush1.msra.mxu0 0.0
        %1319 = vmatprep.subr.mxu0 0.0
        %1320 = vmatpush1.msra.mxu0 0.0
        %1321 = vmatprep.subr.mxu0 0.0
        %1322 = vmatpush1.msra.mxu0 0.0
        %1323 = vmatprep.subr.mxu0 0.0
        %1324 = vmatpush1.msra.mxu0 0.0
        %1325 = vmatprep.subr.mxu0 0.0
        %1326 = vmatpush1.msra.mxu0 0.0
        %1327 = vmatprep.subr.mxu0 0.0
        %1328 = vmatpush1.msra.mxu0 0.0
        %1329 = vmatprep.subr.mxu0 0.0
        %1330 = vmatpush1.msra.mxu0 0.0
        %1331 = vmatprep.subr.mxu0 0.0
        %1332 = vmatpush1.msra.mxu0 0.0
        %1333 = vmatprep.subr.mxu0 0.0
        %1334 = vmatpush1.msra.mxu0 0.0
        %1335 = vmatprep.subr.mxu0 0.0
        %1336 = vmatpush1.msra.mxu0 0.0
        %1337 = vmatprep.subr.mxu0 0.0
        %1338 = vmatpush1.msra.mxu0 0.0
        %1339 = vmatprep.subr.mxu0 0.0
        %1340 = vmatpush1.msra.mxu0 0.0
        %1341 = vmatprep.mubr.f32.mxu0 0.0
        %1342 = vmatmul.mubr.f32.gmra.mrb[0].mxu0 %v1275
        %v1343 = vpop.f32.mrb[0].mxu0
        %v1344 = vadd.f32 %v1272, %v1343
        %v1345 = vpop.f32.mrb[0].mxu0
        %1346 = vdwg.mxu0
        %v1347 = vld [vmem:[%s9 + $0x2] sm:$0x1]
        %v1348 = vadd.f32 %v480, %v1344
        %v1349 = vsel %vm499, %v1348, 0.0
        %1350 = vadd.xlane.f32.xlu0 %v1349
        %v1351 = vpop.xlane.xlu0 %1350
        %v1352 = vrcp.pop 32.0
        %v1353 = vmul.f32 %v1351, %v1352
        %v1354 = vsub.f32 %v1348, %v1353
        %v1355 = vmul.f32 %v1354, %v1354
        %v1356 = vsel %vm499, %v1355, 0.0
        %1357 = vadd.xlane.f32.xlu0 %v1356
        %v1358 = vpop.xlane.xlu0 %1357
        %v1359 = vmul.f32 %v1358, %v1352
        %v1360 = vadd.f32 %v1359, 1e-12
        %v1361 = vrsqrt.pop %v1360
        %v1362 = vmul.f32 %v1354, %v1361
        %v1363 = vlaneseq
        %v1364 = vshrl.u32 %v1363, 7
        %v1365 = vsub.s32 0, %v1364
        %v1366 = vrot.slane %v1347, %v1365
        %v1367 = vmul.f32 %v1362, %v1366
        %1369 = vrot.lane.b32.xlu0 %v1366, 96
        %v1370 = vpop.permute.xlu0 %1369
        %v1372 = vadd.f32 %v1367, %v1370
        %v1373 = vld [vmem:[%s8 + $0x8] sm:$0xff]
        %v1374 = vld [vmem:[%s8 + $0x28] sm:$0xff]
        %v1375 = vld [vmem:[%s8 + $0x48] sm:$0xff]
        %v1376 = vld [vmem:[%s8 + $0x68] sm:$0xff]
        %1377 = vrot.lane.b32.xlu0 %v1366, 64
        %v1378 = vpop.permute.xlu0 %1377
        %v1381 = vsel %vm499, %v1372, 0
        %1383 = vmatprep.subr.mxu0 0.0
        %1384 = vmatpush1.msra.mxu0 %v1373
        %1385 = vmatprep.subr.mxu0 0.0
        %1386 = vmatpush1.msra.mxu0 %v1374
        %1387 = vmatprep.subr.mxu0 0.0
        %1388 = vmatpush1.msra.mxu0 %v1375
        %1389 = vmatprep.subr.mxu0 0.0
        %1390 = vmatpush1.msra.mxu0 %v1376
        %1391 = vmatprep.subr.mxu0 0.0
        %1392 = vmatpush1.msra.mxu0 0.0
        %1393 = vmatprep.subr.mxu0 0.0
        %1394 = vmatpush1.msra.mxu0 0.0
        %1395 = vmatprep.subr.mxu0 0.0
        %1396 = vmatpush1.msra.mxu0 0.0
        %1397 = vmatprep.subr.mxu0 0.0
        %1398 = vmatpush1.msra.mxu0 0.0
        %1399 = vmatprep.subr.mxu0 0.0
        %1400 = vmatpush1.msra.mxu0 0.0
        %1401 = vmatprep.subr.mxu0 0.0
        %1402 = vmatpush1.msra.mxu0 0.0
        %1403 = vmatprep.subr.mxu0 0.0
        %1404 = vmatpush1.msra.mxu0 0.0
        %1405 = vmatprep.subr.mxu0 0.0
        %1406 = vmatpush1.msra.mxu0 0.0
        %1407 = vmatprep.subr.mxu0 0.0
        %1408 = vmatpush1.msra.mxu0 0.0
        %1409 = vmatprep.subr.mxu0 0.0
        %1410 = vmatpush1.msra.mxu0 0.0
        %1411 = vmatprep.subr.mxu0 0.0
        %1412 = vmatpush1.msra.mxu0 0.0
        %1413 = vmatprep.subr.mxu0 0.0
        %1414 = vmatpush1.msra.mxu0 0.0
        %1415 = vmatprep.subr.mxu0 0.0
        %1416 = vmatpush1.msra.mxu0 0.0
        %1417 = vmatprep.subr.mxu0 0.0
        %1418 = vmatpush1.msra.mxu0 0.0
        %1419 = vmatprep.subr.mxu0 0.0
        %1420 = vmatpush1.msra.mxu0 0.0
        %1421 = vmatprep.subr.mxu0 0.0
        %1422 = vmatpush1.msra.mxu0 0.0
        %1423 = vmatprep.subr.mxu0 0.0
        %1424 = vmatpush1.msra.mxu0 0.0
        %1425 = vmatprep.subr.mxu0 0.0
        %1426 = vmatpush1.msra.mxu0 0.0
        %1427 = vmatprep.subr.mxu0 0.0
        %1428 = vmatpush1.msra.mxu0 0.0
        %1429 = vmatprep.subr.mxu0 0.0
        %1430 = vmatpush1.msra.mxu0 0.0
        %1431 = vmatprep.subr.mxu0 0.0
        %1432 = vmatpush1.msra.mxu0 0.0
        %1433 = vmatprep.subr.mxu0 0.0
        %1434 = vmatpush1.msra.mxu0 0.0
        %1435 = vmatprep.subr.mxu0 0.0
        %1436 = vmatpush1.msra.mxu0 0.0
        %1437 = vmatprep.subr.mxu0 0.0
        %1438 = vmatpush1.msra.mxu0 0.0
        %1439 = vmatprep.subr.mxu0 0.0
        %1440 = vmatpush1.msra.mxu0 0.0
        %1441 = vmatprep.subr.mxu0 0.0
        %1442 = vmatpush1.msra.mxu0 0.0
        %1443 = vmatprep.subr.mxu0 0.0
        %1444 = vmatpush1.msra.mxu0 0.0
        %1445 = vmatprep.subr.mxu0 0.0
        %1446 = vmatpush1.msra.mxu0 0.0
        %1447 = vmatprep.mubr.f32.mxu0 0.0
        %1448 = vmatmul.mubr.f32.gmra.mrb[0].mxu0 %v1381
        %v1449 = vpop.f32.mrb[0].mxu0
        %v1450 = vadd.f32 %v1378, %v1449
        %v1451 = vpop.f32.mrb[0].mxu0
        %1452 = vdwg.mxu0
        %1457 = vrot.lane.b32.xlu0 %v1373, 96
        %v1458 = vpop.permute.xlu0 %1457
        %1459 = vrot.lane.b32.xlu0 %v1374, 96
        %v1460 = vpop.permute.xlu0 %1459
        %1461 = vrot.lane.b32.xlu0 %v1375, 96
        %v1462 = vpop.permute.xlu0 %1461
        %1463 = vrot.lane.b32.xlu0 %v1376, 96
        %v1464 = vpop.permute.xlu0 %1463
        %1469 = vrot.lane.b32.xlu0 %v1366, 32
        %v1470 = vpop.permute.xlu0 %1469
        %v1473 = vsel %vm499, %v481, 0
        %1475 = vmatprep.subr.mxu0 0.0
        %1476 = vmatpush1.msra.mxu0 %v1458
        %1477 = vmatprep.subr.mxu0 0.0
        %1478 = vmatpush1.msra.mxu0 %v1460
        %1479 = vmatprep.subr.mxu0 0.0
        %1480 = vmatpush1.msra.mxu0 %v1462
        %1481 = vmatprep.subr.mxu0 0.0
        %1482 = vmatpush1.msra.mxu0 %v1464
        %1483 = vmatprep.subr.mxu0 0.0
        %1484 = vmatpush1.msra.mxu0 0.0
        %1485 = vmatprep.subr.mxu0 0.0
        %1486 = vmatpush1.msra.mxu0 0.0
        %1487 = vmatprep.subr.mxu0 0.0
        %1488 = vmatpush1.msra.mxu0 0.0
        %1489 = vmatprep.subr.mxu0 0.0
        %1490 = vmatpush1.msra.mxu0 0.0
        %1491 = vmatprep.subr.mxu0 0.0
        %1492 = vmatpush1.msra.mxu0 0.0
        %1493 = vmatprep.subr.mxu0 0.0
        %1494 = vmatpush1.msra.mxu0 0.0
        %1495 = vmatprep.subr.mxu0 0.0
        %1496 = vmatpush1.msra.mxu0 0.0
        %1497 = vmatprep.subr.mxu0 0.0
        %1498 = vmatpush1.msra.mxu0 0.0
        %1499 = vmatprep.subr.mxu0 0.0
        %1500 = vmatpush1.msra.mxu0 0.0
        %1501 = vmatprep.subr.mxu0 0.0
        %1502 = vmatpush1.msra.mxu0 0.0
        %1503 = vmatprep.subr.mxu0 0.0
        %1504 = vmatpush1.msra.mxu0 0.0
        %1505 = vmatprep.subr.mxu0 0.0
        %1506 = vmatpush1.msra.mxu0 0.0
        %1507 = vmatprep.subr.mxu0 0.0
        %1508 = vmatpush1.msra.mxu0 0.0
        %1509 = vmatprep.subr.mxu0 0.0
        %1510 = vmatpush1.msra.mxu0 0.0
        %1511 = vmatprep.subr.mxu0 0.0
        %1512 = vmatpush1.msra.mxu0 0.0
        %1513 = vmatprep.subr.mxu0 0.0
        %1514 = vmatpush1.msra.mxu0 0.0
        %1515 = vmatprep.subr.mxu0 0.0
        %1516 = vmatpush1.msra.mxu0 0.0
        %1517 = vmatprep.subr.mxu0 0.0
        %1518 = vmatpush1.msra.mxu0 0.0
        %1519 = vmatprep.subr.mxu0 0.0
        %1520 = vmatpush1.msra.mxu0 0.0
        %1521 = vmatprep.subr.mxu0 0.0
        %1522 = vmatpush1.msra.mxu0 0.0
        %1523 = vmatprep.subr.mxu0 0.0
        %1524 = vmatpush1.msra.mxu0 0.0
        %1525 = vmatprep.subr.mxu0 0.0
        %1526 = vmatpush1.msra.mxu0 0.0
        %1527 = vmatprep.subr.mxu0 0.0
        %1528 = vmatpush1.msra.mxu0 0.0
        %1529 = vmatprep.subr.mxu0 0.0
        %1530 = vmatpush1.msra.mxu0 0.0
        %1531 = vmatprep.subr.mxu0 0.0
        %1532 = vmatpush1.msra.mxu0 0.0
        %1533 = vmatprep.subr.mxu0 0.0
        %1534 = vmatpush1.msra.mxu0 0.0
        %1535 = vmatprep.subr.mxu0 0.0
        %1536 = vmatpush1.msra.mxu0 0.0
        %1537 = vmatprep.subr.mxu0 0.0
        %1538 = vmatpush1.msra.mxu0 0.0
        %1539 = vmatprep.mubr.f32.mxu0 0.0
        %1540 = vmatmul.mubr.f32.gmra.mrb[0].mxu0 %v1473
        %v1541 = vpop.f32.mrb[0].mxu0
        %v1542 = vadd.f32 %v1470, %v1541
        %v1543 = vpop.f32.mrb[0].mxu0
        %1544 = vdwg.mxu0
        %v1545 = vld [vmem:[%s9 + $0x4] sm:$0x1]
        %v1546 = vlaneseq
        %v1547 = vshrl.u32 %v1546, 7
        %v1548 = vsub.s32 0, %v1547
        %v1549 = vrot.slane %v1545, %v1548
        %1550 = vrot.lane.b32.xlu0 %v1373, 64
        %v1551 = vpop.permute.xlu0 %1550
        %1552 = vrot.lane.b32.xlu0 %v1374, 64
        %v1553 = vpop.permute.xlu0 %1552
        %1554 = vrot.lane.b32.xlu0 %v1375, 64
        %v1555 = vpop.permute.xlu0 %1554
        %1556 = vrot.lane.b32.xlu0 %v1376, 64
        %v1557 = vpop.permute.xlu0 %1556
        %v1563 = vsel %vm499, %v482, 0
        %1565 = vmatprep.subr.mxu0 0.0
        %1566 = vmatpush1.msra.mxu0 %v1551
        %1567 = vmatprep.subr.mxu0 0.0
        %1568 = vmatpush1.msra.mxu0 %v1553
        %1569 = vmatprep.subr.mxu0 0.0
        %1570 = vmatpush1.msra.mxu0 %v1555
        %1571 = vmatprep.subr.mxu0 0.0
        %1572 = vmatpush1.msra.mxu0 %v1557
        %1573 = vmatprep.subr.mxu0 0.0
        %1574 = vmatpush1.msra.mxu0 0.0
        %1575 = vmatprep.subr.mxu0 0.0
        %1576 = vmatpush1.msra.mxu0 0.0
        %1577 = vmatprep.subr.mxu0 0.0
        %1578 = vmatpush1.msra.mxu0 0.0
        %1579 = vmatprep.subr.mxu0 0.0
        %1580 = vmatpush1.msra.mxu0 0.0
        %1581 = vmatprep.subr.mxu0 0.0
        %1582 = vmatpush1.msra.mxu0 0.0
        %1583 = vmatprep.subr.mxu0 0.0
        %1584 = vmatpush1.msra.mxu0 0.0
        %1585 = vmatprep.subr.mxu0 0.0
        %1586 = vmatpush1.msra.mxu0 0.0
        %1587 = vmatprep.subr.mxu0 0.0
        %1588 = vmatpush1.msra.mxu0 0.0
        %1589 = vmatprep.subr.mxu0 0.0
        %1590 = vmatpush1.msra.mxu0 0.0
        %1591 = vmatprep.subr.mxu0 0.0
        %1592 = vmatpush1.msra.mxu0 0.0
        %1593 = vmatprep.subr.mxu0 0.0
        %1594 = vmatpush1.msra.mxu0 0.0
        %1595 = vmatprep.subr.mxu0 0.0
        %1596 = vmatpush1.msra.mxu0 0.0
        %1597 = vmatprep.subr.mxu0 0.0
        %1598 = vmatpush1.msra.mxu0 0.0
        %1599 = vmatprep.subr.mxu0 0.0
        %1600 = vmatpush1.msra.mxu0 0.0
        %1601 = vmatprep.subr.mxu0 0.0
        %1602 = vmatpush1.msra.mxu0 0.0
        %1603 = vmatprep.subr.mxu0 0.0
        %1604 = vmatpush1.msra.mxu0 0.0
        %1605 = vmatprep.subr.mxu0 0.0
        %1606 = vmatpush1.msra.mxu0 0.0
        %1607 = vmatprep.subr.mxu0 0.0
        %1608 = vmatpush1.msra.mxu0 0.0
        %1609 = vmatprep.subr.mxu0 0.0
        %1610 = vmatpush1.msra.mxu0 0.0
        %1611 = vmatprep.subr.mxu0 0.0
        %1612 = vmatpush1.msra.mxu0 0.0
        %1613 = vmatprep.subr.mxu0 0.0
        %1614 = vmatpush1.msra.mxu0 0.0
        %1615 = vmatprep.subr.mxu0 0.0
        %1616 = vmatpush1.msra.mxu0 0.0
        %1617 = vmatprep.subr.mxu0 0.0
        %1618 = vmatpush1.msra.mxu0 0.0
        %1619 = vmatprep.subr.mxu0 0.0
        %1620 = vmatpush1.msra.mxu0 0.0
        %1621 = vmatprep.subr.mxu0 0.0
        %1622 = vmatpush1.msra.mxu0 0.0
        %1623 = vmatprep.subr.mxu0 0.0
        %1624 = vmatpush1.msra.mxu0 0.0
        %1625 = vmatprep.subr.mxu0 0.0
        %1626 = vmatpush1.msra.mxu0 0.0
        %1627 = vmatprep.subr.mxu0 0.0
        %1628 = vmatpush1.msra.mxu0 0.0
        %1629 = vmatprep.mubr.f32.mxu0 0.0
        %1630 = vmatmul.mubr.f32.gmra.mrb[0].mxu0 %v1563
        %v1631 = vpop.f32.mrb[0].mxu0
        %v1632 = vadd.f32 %v1549, %v1631
        %v1633 = vpop.f32.mrb[0].mxu0
        %1634 = vdwg.mxu0
        %v1636 = vsel %vm576, %v1450, 0
        %v1639 = vsel %vm576, %v1542, 0
        %1641 = vmatprep.subr.mxu0 0.0
        %1642 = vmatpush1.xpose.msra.mxu0 %v1639
        %1643 = vmatprep.subr.mxu0 0.0
        %1644 = vmatpush1.xpose.msra.mxu0 0.0
        %1645 = vmatprep.subr.mxu0 0.0
        %1646 = vmatpush1.xpose.msra.mxu0 0.0
        %1647 = vmatprep.subr.mxu0 0.0
        %1648 = vmatpush1.xpose.msra.mxu0 0.0
        %1649 = vmatprep.subr.mxu0 0.0
        %1650 = vmatpush1.xpose.msra.mxu0 0.0
        %1651 = vmatprep.subr.mxu0 0.0
        %1652 = vmatpush1.xpose.msra.mxu0 0.0
        %1653 = vmatprep.subr.mxu0 0.0
        %1654 = vmatpush1.xpose.msra.mxu0 0.0
        %1655 = vmatprep.subr.mxu0 0.0
        %1656 = vmatpush1.xpose.msra.mxu0 0.0
        %1657 = vmatprep.subr.mxu0 0.0
        %1658 = vmatpush1.xpose.msra.mxu0 0.0
        %1659 = vmatprep.subr.mxu0 0.0
        %1660 = vmatpush1.xpose.msra.mxu0 0.0
        %1661 = vmatprep.subr.mxu0 0.0
        %1662 = vmatpush1.xpose.msra.mxu0 0.0
        %1663 = vmatprep.subr.mxu0 0.0
        %1664 = vmatpush1.xpose.msra.mxu0 0.0
        %1665 = vmatprep.subr.mxu0 0.0
        %1666 = vmatpush1.xpose.msra.mxu0 0.0
        %1667 = vmatprep.subr.mxu0 0.0
        %1668 = vmatpush1.xpose.msra.mxu0 0.0
        %1669 = vmatprep.subr.mxu0 0.0
        %1670 = vmatpush1.xpose.msra.mxu0 0.0
        %1671 = vmatprep.subr.mxu0 0.0
        %1672 = vmatpush1.xpose.msra.mxu0 0.0
        %1673 = vmatprep.subr.mxu0 0.0
        %1674 = vmatpush1.xpose.msra.mxu0 0.0
        %1675 = vmatprep.subr.mxu0 0.0
        %1676 = vmatpush1.xpose.msra.mxu0 0.0
        %1677 = vmatprep.subr.mxu0 0.0
        %1678 = vmatpush1.xpose.msra.mxu0 0.0
        %1679 = vmatprep.subr.mxu0 0.0
        %1680 = vmatpush1.xpose.msra.mxu0 0.0
        %1681 = vmatprep.subr.mxu0 0.0
        %1682 = vmatpush1.xpose.msra.mxu0 0.0
        %1683 = vmatprep.subr.mxu0 0.0
        %1684 = vmatpush1.xpose.msra.mxu0 0.0
        %1685 = vmatprep.subr.mxu0 0.0
        %1686 = vmatpush1.xpose.msra.mxu0 0.0
        %1687 = vmatprep.subr.mxu0 0.0
        %1688 = vmatpush1.xpose.msra.mxu0 0.0
        %1689 = vmatprep.subr.mxu0 0.0
        %1690 = vmatpush1.xpose.msra.mxu0 0.0
        %1691 = vmatprep.subr.mxu0 0.0
        %1692 = vmatpush1.xpose.msra.mxu0 0.0
        %1693 = vmatprep.subr.mxu0 0.0
        %1694 = vmatpush1.xpose.msra.mxu0 0.0
        %1695 = vmatprep.subr.mxu0 0.0
        %1696 = vmatpush1.xpose.msra.mxu0 0.0
        %1697 = vmatprep.subr.mxu0 0.0
        %1698 = vmatpush1.xpose.msra.mxu0 0.0
        %1699 = vmatprep.subr.mxu0 0.0
        %1700 = vmatpush1.xpose.msra.mxu0 0.0
        %1701 = vmatprep.subr.mxu0 0.0
        %1702 = vmatpush1.xpose.msra.mxu0 0.0
        %1703 = vmatprep.subr.mxu0 0.0
        %1704 = vmatpush1.xpose.msra.mxu0 0.0
        %1705 = vmatprep.mubr.f32.mxu0 0.0
        %1706 = vmatmul.mubr.f32.gmra.mrb[0].mxu0 %v1636
        %v1707 = vpop.f32.mrb[0].mxu0
        %v1708 = vadd.f32 0.0, %v1707
        %v1709 = vpop.f32.mrb[0].mxu0
        %1710 = vdwg.mxu0
        %1711 = vrot.lane.b32.xlu0 %v1450, 120
        %v1712 = vpop.permute.xlu0 %1711
        %1713 = vrot.lane.b32.xlu0 %v1542, 120
        %v1714 = vpop.permute.xlu0 %1713
        %v1715 = vsel %vm576, %v1712, 0
        %v1717 = vsel %vm576, %v1714, 0
        %1719 = vmatprep.subr.mxu0 0.0
        %1720 = vmatpush1.xpose.msra.mxu0 %v1717
        %1721 = vmatprep.subr.mxu0 0.0
        %1722 = vmatpush1.xpose.msra.mxu0 0.0
        %1723 = vmatprep.subr.mxu0 0.0
        %1724 = vmatpush1.xpose.msra.mxu0 0.0
        %1725 = vmatprep.subr.mxu0 0.0
        %1726 = vmatpush1.xpose.msra.mxu0 0.0
        %1727 = vmatprep.subr.mxu0 0.0
        %1728 = vmatpush1.xpose.msra.mxu0 0.0
        %1729 = vmatprep.subr.mxu0 0.0
        %1730 = vmatpush1.xpose.msra.mxu0 0.0
        %1731 = vmatprep.subr.mxu0 0.0
        %1732 = vmatpush1.xpose.msra.mxu0 0.0
        %1733 = vmatprep.subr.mxu0 0.0
        %1734 = vmatpush1.xpose.msra.mxu0 0.0
        %1735 = vmatprep.subr.mxu0 0.0
        %1736 = vmatpush1.xpose.msra.mxu0 0.0
        %1737 = vmatprep.subr.mxu0 0.0
        %1738 = vmatpush1.xpose.msra.mxu0 0.0
        %1739 = vmatprep.subr.mxu0 0.0
        %1740 = vmatpush1.xpose.msra.mxu0 0.0
        %1741 = vmatprep.subr.mxu0 0.0
        %1742 = vmatpush1.xpose.msra.mxu0 0.0
        %1743 = vmatprep.subr.mxu0 0.0
        %1744 = vmatpush1.xpose.msra.mxu0 0.0
        %1745 = vmatprep.subr.mxu0 0.0
        %1746 = vmatpush1.xpose.msra.mxu0 0.0
        %1747 = vmatprep.subr.mxu0 0.0
        %1748 = vmatpush1.xpose.msra.mxu0 0.0
        %1749 = vmatprep.subr.mxu0 0.0
        %1750 = vmatpush1.xpose.msra.mxu0 0.0
        %1751 = vmatprep.subr.mxu0 0.0
        %1752 = vmatpush1.xpose.msra.mxu0 0.0
        %1753 = vmatprep.subr.mxu0 0.0
        %1754 = vmatpush1.xpose.msra.mxu0 0.0
        %1755 = vmatprep.subr.mxu0 0.0
        %1756 = vmatpush1.xpose.msra.mxu0 0.0
        %1757 = vmatprep.subr.mxu0 0.0
        %1758 = vmatpush1.xpose.msra.mxu0 0.0
        %1759 = vmatprep.subr.mxu0 0.0
        %1760 = vmatpush1.xpose.msra.mxu0 0.0
        %1761 = vmatprep.subr.mxu0 0.0
        %1762 = vmatpush1.xpose.msra.mxu0 0.0
        %1763 = vmatprep.subr.mxu0 0.0
        %1764 = vmatpush1.xpose.msra.mxu0 0.0
        %1765 = vmatprep.subr.mxu0 0.0
        %1766 = vmatpush1.xpose.msra.mxu0 0.0
        %1767 = vmatprep.subr.mxu0 0.0
        %1768 = vmatpush1.xpose.msra.mxu0 0.0
        %1769 = vmatprep.subr.mxu0 0.0
        %1770 = vmatpush1.xpose.msra.mxu0 0.0
        %1771 = vmatprep.subr.mxu0 0.0
        %1772 = vmatpush1.xpose.msra.mxu0 0.0
        %1773 = vmatprep.subr.mxu0 0.0
        %1774 = vmatpush1.xpose.msra.mxu0 0.0
        %1775 = vmatprep.subr.mxu0 0.0
        %1776 = vmatpush1.xpose.msra.mxu0 0.0
        %1777 = vmatprep.subr.mxu0 0.0
        %1778 = vmatpush1.xpose.msra.mxu0 0.0
        %1779 = vmatprep.subr.mxu0 0.0
        %1780 = vmatpush1.xpose.msra.mxu0 0.0
        %1781 = vmatprep.subr.mxu0 0.0
        %1782 = vmatpush1.xpose.msra.mxu0 0.0
        %1783 = vmatprep.mubr.f32.mxu0 0.0
        %1784 = vmatmul.mubr.f32.gmra.mrb[0].mxu0 %v1715
        %v1785 = vpop.f32.mrb[0].mxu0
        %v1786 = vadd.f32 0.0, %v1785
        %v1787 = vpop.f32.mrb[0].mxu0
        %1788 = vdwg.mxu0
        %1789 = vrot.lane.b32.xlu0 %v1450, 112
        %v1790 = vpop.permute.xlu0 %1789
        %1791 = vrot.lane.b32.xlu0 %v1542, 112
        %v1792 = vpop.permute.xlu0 %1791
        %v1793 = vsel %vm576, %v1790, 0
        %v1795 = vsel %vm576, %v1792, 0
        %1797 = vmatprep.subr.mxu0 0.0
        %1798 = vmatpush1.xpose.msra.mxu0 %v1795
        %1799 = vmatprep.subr.mxu0 0.0
        %1800 = vmatpush1.xpose.msra.mxu0 0.0
        %1801 = vmatprep.subr.mxu0 0.0
        %1802 = vmatpush1.xpose.msra.mxu0 0.0
        %1803 = vmatprep.subr.mxu0 0.0
        %1804 = vmatpush1.xpose.msra.mxu0 0.0
        %1805 = vmatprep.subr.mxu0 0.0
        %1806 = vmatpush1.xpose.msra.mxu0 0.0
        %1807 = vmatprep.subr.mxu0 0.0
        %1808 = vmatpush1.xpose.msra.mxu0 0.0
        %1809 = vmatprep.subr.mxu0 0.0
        %1810 = vmatpush1.xpose.msra.mxu0 0.0
        %1811 = vmatprep.subr.mxu0 0.0
        %1812 = vmatpush1.xpose.msra.mxu0 0.0
        %1813 = vmatprep.subr.mxu0 0.0
        %1814 = vmatpush1.xpose.msra.mxu0 0.0
        %1815 = vmatprep.subr.mxu0 0.0
        %1816 = vmatpush1.xpose.msra.mxu0 0.0
        %1817 = vmatprep.subr.mxu0 0.0
        %1818 = vmatpush1.xpose.msra.mxu0 0.0
        %1819 = vmatprep.subr.mxu0 0.0
        %1820 = vmatpush1.xpose.msra.mxu0 0.0
        %1821 = vmatprep.subr.mxu0 0.0
        %1822 = vmatpush1.xpose.msra.mxu0 0.0
        %1823 = vmatprep.subr.mxu0 0.0
        %1824 = vmatpush1.xpose.msra.mxu0 0.0
        %1825 = vmatprep.subr.mxu0 0.0
        %1826 = vmatpush1.xpose.msra.mxu0 0.0
        %1827 = vmatprep.subr.mxu0 0.0
        %1828 = vmatpush1.xpose.msra.mxu0 0.0
        %1829 = vmatprep.subr.mxu0 0.0
        %1830 = vmatpush1.xpose.msra.mxu0 0.0
        %1831 = vmatprep.subr.mxu0 0.0
        %1832 = vmatpush1.xpose.msra.mxu0 0.0
        %1833 = vmatprep.subr.mxu0 0.0
        %1834 = vmatpush1.xpose.msra.mxu0 0.0
        %1835 = vmatprep.subr.mxu0 0.0
        %1836 = vmatpush1.xpose.msra.mxu0 0.0
        %1837 = vmatprep.subr.mxu0 0.0
        %1838 = vmatpush1.xpose.msra.mxu0 0.0
        %1839 = vmatprep.subr.mxu0 0.0
        %1840 = vmatpush1.xpose.msra.mxu0 0.0
        %1841 = vmatprep.subr.mxu0 0.0
        %1842 = vmatpush1.xpose.msra.mxu0 0.0
        %1843 = vmatprep.subr.mxu0 0.0
        %1844 = vmatpush1.xpose.msra.mxu0 0.0
        %1845 = vmatprep.subr.mxu0 0.0
        %1846 = vmatpush1.xpose.msra.mxu0 0.0
        %1847 = vmatprep.subr.mxu0 0.0
        %1848 = vmatpush1.xpose.msra.mxu0 0.0
        %1849 = vmatprep.subr.mxu0 0.0
        %1850 = vmatpush1.xpose.msra.mxu0 0.0
        %1851 = vmatprep.subr.mxu0 0.0
        %1852 = vmatpush1.xpose.msra.mxu0 0.0
        %1853 = vmatprep.subr.mxu0 0.0
        %1854 = vmatpush1.xpose.msra.mxu0 0.0
        %1855 = vmatprep.subr.mxu0 0.0
        %1856 = vmatpush1.xpose.msra.mxu0 0.0
        %1857 = vmatprep.subr.mxu0 0.0
        %1858 = vmatpush1.xpose.msra.mxu0 0.0
        %1859 = vmatprep.subr.mxu0 0.0
        %1860 = vmatpush1.xpose.msra.mxu0 0.0
        %1861 = vmatprep.mubr.f32.mxu0 0.0
        %1862 = vmatmul.mubr.f32.gmra.mrb[0].mxu0 %v1793
        %v1863 = vpop.f32.mrb[0].mxu0
        %v1864 = vadd.f32 0.0, %v1863
        %v1865 = vpop.f32.mrb[0].mxu0
        %1866 = vdwg.mxu0
        %1867 = vrot.lane.b32.xlu0 %v1450, 104
        %v1868 = vpop.permute.xlu0 %1867
        %1869 = vrot.lane.b32.xlu0 %v1542, 104
        %v1870 = vpop.permute.xlu0 %1869
        %v1871 = vsel %vm576, %v1868, 0
        %v1873 = vsel %vm576, %v1870, 0
        %1875 = vmatprep.subr.mxu0 0.0
        %1876 = vmatpush1.xpose.msra.mxu0 %v1873
        %1877 = vmatprep.subr.mxu0 0.0
        %1878 = vmatpush1.xpose.msra.mxu0 0.0
        %1879 = vmatprep.subr.mxu0 0.0
        %1880 = vmatpush1.xpose.msra.mxu0 0.0
        %1881 = vmatprep.subr.mxu0 0.0
        %1882 = vmatpush1.xpose.msra.mxu0 0.0
        %1883 = vmatprep.subr.mxu0 0.0
        %1884 = vmatpush1.xpose.msra.mxu0 0.0
        %1885 = vmatprep.subr.mxu0 0.0
        %1886 = vmatpush1.xpose.msra.mxu0 0.0
        %1887 = vmatprep.subr.mxu0 0.0
        %1888 = vmatpush1.xpose.msra.mxu0 0.0
        %1889 = vmatprep.subr.mxu0 0.0
        %1890 = vmatpush1.xpose.msra.mxu0 0.0
        %1891 = vmatprep.subr.mxu0 0.0
        %1892 = vmatpush1.xpose.msra.mxu0 0.0
        %1893 = vmatprep.subr.mxu0 0.0
        %1894 = vmatpush1.xpose.msra.mxu0 0.0
        %1895 = vmatprep.subr.mxu0 0.0
        %1896 = vmatpush1.xpose.msra.mxu0 0.0
        %1897 = vmatprep.subr.mxu0 0.0
        %1898 = vmatpush1.xpose.msra.mxu0 0.0
        %1899 = vmatprep.subr.mxu0 0.0
        %1900 = vmatpush1.xpose.msra.mxu0 0.0
        %1901 = vmatprep.subr.mxu0 0.0
        %1902 = vmatpush1.xpose.msra.mxu0 0.0
        %1903 = vmatprep.subr.mxu0 0.0
        %1904 = vmatpush1.xpose.msra.mxu0 0.0
        %1905 = vmatprep.subr.mxu0 0.0
        %1906 = vmatpush1.xpose.msra.mxu0 0.0
        %1907 = vmatprep.subr.mxu0 0.0
        %1908 = vmatpush1.xpose.msra.mxu0 0.0
        %1909 = vmatprep.subr.mxu0 0.0
        %1910 = vmatpush1.xpose.msra.mxu0 0.0
        %1911 = vmatprep.subr.mxu0 0.0
        %1912 = vmatpush1.xpose.msra.mxu0 0.0
        %1913 = vmatprep.subr.mxu0 0.0
        %1914 = vmatpush1.xpose.msra.mxu0 0.0
        %1915 = vmatprep.subr.mxu0 0.0
        %1916 = vmatpush1.xpose.msra.mxu0 0.0
        %1917 = vmatprep.subr.mxu0 0.0
        %1918 = vmatpush1.xpose.msra.mxu0 0.0
        %1919 = vmatprep.subr.mxu0 0.0
        %1920 = vmatpush1.xpose.msra.mxu0 0.0
        %1921 = vmatprep.subr.mxu0 0.0
        %1922 = vmatpush1.xpose.msra.mxu0 0.0
        %1923 = vmatprep.subr.mxu0 0.0
        %1924 = vmatpush1.xpose.msra.mxu0 0.0
        %1925 = vmatprep.subr.mxu0 0.0
        %1926 = vmatpush1.xpose.msra.mxu0 0.0
        %1927 = vmatprep.subr.mxu0 0.0
        %1928 = vmatpush1.xpose.msra.mxu0 0.0
        %1929 = vmatprep.subr.mxu0 0.0
        %1930 = vmatpush1.xpose.msra.mxu0 0.0
        %1931 = vmatprep.subr.mxu0 0.0
        %1932 = vmatpush1.xpose.msra.mxu0 0.0
        %1933 = vmatprep.subr.mxu0 0.0
        %1934 = vmatpush1.xpose.msra.mxu0 0.0
        %1935 = vmatprep.subr.mxu0 0.0
        %1936 = vmatpush1.xpose.msra.mxu0 0.0
        %1937 = vmatprep.subr.mxu0 0.0
        %1938 = vmatpush1.xpose.msra.mxu0 0.0
        %1939 = vmatprep.mubr.f32.mxu0 0.0
        %1940 = vmatmul.mubr.f32.gmra.mrb[0].mxu0 %v1871
        %v1941 = vpop.f32.mrb[0].mxu0
        %v1942 = vadd.f32 0.0, %v1941
        %v1943 = vpop.f32.mrb[0].mxu0
        %1944 = vdwg.mxu0
        %v1945 = vadd.f32 %v1708, %v488
        %v1946 = vadd.f32 %v1786, %v488
        %v1947 = vadd.f32 %v1864, %v488
        %v1948 = vadd.f32 %v1942, %v488
        %v1949 = vsel %vm576, %v1945, -inf
        %1950 = vmax.xlane.f32.xlu0 %v1949
        %v1951 = vpop.xlane.xlu0 %1950
        %v1952 = vsel %vm576, %v1946, -inf
        %1953 = vmax.xlane.f32.xlu0 %v1952
        %v1954 = vpop.xlane.xlu0 %1953
        %v1955 = vsel %vm576, %v1947, -inf
        %1956 = vmax.xlane.f32.xlu0 %v1955
        %v1957 = vpop.xlane.xlu0 %1956
        %v1958 = vsel %vm576, %v1948, -inf
        %1959 = vmax.xlane.f32.xlu0 %v1958
        %v1960 = vpop.xlane.xlu0 %1959
        %v1961 = vsub.f32 %v1945, %v1951
        %v1962 = vsub.f32 %v1946, %v1954
        %v1963 = vsub.f32 %v1947, %v1957
        %v1964 = vsub.f32 %v1948, %v1960
        %v1965 = vmul.f32 %v1961, 1.442695
        %v1966 = vpow.pop %v1965
        %v1967 = vmul.f32 %v1962, 1.442695
        %v1968 = vpow.pop %v1967
        %v1969 = vmul.f32 %v1963, 1.442695
        %v1970 = vpow.pop %v1969
        %v1971 = vmul.f32 %v1964, 1.442695
        %v1972 = vpow.pop %v1971
        %v1973 = vsel %vm576, %v1966, 0.0
        %1974 = vadd.xlane.f32.xlu0 %v1973
        %v1975 = vpop.xlane.xlu0 %1974
        %v1976 = vsel %vm576, %v1968, 0.0
        %1977 = vadd.xlane.f32.xlu0 %v1976
        %v1978 = vpop.xlane.xlu0 %1977
        %v1979 = vsel %vm576, %v1970, 0.0
        %1980 = vadd.xlane.f32.xlu0 %v1979
        %v1981 = vpop.xlane.xlu0 %1980
        %v1982 = vsel %vm576, %v1972, 0.0
        %1983 = vadd.xlane.f32.xlu0 %v1982
        %v1984 = vpop.xlane.xlu0 %1983
        %v1985 = vrcp.pop %v1975
        %v1986 = vrcp.pop %v1978
        %v1987 = vrcp.pop %v1981
        %v1988 = vrcp.pop %v1984
        %v1989 = vmul.f32 %v1966, %v1985
        %v1990 = vmul.f32 %v1968, %v1986
        %v1991 = vmul.f32 %v1970, %v1987
        %v1992 = vmul.f32 %v1972, %v1988
        %v1994 = vsel %vm576, %v1989, 0
        %1996 = vmatprep.subr.mxu0 0.0
        %1997 = vmatpush1.msra.mxu0 %v1632
        %1998 = vmatprep.subr.mxu0 0.0
        %1999 = vmatpush1.msra.mxu0 0.0
        %2000 = vmatprep.subr.mxu0 0.0
        %2001 = vmatpush1.msra.mxu0 0.0
        %2002 = vmatprep.subr.mxu0 0.0
        %2003 = vmatpush1.msra.mxu0 0.0
        %2004 = vmatprep.subr.mxu0 0.0
        %2005 = vmatpush1.msra.mxu0 0.0
        %2006 = vmatprep.subr.mxu0 0.0
        %2007 = vmatpush1.msra.mxu0 0.0
        %2008 = vmatprep.subr.mxu0 0.0
        %2009 = vmatpush1.msra.mxu0 0.0
        %2010 = vmatprep.subr.mxu0 0.0
        %2011 = vmatpush1.msra.mxu0 0.0
        %2012 = vmatprep.subr.mxu0 0.0
        %2013 = vmatpush1.msra.mxu0 0.0
        %2014 = vmatprep.subr.mxu0 0.0
        %2015 = vmatpush1.msra.mxu0 0.0
        %2016 = vmatprep.subr.mxu0 0.0
        %2017 = vmatpush1.msra.mxu0 0.0
        %2018 = vmatprep.subr.mxu0 0.0
        %2019 = vmatpush1.msra.mxu0 0.0
        %2020 = vmatprep.subr.mxu0 0.0
        %2021 = vmatpush1.msra.mxu0 0.0
        %2022 = vmatprep.subr.mxu0 0.0
        %2023 = vmatpush1.msra.mxu0 0.0
        %2024 = vmatprep.subr.mxu0 0.0
        %2025 = vmatpush1.msra.mxu0 0.0
        %2026 = vmatprep.subr.mxu0 0.0
        %2027 = vmatpush1.msra.mxu0 0.0
        %2028 = vmatprep.subr.mxu0 0.0
        %2029 = vmatpush1.msra.mxu0 0.0
        %2030 = vmatprep.subr.mxu0 0.0
        %2031 = vmatpush1.msra.mxu0 0.0
        %2032 = vmatprep.subr.mxu0 0.0
        %2033 = vmatpush1.msra.mxu0 0.0
        %2034 = vmatprep.subr.mxu0 0.0
        %2035 = vmatpush1.msra.mxu0 0.0
        %2036 = vmatprep.subr.mxu0 0.0
        %2037 = vmatpush1.msra.mxu0 0.0
        %2038 = vmatprep.subr.mxu0 0.0
        %2039 = vmatpush1.msra.mxu0 0.0
        %2040 = vmatprep.subr.mxu0 0.0
        %2041 = vmatpush1.msra.mxu0 0.0
        %2042 = vmatprep.subr.mxu0 0.0
        %2043 = vmatpush1.msra.mxu0 0.0
        %2044 = vmatprep.subr.mxu0 0.0
        %2045 = vmatpush1.msra.mxu0 0.0
        %2046 = vmatprep.subr.mxu0 0.0
        %2047 = vmatpush1.msra.mxu0 0.0
        %2048 = vmatprep.subr.mxu0 0.0
        %2049 = vmatpush1.msra.mxu0 0.0
        %2050 = vmatprep.subr.mxu0 0.0
        %2051 = vmatpush1.msra.mxu0 0.0
        %2052 = vmatprep.subr.mxu0 0.0
        %2053 = vmatpush1.msra.mxu0 0.0
        %2054 = vmatprep.subr.mxu0 0.0
        %2055 = vmatpush1.msra.mxu0 0.0
        %2056 = vmatprep.subr.mxu0 0.0
        %2057 = vmatpush1.msra.mxu0 0.0
        %2058 = vmatprep.subr.mxu0 0.0
        %2059 = vmatpush1.msra.mxu0 0.0
        %2060 = vmatprep.mubr.f32.mxu0 0.0
        %2061 = vmatmul.mubr.f32.gmra.mrb[0].mxu0 %v1994
        %v2062 = vpop.f32.mrb[0].mxu0
        %v2063 = vadd.f32 0.0, %v2062
        %v2064 = vpop.f32.mrb[0].mxu0
        %2065 = vdwg.mxu0
        %2067 = vrot.lane.b32.xlu0 %v1632, 120
        %v2068 = vpop.permute.xlu0 %2067
        %v2071 = vsel %vm576, %v1990, 0
        %2073 = vmatprep.subr.mxu0 0.0
        %2074 = vmatpush1.msra.mxu0 %v2068
        %2075 = vmatprep.subr.mxu0 0.0
        %2076 = vmatpush1.msra.mxu0 0.0
        %2077 = vmatprep.subr.mxu0 0.0
        %2078 = vmatpush1.msra.mxu0 0.0
        %2079 = vmatprep.subr.mxu0 0.0
        %2080 = vmatpush1.msra.mxu0 0.0
        %2081 = vmatprep.subr.mxu0 0.0
        %2082 = vmatpush1.msra.mxu0 0.0
        %2083 = vmatprep.subr.mxu0 0.0
        %2084 = vmatpush1.msra.mxu0 0.0
        %2085 = vmatprep.subr.mxu0 0.0
        %2086 = vmatpush1.msra.mxu0 0.0
        %2087 = vmatprep.subr.mxu0 0.0
        %2088 = vmatpush1.msra.mxu0 0.0
        %2089 = vmatprep.subr.mxu0 0.0
        %2090 = vmatpush1.msra.mxu0 0.0
        %2091 = vmatprep.subr.mxu0 0.0
        %2092 = vmatpush1.msra.mxu0 0.0
        %2093 = vmatprep.subr.mxu0 0.0
        %2094 = vmatpush1.msra.mxu0 0.0
        %2095 = vmatprep.subr.mxu0 0.0
        %2096 = vmatpush1.msra.mxu0 0.0
        %2097 = vmatprep.subr.mxu0 0.0
        %2098 = vmatpush1.msra.mxu0 0.0
        %2099 = vmatprep.subr.mxu0 0.0
        %2100 = vmatpush1.msra.mxu0 0.0
        %2101 = vmatprep.subr.mxu0 0.0
        %2102 = vmatpush1.msra.mxu0 0.0
        %2103 = vmatprep.subr.mxu0 0.0
        %2104 = vmatpush1.msra.mxu0 0.0
        %2105 = vmatprep.subr.mxu0 0.0
        %2106 = vmatpush1.msra.mxu0 0.0
        %2107 = vmatprep.subr.mxu0 0.0
        %2108 = vmatpush1.msra.mxu0 0.0
        %2109 = vmatprep.subr.mxu0 0.0
        %2110 = vmatpush1.msra.mxu0 0.0
        %2111 = vmatprep.subr.mxu0 0.0
        %2112 = vmatpush1.msra.mxu0 0.0
        %2113 = vmatprep.subr.mxu0 0.0
        %2114 = vmatpush1.msra.mxu0 0.0
        %2115 = vmatprep.subr.mxu0 0.0
        %2116 = vmatpush1.msra.mxu0 0.0
        %2117 = vmatprep.subr.mxu0 0.0
        %2118 = vmatpush1.msra.mxu0 0.0
        %2119 = vmatprep.subr.mxu0 0.0
        %2120 = vmatpush1.msra.mxu0 0.0
        %2121 = vmatprep.subr.mxu0 0.0
        %2122 = vmatpush1.msra.mxu0 0.0
        %2123 = vmatprep.subr.mxu0 0.0
        %2124 = vmatpush1.msra.mxu0 0.0
        %2125 = vmatprep.subr.mxu0 0.0
        %2126 = vmatpush1.msra.mxu0 0.0
        %2127 = vmatprep.subr.mxu0 0.0
        %2128 = vmatpush1.msra.mxu0 0.0
        %2129 = vmatprep.subr.mxu0 0.0
        %2130 = vmatpush1.msra.mxu0 0.0
        %2131 = vmatprep.subr.mxu0 0.0
        %2132 = vmatpush1.msra.mxu0 0.0
        %2133 = vmatprep.subr.mxu0 0.0
        %2134 = vmatpush1.msra.mxu0 0.0
        %2135 = vmatprep.subr.mxu0 0.0
        %2136 = vmatpush1.msra.mxu0 0.0
        %2137 = vmatprep.mubr.f32.mxu0 0.0
        %2138 = vmatmul.mubr.f32.gmra.mrb[0].mxu0 %v2071
        %v2139 = vpop.f32.mrb[0].mxu0
        %v2140 = vadd.f32 0.0, %v2139
        %v2141 = vpop.f32.mrb[0].mxu0
        %2142 = vdwg.mxu0
        %2143 = vrot.lane.b32.xlu0 %v1632, 112
        %v2144 = vpop.permute.xlu0 %2143
        %v2147 = vsel %vm576, %v1991, 0
        %2149 = vmatprep.subr.mxu0 0.0
        %2150 = vmatpush1.msra.mxu0 %v2144
        %2151 = vmatprep.subr.mxu0 0.0
        %2152 = vmatpush1.msra.mxu0 0.0
        %2153 = vmatprep.subr.mxu0 0.0
        %2154 = vmatpush1.msra.mxu0 0.0
        %2155 = vmatprep.subr.mxu0 0.0
        %2156 = vmatpush1.msra.mxu0 0.0
        %2157 = vmatprep.subr.mxu0 0.0
        %2158 = vmatpush1.msra.mxu0 0.0
        %2159 = vmatprep.subr.mxu0 0.0
        %2160 = vmatpush1.msra.mxu0 0.0
        %2161 = vmatprep.subr.mxu0 0.0
        %2162 = vmatpush1.msra.mxu0 0.0
        %2163 = vmatprep.subr.mxu0 0.0
        %2164 = vmatpush1.msra.mxu0 0.0
        %2165 = vmatprep.subr.mxu0 0.0
        %2166 = vmatpush1.msra.mxu0 0.0
        %2167 = vmatprep.subr.mxu0 0.0
        %2168 = vmatpush1.msra.mxu0 0.0
        %2169 = vmatprep.subr.mxu0 0.0
        %2170 = vmatpush1.msra.mxu0 0.0
        %2171 = vmatprep.subr.mxu0 0.0
        %2172 = vmatpush1.msra.mxu0 0.0
        %2173 = vmatprep.subr.mxu0 0.0
        %2174 = vmatpush1.msra.mxu0 0.0
        %2175 = vmatprep.subr.mxu0 0.0
        %2176 = vmatpush1.msra.mxu0 0.0
        %2177 = vmatprep.subr.mxu0 0.0
        %2178 = vmatpush1.msra.mxu0 0.0
        %2179 = vmatprep.subr.mxu0 0.0
        %2180 = vmatpush1.msra.mxu0 0.0
        %2181 = vmatprep.subr.mxu0 0.0
        %2182 = vmatpush1.msra.mxu0 0.0
        %2183 = vmatprep.subr.mxu0 0.0
        %2184 = vmatpush1.msra.mxu0 0.0
        %2185 = vmatprep.subr.mxu0 0.0
        %2186 = vmatpush1.msra.mxu0 0.0
        %2187 = vmatprep.subr.mxu0 0.0
        %2188 = vmatpush1.msra.mxu0 0.0
        %2189 = vmatprep.subr.mxu0 0.0
        %2190 = vmatpush1.msra.mxu0 0.0
        %2191 = vmatprep.subr.mxu0 0.0
        %2192 = vmatpush1.msra.mxu0 0.0
        %2193 = vmatprep.subr.mxu0 0.0
        %2194 = vmatpush1.msra.mxu0 0.0
        %2195 = vmatprep.subr.mxu0 0.0
        %2196 = vmatpush1.msra.mxu0 0.0
        %2197 = vmatprep.subr.mxu0 0.0
        %2198 = vmatpush1.msra.mxu0 0.0
        %2199 = vmatprep.subr.mxu0 0.0
        %2200 = vmatpush1.msra.mxu0 0.0
        %2201 = vmatprep.subr.mxu0 0.0
        %2202 = vmatpush1.msra.mxu0 0.0
        %2203 = vmatprep.subr.mxu0 0.0
        %2204 = vmatpush1.msra.mxu0 0.0
        %2205 = vmatprep.subr.mxu0 0.0
        %2206 = vmatpush1.msra.mxu0 0.0
        %2207 = vmatprep.subr.mxu0 0.0
        %2208 = vmatpush1.msra.mxu0 0.0
        %2209 = vmatprep.subr.mxu0 0.0
        %2210 = vmatpush1.msra.mxu0 0.0
        %2211 = vmatprep.subr.mxu0 0.0
        %2212 = vmatpush1.msra.mxu0 0.0
        %2213 = vmatprep.mubr.f32.mxu0 0.0
        %2214 = vmatmul.mubr.f32.gmra.mrb[0].mxu0 %v2147
        %v2215 = vpop.f32.mrb[0].mxu0
        %v2216 = vadd.f32 0.0, %v2215
        %v2217 = vpop.f32.mrb[0].mxu0
        %2218 = vdwg.mxu0
        %2219 = vrot.lane.b32.xlu0 %v1632, 104
        %v2220 = vpop.permute.xlu0 %2219
        %v2223 = vsel %vm576, %v1992, 0
        %2225 = vmatprep.subr.mxu0 0.0
        %2226 = vmatpush1.msra.mxu0 %v2220
        %2227 = vmatprep.subr.mxu0 0.0
        %2228 = vmatpush1.msra.mxu0 0.0
        %2229 = vmatprep.subr.mxu0 0.0
        %2230 = vmatpush1.msra.mxu0 0.0
        %2231 = vmatprep.subr.mxu0 0.0
        %2232 = vmatpush1.msra.mxu0 0.0
        %2233 = vmatprep.subr.mxu0 0.0
        %2234 = vmatpush1.msra.mxu0 0.0
        %2235 = vmatprep.subr.mxu0 0.0
        %2236 = vmatpush1.msra.mxu0 0.0
        %2237 = vmatprep.subr.mxu0 0.0
        %2238 = vmatpush1.msra.mxu0 0.0
        %2239 = vmatprep.subr.mxu0 0.0
        %2240 = vmatpush1.msra.mxu0 0.0
        %2241 = vmatprep.subr.mxu0 0.0
        %2242 = vmatpush1.msra.mxu0 0.0
        %2243 = vmatprep.subr.mxu0 0.0
        %2244 = vmatpush1.msra.mxu0 0.0
        %2245 = vmatprep.subr.mxu0 0.0
        %2246 = vmatpush1.msra.mxu0 0.0
        %2247 = vmatprep.subr.mxu0 0.0
        %2248 = vmatpush1.msra.mxu0 0.0
        %2249 = vmatprep.subr.mxu0 0.0
        %2250 = vmatpush1.msra.mxu0 0.0
        %2251 = vmatprep.subr.mxu0 0.0
        %2252 = vmatpush1.msra.mxu0 0.0
        %2253 = vmatprep.subr.mxu0 0.0
        %2254 = vmatpush1.msra.mxu0 0.0
        %2255 = vmatprep.subr.mxu0 0.0
        %2256 = vmatpush1.msra.mxu0 0.0
        %2257 = vmatprep.subr.mxu0 0.0
        %2258 = vmatpush1.msra.mxu0 0.0
        %2259 = vmatprep.subr.mxu0 0.0
        %2260 = vmatpush1.msra.mxu0 0.0
        %2261 = vmatprep.subr.mxu0 0.0
        %2262 = vmatpush1.msra.mxu0 0.0
        %2263 = vmatprep.subr.mxu0 0.0
        %2264 = vmatpush1.msra.mxu0 0.0
        %2265 = vmatprep.subr.mxu0 0.0
        %2266 = vmatpush1.msra.mxu0 0.0
        %2267 = vmatprep.subr.mxu0 0.0
        %2268 = vmatpush1.msra.mxu0 0.0
        %2269 = vmatprep.subr.mxu0 0.0
        %2270 = vmatpush1.msra.mxu0 0.0
        %2271 = vmatprep.subr.mxu0 0.0
        %2272 = vmatpush1.msra.mxu0 0.0
        %2273 = vmatprep.subr.mxu0 0.0
        %2274 = vmatpush1.msra.mxu0 0.0
        %2275 = vmatprep.subr.mxu0 0.0
        %2276 = vmatpush1.msra.mxu0 0.0
        %2277 = vmatprep.subr.mxu0 0.0
        %2278 = vmatpush1.msra.mxu0 0.0
        %2279 = vmatprep.subr.mxu0 0.0
        %2280 = vmatpush1.msra.mxu0 0.0
        %2281 = vmatprep.subr.mxu0 0.0
        %2282 = vmatpush1.msra.mxu0 0.0
        %2283 = vmatprep.subr.mxu0 0.0
        %2284 = vmatpush1.msra.mxu0 0.0
        %2285 = vmatprep.subr.mxu0 0.0
        %2286 = vmatpush1.msra.mxu0 0.0
        %2287 = vmatprep.subr.mxu0 0.0
        %2288 = vmatpush1.msra.mxu0 0.0
        %2289 = vmatprep.mubr.f32.mxu0 0.0
        %2290 = vmatmul.mubr.f32.gmra.mrb[0].mxu0 %v2223
        %v2291 = vpop.f32.mrb[0].mxu0
        %v2292 = vadd.f32 0.0, %v2291
        %v2293 = vpop.f32.mrb[0].mxu0
        %2294 = vdwg.mxu0
        %2296 = vrot.lane.b32.xlu0 %v2140, 8
        %v2297 = vpop.permute.xlu0 %2296
        %2300 = vrot.lane.b32.xlu0 %v2216, 16
        %v2301 = vpop.permute.xlu0 %2300
        %2304 = vrot.lane.b32.xlu0 %v2292, 24
        %v2305 = vpop.permute.xlu0 %2304
        %v2307 = vsel %vm576, %v2063, %v2297
        %v2308 = vsel %vm1250, %v2307, %v2301
        %v2309 = vsel %vm1252, %v2308, %v2305
        %v2310 = vld [vmem:[%s8 + $0x10] sm:$0xff]
        %v2311 = vld [vmem:[%s8 + $0x30] sm:$0xff]
        %v2312 = vld [vmem:[%s8 + $0x50] sm:$0xff]
        %v2313 = vld [vmem:[%s8 + $0x70] sm:$0xff]
        %2315 = vrot.lane.b32.xlu0 %v1549, 96
        %v2316 = vpop.permute.xlu0 %2315
        %2318 = vmatprep.subr.mxu0 0.0
        %2319 = vmatpush1.msra.mxu0 %v2310
        %2320 = vmatprep.subr.mxu0 0.0
        %2321 = vmatpush1.msra.mxu0 %v2311
        %2322 = vmatprep.subr.mxu0 0.0
        %2323 = vmatpush1.msra.mxu0 %v2312
        %2324 = vmatprep.subr.mxu0 0.0
        %2325 = vmatpush1.msra.mxu0 %v2313
        %2326 = vmatprep.subr.mxu0 0.0
        %2327 = vmatpush1.msra.mxu0 0.0
        %2328 = vmatprep.subr.mxu0 0.0
        %2329 = vmatpush1.msra.mxu0 0.0
        %2330 = vmatprep.subr.mxu0 0.0
        %2331 = vmatpush1.msra.mxu0 0.0
        %2332 = vmatprep.subr.mxu0 0.0
        %2333 = vmatpush1.msra.mxu0 0.0
        %2334 = vmatprep.subr.mxu0 0.0
        %2335 = vmatpush1.msra.mxu0 0.0
        %2336 = vmatprep.subr.mxu0 0.0
        %2337 = vmatpush1.msra.mxu0 0.0
        %2338 = vmatprep.subr.mxu0 0.0
        %2339 = vmatpush1.msra.mxu0 0.0
        %2340 = vmatprep.subr.mxu0 0.0
        %2341 = vmatpush1.msra.mxu0 0.0
        %2342 = vmatprep.subr.mxu0 0.0
        %2343 = vmatpush1.msra.mxu0 0.0
        %2344 = vmatprep.subr.mxu0 0.0
        %2345 = vmatpush1.msra.mxu0 0.0
        %2346 = vmatprep.subr.mxu0 0.0
        %2347 = vmatpush1.msra.mxu0 0.0
        %2348 = vmatprep.subr.mxu0 0.0
        %2349 = vmatpush1.msra.mxu0 0.0
        %2350 = vmatprep.subr.mxu0 0.0
        %2351 = vmatpush1.msra.mxu0 0.0
        %2352 = vmatprep.subr.mxu0 0.0
        %2353 = vmatpush1.msra.mxu0 0.0
        %2354 = vmatprep.subr.mxu0 0.0
        %2355 = vmatpush1.msra.mxu0 0.0
        %2356 = vmatprep.subr.mxu0 0.0
        %2357 = vmatpush1.msra.mxu0 0.0
        %2358 = vmatprep.subr.mxu0 0.0
        %2359 = vmatpush1.msra.mxu0 0.0
        %2360 = vmatprep.subr.mxu0 0.0
        %2361 = vmatpush1.msra.mxu0 0.0
        %2362 = vmatprep.subr.mxu0 0.0
        %2363 = vmatpush1.msra.mxu0 0.0
        %2364 = vmatprep.subr.mxu0 0.0
        %2365 = vmatpush1.msra.mxu0 0.0
        %2366 = vmatprep.subr.mxu0 0.0
        %2367 = vmatpush1.msra.mxu0 0.0
        %2368 = vmatprep.subr.mxu0 0.0
        %2369 = vmatpush1.msra.mxu0 0.0
        %2370 = vmatprep.subr.mxu0 0.0
        %2371 = vmatpush1.msra.mxu0 0.0
        %2372 = vmatprep.subr.mxu0 0.0
        %2373 = vmatpush1.msra.mxu0 0.0
        %2374 = vmatprep.subr.mxu0 0.0
        %2375 = vmatpush1.msra.mxu0 0.0
        %2376 = vmatprep.subr.mxu0 0.0
        %2377 = vmatpush1.msra.mxu0 0.0
        %2378 = vmatprep.subr.mxu0 0.0
        %2379 = vmatpush1.msra.mxu0 0.0
        %2380 = vmatprep.subr.mxu0 0.0
        %2381 = vmatpush1.msra.mxu0 0.0
        %2382 = vmatprep.mubr.f32.mxu0 0.0
        %2383 = vmatmul.mubr.f32.gmra.mrb[0].mxu0 %v1381
        %v2384 = vpop.f32.mrb[0].mxu0
        %v2385 = vadd.f32 %v2316, %v2384
        %v2386 = vpop.f32.mrb[0].mxu0
        %2387 = vdwg.mxu0
        %2392 = vrot.lane.b32.xlu0 %v2310, 96
        %v2393 = vpop.permute.xlu0 %2392
        %2394 = vrot.lane.b32.xlu0 %v2311, 96
        %v2395 = vpop.permute.xlu0 %2394
        %2396 = vrot.lane.b32.xlu0 %v2312, 96
        %v2397 = vpop.permute.xlu0 %2396
        %2398 = vrot.lane.b32.xlu0 %v2313, 96
        %v2399 = vpop.permute.xlu0 %2398
        %2404 = vrot.lane.b32.xlu0 %v1549, 64
        %v2405 = vpop.permute.xlu0 %2404
        %v2408 = vsel %vm499, %v483, 0
        %v2411 = vsel %vm499, %v484, 0
        %2413 = vmatprep.subr.mxu0 0.0
        %2414 = vmatpush1.msra.mxu0 %v2393
        %2415 = vmatprep.subr.mxu0 0.0
        %2416 = vmatpush1.msra.mxu0 %v2395
        %2417 = vmatprep.subr.mxu0 0.0
        %2418 = vmatpush1.msra.mxu0 %v2397
        %2419 = vmatprep.subr.mxu0 0.0
        %2420 = vmatpush1.msra.mxu0 %v2399
        %2421 = vmatprep.subr.mxu0 0.0
        %2422 = vmatpush1.msra.mxu0 0.0
        %2423 = vmatprep.subr.mxu0 0.0
        %2424 = vmatpush1.msra.mxu0 0.0
        %2425 = vmatprep.subr.mxu0 0.0
        %2426 = vmatpush1.msra.mxu0 0.0
        %2427 = vmatprep.subr.mxu0 0.0
        %2428 = vmatpush1.msra.mxu0 0.0
        %2429 = vmatprep.subr.mxu0 0.0
        %2430 = vmatpush1.msra.mxu0 0.0
        %2431 = vmatprep.subr.mxu0 0.0
        %2432 = vmatpush1.msra.mxu0 0.0
        %2433 = vmatprep.subr.mxu0 0.0
        %2434 = vmatpush1.msra.mxu0 0.0
        %2435 = vmatprep.subr.mxu0 0.0
        %2436 = vmatpush1.msra.mxu0 0.0
        %2437 = vmatprep.subr.mxu0 0.0
        %2438 = vmatpush1.msra.mxu0 0.0
        %2439 = vmatprep.subr.mxu0 0.0
        %2440 = vmatpush1.msra.mxu0 0.0
        %2441 = vmatprep.subr.mxu0 0.0
        %2442 = vmatpush1.msra.mxu0 0.0
        %2443 = vmatprep.subr.mxu0 0.0
        %2444 = vmatpush1.msra.mxu0 0.0
        %2445 = vmatprep.subr.mxu0 0.0
        %2446 = vmatpush1.msra.mxu0 0.0
        %2447 = vmatprep.subr.mxu0 0.0
        %2448 = vmatpush1.msra.mxu0 0.0
        %2449 = vmatprep.subr.mxu0 0.0
        %2450 = vmatpush1.msra.mxu0 0.0
        %2451 = vmatprep.subr.mxu0 0.0
        %2452 = vmatpush1.msra.mxu0 0.0
        %2453 = vmatprep.subr.mxu0 0.0
        %2454 = vmatpush1.msra.mxu0 0.0
        %2455 = vmatprep.subr.mxu0 0.0
        %2456 = vmatpush1.msra.mxu0 0.0
        %2457 = vmatprep.subr.mxu0 0.0
        %2458 = vmatpush1.msra.mxu0 0.0
        %2459 = vmatprep.subr.mxu0 0.0
        %2460 = vmatpush1.msra.mxu0 0.0
        %2461 = vmatprep.subr.mxu0 0.0
        %2462 = vmatpush1.msra.mxu0 0.0
        %2463 = vmatprep.subr.mxu0 0.0
        %2464 = vmatpush1.msra.mxu0 0.0
        %2465 = vmatprep.subr.mxu0 0.0
        %2466 = vmatpush1.msra.mxu0 0.0
        %2467 = vmatprep.subr.mxu0 0.0
        %2468 = vmatpush1.msra.mxu0 0.0
        %2469 = vmatprep.subr.mxu0 0.0
        %2470 = vmatpush1.msra.mxu0 0.0
        %2471 = vmatprep.subr.mxu0 0.0
        %2472 = vmatpush1.msra.mxu0 0.0
        %2473 = vmatprep.subr.mxu0 0.0
        %2474 = vmatpush1.msra.mxu0 0.0
        %2475 = vmatprep.subr.mxu0 0.0
        %2476 = vmatpush1.msra.mxu0 0.0
        %2477 = vmatprep.mubr.f32.mxu0 0.0
        %2478 = vmatmul.mubr.f32.gmra.mrb[0].mxu0 %v2408
        %v2479 = vpop.f32.mrb[0].mxu0
        %v2480 = vadd.f32 %v2405, %v2479
        %v2481 = vpop.f32.mrb[0].mxu0
        %2482 = vmatprep.mubr.f32.mxu0 0.0
        %2483 = vmatmul.mubr.f32.gmra.mrb[0].mxu0 %v2411
        %v2484 = vpop.f32.mrb[0].mxu0
        %v2485 = vadd.f32 %v2405, %v2484
        %v2486 = vpop.f32.mrb[0].mxu0
        %2487 = vdwg.mxu0
        %2488 = vrot.lane.b32.xlu0 %v2310, 64
        %v2489 = vpop.permute.xlu0 %2488
        %2490 = vrot.lane.b32.xlu0 %v2311, 64
        %v2491 = vpop.permute.xlu0 %2490
        %2492 = vrot.lane.b32.xlu0 %v2312, 64
        %v2493 = vpop.permute.xlu0 %2492
        %2494 = vrot.lane.b32.xlu0 %v2313, 64
        %v2495 = vpop.permute.xlu0 %2494
        %2500 = vrot.lane.b32.xlu0 %v1549, 32
        %v2501 = vpop.permute.xlu0 %2500
        %v2504 = vsel %vm499, %v485, 0
        %v2507 = vsel %vm499, %v486, 0
        %2509 = vmatprep.subr.mxu0 0.0
        %2510 = vmatpush1.msra.mxu0 %v2489
        %2511 = vmatprep.subr.mxu0 0.0
        %2512 = vmatpush1.msra.mxu0 %v2491
        %2513 = vmatprep.subr.mxu0 0.0
        %2514 = vmatpush1.msra.mxu0 %v2493
        %2515 = vmatprep.subr.mxu0 0.0
        %2516 = vmatpush1.msra.mxu0 %v2495
        %2517 = vmatprep.subr.mxu0 0.0
        %2518 = vmatpush1.msra.mxu0 0.0
        %2519 = vmatprep.subr.mxu0 0.0
        %2520 = vmatpush1.msra.mxu0 0.0
        %2521 = vmatprep.subr.mxu0 0.0
        %2522 = vmatpush1.msra.mxu0 0.0
        %2523 = vmatprep.subr.mxu0 0.0
        %2524 = vmatpush1.msra.mxu0 0.0
        %2525 = vmatprep.subr.mxu0 0.0
        %2526 = vmatpush1.msra.mxu0 0.0
        %2527 = vmatprep.subr.mxu0 0.0
        %2528 = vmatpush1.msra.mxu0 0.0
        %2529 = vmatprep.subr.mxu0 0.0
        %2530 = vmatpush1.msra.mxu0 0.0
        %2531 = vmatprep.subr.mxu0 0.0
        %2532 = vmatpush1.msra.mxu0 0.0
        %2533 = vmatprep.subr.mxu0 0.0
        %2534 = vmatpush1.msra.mxu0 0.0
        %2535 = vmatprep.subr.mxu0 0.0
        %2536 = vmatpush1.msra.mxu0 0.0
        %2537 = vmatprep.subr.mxu0 0.0
        %2538 = vmatpush1.msra.mxu0 0.0
        %2539 = vmatprep.subr.mxu0 0.0
        %2540 = vmatpush1.msra.mxu0 0.0
        %2541 = vmatprep.subr.mxu0 0.0
        %2542 = vmatpush1.msra.mxu0 0.0
        %2543 = vmatprep.subr.mxu0 0.0
        %2544 = vmatpush1.msra.mxu0 0.0
        %2545 = vmatprep.subr.mxu0 0.0
        %2546 = vmatpush1.msra.mxu0 0.0
        %2547 = vmatprep.subr.mxu0 0.0
        %2548 = vmatpush1.msra.mxu0 0.0
        %2549 = vmatprep.subr.mxu0 0.0
        %2550 = vmatpush1.msra.mxu0 0.0
        %2551 = vmatprep.subr.mxu0 0.0
        %2552 = vmatpush1.msra.mxu0 0.0
        %2553 = vmatprep.subr.mxu0 0.0
        %2554 = vmatpush1.msra.mxu0 0.0
        %2555 = vmatprep.subr.mxu0 0.0
        %2556 = vmatpush1.msra.mxu0 0.0
        %2557 = vmatprep.subr.mxu0 0.0
        %2558 = vmatpush1.msra.mxu0 0.0
        %2559 = vmatprep.subr.mxu0 0.0
        %2560 = vmatpush1.msra.mxu0 0.0
        %2561 = vmatprep.subr.mxu0 0.0
        %2562 = vmatpush1.msra.mxu0 0.0
        %2563 = vmatprep.subr.mxu0 0.0
        %2564 = vmatpush1.msra.mxu0 0.0
        %2565 = vmatprep.subr.mxu0 0.0
        %2566 = vmatpush1.msra.mxu0 0.0
        %2567 = vmatprep.subr.mxu0 0.0
        %2568 = vmatpush1.msra.mxu0 0.0
        %2569 = vmatprep.subr.mxu0 0.0
        %2570 = vmatpush1.msra.mxu0 0.0
        %2571 = vmatprep.subr.mxu0 0.0
        %2572 = vmatpush1.msra.mxu0 0.0
        %2573 = vmatprep.mubr.f32.mxu0 0.0
        %2574 = vmatmul.mubr.f32.gmra.mrb[0].mxu0 %v2504
        %v2575 = vpop.f32.mrb[0].mxu0
        %v2576 = vadd.f32 %v2501, %v2575
        %v2577 = vpop.f32.mrb[0].mxu0
        %2578 = vmatprep.mubr.f32.mxu0 0.0
        %2579 = vmatmul.mubr.f32.gmra.mrb[0].mxu0 %v2507
        %v2580 = vpop.f32.mrb[0].mxu0
        %v2581 = vadd.f32 %v2501, %v2580
        %v2582 = vpop.f32.mrb[0].mxu0
        %2583 = vdwg.mxu0
        %v2585 = vsel %vm576, %v2385, 0
        %v2588 = vsel %vm576, %v2480, 0
        %v2591 = vsel %vm576, %v2485, 0
        %2593 = vmatprep.subr.mxu0 0.0
        %2594 = vmatpush1.xpose.msra.mxu0 %v2588
        %2595 = vmatprep.subr.mxu0 0.0
        %2596 = vmatpush1.xpose.msra.mxu0 %v2591
        %2597 = vmatprep.subr.mxu0 0.0
        %2598 = vmatpush1.xpose.msra.mxu0 0.0
        %2599 = vmatprep.subr.mxu0 0.0
        %2600 = vmatpush1.xpose.msra.mxu0 0.0
        %2601 = vmatprep.subr.mxu0 0.0
        %2602 = vmatpush1.xpose.msra.mxu0 0.0
        %2603 = vmatprep.subr.mxu0 0.0
        %2604 = vmatpush1.xpose.msra.mxu0 0.0
        %2605 = vmatprep.subr.mxu0 0.0
        %2606 = vmatpush1.xpose.msra.mxu0 0.0
        %2607 = vmatprep.subr.mxu0 0.0
        %2608 = vmatpush1.xpose.msra.mxu0 0.0
        %2609 = vmatprep.subr.mxu0 0.0
        %2610 = vmatpush1.xpose.msra.mxu0 0.0
        %2611 = vmatprep.subr.mxu0 0.0
        %2612 = vmatpush1.xpose.msra.mxu0 0.0
        %2613 = vmatprep.subr.mxu0 0.0
        %2614 = vmatpush1.xpose.msra.mxu0 0.0
        %2615 = vmatprep.subr.mxu0 0.0
        %2616 = vmatpush1.xpose.msra.mxu0 0.0
        %2617 = vmatprep.subr.mxu0 0.0
        %2618 = vmatpush1.xpose.msra.mxu0 0.0
        %2619 = vmatprep.subr.mxu0 0.0
        %2620 = vmatpush1.xpose.msra.mxu0 0.0
        %2621 = vmatprep.subr.mxu0 0.0
        %2622 = vmatpush1.xpose.msra.mxu0 0.0
        %2623 = vmatprep.subr.mxu0 0.0
        %2624 = vmatpush1.xpose.msra.mxu0 0.0
        %2625 = vmatprep.subr.mxu0 0.0
        %2626 = vmatpush1.xpose.msra.mxu0 0.0
        %2627 = vmatprep.subr.mxu0 0.0
        %2628 = vmatpush1.xpose.msra.mxu0 0.0
        %2629 = vmatprep.subr.mxu0 0.0
        %2630 = vmatpush1.xpose.msra.mxu0 0.0
        %2631 = vmatprep.subr.mxu0 0.0
        %2632 = vmatpush1.xpose.msra.mxu0 0.0
        %2633 = vmatprep.subr.mxu0 0.0
        %2634 = vmatpush1.xpose.msra.mxu0 0.0
        %2635 = vmatprep.subr.mxu0 0.0
        %2636 = vmatpush1.xpose.msra.mxu0 0.0
        %2637 = vmatprep.subr.mxu0 0.0
        %2638 = vmatpush1.xpose.msra.mxu0 0.0
        %2639 = vmatprep.subr.mxu0 0.0
        %2640 = vmatpush1.xpose.msra.mxu0 0.0
        %2641 = vmatprep.subr.mxu0 0.0
        %2642 = vmatpush1.xpose.msra.mxu0 0.0
        %2643 = vmatprep.subr.mxu0 0.0
        %2644 = vmatpush1.xpose.msra.mxu0 0.0
        %2645 = vmatprep.subr.mxu0 0.0
        %2646 = vmatpush1.xpose.msra.mxu0 0.0
        %2647 = vmatprep.subr.mxu0 0.0
        %2648 = vmatpush1.xpose.msra.mxu0 0.0
        %2649 = vmatprep.subr.mxu0 0.0
        %2650 = vmatpush1.xpose.msra.mxu0 0.0
        %2651 = vmatprep.subr.mxu0 0.0
        %2652 = vmatpush1.xpose.msra.mxu0 0.0
        %2653 = vmatprep.subr.mxu0 0.0
        %2654 = vmatpush1.xpose.msra.mxu0 0.0
        %2655 = vmatprep.subr.mxu0 0.0
        %2656 = vmatpush1.xpose.msra.mxu0 0.0
        %2657 = vmatprep.mubr.f32.mxu0 0.0
        %2658 = vmatmul.mubr.f32.gmra.mrb[0].mxu0 %v2585
        %v2659 = vpop.f32.mrb[0].mxu0
        %v2660 = vadd.f32 0.0, %v2659
        %v2661 = vpop.f32.mrb[0].mxu0
        %2662 = vdwg.mxu0
        %2663 = vrot.lane.b32.xlu0 %v2385, 120
        %v2664 = vpop.permute.xlu0 %2663
        %2665 = vrot.lane.b32.xlu0 %v2480, 120
        %v2666 = vpop.permute.xlu0 %2665
        %2667 = vrot.lane.b32.xlu0 %v2485, 120
        %v2668 = vpop.permute.xlu0 %2667
        %v2669 = vsel %vm576, %v2664, 0
        %v2671 = vsel %vm576, %v2666, 0
        %v2673 = vsel %vm576, %v2668, 0
        %2675 = vmatprep.subr.mxu0 0.0
        %2676 = vmatpush1.xpose.msra.mxu0 %v2671
        %2677 = vmatprep.subr.mxu0 0.0
        %2678 = vmatpush1.xpose.msra.mxu0 %v2673
        %2679 = vmatprep.subr.mxu0 0.0
        %2680 = vmatpush1.xpose.msra.mxu0 0.0
        %2681 = vmatprep.subr.mxu0 0.0
        %2682 = vmatpush1.xpose.msra.mxu0 0.0
        %2683 = vmatprep.subr.mxu0 0.0
        %2684 = vmatpush1.xpose.msra.mxu0 0.0
        %2685 = vmatprep.subr.mxu0 0.0
        %2686 = vmatpush1.xpose.msra.mxu0 0.0
        %2687 = vmatprep.subr.mxu0 0.0
        %2688 = vmatpush1.xpose.msra.mxu0 0.0
        %2689 = vmatprep.subr.mxu0 0.0
        %2690 = vmatpush1.xpose.msra.mxu0 0.0
        %2691 = vmatprep.subr.mxu0 0.0
        %2692 = vmatpush1.xpose.msra.mxu0 0.0
        %2693 = vmatprep.subr.mxu0 0.0
        %2694 = vmatpush1.xpose.msra.mxu0 0.0
        %2695 = vmatprep.subr.mxu0 0.0
        %2696 = vmatpush1.xpose.msra.mxu0 0.0
        %2697 = vmatprep.subr.mxu0 0.0
        %2698 = vmatpush1.xpose.msra.mxu0 0.0
        %2699 = vmatprep.subr.mxu0 0.0
        %2700 = vmatpush1.xpose.msra.mxu0 0.0
        %2701 = vmatprep.subr.mxu0 0.0
        %2702 = vmatpush1.xpose.msra.mxu0 0.0
        %2703 = vmatprep.subr.mxu0 0.0
        %2704 = vmatpush1.xpose.msra.mxu0 0.0
        %2705 = vmatprep.subr.mxu0 0.0
        %2706 = vmatpush1.xpose.msra.mxu0 0.0
        %2707 = vmatprep.subr.mxu0 0.0
        %2708 = vmatpush1.xpose.msra.mxu0 0.0
        %2709 = vmatprep.subr.mxu0 0.0
        %2710 = vmatpush1.xpose.msra.mxu0 0.0
        %2711 = vmatprep.subr.mxu0 0.0
        %2712 = vmatpush1.xpose.msra.mxu0 0.0
        %2713 = vmatprep.subr.mxu0 0.0
        %2714 = vmatpush1.xpose.msra.mxu0 0.0
        %2715 = vmatprep.subr.mxu0 0.0
        %2716 = vmatpush1.xpose.msra.mxu0 0.0
        %2717 = vmatprep.subr.mxu0 0.0
        %2718 = vmatpush1.xpose.msra.mxu0 0.0
        %2719 = vmatprep.subr.mxu0 0.0
        %2720 = vmatpush1.xpose.msra.mxu0 0.0
        %2721 = vmatprep.subr.mxu0 0.0
        %2722 = vmatpush1.xpose.msra.mxu0 0.0
        %2723 = vmatprep.subr.mxu0 0.0
        %2724 = vmatpush1.xpose.msra.mxu0 0.0
        %2725 = vmatprep.subr.mxu0 0.0
        %2726 = vmatpush1.xpose.msra.mxu0 0.0
        %2727 = vmatprep.subr.mxu0 0.0
        %2728 = vmatpush1.xpose.msra.mxu0 0.0
        %2729 = vmatprep.subr.mxu0 0.0
        %2730 = vmatpush1.xpose.msra.mxu0 0.0
        %2731 = vmatprep.subr.mxu0 0.0
        %2732 = vmatpush1.xpose.msra.mxu0 0.0
        %2733 = vmatprep.subr.mxu0 0.0
        %2734 = vmatpush1.xpose.msra.mxu0 0.0
        %2735 = vmatprep.subr.mxu0 0.0
        %2736 = vmatpush1.xpose.msra.mxu0 0.0
        %2737 = vmatprep.subr.mxu0 0.0
        %2738 = vmatpush1.xpose.msra.mxu0 0.0
        %2739 = vmatprep.mubr.f32.mxu0 0.0
        %2740 = vmatmul.mubr.f32.gmra.mrb[0].mxu0 %v2669
        %v2741 = vpop.f32.mrb[0].mxu0
        %v2742 = vadd.f32 0.0, %v2741
        %v2743 = vpop.f32.mrb[0].mxu0
        %2744 = vdwg.mxu0
        %2745 = vrot.lane.b32.xlu0 %v2385, 112
        %v2746 = vpop.permute.xlu0 %2745
        %2747 = vrot.lane.b32.xlu0 %v2480, 112
        %v2748 = vpop.permute.xlu0 %2747
        %2749 = vrot.lane.b32.xlu0 %v2485, 112
        %v2750 = vpop.permute.xlu0 %2749
        %v2751 = vsel %vm576, %v2746, 0
        %v2753 = vsel %vm576, %v2748, 0
        %v2755 = vsel %vm576, %v2750, 0
        %2757 = vmatprep.subr.mxu0 0.0
        %2758 = vmatpush1.xpose.msra.mxu0 %v2753
        %2759 = vmatprep.subr.mxu0 0.0
        %2760 = vmatpush1.xpose.msra.mxu0 %v2755
        %2761 = vmatprep.subr.mxu0 0.0
        %2762 = vmatpush1.xpose.msra.mxu0 0.0
        %2763 = vmatprep.subr.mxu0 0.0
        %2764 = vmatpush1.xpose.msra.mxu0 0.0
        %2765 = vmatprep.subr.mxu0 0.0
        %2766 = vmatpush1.xpose.msra.mxu0 0.0
        %2767 = vmatprep.subr.mxu0 0.0
        %2768 = vmatpush1.xpose.msra.mxu0 0.0
        %2769 = vmatprep.subr.mxu0 0.0
        %2770 = vmatpush1.xpose.msra.mxu0 0.0
        %2771 = vmatprep.subr.mxu0 0.0
        %2772 = vmatpush1.xpose.msra.mxu0 0.0
        %2773 = vmatprep.subr.mxu0 0.0
        %2774 = vmatpush1.xpose.msra.mxu0 0.0
        %2775 = vmatprep.subr.mxu0 0.0
        %2776 = vmatpush1.xpose.msra.mxu0 0.0
        %2777 = vmatprep.subr.mxu0 0.0
        %2778 = vmatpush1.xpose.msra.mxu0 0.0
        %2779 = vmatprep.subr.mxu0 0.0
        %2780 = vmatpush1.xpose.msra.mxu0 0.0
        %2781 = vmatprep.subr.mxu0 0.0
        %2782 = vmatpush1.xpose.msra.mxu0 0.0
        %2783 = vmatprep.subr.mxu0 0.0
        %2784 = vmatpush1.xpose.msra.mxu0 0.0
        %2785 = vmatprep.subr.mxu0 0.0
        %2786 = vmatpush1.xpose.msra.mxu0 0.0
        %2787 = vmatprep.subr.mxu0 0.0
        %2788 = vmatpush1.xpose.msra.mxu0 0.0
        %2789 = vmatprep.subr.mxu0 0.0
        %2790 = vmatpush1.xpose.msra.mxu0 0.0
        %2791 = vmatprep.subr.mxu0 0.0
        %2792 = vmatpush1.xpose.msra.mxu0 0.0
        %2793 = vmatprep.subr.mxu0 0.0
        %2794 = vmatpush1.xpose.msra.mxu0 0.0
        %2795 = vmatprep.subr.mxu0 0.0
        %2796 = vmatpush1.xpose.msra.mxu0 0.0
        %2797 = vmatprep.subr.mxu0 0.0
        %2798 = vmatpush1.xpose.msra.mxu0 0.0
        %2799 = vmatprep.subr.mxu0 0.0
        %2800 = vmatpush1.xpose.msra.mxu0 0.0
        %2801 = vmatprep.subr.mxu0 0.0
        %2802 = vmatpush1.xpose.msra.mxu0 0.0
        %2803 = vmatprep.subr.mxu0 0.0
        %2804 = vmatpush1.xpose.msra.mxu0 0.0
        %2805 = vmatprep.subr.mxu0 0.0
        %2806 = vmatpush1.xpose.msra.mxu0 0.0
        %2807 = vmatprep.subr.mxu0 0.0
        %2808 = vmatpush1.xpose.msra.mxu0 0.0
        %2809 = vmatprep.subr.mxu0 0.0
        %2810 = vmatpush1.xpose.msra.mxu0 0.0
        %2811 = vmatprep.subr.mxu0 0.0
        %2812 = vmatpush1.xpose.msra.mxu0 0.0
        %2813 = vmatprep.subr.mxu0 0.0
        %2814 = vmatpush1.xpose.msra.mxu0 0.0
        %2815 = vmatprep.subr.mxu0 0.0
        %2816 = vmatpush1.xpose.msra.mxu0 0.0
        %2817 = vmatprep.subr.mxu0 0.0
        %2818 = vmatpush1.xpose.msra.mxu0 0.0
        %2819 = vmatprep.subr.mxu0 0.0
        %2820 = vmatpush1.xpose.msra.mxu0 0.0
        %2821 = vmatprep.mubr.f32.mxu0 0.0
        %2822 = vmatmul.mubr.f32.gmra.mrb[0].mxu0 %v2751
        %v2823 = vpop.f32.mrb[0].mxu0
        %v2824 = vadd.f32 0.0, %v2823
        %v2825 = vpop.f32.mrb[0].mxu0
        %2826 = vdwg.mxu0
        %2827 = vrot.lane.b32.xlu0 %v2385, 104
        %v2828 = vpop.permute.xlu0 %2827
        %2829 = vrot.lane.b32.xlu0 %v2480, 104
        %v2830 = vpop.permute.xlu0 %2829
        %2831 = vrot.lane.b32.xlu0 %v2485, 104
        %v2832 = vpop.permute.xlu0 %2831
        %v2833 = vsel %vm576, %v2828, 0
        %v2835 = vsel %vm576, %v2830, 0
        %v2837 = vsel %vm576, %v2832, 0
        %2839 = vmatprep.subr.mxu0 0.0
        %2840 = vmatpush1.xpose.msra.mxu0 %v2835
        %2841 = vmatprep.subr.mxu0 0.0
        %2842 = vmatpush1.xpose.msra.mxu0 %v2837
        %2843 = vmatprep.subr.mxu0 0.0
        %2844 = vmatpush1.xpose.msra.mxu0 0.0
        %2845 = vmatprep.subr.mxu0 0.0
        %2846 = vmatpush1.xpose.msra.mxu0 0.0
        %2847 = vmatprep.subr.mxu0 0.0
        %2848 = vmatpush1.xpose.msra.mxu0 0.0
        %2849 = vmatprep.subr.mxu0 0.0
        %2850 = vmatpush1.xpose.msra.mxu0 0.0
        %2851 = vmatprep.subr.mxu0 0.0
        %2852 = vmatpush1.xpose.msra.mxu0 0.0
        %2853 = vmatprep.subr.mxu0 0.0
        %2854 = vmatpush1.xpose.msra.mxu0 0.0
        %2855 = vmatprep.subr.mxu0 0.0
        %2856 = vmatpush1.xpose.msra.mxu0 0.0
        %2857 = vmatprep.subr.mxu0 0.0
        %2858 = vmatpush1.xpose.msra.mxu0 0.0
        %2859 = vmatprep.subr.mxu0 0.0
        %2860 = vmatpush1.xpose.msra.mxu0 0.0
        %2861 = vmatprep.subr.mxu0 0.0
        %2862 = vmatpush1.xpose.msra.mxu0 0.0
        %2863 = vmatprep.subr.mxu0 0.0
        %2864 = vmatpush1.xpose.msra.mxu0 0.0
        %2865 = vmatprep.subr.mxu0 0.0
        %2866 = vmatpush1.xpose.msra.mxu0 0.0
        %2867 = vmatprep.subr.mxu0 0.0
        %2868 = vmatpush1.xpose.msra.mxu0 0.0
        %2869 = vmatprep.subr.mxu0 0.0
        %2870 = vmatpush1.xpose.msra.mxu0 0.0
        %2871 = vmatprep.subr.mxu0 0.0
        %2872 = vmatpush1.xpose.msra.mxu0 0.0
        %2873 = vmatprep.subr.mxu0 0.0
        %2874 = vmatpush1.xpose.msra.mxu0 0.0
        %2875 = vmatprep.subr.mxu0 0.0
        %2876 = vmatpush1.xpose.msra.mxu0 0.0
        %2877 = vmatprep.subr.mxu0 0.0
        %2878 = vmatpush1.xpose.msra.mxu0 0.0
        %2879 = vmatprep.subr.mxu0 0.0
        %2880 = vmatpush1.xpose.msra.mxu0 0.0
        %2881 = vmatprep.subr.mxu0 0.0
        %2882 = vmatpush1.xpose.msra.mxu0 0.0
        %2883 = vmatprep.subr.mxu0 0.0
        %2884 = vmatpush1.xpose.msra.mxu0 0.0
        %2885 = vmatprep.subr.mxu0 0.0
        %2886 = vmatpush1.xpose.msra.mxu0 0.0
        %2887 = vmatprep.subr.mxu0 0.0
        %2888 = vmatpush1.xpose.msra.mxu0 0.0
        %2889 = vmatprep.subr.mxu0 0.0
        %2890 = vmatpush1.xpose.msra.mxu0 0.0
        %2891 = vmatprep.subr.mxu0 0.0
        %2892 = vmatpush1.xpose.msra.mxu0 0.0
        %2893 = vmatprep.subr.mxu0 0.0
        %2894 = vmatpush1.xpose.msra.mxu0 0.0
        %2895 = vmatprep.subr.mxu0 0.0
        %2896 = vmatpush1.xpose.msra.mxu0 0.0
        %2897 = vmatprep.subr.mxu0 0.0
        %2898 = vmatpush1.xpose.msra.mxu0 0.0
        %2899 = vmatprep.subr.mxu0 0.0
        %2900 = vmatpush1.xpose.msra.mxu0 0.0
        %2901 = vmatprep.subr.mxu0 0.0
        %2902 = vmatpush1.xpose.msra.mxu0 0.0
        %2903 = vmatprep.mubr.f32.mxu0 0.0
        %2904 = vmatmul.mubr.f32.gmra.mrb[0].mxu0 %v2833
        %v2905 = vpop.f32.mrb[0].mxu0
        %v2906 = vadd.f32 0.0, %v2905
        %v2907 = vpop.f32.mrb[0].mxu0
        %2908 = vdwg.mxu0
        %v2909 = vadd.f32 %v2660, %v489
        %v2910 = vadd.f32 %v2742, %v489
        %v2911 = vadd.f32 %v2824, %v489
        %v2912 = vadd.f32 %v2906, %v489
        %v2913 = vsel %vm1250, %v2909, -inf
        %2914 = vmax.xlane.f32.xlu0 %v2913
        %v2915 = vpop.xlane.xlu0 %2914
        %v2916 = vsel %vm1250, %v2910, -inf
        %2917 = vmax.xlane.f32.xlu0 %v2916
        %v2918 = vpop.xlane.xlu0 %2917
        %v2919 = vsel %vm1250, %v2911, -inf
        %2920 = vmax.xlane.f32.xlu0 %v2919
        %v2921 = vpop.xlane.xlu0 %2920
        %v2922 = vsel %vm1250, %v2912, -inf
        %2923 = vmax.xlane.f32.xlu0 %v2922
        %v2924 = vpop.xlane.xlu0 %2923
        %v2925 = vsub.f32 %v2909, %v2915
        %v2926 = vsub.f32 %v2910, %v2918
        %v2927 = vsub.f32 %v2911, %v2921
        %v2928 = vsub.f32 %v2912, %v2924
        %v2929 = vmul.f32 %v2925, 1.442695
        %v2930 = vpow.pop %v2929
        %v2931 = vmul.f32 %v2926, 1.442695
        %v2932 = vpow.pop %v2931
        %v2933 = vmul.f32 %v2927, 1.442695
        %v2934 = vpow.pop %v2933
        %v2935 = vmul.f32 %v2928, 1.442695
        %v2936 = vpow.pop %v2935
        %v2937 = vsel %vm1250, %v2930, 0.0
        %2938 = vadd.xlane.f32.xlu0 %v2937
        %v2939 = vpop.xlane.xlu0 %2938
        %v2940 = vsel %vm1250, %v2932, 0.0
        %2941 = vadd.xlane.f32.xlu0 %v2940
        %v2942 = vpop.xlane.xlu0 %2941
        %v2943 = vsel %vm1250, %v2934, 0.0
        %2944 = vadd.xlane.f32.xlu0 %v2943
        %v2945 = vpop.xlane.xlu0 %2944
        %v2946 = vsel %vm1250, %v2936, 0.0
        %2947 = vadd.xlane.f32.xlu0 %v2946
        %v2948 = vpop.xlane.xlu0 %2947
        %v2949 = vrcp.pop %v2939
        %v2950 = vrcp.pop %v2942
        %v2951 = vrcp.pop %v2945
        %v2952 = vrcp.pop %v2948
        %v2953 = vmul.f32 %v2930, %v2949
        %v2954 = vmul.f32 %v2932, %v2950
        %v2955 = vmul.f32 %v2934, %v2951
        %v2956 = vmul.f32 %v2936, %v2952
        %v2958 = vsel %vm1250, %v2953, 0
        %2960 = vmatprep.subr.mxu0 0.0
        %2961 = vmatpush1.msra.mxu0 %v2576
        %2962 = vmatprep.subr.mxu0 0.0
        %2963 = vmatpush1.msra.mxu0 %v2581
        %2964 = vmatprep.subr.mxu0 0.0
        %2965 = vmatpush1.msra.mxu0 0.0
        %2966 = vmatprep.subr.mxu0 0.0
        %2967 = vmatpush1.msra.mxu0 0.0
        %2968 = vmatprep.subr.mxu0 0.0
        %2969 = vmatpush1.msra.mxu0 0.0
        %2970 = vmatprep.subr.mxu0 0.0
        %2971 = vmatpush1.msra.mxu0 0.0
        %2972 = vmatprep.subr.mxu0 0.0
        %2973 = vmatpush1.msra.mxu0 0.0
        %2974 = vmatprep.subr.mxu0 0.0
        %2975 = vmatpush1.msra.mxu0 0.0
        %2976 = vmatprep.subr.mxu0 0.0
        %2977 = vmatpush1.msra.mxu0 0.0
        %2978 = vmatprep.subr.mxu0 0.0
        %2979 = vmatpush1.msra.mxu0 0.0
        %2980 = vmatprep.subr.mxu0 0.0
        %2981 = vmatpush1.msra.mxu0 0.0
        %2982 = vmatprep.subr.mxu0 0.0
        %2983 = vmatpush1.msra.mxu0 0.0
        %2984 = vmatprep.subr.mxu0 0.0
        %2985 = vmatpush1.msra.mxu0 0.0
        %2986 = vmatprep.subr.mxu0 0.0
        %2987 = vmatpush1.msra.mxu0 0.0
        %2988 = vmatprep.subr.mxu0 0.0
        %2989 = vmatpush1.msra.mxu0 0.0
        %2990 = vmatprep.subr.mxu0 0.0
        %2991 = vmatpush1.msra.mxu0 0.0
        %2992 = vmatprep.subr.mxu0 0.0
        %2993 = vmatpush1.msra.mxu0 0.0
        %2994 = vmatprep.subr.mxu0 0.0
        %2995 = vmatpush1.msra.mxu0 0.0
        %2996 = vmatprep.subr.mxu0 0.0
        %2997 = vmatpush1.msra.mxu0 0.0
        %2998 = vmatprep.subr.mxu0 0.0
        %2999 = vmatpush1.msra.mxu0 0.0
        %3000 = vmatprep.subr.mxu0 0.0
        %3001 = vmatpush1.msra.mxu0 0.0
        %3002 = vmatprep.subr.mxu0 0.0
        %3003 = vmatpush1.msra.mxu0 0.0
        %3004 = vmatprep.subr.mxu0 0.0
        %3005 = vmatpush1.msra.mxu0 0.0
        %3006 = vmatprep.subr.mxu0 0.0
        %3007 = vmatpush1.msra.mxu0 0.0
        %3008 = vmatprep.subr.mxu0 0.0
        %3009 = vmatpush1.msra.mxu0 0.0
        %3010 = vmatprep.subr.mxu0 0.0
        %3011 = vmatpush1.msra.mxu0 0.0
        %3012 = vmatprep.subr.mxu0 0.0
        %3013 = vmatpush1.msra.mxu0 0.0
        %3014 = vmatprep.subr.mxu0 0.0
        %3015 = vmatpush1.msra.mxu0 0.0
        %3016 = vmatprep.subr.mxu0 0.0
        %3017 = vmatpush1.msra.mxu0 0.0
        %3018 = vmatprep.subr.mxu0 0.0
        %3019 = vmatpush1.msra.mxu0 0.0
        %3020 = vmatprep.subr.mxu0 0.0
        %3021 = vmatpush1.msra.mxu0 0.0
        %3022 = vmatprep.subr.mxu0 0.0
        %3023 = vmatpush1.msra.mxu0 0.0
        %3024 = vmatprep.mubr.f32.mxu0 0.0
        %3025 = vmatmul.mubr.f32.gmra.mrb[0].mxu0 %v2958
        %v3026 = vpop.f32.mrb[0].mxu0
        %v3027 = vadd.f32 0.0, %v3026
        %v3028 = vpop.f32.mrb[0].mxu0
        %3029 = vdwg.mxu0
        %3032 = vrot.lane.b32.xlu0 %v2576, 120
        %v3033 = vpop.permute.xlu0 %3032
        %3034 = vrot.lane.b32.xlu0 %v2581, 120
        %v3035 = vpop.permute.xlu0 %3034
        %v3039 = vsel %vm1250, %v2954, 0
        %3041 = vmatprep.subr.mxu0 0.0
        %3042 = vmatpush1.msra.mxu0 %v3033
        %3043 = vmatprep.subr.mxu0 0.0
        %3044 = vmatpush1.msra.mxu0 %v3035
        %3045 = vmatprep.subr.mxu0 0.0
        %3046 = vmatpush1.msra.mxu0 0.0
        %3047 = vmatprep.subr.mxu0 0.0
        %3048 = vmatpush1.msra.mxu0 0.0
        %3049 = vmatprep.subr.mxu0 0.0
        %3050 = vmatpush1.msra.mxu0 0.0
        %3051 = vmatprep.subr.mxu0 0.0
        %3052 = vmatpush1.msra.mxu0 0.0
        %3053 = vmatprep.subr.mxu0 0.0
        %3054 = vmatpush1.msra.mxu0 0.0
        %3055 = vmatprep.subr.mxu0 0.0
        %3056 = vmatpush1.msra.mxu0 0.0
        %3057 = vmatprep.subr.mxu0 0.0
        %3058 = vmatpush1.msra.mxu0 0.0
        %3059 = vmatprep.subr.mxu0 0.0
        %3060 = vmatpush1.msra.mxu0 0.0
        %3061 = vmatprep.subr.mxu0 0.0
        %3062 = vmatpush1.msra.mxu0 0.0
        %3063 = vmatprep.subr.mxu0 0.0
        %3064 = vmatpush1.msra.mxu0 0.0
        %3065 = vmatprep.subr.mxu0 0.0
        %3066 = vmatpush1.msra.mxu0 0.0
        %3067 = vmatprep.subr.mxu0 0.0
        %3068 = vmatpush1.msra.mxu0 0.0
        %3069 = vmatprep.subr.mxu0 0.0
        %3070 = vmatpush1.msra.mxu0 0.0
        %3071 = vmatprep.subr.mxu0 0.0
        %3072 = vmatpush1.msra.mxu0 0.0
        %3073 = vmatprep.subr.mxu0 0.0
        %3074 = vmatpush1.msra.mxu0 0.0
        %3075 = vmatprep.subr.mxu0 0.0
        %3076 = vmatpush1.msra.mxu0 0.0
        %3077 = vmatprep.subr.mxu0 0.0
        %3078 = vmatpush1.msra.mxu0 0.0
        %3079 = vmatprep.subr.mxu0 0.0
        %3080 = vmatpush1.msra.mxu0 0.0
        %3081 = vmatprep.subr.mxu0 0.0
        %3082 = vmatpush1.msra.mxu0 0.0
        %3083 = vmatprep.subr.mxu0 0.0
        %3084 = vmatpush1.msra.mxu0 0.0
        %3085 = vmatprep.subr.mxu0 0.0
        %3086 = vmatpush1.msra.mxu0 0.0
        %3087 = vmatprep.subr.mxu0 0.0
        %3088 = vmatpush1.msra.mxu0 0.0
        %3089 = vmatprep.subr.mxu0 0.0
        %3090 = vmatpush1.msra.mxu0 0.0
        %3091 = vmatprep.subr.mxu0 0.0
        %3092 = vmatpush1.msra.mxu0 0.0
        %3093 = vmatprep.subr.mxu0 0.0
        %3094 = vmatpush1.msra.mxu0 0.0
        %3095 = vmatprep.subr.mxu0 0.0
        %3096 = vmatpush1.msra.mxu0 0.0
        %3097 = vmatprep.subr.mxu0 0.0
        %3098 = vmatpush1.msra.mxu0 0.0
        %3099 = vmatprep.subr.mxu0 0.0
        %3100 = vmatpush1.msra.mxu0 0.0
        %3101 = vmatprep.subr.mxu0 0.0
        %3102 = vmatpush1.msra.mxu0 0.0
        %3103 = vmatprep.subr.mxu0 0.0
        %3104 = vmatpush1.msra.mxu0 0.0
        %3105 = vmatprep.mubr.f32.mxu0 0.0
        %3106 = vmatmul.mubr.f32.gmra.mrb[0].mxu0 %v3039
        %v3107 = vpop.f32.mrb[0].mxu0
        %v3108 = vadd.f32 0.0, %v3107
        %v3109 = vpop.f32.mrb[0].mxu0
        %3110 = vdwg.mxu0
        %3111 = vrot.lane.b32.xlu0 %v2576, 112
        %v3112 = vpop.permute.xlu0 %3111
        %3113 = vrot.lane.b32.xlu0 %v2581, 112
        %v3114 = vpop.permute.xlu0 %3113
        %v3118 = vsel %vm1250, %v2955, 0
        %3120 = vmatprep.subr.mxu0 0.0
        %3121 = vmatpush1.msra.mxu0 %v3112
        %3122 = vmatprep.subr.mxu0 0.0
        %3123 = vmatpush1.msra.mxu0 %v3114
        %3124 = vmatprep.subr.mxu0 0.0
        %3125 = vmatpush1.msra.mxu0 0.0
        %3126 = vmatprep.subr.mxu0 0.0
        %3127 = vmatpush1.msra.mxu0 0.0
        %3128 = vmatprep.subr.mxu0 0.0
        %3129 = vmatpush1.msra.mxu0 0.0
        %3130 = vmatprep.subr.mxu0 0.0
        %3131 = vmatpush1.msra.mxu0 0.0
        %3132 = vmatprep.subr.mxu0 0.0
        %3133 = vmatpush1.msra.mxu0 0.0
        %3134 = vmatprep.subr.mxu0 0.0
        %3135 = vmatpush1.msra.mxu0 0.0
        %3136 = vmatprep.subr.mxu0 0.0
        %3137 = vmatpush1.msra.mxu0 0.0
        %3138 = vmatprep.subr.mxu0 0.0
        %3139 = vmatpush1.msra.mxu0 0.0
        %3140 = vmatprep.subr.mxu0 0.0
        %3141 = vmatpush1.msra.mxu0 0.0
        %3142 = vmatprep.subr.mxu0 0.0
        %3143 = vmatpush1.msra.mxu0 0.0
        %3144 = vmatprep.subr.mxu0 0.0
        %3145 = vmatpush1.msra.mxu0 0.0
        %3146 = vmatprep.subr.mxu0 0.0
        %3147 = vmatpush1.msra.mxu0 0.0
        %3148 = vmatprep.subr.mxu0 0.0
        %3149 = vmatpush1.msra.mxu0 0.0
        %3150 = vmatprep.subr.mxu0 0.0
        %3151 = vmatpush1.msra.mxu0 0.0
        %3152 = vmatprep.subr.mxu0 0.0
        %3153 = vmatpush1.msra.mxu0 0.0
        %3154 = vmatprep.subr.mxu0 0.0
        %3155 = vmatpush1.msra.mxu0 0.0
        %3156 = vmatprep.subr.mxu0 0.0
        %3157 = vmatpush1.msra.mxu0 0.0
        %3158 = vmatprep.subr.mxu0 0.0
        %3159 = vmatpush1.msra.mxu0 0.0
        %3160 = vmatprep.subr.mxu0 0.0
        %3161 = vmatpush1.msra.mxu0 0.0
        %3162 = vmatprep.subr.mxu0 0.0
        %3163 = vmatpush1.msra.mxu0 0.0
        %3164 = vmatprep.subr.mxu0 0.0
        %3165 = vmatpush1.msra.mxu0 0.0
        %3166 = vmatprep.subr.mxu0 0.0
        %3167 = vmatpush1.msra.mxu0 0.0
        %3168 = vmatprep.subr.mxu0 0.0
        %3169 = vmatpush1.msra.mxu0 0.0
        %3170 = vmatprep.subr.mxu0 0.0
        %3171 = vmatpush1.msra.mxu0 0.0
        %3172 = vmatprep.subr.mxu0 0.0
        %3173 = vmatpush1.msra.mxu0 0.0
        %3174 = vmatprep.subr.mxu0 0.0
        %3175 = vmatpush1.msra.mxu0 0.0
        %3176 = vmatprep.subr.mxu0 0.0
        %3177 = vmatpush1.msra.mxu0 0.0
        %3178 = vmatprep.subr.mxu0 0.0
        %3179 = vmatpush1.msra.mxu0 0.0
        %3180 = vmatprep.subr.mxu0 0.0
        %3181 = vmatpush1.msra.mxu0 0.0
        %3182 = vmatprep.subr.mxu0 0.0
        %3183 = vmatpush1.msra.mxu0 0.0
        %3184 = vmatprep.mubr.f32.mxu0 0.0
        %3185 = vmatmul.mubr.f32.gmra.mrb[0].mxu0 %v3118
        %v3186 = vpop.f32.mrb[0].mxu0
        %v3187 = vadd.f32 0.0, %v3186
        %v3188 = vpop.f32.mrb[0].mxu0
        %3189 = vdwg.mxu0
        %3190 = vrot.lane.b32.xlu0 %v2576, 104
        %v3191 = vpop.permute.xlu0 %3190
        %3192 = vrot.lane.b32.xlu0 %v2581, 104
        %v3193 = vpop.permute.xlu0 %3192
        %v3197 = vsel %vm1250, %v2956, 0
        %3199 = vmatprep.subr.mxu0 0.0
        %3200 = vmatpush1.msra.mxu0 %v3191
        %3201 = vmatprep.subr.mxu0 0.0
        %3202 = vmatpush1.msra.mxu0 %v3193
        %3203 = vmatprep.subr.mxu0 0.0
        %3204 = vmatpush1.msra.mxu0 0.0
        %3205 = vmatprep.subr.mxu0 0.0
        %3206 = vmatpush1.msra.mxu0 0.0
        %3207 = vmatprep.subr.mxu0 0.0
        %3208 = vmatpush1.msra.mxu0 0.0
        %3209 = vmatprep.subr.mxu0 0.0
        %3210 = vmatpush1.msra.mxu0 0.0
        %3211 = vmatprep.subr.mxu0 0.0
        %3212 = vmatpush1.msra.mxu0 0.0
        %3213 = vmatprep.subr.mxu0 0.0
        %3214 = vmatpush1.msra.mxu0 0.0
        %3215 = vmatprep.subr.mxu0 0.0
        %3216 = vmatpush1.msra.mxu0 0.0
        %3217 = vmatprep.subr.mxu0 0.0
        %3218 = vmatpush1.msra.mxu0 0.0
        %3219 = vmatprep.subr.mxu0 0.0
        %3220 = vmatpush1.msra.mxu0 0.0
        %3221 = vmatprep.subr.mxu0 0.0
        %3222 = vmatpush1.msra.mxu0 0.0
        %3223 = vmatprep.subr.mxu0 0.0
        %3224 = vmatpush1.msra.mxu0 0.0
        %3225 = vmatprep.subr.mxu0 0.0
        %3226 = vmatpush1.msra.mxu0 0.0
        %3227 = vmatprep.subr.mxu0 0.0
        %3228 = vmatpush1.msra.mxu0 0.0
        %3229 = vmatprep.subr.mxu0 0.0
        %3230 = vmatpush1.msra.mxu0 0.0
        %3231 = vmatprep.subr.mxu0 0.0
        %3232 = vmatpush1.msra.mxu0 0.0
        %3233 = vmatprep.subr.mxu0 0.0
        %3234 = vmatpush1.msra.mxu0 0.0
        %3235 = vmatprep.subr.mxu0 0.0
        %3236 = vmatpush1.msra.mxu0 0.0
        %3237 = vmatprep.subr.mxu0 0.0
        %3238 = vmatpush1.msra.mxu0 0.0
        %3239 = vmatprep.subr.mxu0 0.0
        %3240 = vmatpush1.msra.mxu0 0.0
        %3241 = vmatprep.subr.mxu0 0.0
        %3242 = vmatpush1.msra.mxu0 0.0
        %3243 = vmatprep.subr.mxu0 0.0
        %3244 = vmatpush1.msra.mxu0 0.0
        %3245 = vmatprep.subr.mxu0 0.0
        %3246 = vmatpush1.msra.mxu0 0.0
        %3247 = vmatprep.subr.mxu0 0.0
        %3248 = vmatpush1.msra.mxu0 0.0
        %3249 = vmatprep.subr.mxu0 0.0
        %3250 = vmatpush1.msra.mxu0 0.0
        %3251 = vmatprep.subr.mxu0 0.0
        %3252 = vmatpush1.msra.mxu0 0.0
        %3253 = vmatprep.subr.mxu0 0.0
        %3254 = vmatpush1.msra.mxu0 0.0
        %3255 = vmatprep.subr.mxu0 0.0
        %3256 = vmatpush1.msra.mxu0 0.0
        %3257 = vmatprep.subr.mxu0 0.0
        %3258 = vmatpush1.msra.mxu0 0.0
        %3259 = vmatprep.subr.mxu0 0.0
        %3260 = vmatpush1.msra.mxu0 0.0
        %3261 = vmatprep.subr.mxu0 0.0
        %3262 = vmatpush1.msra.mxu0 0.0
        %3263 = vmatprep.mubr.f32.mxu0 0.0
        %3264 = vmatmul.mubr.f32.gmra.mrb[0].mxu0 %v3197
        %v3265 = vpop.f32.mrb[0].mxu0
        %v3266 = vadd.f32 0.0, %v3265
        %v3267 = vpop.f32.mrb[0].mxu0
        %3268 = vdwg.mxu0
        %3270 = vrot.lane.b32.xlu0 %v3108, 8
        %v3271 = vpop.permute.xlu0 %3270
        %3274 = vrot.lane.b32.xlu0 %v3187, 16
        %v3275 = vpop.permute.xlu0 %3274
        %3278 = vrot.lane.b32.xlu0 %v3266, 24
        %v3279 = vpop.permute.xlu0 %3278
        %v3281 = vsel %vm576, %v3027, %v3271
        %v3282 = vsel %vm1250, %v3281, %v3275
        %v3283 = vsel %vm1252, %v3282, %v3279
        %3284 = vrot.lane.b32.xlu0 %v2310, 32
        %v3285 = vpop.permute.xlu0 %3284
        %3286 = vrot.lane.b32.xlu0 %v2311, 32
        %v3287 = vpop.permute.xlu0 %3286
        %3288 = vrot.lane.b32.xlu0 %v2312, 32
        %v3289 = vpop.permute.xlu0 %3288
        %3290 = vrot.lane.b32.xlu0 %v2313, 32
        %v3291 = vpop.permute.xlu0 %3290
        %v3297 = vsel %vm499, %v3283, 0
        %3299 = vmatprep.subr.mxu0 0.0
        %3300 = vmatpush1.msra.mxu0 %v3285
        %3301 = vmatprep.subr.mxu0 0.0
        %3302 = vmatpush1.msra.mxu0 %v3287
        %3303 = vmatprep.subr.mxu0 0.0
        %3304 = vmatpush1.msra.mxu0 %v3289
        %3305 = vmatprep.subr.mxu0 0.0
        %3306 = vmatpush1.msra.mxu0 %v3291
        %3307 = vmatprep.subr.mxu0 0.0
        %3308 = vmatpush1.msra.mxu0 0.0
        %3309 = vmatprep.subr.mxu0 0.0
        %3310 = vmatpush1.msra.mxu0 0.0
        %3311 = vmatprep.subr.mxu0 0.0
        %3312 = vmatpush1.msra.mxu0 0.0
        %3313 = vmatprep.subr.mxu0 0.0
        %3314 = vmatpush1.msra.mxu0 0.0
        %3315 = vmatprep.subr.mxu0 0.0
        %3316 = vmatpush1.msra.mxu0 0.0
        %3317 = vmatprep.subr.mxu0 0.0
        %3318 = vmatpush1.msra.mxu0 0.0
        %3319 = vmatprep.subr.mxu0 0.0
        %3320 = vmatpush1.msra.mxu0 0.0
        %3321 = vmatprep.subr.mxu0 0.0
        %3322 = vmatpush1.msra.mxu0 0.0
        %3323 = vmatprep.subr.mxu0 0.0
        %3324 = vmatpush1.msra.mxu0 0.0
        %3325 = vmatprep.subr.mxu0 0.0
        %3326 = vmatpush1.msra.mxu0 0.0
        %3327 = vmatprep.subr.mxu0 0.0
        %3328 = vmatpush1.msra.mxu0 0.0
        %3329 = vmatprep.subr.mxu0 0.0
        %3330 = vmatpush1.msra.mxu0 0.0
        %3331 = vmatprep.subr.mxu0 0.0
        %3332 = vmatpush1.msra.mxu0 0.0
        %3333 = vmatprep.subr.mxu0 0.0
        %3334 = vmatpush1.msra.mxu0 0.0
        %3335 = vmatprep.subr.mxu0 0.0
        %3336 = vmatpush1.msra.mxu0 0.0
        %3337 = vmatprep.subr.mxu0 0.0
        %3338 = vmatpush1.msra.mxu0 0.0
        %3339 = vmatprep.subr.mxu0 0.0
        %3340 = vmatpush1.msra.mxu0 0.0
        %3341 = vmatprep.subr.mxu0 0.0
        %3342 = vmatpush1.msra.mxu0 0.0
        %3343 = vmatprep.subr.mxu0 0.0
        %3344 = vmatpush1.msra.mxu0 0.0
        %3345 = vmatprep.subr.mxu0 0.0
        %3346 = vmatpush1.msra.mxu0 0.0
        %3347 = vmatprep.subr.mxu0 0.0
        %3348 = vmatpush1.msra.mxu0 0.0
        %3349 = vmatprep.subr.mxu0 0.0
        %3350 = vmatpush1.msra.mxu0 0.0
        %3351 = vmatprep.subr.mxu0 0.0
        %3352 = vmatpush1.msra.mxu0 0.0
        %3353 = vmatprep.subr.mxu0 0.0
        %3354 = vmatpush1.msra.mxu0 0.0
        %3355 = vmatprep.subr.mxu0 0.0
        %3356 = vmatpush1.msra.mxu0 0.0
        %3357 = vmatprep.subr.mxu0 0.0
        %3358 = vmatpush1.msra.mxu0 0.0
        %3359 = vmatprep.subr.mxu0 0.0
        %3360 = vmatpush1.msra.mxu0 0.0
        %3361 = vmatprep.subr.mxu0 0.0
        %3362 = vmatpush1.msra.mxu0 0.0
        %3363 = vmatprep.mubr.f32.mxu0 0.0
        %3364 = vmatmul.mubr.f32.gmra.mrb[0].mxu0 %v3297
        %v3365 = vpop.f32.mrb[0].mxu0
        %v3366 = vadd.f32 0.0, %v3365
        %v3367 = vpop.f32.mrb[0].mxu0
        %3368 = vdwg.mxu0
        %3369 = vrot.lane.b32.xlu0 %v1373, 32
        %v3370 = vpop.permute.xlu0 %3369
        %3371 = vrot.lane.b32.xlu0 %v1374, 32
        %v3372 = vpop.permute.xlu0 %3371
        %3373 = vrot.lane.b32.xlu0 %v1375, 32
        %v3374 = vpop.permute.xlu0 %3373
        %3375 = vrot.lane.b32.xlu0 %v1376, 32
        %v3376 = vpop.permute.xlu0 %3375
        %v3382 = vsel %vm499, %v2309, 0
        %3384 = vmatprep.subr.mxu0 0.0
        %3385 = vmatpush1.msra.mxu0 %v3370
        %3386 = vmatprep.subr.mxu0 0.0
        %3387 = vmatpush1.msra.mxu0 %v3372
        %3388 = vmatprep.subr.mxu0 0.0
        %3389 = vmatpush1.msra.mxu0 %v3374
        %3390 = vmatprep.subr.mxu0 0.0
        %3391 = vmatpush1.msra.mxu0 %v3376
        %3392 = vmatprep.subr.mxu0 0.0
        %3393 = vmatpush1.msra.mxu0 0.0
        %3394 = vmatprep.subr.mxu0 0.0
        %3395 = vmatpush1.msra.mxu0 0.0
        %3396 = vmatprep.subr.mxu0 0.0
        %3397 = vmatpush1.msra.mxu0 0.0
        %3398 = vmatprep.subr.mxu0 0.0
        %3399 = vmatpush1.msra.mxu0 0.0
        %3400 = vmatprep.subr.mxu0 0.0
        %3401 = vmatpush1.msra.mxu0 0.0
        %3402 = vmatprep.subr.mxu0 0.0
        %3403 = vmatpush1.msra.mxu0 0.0
        %3404 = vmatprep.subr.mxu0 0.0
        %3405 = vmatpush1.msra.mxu0 0.0
        %3406 = vmatprep.subr.mxu0 0.0
        %3407 = vmatpush1.msra.mxu0 0.0
        %3408 = vmatprep.subr.mxu0 0.0
        %3409 = vmatpush1.msra.mxu0 0.0
        %3410 = vmatprep.subr.mxu0 0.0
        %3411 = vmatpush1.msra.mxu0 0.0
        %3412 = vmatprep.subr.mxu0 0.0
        %3413 = vmatpush1.msra.mxu0 0.0
        %3414 = vmatprep.subr.mxu0 0.0
        %3415 = vmatpush1.msra.mxu0 0.0
        %3416 = vmatprep.subr.mxu0 0.0
        %3417 = vmatpush1.msra.mxu0 0.0
        %3418 = vmatprep.subr.mxu0 0.0
        %3419 = vmatpush1.msra.mxu0 0.0
        %3420 = vmatprep.subr.mxu0 0.0
        %3421 = vmatpush1.msra.mxu0 0.0
        %3422 = vmatprep.subr.mxu0 0.0
        %3423 = vmatpush1.msra.mxu0 0.0
        %3424 = vmatprep.subr.mxu0 0.0
        %3425 = vmatpush1.msra.mxu0 0.0
        %3426 = vmatprep.subr.mxu0 0.0
        %3427 = vmatpush1.msra.mxu0 0.0
        %3428 = vmatprep.subr.mxu0 0.0
        %3429 = vmatpush1.msra.mxu0 0.0
        %3430 = vmatprep.subr.mxu0 0.0
        %3431 = vmatpush1.msra.mxu0 0.0
        %3432 = vmatprep.subr.mxu0 0.0
        %3433 = vmatpush1.msra.mxu0 0.0
        %3434 = vmatprep.subr.mxu0 0.0
        %3435 = vmatpush1.msra.mxu0 0.0
        %3436 = vmatprep.subr.mxu0 0.0
        %3437 = vmatpush1.msra.mxu0 0.0
        %3438 = vmatprep.subr.mxu0 0.0
        %3439 = vmatpush1.msra.mxu0 0.0
        %3440 = vmatprep.subr.mxu0 0.0
        %3441 = vmatpush1.msra.mxu0 0.0
        %3442 = vmatprep.subr.mxu0 0.0
        %3443 = vmatpush1.msra.mxu0 0.0
        %3444 = vmatprep.subr.mxu0 0.0
        %3445 = vmatpush1.msra.mxu0 0.0
        %3446 = vmatprep.subr.mxu0 0.0
        %3447 = vmatpush1.msra.mxu0 0.0
        %3448 = vmatprep.mubr.f32.mxu0 0.0
        %3449 = vmatmul.mubr.f32.gmra.mrb[0].mxu0 %v3382
        %v3450 = vpop.f32.mrb[0].mxu0
        %v3451 = vadd.f32 %v3366, %v3450
        %v3452 = vpop.f32.mrb[0].mxu0
        %3453 = vdwg.mxu0
        %v3454 = vld [vmem:[%s9 + $0x6] sm:$0x1]
        %v3455 = vlaneseq
        %v3456 = vshrl.u32 %v3455, 7
        %v3457 = vsub.s32 0, %v3456
        %v3458 = vrot.slane %v3454, %v3457
        %v3459 = vadd.f32 %v3451, %v3458
        %v3460 = vadd.f32 %v1372, %v3459
        %v3461 = vsel %vm499, %v3460, 0.0
        %3462 = vadd.xlane.f32.xlu0 %v3461
        %v3463 = vpop.xlane.xlu0 %3462
        %v3464 = vmul.f32 %v3463, %v1352
        %v3465 = vsub.f32 %v3460, %v3464
        %v3466 = vmul.f32 %v3465, %v3465
        %v3467 = vsel %vm499, %v3466, 0.0
        %3468 = vadd.xlane.f32.xlu0 %v3467
        %v3469 = vpop.xlane.xlu0 %3468
        %v3470 = vmul.f32 %v3469, %v1352
        %v3471 = vadd.f32 %v3470, 1e-12
        %v3472 = vrsqrt.pop %v3471
        %v3473 = vmul.f32 %v3465, %v3472
        %3475 = vrot.lane.b32.xlu0 %v3458, 96
        %v3476 = vpop.permute.xlu0 %3475
        %v3478 = vmul.f32 %v3473, %v3476
        %3479 = vrot.lane.b32.xlu0 %v3458, 64
        %v3480 = vpop.permute.xlu0 %3479
        %v3482 = vadd.f32 %v3478, %v3480
        %v3483 = vld [vmem:[%s8 + $0x18] sm:$0xff]
        %v3484 = vld [vmem:[%s8 + $0x38] sm:$0xff]
        %v3485 = vld [vmem:[%s8 + $0x58] sm:$0xff]
        %v3486 = vld [vmem:[%s8 + $0x78] sm:$0xff]
        %v3487 = vld [vmem:[%s9 + $0x8] sm:$0x1]
        %v3488 = vlaneseq
        %v3489 = vshrl.u32 %v3488, 7
        %v3490 = vsub.s32 0, %v3489
        %v3491 = vrot.slane %v3487, %v3490
        %v3493 = vsel %vm499, %v3482, 0
        %3495 = vmatprep.subr.mxu0 0.0
        %3496 = vmatpush1.msra.mxu0 %v3483
        %3497 = vmatprep.subr.mxu0 0.0
        %3498 = vmatpush1.msra.mxu0 %v3484
        %3499 = vmatprep.subr.mxu0 0.0
        %3500 = vmatpush1.msra.mxu0 %v3485
        %3501 = vmatprep.subr.mxu0 0.0
        %3502 = vmatpush1.msra.mxu0 %v3486
        %3503 = vmatprep.subr.mxu0 0.0
        %3504 = vmatpush1.msra.mxu0 0.0
        %3505 = vmatprep.subr.mxu0 0.0
        %3506 = vmatpush1.msra.mxu0 0.0
        %3507 = vmatprep.subr.mxu0 0.0
        %3508 = vmatpush1.msra.mxu0 0.0
        %3509 = vmatprep.subr.mxu0 0.0
        %3510 = vmatpush1.msra.mxu0 0.0
        %3511 = vmatprep.subr.mxu0 0.0
        %3512 = vmatpush1.msra.mxu0 0.0
        %3513 = vmatprep.subr.mxu0 0.0
        %3514 = vmatpush1.msra.mxu0 0.0
        %3515 = vmatprep.subr.mxu0 0.0
        %3516 = vmatpush1.msra.mxu0 0.0
        %3517 = vmatprep.subr.mxu0 0.0
        %3518 = vmatpush1.msra.mxu0 0.0
        %3519 = vmatprep.subr.mxu0 0.0
        %3520 = vmatpush1.msra.mxu0 0.0
        %3521 = vmatprep.subr.mxu0 0.0
        %3522 = vmatpush1.msra.mxu0 0.0
        %3523 = vmatprep.subr.mxu0 0.0
        %3524 = vmatpush1.msra.mxu0 0.0
        %3525 = vmatprep.subr.mxu0 0.0
        %3526 = vmatpush1.msra.mxu0 0.0
        %3527 = vmatprep.subr.mxu0 0.0
        %3528 = vmatpush1.msra.mxu0 0.0
        %3529 = vmatprep.subr.mxu0 0.0
        %3530 = vmatpush1.msra.mxu0 0.0
        %3531 = vmatprep.subr.mxu0 0.0
        %3532 = vmatpush1.msra.mxu0 0.0
        %3533 = vmatprep.subr.mxu0 0.0
        %3534 = vmatpush1.msra.mxu0 0.0
        %3535 = vmatprep.subr.mxu0 0.0
        %3536 = vmatpush1.msra.mxu0 0.0
        %3537 = vmatprep.subr.mxu0 0.0
        %3538 = vmatpush1.msra.mxu0 0.0
        %3539 = vmatprep.subr.mxu0 0.0
        %3540 = vmatpush1.msra.mxu0 0.0
        %3541 = vmatprep.subr.mxu0 0.0
        %3542 = vmatpush1.msra.mxu0 0.0
        %3543 = vmatprep.subr.mxu0 0.0
        %3544 = vmatpush1.msra.mxu0 0.0
        %3545 = vmatprep.subr.mxu0 0.0
        %3546 = vmatpush1.msra.mxu0 0.0
        %3547 = vmatprep.subr.mxu0 0.0
        %3548 = vmatpush1.msra.mxu0 0.0
        %3549 = vmatprep.subr.mxu0 0.0
        %3550 = vmatpush1.msra.mxu0 0.0
        %3551 = vmatprep.subr.mxu0 0.0
        %3552 = vmatpush1.msra.mxu0 0.0
        %3553 = vmatprep.subr.mxu0 0.0
        %3554 = vmatpush1.msra.mxu0 0.0
        %3555 = vmatprep.subr.mxu0 0.0
        %3556 = vmatpush1.msra.mxu0 0.0
        %3557 = vmatprep.subr.mxu0 0.0
        %3558 = vmatpush1.msra.mxu0 0.0
        %3559 = vmatprep.mubr.f32.mxu0 0.0
        %3560 = vmatmul.mubr.f32.gmra.mrb[0].mxu0 %v3493
        %v3561 = vpop.f32.mrb[0].mxu0
        %v3562 = vadd.f32 %v3491, %v3561
        %v3563 = vpop.f32.mrb[0].mxu0
        %3564 = vdwg.mxu0
        %v3565 = vmul.f32 %v3562, %v3562
        %v3566 = vmul.f32 %v3562, %v3565
        %v3567 = vmul.f32 %v3566, 0.044715
        %v3568 = vadd.f32 %v3562, %v3567
        %v3569 = vmul.f32 %v3568, 0.7978846
        %v3570 = vtanh.pop %v3569
        %v3571 = vadd.f32 %v3570, 1.0
        %v3572 = vmul.f32 %v3571, 0.5
        %v3573 = vmul.f32 %v3562, %v3572
        %3578 = vrot.lane.b32.xlu0 %v3483, 64
        %v3579 = vpop.permute.xlu0 %3578
        %3580 = vrot.lane.b32.xlu0 %v3484, 64
        %v3581 = vpop.permute.xlu0 %3580
        %3582 = vrot.lane.b32.xlu0 %v3485, 64
        %v3583 = vpop.permute.xlu0 %3582
        %3584 = vrot.lane.b32.xlu0 %v3486, 64
        %v3585 = vpop.permute.xlu0 %3584
        %3586 = vrot.lane.b32.xlu0 %v3458, 32
        %v3587 = vpop.permute.xlu0 %3586
        %vm3589 = vcmask 523264
        %v3591 = vsel %vm3589, %v3573, 0
        %v3593 = vsel %vm3589, %v3579, 0
        %v3595 = vsel %vm3589, %v3581, 0
        %v3597 = vsel %vm3589, %v3583, 0
        %v3599 = vsel %vm3589, %v3585, 0
        %3601 = vmatprep.subr.mxu0 0.0
        %3602 = vmatpush1.xpose.msra.mxu0 %v3593
        %3603 = vmatprep.subr.mxu0 0.0
        %3604 = vmatpush1.xpose.msra.mxu0 %v3595
        %3605 = vmatprep.subr.mxu0 0.0
        %3606 = vmatpush1.xpose.msra.mxu0 %v3597
        %3607 = vmatprep.subr.mxu0 0.0
        %3608 = vmatpush1.xpose.msra.mxu0 %v3599
        %3609 = vmatprep.subr.mxu0 0.0
        %3610 = vmatpush1.xpose.msra.mxu0 0.0
        %3611 = vmatprep.subr.mxu0 0.0
        %3612 = vmatpush1.xpose.msra.mxu0 0.0
        %3613 = vmatprep.subr.mxu0 0.0
        %3614 = vmatpush1.xpose.msra.mxu0 0.0
        %3615 = vmatprep.subr.mxu0 0.0
        %3616 = vmatpush1.xpose.msra.mxu0 0.0
        %3617 = vmatprep.subr.mxu0 0.0
        %3618 = vmatpush1.xpose.msra.mxu0 0.0
        %3619 = vmatprep.subr.mxu0 0.0
        %3620 = vmatpush1.xpose.msra.mxu0 0.0
        %3621 = vmatprep.subr.mxu0 0.0
        %3622 = vmatpush1.xpose.msra.mxu0 0.0
        %3623 = vmatprep.subr.mxu0 0.0
        %3624 = vmatpush1.xpose.msra.mxu0 0.0
        %3625 = vmatprep.subr.mxu0 0.0
        %3626 = vmatpush1.xpose.msra.mxu0 0.0
        %3627 = vmatprep.subr.mxu0 0.0
        %3628 = vmatpush1.xpose.msra.mxu0 0.0
        %3629 = vmatprep.subr.mxu0 0.0
        %3630 = vmatpush1.xpose.msra.mxu0 0.0
        %3631 = vmatprep.subr.mxu0 0.0
        %3632 = vmatpush1.xpose.msra.mxu0 0.0
        %3633 = vmatprep.subr.mxu0 0.0
        %3634 = vmatpush1.xpose.msra.mxu0 0.0
        %3635 = vmatprep.subr.mxu0 0.0
        %3636 = vmatpush1.xpose.msra.mxu0 0.0
        %3637 = vmatprep.subr.mxu0 0.0
        %3638 = vmatpush1.xpose.msra.mxu0 0.0
        %3639 = vmatprep.subr.mxu0 0.0
        %3640 = vmatpush1.xpose.msra.mxu0 0.0
        %3641 = vmatprep.subr.mxu0 0.0
        %3642 = vmatpush1.xpose.msra.mxu0 0.0
        %3643 = vmatprep.subr.mxu0 0.0
        %3644 = vmatpush1.xpose.msra.mxu0 0.0
        %3645 = vmatprep.subr.mxu0 0.0
        %3646 = vmatpush1.xpose.msra.mxu0 0.0
        %3647 = vmatprep.subr.mxu0 0.0
        %3648 = vmatpush1.xpose.msra.mxu0 0.0
        %3649 = vmatprep.subr.mxu0 0.0
        %3650 = vmatpush1.xpose.msra.mxu0 0.0
        %3651 = vmatprep.subr.mxu0 0.0
        %3652 = vmatpush1.xpose.msra.mxu0 0.0
        %3653 = vmatprep.subr.mxu0 0.0
        %3654 = vmatpush1.xpose.msra.mxu0 0.0
        %3655 = vmatprep.subr.mxu0 0.0
        %3656 = vmatpush1.xpose.msra.mxu0 0.0
        %3657 = vmatprep.subr.mxu0 0.0
        %3658 = vmatpush1.xpose.msra.mxu0 0.0
        %3659 = vmatprep.subr.mxu0 0.0
        %3660 = vmatpush1.xpose.msra.mxu0 0.0
        %3661 = vmatprep.subr.mxu0 0.0
        %3662 = vmatpush1.xpose.msra.mxu0 0.0
        %3663 = vmatprep.subr.mxu0 0.0
        %3664 = vmatpush1.xpose.msra.mxu0 0.0
        %3665 = vmatprep.mubr.f32.mxu0 0.0
        %3666 = vmatmul.mubr.f32.gmra.mrb[0].mxu0 %v3591
        %v3667 = vpop.f32.mrb[0].mxu0
        %v3668 = vadd.f32 %v3587, %v3667
        %v3669 = vpop.f32.mrb[0].mxu0
        %3670 = vdwg.mxu0
        %v3671 = vadd.f32 %v3482, %v3668
        %v3672 = vsel %vm499, %v3671, 0.0
        %3673 = vadd.xlane.f32.xlu0 %v3672
        %v3674 = vpop.xlane.xlu0 %3673
        %v3675 = vmul.f32 %v3674, %v1352
        %v3676 = vsub.f32 %v3671, %v3675
        %v3677 = vmul.f32 %v3676, %v3676
        %v3678 = vsel %vm499, %v3677, 0.0
        %3679 = vadd.xlane.f32.xlu0 %v3678
        %v3680 = vpop.xlane.xlu0 %3679
        %v3681 = vmul.f32 %v3680, %v1352
        %v3682 = vadd.f32 %v3681, 1e-12
        %v3683 = vrsqrt.pop %v3682
        %v3684 = vmul.f32 %v3676, %v3683
        %3686 = vrot.lane.b32.xlu0 %v3491, 64
        %v3687 = vpop.permute.xlu0 %3686
        %v3689 = vmul.f32 %v3684, %v3687
        %3690 = vrot.lane.b32.xlu0 %v3491, 32
        %v3691 = vpop.permute.xlu0 %3690
        %v3693 = vadd.f32 %v3689, %v3691
        %s3694 = scalar_lea.vmem %s8, 128
        %v3695 = vld [vmem:[%s3694] sm:$0xff]
        %v3696 = vld [vmem:[%s3694 + $0x20] sm:$0xff]
        %v3697 = vld [vmem:[%s3694 + $0x40] sm:$0xff]
        %v3698 = vld [vmem:[%s3694 + $0x60] sm:$0xff]
        %v3699 = vld [vmem:[%s9 + $0x1] sm:$0x1]
        %v3700 = vlaneseq
        %v3701 = vshrl.u32 %v3700, 7
        %v3702 = vsub.s32 0, %v3701
        %v3703 = vrot.slane %v3699, %v3702
        %v3705 = vsel %vm499, %v3693, 0
        %3707 = vmatprep.subr.mxu0 0.0
        %3708 = vmatpush1.msra.mxu0 %v3695
        %3709 = vmatprep.subr.mxu0 0.0
        %3710 = vmatpush1.msra.mxu0 %v3696
        %3711 = vmatprep.subr.mxu0 0.0
        %3712 = vmatpush1.msra.mxu0 %v3697
        %3713 = vmatprep.subr.mxu0 0.0
        %3714 = vmatpush1.msra.mxu0 %v3698
        %3715 = vmatprep.subr.mxu0 0.0
        %3716 = vmatpush1.msra.mxu0 0.0
        %3717 = vmatprep.subr.mxu0 0.0
        %3718 = vmatpush1.msra.mxu0 0.0
        %3719 = vmatprep.subr.mxu0 0.0
        %3720 = vmatpush1.msra.mxu0 0.0
        %3721 = vmatprep.subr.mxu0 0.0
        %3722 = vmatpush1.msra.mxu0 0.0
        %3723 = vmatprep.subr.mxu0 0.0
        %3724 = vmatpush1.msra.mxu0 0.0
        %3725 = vmatprep.subr.mxu0 0.0
        %3726 = vmatpush1.msra.mxu0 0.0
        %3727 = vmatprep.subr.mxu0 0.0
        %3728 = vmatpush1.msra.mxu0 0.0
        %3729 = vmatprep.subr.mxu0 0.0
        %3730 = vmatpush1.msra.mxu0 0.0
        %3731 = vmatprep.subr.mxu0 0.0
        %3732 = vmatpush1.msra.mxu0 0.0
        %3733 = vmatprep.subr.mxu0 0.0
        %3734 = vmatpush1.msra.mxu0 0.0
        %3735 = vmatprep.subr.mxu0 0.0
        %3736 = vmatpush1.msra.mxu0 0.0
        %3737 = vmatprep.subr.mxu0 0.0
        %3738 = vmatpush1.msra.mxu0 0.0
        %3739 = vmatprep.subr.mxu0 0.0
        %3740 = vmatpush1.msra.mxu0 0.0
        %3741 = vmatprep.subr.mxu0 0.0
        %3742 = vmatpush1.msra.mxu0 0.0
        %3743 = vmatprep.subr.mxu0 0.0
        %3744 = vmatpush1.msra.mxu0 0.0
        %3745 = vmatprep.subr.mxu0 0.0
        %3746 = vmatpush1.msra.mxu0 0.0
        %3747 = vmatprep.subr.mxu0 0.0
        %3748 = vmatpush1.msra.mxu0 0.0
        %3749 = vmatprep.subr.mxu0 0.0
        %3750 = vmatpush1.msra.mxu0 0.0
        %3751 = vmatprep.subr.mxu0 0.0
        %3752 = vmatpush1.msra.mxu0 0.0
        %3753 = vmatprep.subr.mxu0 0.0
        %3754 = vmatpush1.msra.mxu0 0.0
        %3755 = vmatprep.subr.mxu0 0.0
        %3756 = vmatpush1.msra.mxu0 0.0
        %3757 = vmatprep.subr.mxu0 0.0
        %3758 = vmatpush1.msra.mxu0 0.0
        %3759 = vmatprep.subr.mxu0 0.0
        %3760 = vmatpush1.msra.mxu0 0.0
        %3761 = vmatprep.subr.mxu0 0.0
        %3762 = vmatpush1.msra.mxu0 0.0
        %3763 = vmatprep.subr.mxu0 0.0
        %3764 = vmatpush1.msra.mxu0 0.0
        %3765 = vmatprep.subr.mxu0 0.0
        %3766 = vmatpush1.msra.mxu0 0.0
        %3767 = vmatprep.subr.mxu0 0.0
        %3768 = vmatpush1.msra.mxu0 0.0
        %3769 = vmatprep.subr.mxu0 0.0
        %3770 = vmatpush1.msra.mxu0 0.0
        %3771 = vmatprep.mubr.f32.mxu0 0.0
        %3772 = vmatmul.mubr.f32.gmra.mrb[0].mxu0 %v3705
        %v3773 = vpop.f32.mrb[0].mxu0
        %v3774 = vadd.f32 %v3703, %v3773
        %v3775 = vpop.f32.mrb[0].mxu0
        %3776 = vdwg.mxu0
        %3778 = vrot.lane.b32.xlu0 %v3774, 96
        %v3779 = vpop.permute.xlu0 %3778
        %v3780 = vsel %vm576, %v3774, 0
        %v3782 = vsel %vm576, %v3779, 0
        %3784 = vmatprep.subr.mxu0 0.0
        %3785 = vmatpush1.xpose.msra.mxu0 %v3782
        %3786 = vmatprep.subr.mxu0 0.0
        %3787 = vmatpush1.xpose.msra.mxu0 0.0
        %3788 = vmatprep.subr.mxu0 0.0
        %3789 = vmatpush1.xpose.msra.mxu0 0.0
        %3790 = vmatprep.subr.mxu0 0.0
        %3791 = vmatpush1.xpose.msra.mxu0 0.0
        %3792 = vmatprep.subr.mxu0 0.0
        %3793 = vmatpush1.xpose.msra.mxu0 0.0
        %3794 = vmatprep.subr.mxu0 0.0
        %3795 = vmatpush1.xpose.msra.mxu0 0.0
        %3796 = vmatprep.subr.mxu0 0.0
        %3797 = vmatpush1.xpose.msra.mxu0 0.0
        %3798 = vmatprep.subr.mxu0 0.0
        %3799 = vmatpush1.xpose.msra.mxu0 0.0
        %3800 = vmatprep.subr.mxu0 0.0
        %3801 = vmatpush1.xpose.msra.mxu0 0.0
        %3802 = vmatprep.subr.mxu0 0.0
        %3803 = vmatpush1.xpose.msra.mxu0 0.0
        %3804 = vmatprep.subr.mxu0 0.0
        %3805 = vmatpush1.xpose.msra.mxu0 0.0
        %3806 = vmatprep.subr.mxu0 0.0
        %3807 = vmatpush1.xpose.msra.mxu0 0.0
        %3808 = vmatprep.subr.mxu0 0.0
        %3809 = vmatpush1.xpose.msra.mxu0 0.0
        %3810 = vmatprep.subr.mxu0 0.0
        %3811 = vmatpush1.xpose.msra.mxu0 0.0
        %3812 = vmatprep.subr.mxu0 0.0
        %3813 = vmatpush1.xpose.msra.mxu0 0.0
        %3814 = vmatprep.subr.mxu0 0.0
        %3815 = vmatpush1.xpose.msra.mxu0 0.0
        %3816 = vmatprep.subr.mxu0 0.0
        %3817 = vmatpush1.xpose.msra.mxu0 0.0
        %3818 = vmatprep.subr.mxu0 0.0
        %3819 = vmatpush1.xpose.msra.mxu0 0.0
        %3820 = vmatprep.subr.mxu0 0.0
        %3821 = vmatpush1.xpose.msra.mxu0 0.0
        %3822 = vmatprep.subr.mxu0 0.0
        %3823 = vmatpush1.xpose.msra.mxu0 0.0
        %3824 = vmatprep.subr.mxu0 0.0
        %3825 = vmatpush1.xpose.msra.mxu0 0.0
        %3826 = vmatprep.subr.mxu0 0.0
        %3827 = vmatpush1.xpose.msra.mxu0 0.0
        %3828 = vmatprep.subr.mxu0 0.0
        %3829 = vmatpush1.xpose.msra.mxu0 0.0
        %3830 = vmatprep.subr.mxu0 0.0
        %3831 = vmatpush1.xpose.msra.mxu0 0.0
        %3832 = vmatprep.subr.mxu0 0.0
        %3833 = vmatpush1.xpose.msra.mxu0 0.0
        %3834 = vmatprep.subr.mxu0 0.0
        %3835 = vmatpush1.xpose.msra.mxu0 0.0
        %3836 = vmatprep.subr.mxu0 0.0
        %3837 = vmatpush1.xpose.msra.mxu0 0.0
        %3838 = vmatprep.subr.mxu0 0.0
        %3839 = vmatpush1.xpose.msra.mxu0 0.0
        %3840 = vmatprep.subr.mxu0 0.0
        %3841 = vmatpush1.xpose.msra.mxu0 0.0
        %3842 = vmatprep.subr.mxu0 0.0
        %3843 = vmatpush1.xpose.msra.mxu0 0.0
        %3844 = vmatprep.subr.mxu0 0.0
        %3845 = vmatpush1.xpose.msra.mxu0 0.0
        %3846 = vmatprep.subr.mxu0 0.0
        %3847 = vmatpush1.xpose.msra.mxu0 0.0
        %3848 = vmatprep.mubr.f32.mxu0 0.0
        %3849 = vmatmul.mubr.f32.gmra.mrb[0].mxu0 %v3780
        %v3850 = vpop.f32.mrb[0].mxu0
        %v3851 = vadd.f32 0.0, %v3850
        %v3852 = vpop.f32.mrb[0].mxu0
        %3853 = vdwg.mxu0
        %3854 = vrot.lane.b32.xlu0 %v3774, 120
        %v3855 = vpop.permute.xlu0 %3854
        %3856 = vrot.lane.b32.xlu0 %v3774, 88
        %v3857 = vpop.permute.xlu0 %3856
        %v3858 = vsel %vm576, %v3855, 0
        %v3860 = vsel %vm576, %v3857, 0
        %3862 = vmatprep.subr.mxu0 0.0
        %3863 = vmatpush1.xpose.msra.mxu0 %v3860
        %3864 = vmatprep.subr.mxu0 0.0
        %3865 = vmatpush1.xpose.msra.mxu0 0.0
        %3866 = vmatprep.subr.mxu0 0.0
        %3867 = vmatpush1.xpose.msra.mxu0 0.0
        %3868 = vmatprep.subr.mxu0 0.0
        %3869 = vmatpush1.xpose.msra.mxu0 0.0
        %3870 = vmatprep.subr.mxu0 0.0
        %3871 = vmatpush1.xpose.msra.mxu0 0.0
        %3872 = vmatprep.subr.mxu0 0.0
        %3873 = vmatpush1.xpose.msra.mxu0 0.0
        %3874 = vmatprep.subr.mxu0 0.0
        %3875 = vmatpush1.xpose.msra.mxu0 0.0
        %3876 = vmatprep.subr.mxu0 0.0
        %3877 = vmatpush1.xpose.msra.mxu0 0.0
        %3878 = vmatprep.subr.mxu0 0.0
        %3879 = vmatpush1.xpose.msra.mxu0 0.0
        %3880 = vmatprep.subr.mxu0 0.0
        %3881 = vmatpush1.xpose.msra.mxu0 0.0
        %3882 = vmatprep.subr.mxu0 0.0
        %3883 = vmatpush1.xpose.msra.mxu0 0.0
        %3884 = vmatprep.subr.mxu0 0.0
        %3885 = vmatpush1.xpose.msra.mxu0 0.0
        %3886 = vmatprep.subr.mxu0 0.0
        %3887 = vmatpush1.xpose.msra.mxu0 0.0
        %3888 = vmatprep.subr.mxu0 0.0
        %3889 = vmatpush1.xpose.msra.mxu0 0.0
        %3890 = vmatprep.subr.mxu0 0.0
        %3891 = vmatpush1.xpose.msra.mxu0 0.0
        %3892 = vmatprep.subr.mxu0 0.0
        %3893 = vmatpush1.xpose.msra.mxu0 0.0
        %3894 = vmatprep.subr.mxu0 0.0
        %3895 = vmatpush1.xpose.msra.mxu0 0.0
        %3896 = vmatprep.subr.mxu0 0.0
        %3897 = vmatpush1.xpose.msra.mxu0 0.0
        %3898 = vmatprep.subr.mxu0 0.0
        %3899 = vmatpush1.xpose.msra.mxu0 0.0
        %3900 = vmatprep.subr.mxu0 0.0
        %3901 = vmatpush1.xpose.msra.mxu0 0.0
        %3902 = vmatprep.subr.mxu0 0.0
        %3903 = vmatpush1.xpose.msra.mxu0 0.0
        %3904 = vmatprep.subr.mxu0 0.0
        %3905 = vmatpush1.xpose.msra.mxu0 0.0
        %3906 = vmatprep.subr.mxu0 0.0
        %3907 = vmatpush1.xpose.msra.mxu0 0.0
        %3908 = vmatprep.subr.mxu0 0.0
        %3909 = vmatpush1.xpose.msra.mxu0 0.0
        %3910 = vmatprep.subr.mxu0 0.0
        %3911 = vmatpush1.xpose.msra.mxu0 0.0
        %3912 = vmatprep.subr.mxu0 0.0
        %3913 = vmatpush1.xpose.msra.mxu0 0.0
        %3914 = vmatprep.subr.mxu0 0.0
        %3915 = vmatpush1.xpose.msra.mxu0 0.0
        %3916 = vmatprep.subr.mxu0 0.0
        %3917 = vmatpush1.xpose.msra.mxu0 0.0
        %3918 = vmatprep.subr.mxu0 0.0
        %3919 = vmatpush1.xpose.msra.mxu0 0.0
        %3920 = vmatprep.subr.mxu0 0.0
        %3921 = vmatpush1.xpose.msra.mxu0 0.0
        %3922 = vmatprep.subr.mxu0 0.0
        %3923 = vmatpush1.xpose.msra.mxu0 0.0
        %3924 = vmatprep.subr.mxu0 0.0
        %3925 = vmatpush1.xpose.msra.mxu0 0.0
        %3926 = vmatprep.mubr.f32.mxu0 0.0
        %3927 = vmatmul.mubr.f32.gmra.mrb[0].mxu0 %v3858
        %v3928 = vpop.f32.mrb[0].mxu0
        %v3929 = vadd.f32 0.0, %v3928
        %v3930 = vpop.f32.mrb[0].mxu0
        %3931 = vdwg.mxu0
        %3932 = vrot.lane.b32.xlu0 %v3774, 112
        %v3933 = vpop.permute.xlu0 %3932
        %3934 = vrot.lane.b32.xlu0 %v3774, 80
        %v3935 = vpop.permute.xlu0 %3934
        %v3936 = vsel %vm576, %v3933, 0
        %v3938 = vsel %vm576, %v3935, 0
        %3940 = vmatprep.subr.mxu0 0.0
        %3941 = vmatpush1.xpose.msra.mxu0 %v3938
        %3942 = vmatprep.subr.mxu0 0.0
        %3943 = vmatpush1.xpose.msra.mxu0 0.0
        %3944 = vmatprep.subr.mxu0 0.0
        %3945 = vmatpush1.xpose.msra.mxu0 0.0
        %3946 = vmatprep.subr.mxu0 0.0
        %3947 = vmatpush1.xpose.msra.mxu0 0.0
        %3948 = vmatprep.subr.mxu0 0.0
        %3949 = vmatpush1.xpose.msra.mxu0 0.0
        %3950 = vmatprep.subr.mxu0 0.0
        %3951 = vmatpush1.xpose.msra.mxu0 0.0
        %3952 = vmatprep.subr.mxu0 0.0
        %3953 = vmatpush1.xpose.msra.mxu0 0.0
        %3954 = vmatprep.subr.mxu0 0.0
        %3955 = vmatpush1.xpose.msra.mxu0 0.0
        %3956 = vmatprep.subr.mxu0 0.0
        %3957 = vmatpush1.xpose.msra.mxu0 0.0
        %3958 = vmatprep.subr.mxu0 0.0
        %3959 = vmatpush1.xpose.msra.mxu0 0.0
        %3960 = vmatprep.subr.mxu0 0.0
        %3961 = vmatpush1.xpose.msra.mxu0 0.0
        %3962 = vmatprep.subr.mxu0 0.0
        %3963 = vmatpush1.xpose.msra.mxu0 0.0
        %3964 = vmatprep.subr.mxu0 0.0
        %3965 = vmatpush1.xpose.msra.mxu0 0.0
        %3966 = vmatprep.subr.mxu0 0.0
        %3967 = vmatpush1.xpose.msra.mxu0 0.0
        %3968 = vmatprep.subr.mxu0 0.0
        %3969 = vmatpush1.xpose.msra.mxu0 0.0
        %3970 = vmatprep.subr.mxu0 0.0
        %3971 = vmatpush1.xpose.msra.mxu0 0.0
        %3972 = vmatprep.subr.mxu0 0.0
        %3973 = vmatpush1.xpose.msra.mxu0 0.0
        %3974 = vmatprep.subr.mxu0 0.0
        %3975 = vmatpush1.xpose.msra.mxu0 0.0
        %3976 = vmatprep.subr.mxu0 0.0
        %3977 = vmatpush1.xpose.msra.mxu0 0.0
        %3978 = vmatprep.subr.mxu0 0.0
        %3979 = vmatpush1.xpose.msra.mxu0 0.0
        %3980 = vmatprep.subr.mxu0 0.0
        %3981 = vmatpush1.xpose.msra.mxu0 0.0
        %3982 = vmatprep.subr.mxu0 0.0
        %3983 = vmatpush1.xpose.msra.mxu0 0.0
        %3984 = vmatprep.subr.mxu0 0.0
        %3985 = vmatpush1.xpose.msra.mxu0 0.0
        %3986 = vmatprep.subr.mxu0 0.0
        %3987 = vmatpush1.xpose.msra.mxu0 0.0
        %3988 = vmatprep.subr.mxu0 0.0
        %3989 = vmatpush1.xpose.msra.mxu0 0.0
        %3990 = vmatprep.subr.mxu0 0.0
        %3991 = vmatpush1.xpose.msra.mxu0 0.0
        %3992 = vmatprep.subr.mxu0 0.0
        %3993 = vmatpush1.xpose.msra.mxu0 0.0
        %3994 = vmatprep.subr.mxu0 0.0
        %3995 = vmatpush1.xpose.msra.mxu0 0.0
        %3996 = vmatprep.subr.mxu0 0.0
        %3997 = vmatpush1.xpose.msra.mxu0 0.0
        %3998 = vmatprep.subr.mxu0 0.0
        %3999 = vmatpush1.xpose.msra.mxu0 0.0
        %4000 = vmatprep.subr.mxu0 0.0
        %4001 = vmatpush1.xpose.msra.mxu0 0.0
        %4002 = vmatprep.subr.mxu0 0.0
        %4003 = vmatpush1.xpose.msra.mxu0 0.0
        %4004 = vmatprep.mubr.f32.mxu0 0.0
        %4005 = vmatmul.mubr.f32.gmra.mrb[0].mxu0 %v3936
        %v4006 = vpop.f32.mrb[0].mxu0
        %v4007 = vadd.f32 0.0, %v4006
        %v4008 = vpop.f32.mrb[0].mxu0
        %4009 = vdwg.mxu0
        %4010 = vrot.lane.b32.xlu0 %v3774, 104
        %v4011 = vpop.permute.xlu0 %4010
        %4012 = vrot.lane.b32.xlu0 %v3774, 72
        %v4013 = vpop.permute.xlu0 %4012
        %v4014 = vsel %vm576, %v4011, 0
        %v4016 = vsel %vm576, %v4013, 0
        %4018 = vmatprep.subr.mxu0 0.0
        %4019 = vmatpush1.xpose.msra.mxu0 %v4016
        %4020 = vmatprep.subr.mxu0 0.0
        %4021 = vmatpush1.xpose.msra.mxu0 0.0
        %4022 = vmatprep.subr.mxu0 0.0
        %4023 = vmatpush1.xpose.msra.mxu0 0.0
        %4024 = vmatprep.subr.mxu0 0.0
        %4025 = vmatpush1.xpose.msra.mxu0 0.0
        %4026 = vmatprep.subr.mxu0 0.0
        %4027 = vmatpush1.xpose.msra.mxu0 0.0
        %4028 = vmatprep.subr.mxu0 0.0
        %4029 = vmatpush1.xpose.msra.mxu0 0.0
        %4030 = vmatprep.subr.mxu0 0.0
        %4031 = vmatpush1.xpose.msra.mxu0 0.0
        %4032 = vmatprep.subr.mxu0 0.0
        %4033 = vmatpush1.xpose.msra.mxu0 0.0
        %4034 = vmatprep.subr.mxu0 0.0
        %4035 = vmatpush1.xpose.msra.mxu0 0.0
        %4036 = vmatprep.subr.mxu0 0.0
        %4037 = vmatpush1.xpose.msra.mxu0 0.0
        %4038 = vmatprep.subr.mxu0 0.0
        %4039 = vmatpush1.xpose.msra.mxu0 0.0
        %4040 = vmatprep.subr.mxu0 0.0
        %4041 = vmatpush1.xpose.msra.mxu0 0.0
        %4042 = vmatprep.subr.mxu0 0.0
        %4043 = vmatpush1.xpose.msra.mxu0 0.0
        %4044 = vmatprep.subr.mxu0 0.0
        %4045 = vmatpush1.xpose.msra.mxu0 0.0
        %4046 = vmatprep.subr.mxu0 0.0
        %4047 = vmatpush1.xpose.msra.mxu0 0.0
        %4048 = vmatprep.subr.mxu0 0.0
        %4049 = vmatpush1.xpose.msra.mxu0 0.0
        %4050 = vmatprep.subr.mxu0 0.0
        %4051 = vmatpush1.xpose.msra.mxu0 0.0
        %4052 = vmatprep.subr.mxu0 0.0
        %4053 = vmatpush1.xpose.msra.mxu0 0.0
        %4054 = vmatprep.subr.mxu0 0.0
        %4055 = vmatpush1.xpose.msra.mxu0 0.0
        %4056 = vmatprep.subr.mxu0 0.0
        %4057 = vmatpush1.xpose.msra.mxu0 0.0
        %4058 = vmatprep.subr.mxu0 0.0
        %4059 = vmatpush1.xpose.msra.mxu0 0.0
        %4060 = vmatprep.subr.mxu0 0.0
        %4061 = vmatpush1.xpose.msra.mxu0 0.0
        %4062 = vmatprep.subr.mxu0 0.0
        %4063 = vmatpush1.xpose.msra.mxu0 0.0
        %4064 = vmatprep.subr.mxu0 0.0
        %4065 = vmatpush1.xpose.msra.mxu0 0.0
        %4066 = vmatprep.subr.mxu0 0.0
        %4067 = vmatpush1.xpose.msra.mxu0 0.0
        %4068 = vmatprep.subr.mxu0 0.0
        %4069 = vmatpush1.xpose.msra.mxu0 0.0
        %4070 = vmatprep.subr.mxu0 0.0
        %4071 = vmatpush1.xpose.msra.mxu0 0.0
        %4072 = vmatprep.subr.mxu0 0.0
        %4073 = vmatpush1.xpose.msra.mxu0 0.0
        %4074 = vmatprep.subr.mxu0 0.0
        %4075 = vmatpush1.xpose.msra.mxu0 0.0
        %4076 = vmatprep.subr.mxu0 0.0
        %4077 = vmatpush1.xpose.msra.mxu0 0.0
        %4078 = vmatprep.subr.mxu0 0.0
        %4079 = vmatpush1.xpose.msra.mxu0 0.0
        %4080 = vmatprep.subr.mxu0 0.0
        %4081 = vmatpush1.xpose.msra.mxu0 0.0
        %4082 = vmatprep.mubr.f32.mxu0 0.0
        %4083 = vmatmul.mubr.f32.gmra.mrb[0].mxu0 %v4014
        %v4084 = vpop.f32.mrb[0].mxu0
        %v4085 = vadd.f32 0.0, %v4084
        %v4086 = vpop.f32.mrb[0].mxu0
        %4087 = vdwg.mxu0
        %v4088 = vadd.f32 %v3851, %v487
        %v4089 = vadd.f32 %v3929, %v487
        %v4090 = vadd.f32 %v4007, %v487
        %v4091 = vadd.f32 %v4085, %v487
        %v4092 = vsel %vm576, %v4088, -inf
        %4093 = vmax.xlane.f32.xlu0 %v4092
        %v4094 = vpop.xlane.xlu0 %4093
        %v4095 = vsel %vm576, %v4089, -inf
        %4096 = vmax.xlane.f32.xlu0 %v4095
        %v4097 = vpop.xlane.xlu0 %4096
        %v4098 = vsel %vm576, %v4090, -inf
        %4099 = vmax.xlane.f32.xlu0 %v4098
        %v4100 = vpop.xlane.xlu0 %4099
        %v4101 = vsel %vm576, %v4091, -inf
        %4102 = vmax.xlane.f32.xlu0 %v4101
        %v4103 = vpop.xlane.xlu0 %4102
        %v4104 = vsub.f32 %v4088, %v4094
        %v4105 = vsub.f32 %v4089, %v4097
        %v4106 = vsub.f32 %v4090, %v4100
        %v4107 = vsub.f32 %v4091, %v4103
        %v4108 = vmul.f32 %v4104, 1.442695
        %v4109 = vpow.pop %v4108
        %v4110 = vmul.f32 %v4105, 1.442695
        %v4111 = vpow.pop %v4110
        %v4112 = vmul.f32 %v4106, 1.442695
        %v4113 = vpow.pop %v4112
        %v4114 = vmul.f32 %v4107, 1.442695
        %v4115 = vpow.pop %v4114
        %v4116 = vsel %vm576, %v4109, 0.0
        %4117 = vadd.xlane.f32.xlu0 %v4116
        %v4118 = vpop.xlane.xlu0 %4117
        %v4119 = vsel %vm576, %v4111, 0.0
        %4120 = vadd.xlane.f32.xlu0 %v4119
        %v4121 = vpop.xlane.xlu0 %4120
        %v4122 = vsel %vm576, %v4113, 0.0
        %4123 = vadd.xlane.f32.xlu0 %v4122
        %v4124 = vpop.xlane.xlu0 %4123
        %v4125 = vsel %vm576, %v4115, 0.0
        %4126 = vadd.xlane.f32.xlu0 %v4125
        %v4127 = vpop.xlane.xlu0 %4126
        %v4128 = vrcp.pop %v4118
        %v4129 = vrcp.pop %v4121
        %v4130 = vrcp.pop %v4124
        %v4131 = vrcp.pop %v4127
        %v4132 = vmul.f32 %v4109, %v4128
        %v4133 = vmul.f32 %v4111, %v4129
        %v4134 = vmul.f32 %v4113, %v4130
        %v4135 = vmul.f32 %v4115, %v4131
        %4136 = vrot.lane.b32.xlu0 %v3774, 64
        %v4137 = vpop.permute.xlu0 %4136
        %v4140 = vsel %vm576, %v4132, 0
        %4142 = vmatprep.subr.mxu0 0.0
        %4143 = vmatpush1.msra.mxu0 %v4137
        %4144 = vmatprep.subr.mxu0 0.0
        %4145 = vmatpush1.msra.mxu0 0.0
        %4146 = vmatprep.subr.mxu0 0.0
        %4147 = vmatpush1.msra.mxu0 0.0
        %4148 = vmatprep.subr.mxu0 0.0
        %4149 = vmatpush1.msra.mxu0 0.0
        %4150 = vmatprep.subr.mxu0 0.0
        %4151 = vmatpush1.msra.mxu0 0.0
        %4152 = vmatprep.subr.mxu0 0.0
        %4153 = vmatpush1.msra.mxu0 0.0
        %4154 = vmatprep.subr.mxu0 0.0
        %4155 = vmatpush1.msra.mxu0 0.0
        %4156 = vmatprep.subr.mxu0 0.0
        %4157 = vmatpush1.msra.mxu0 0.0
        %4158 = vmatprep.subr.mxu0 0.0
        %4159 = vmatpush1.msra.mxu0 0.0
        %4160 = vmatprep.subr.mxu0 0.0
        %4161 = vmatpush1.msra.mxu0 0.0
        %4162 = vmatprep.subr.mxu0 0.0
        %4163 = vmatpush1.msra.mxu0 0.0
        %4164 = vmatprep.subr.mxu0 0.0
        %4165 = vmatpush1.msra.mxu0 0.0
        %4166 = vmatprep.subr.mxu0 0.0
        %4167 = vmatpush1.msra.mxu0 0.0
        %4168 = vmatprep.subr.mxu0 0.0
        %4169 = vmatpush1.msra.mxu0 0.0
        %4170 = vmatprep.subr.mxu0 0.0
        %4171 = vmatpush1.msra.mxu0 0.0
        %4172 = vmatprep.subr.mxu0 0.0
        %4173 = vmatpush1.msra.mxu0 0.0
        %4174 = vmatprep.subr.mxu0 0.0
        %4175 = vmatpush1.msra.mxu0 0.0
        %4176 = vmatprep.subr.mxu0 0.0
        %4177 = vmatpush1.msra.mxu0 0.0
        %4178 = vmatprep.subr.mxu0 0.0
        %4179 = vmatpush1.msra.mxu0 0.0
        %4180 = vmatprep.subr.mxu0 0.0
        %4181 = vmatpush1.msra.mxu0 0.0
        %4182 = vmatprep.subr.mxu0 0.0
        %4183 = vmatpush1.msra.mxu0 0.0
        %4184 = vmatprep.subr.mxu0 0.0
        %4185 = vmatpush1.msra.mxu0 0.0
        %4186 = vmatprep.subr.mxu0 0.0
        %4187 = vmatpush1.msra.mxu0 0.0
        %4188 = vmatprep.subr.mxu0 0.0
        %4189 = vmatpush1.msra.mxu0 0.0
        %4190 = vmatprep.subr.mxu0 0.0
        %4191 = vmatpush1.msra.mxu0 0.0
        %4192 = vmatprep.subr.mxu0 0.0
        %4193 = vmatpush1.msra.mxu0 0.0
        %4194 = vmatprep.subr.mxu0 0.0
        %4195 = vmatpush1.msra.mxu0 0.0
        %4196 = vmatprep.subr.mxu0 0.0
        %4197 = vmatpush1.msra.mxu0 0.0
        %4198 = vmatprep.subr.mxu0 0.0
        %4199 = vmatpush1.msra.mxu0 0.0
        %4200 = vmatprep.subr.mxu0 0.0
        %4201 = vmatpush1.msra.mxu0 0.0
        %4202 = vmatprep.subr.mxu0 0.0
        %4203 = vmatpush1.msra.mxu0 0.0
        %4204 = vmatprep.subr.mxu0 0.0
        %4205 = vmatpush1.msra.mxu0 0.0
        %4206 = vmatprep.mubr.f32.mxu0 0.0
        %4207 = vmatmul.mubr.f32.gmra.mrb[0].mxu0 %v4140
        %v4208 = vpop.f32.mrb[0].mxu0
        %v4209 = vadd.f32 0.0, %v4208
        %v4210 = vpop.f32.mrb[0].mxu0
        %4211 = vdwg.mxu0
        %4212 = vrot.lane.b32.xlu0 %v3774, 56
        %v4213 = vpop.permute.xlu0 %4212
        %v4216 = vsel %vm576, %v4133, 0
        %4218 = vmatprep.subr.mxu0 0.0
        %4219 = vmatpush1.msra.mxu0 %v4213
        %4220 = vmatprep.subr.mxu0 0.0
        %4221 = vmatpush1.msra.mxu0 0.0
        %4222 = vmatprep.subr.mxu0 0.0
        %4223 = vmatpush1.msra.mxu0 0.0
        %4224 = vmatprep.subr.mxu0 0.0
        %4225 = vmatpush1.msra.mxu0 0.0
        %4226 = vmatprep.subr.mxu0 0.0
        %4227 = vmatpush1.msra.mxu0 0.0
        %4228 = vmatprep.subr.mxu0 0.0
        %4229 = vmatpush1.msra.mxu0 0.0
        %4230 = vmatprep.subr.mxu0 0.0
        %4231 = vmatpush1.msra.mxu0 0.0
        %4232 = vmatprep.subr.mxu0 0.0
        %4233 = vmatpush1.msra.mxu0 0.0
        %4234 = vmatprep.subr.mxu0 0.0
        %4235 = vmatpush1.msra.mxu0 0.0
        %4236 = vmatprep.subr.mxu0 0.0
        %4237 = vmatpush1.msra.mxu0 0.0
        %4238 = vmatprep.subr.mxu0 0.0
        %4239 = vmatpush1.msra.mxu0 0.0
        %4240 = vmatprep.subr.mxu0 0.0
        %4241 = vmatpush1.msra.mxu0 0.0
        %4242 = vmatprep.subr.mxu0 0.0
        %4243 = vmatpush1.msra.mxu0 0.0
        %4244 = vmatprep.subr.mxu0 0.0
        %4245 = vmatpush1.msra.mxu0 0.0
        %4246 = vmatprep.subr.mxu0 0.0
        %4247 = vmatpush1.msra.mxu0 0.0
        %4248 = vmatprep.subr.mxu0 0.0
        %4249 = vmatpush1.msra.mxu0 0.0
        %4250 = vmatprep.subr.mxu0 0.0
        %4251 = vmatpush1.msra.mxu0 0.0
        %4252 = vmatprep.subr.mxu0 0.0
        %4253 = vmatpush1.msra.mxu0 0.0
        %4254 = vmatprep.subr.mxu0 0.0
        %4255 = vmatpush1.msra.mxu0 0.0
        %4256 = vmatprep.subr.mxu0 0.0
        %4257 = vmatpush1.msra.mxu0 0.0
        %4258 = vmatprep.subr.mxu0 0.0
        %4259 = vmatpush1.msra.mxu0 0.0
        %4260 = vmatprep.subr.mxu0 0.0
        %4261 = vmatpush1.msra.mxu0 0.0
        %4262 = vmatprep.subr.mxu0 0.0
        %4263 = vmatpush1.msra.mxu0 0.0
        %4264 = vmatprep.subr.mxu0 0.0
        %4265 = vmatpush1.msra.mxu0 0.0
        %4266 = vmatprep.subr.mxu0 0.0
        %4267 = vmatpush1.msra.mxu0 0.0
        %4268 = vmatprep.subr.mxu0 0.0
        %4269 = vmatpush1.msra.mxu0 0.0
        %4270 = vmatprep.subr.mxu0 0.0
        %4271 = vmatpush1.msra.mxu0 0.0
        %4272 = vmatprep.subr.mxu0 0.0
        %4273 = vmatpush1.msra.mxu0 0.0
        %4274 = vmatprep.subr.mxu0 0.0
        %4275 = vmatpush1.msra.mxu0 0.0
        %4276 = vmatprep.subr.mxu0 0.0
        %4277 = vmatpush1.msra.mxu0 0.0
        %4278 = vmatprep.subr.mxu0 0.0
        %4279 = vmatpush1.msra.mxu0 0.0
        %4280 = vmatprep.subr.mxu0 0.0
        %4281 = vmatpush1.msra.mxu0 0.0
        %4282 = vmatprep.mubr.f32.mxu0 0.0
        %4283 = vmatmul.mubr.f32.gmra.mrb[0].mxu0 %v4216
        %v4284 = vpop.f32.mrb[0].mxu0
        %v4285 = vadd.f32 0.0, %v4284
        %v4286 = vpop.f32.mrb[0].mxu0
        %4287 = vdwg.mxu0
        %4288 = vrot.lane.b32.xlu0 %v3774, 48
        %v4289 = vpop.permute.xlu0 %4288
        %v4292 = vsel %vm576, %v4134, 0
        %4294 = vmatprep.subr.mxu0 0.0
        %4295 = vmatpush1.msra.mxu0 %v4289
        %4296 = vmatprep.subr.mxu0 0.0
        %4297 = vmatpush1.msra.mxu0 0.0
        %4298 = vmatprep.subr.mxu0 0.0
        %4299 = vmatpush1.msra.mxu0 0.0
        %4300 = vmatprep.subr.mxu0 0.0
        %4301 = vmatpush1.msra.mxu0 0.0
        %4302 = vmatprep.subr.mxu0 0.0
        %4303 = vmatpush1.msra.mxu0 0.0
        %4304 = vmatprep.subr.mxu0 0.0
        %4305 = vmatpush1.msra.mxu0 0.0
        %4306 = vmatprep.subr.mxu0 0.0
        %4307 = vmatpush1.msra.mxu0 0.0
        %4308 = vmatprep.subr.mxu0 0.0
        %4309 = vmatpush1.msra.mxu0 0.0
        %4310 = vmatprep.subr.mxu0 0.0
        %4311 = vmatpush1.msra.mxu0 0.0
        %4312 = vmatprep.subr.mxu0 0.0
        %4313 = vmatpush1.msra.mxu0 0.0
        %4314 = vmatprep.subr.mxu0 0.0
        %4315 = vmatpush1.msra.mxu0 0.0
        %4316 = vmatprep.subr.mxu0 0.0
        %4317 = vmatpush1.msra.mxu0 0.0
        %4318 = vmatprep.subr.mxu0 0.0
        %4319 = vmatpush1.msra.mxu0 0.0
        %4320 = vmatprep.subr.mxu0 0.0
        %4321 = vmatpush1.msra.mxu0 0.0
        %4322 = vmatprep.subr.mxu0 0.0
        %4323 = vmatpush1.msra.mxu0 0.0
        %4324 = vmatprep.subr.mxu0 0.0
        %4325 = vmatpush1.msra.mxu0 0.0
        %4326 = vmatprep.subr.mxu0 0.0
        %4327 = vmatpush1.msra.mxu0 0.0
        %4328 = vmatprep.subr.mxu0 0.0
        %4329 = vmatpush1.msra.mxu0 0.0
        %4330 = vmatprep.subr.mxu0 0.0
        %4331 = vmatpush1.msra.mxu0 0.0
        %4332 = vmatprep.subr.mxu0 0.0
        %4333 = vmatpush1.msra.mxu0 0.0
        %4334 = vmatprep.subr.mxu0 0.0
        %4335 = vmatpush1.msra.mxu0 0.0
        %4336 = vmatprep.subr.mxu0 0.0
        %4337 = vmatpush1.msra.mxu0 0.0
        %4338 = vmatprep.subr.mxu0 0.0
        %4339 = vmatpush1.msra.mxu0 0.0
        %4340 = vmatprep.subr.mxu0 0.0
        %4341 = vmatpush1.msra.mxu0 0.0
        %4342 = vmatprep.subr.mxu0 0.0
        %4343 = vmatpush1.msra.mxu0 0.0
        %4344 = vmatprep.subr.mxu0 0.0
        %4345 = vmatpush1.msra.mxu0 0.0
        %4346 = vmatprep.subr.mxu0 0.0
        %4347 = vmatpush1.msra.mxu0 0.0
        %4348 = vmatprep.subr.mxu0 0.0
        %4349 = vmatpush1.msra.mxu0 0.0
        %4350 = vmatprep.subr.mxu0 0.0
        %4351 = vmatpush1.msra.mxu0 0.0
        %4352 = vmatprep.subr.mxu0 0.0
        %4353 = vmatpush1.msra.mxu0 0.0
        %4354 = vmatprep.subr.mxu0 0.0
        %4355 = vmatpush1.msra.mxu0 0.0
        %4356 = vmatprep.subr.mxu0 0.0
        %4357 = vmatpush1.msra.mxu0 0.0
        %4358 = vmatprep.mubr.f32.mxu0 0.0
        %4359 = vmatmul.mubr.f32.gmra.mrb[0].mxu0 %v4292
        %v4360 = vpop.f32.mrb[0].mxu0
        %v4361 = vadd.f32 0.0, %v4360
        %v4362 = vpop.f32.mrb[0].mxu0
        %4363 = vdwg.mxu0
        %4364 = vrot.lane.b32.xlu0 %v3774, 40
        %v4365 = vpop.permute.xlu0 %4364
        %v4368 = vsel %vm576, %v4135, 0
        %4370 = vmatprep.subr.mxu0 0.0
        %4371 = vmatpush1.msra.mxu0 %v4365
        %4372 = vmatprep.subr.mxu0 0.0
        %4373 = vmatpush1.msra.mxu0 0.0
        %4374 = vmatprep.subr.mxu0 0.0
        %4375 = vmatpush1.msra.mxu0 0.0
        %4376 = vmatprep.subr.mxu0 0.0
        %4377 = vmatpush1.msra.mxu0 0.0
        %4378 = vmatprep.subr.mxu0 0.0
        %4379 = vmatpush1.msra.mxu0 0.0
        %4380 = vmatprep.subr.mxu0 0.0
        %4381 = vmatpush1.msra.mxu0 0.0
        %4382 = vmatprep.subr.mxu0 0.0
        %4383 = vmatpush1.msra.mxu0 0.0
        %4384 = vmatprep.subr.mxu0 0.0
        %4385 = vmatpush1.msra.mxu0 0.0
        %4386 = vmatprep.subr.mxu0 0.0
        %4387 = vmatpush1.msra.mxu0 0.0
        %4388 = vmatprep.subr.mxu0 0.0
        %4389 = vmatpush1.msra.mxu0 0.0
        %4390 = vmatprep.subr.mxu0 0.0
        %4391 = vmatpush1.msra.mxu0 0.0
        %4392 = vmatprep.subr.mxu0 0.0
        %4393 = vmatpush1.msra.mxu0 0.0
        %4394 = vmatprep.subr.mxu0 0.0
        %4395 = vmatpush1.msra.mxu0 0.0
        %4396 = vmatprep.subr.mxu0 0.0
        %4397 = vmatpush1.msra.mxu0 0.0
        %4398 = vmatprep.subr.mxu0 0.0
        %4399 = vmatpush1.msra.mxu0 0.0
        %4400 = vmatprep.subr.mxu0 0.0
        %4401 = vmatpush1.msra.mxu0 0.0
        %4402 = vmatprep.subr.mxu0 0.0
        %4403 = vmatpush1.msra.mxu0 0.0
        %4404 = vmatprep.subr.mxu0 0.0
        %4405 = vmatpush1.msra.mxu0 0.0
        %4406 = vmatprep.subr.mxu0 0.0
        %4407 = vmatpush1.msra.mxu0 0.0
        %4408 = vmatprep.subr.mxu0 0.0
        %4409 = vmatpush1.msra.mxu0 0.0
        %4410 = vmatprep.subr.mxu0 0.0
        %4411 = vmatpush1.msra.mxu0 0.0
        %4412 = vmatprep.subr.mxu0 0.0
        %4413 = vmatpush1.msra.mxu0 0.0
        %4414 = vmatprep.subr.mxu0 0.0
        %4415 = vmatpush1.msra.mxu0 0.0
        %4416 = vmatprep.subr.mxu0 0.0
        %4417 = vmatpush1.msra.mxu0 0.0
        %4418 = vmatprep.subr.mxu0 0.0
        %4419 = vmatpush1.msra.mxu0 0.0
        %4420 = vmatprep.subr.mxu0 0.0
        %4421 = vmatpush1.msra.mxu0 0.0
        %4422 = vmatprep.subr.mxu0 0.0
        %4423 = vmatpush1.msra.mxu0 0.0
        %4424 = vmatprep.subr.mxu0 0.0
        %4425 = vmatpush1.msra.mxu0 0.0
        %4426 = vmatprep.subr.mxu0 0.0
        %4427 = vmatpush1.msra.mxu0 0.0
        %4428 = vmatprep.subr.mxu0 0.0
        %4429 = vmatpush1.msra.mxu0 0.0
        %4430 = vmatprep.subr.mxu0 0.0
        %4431 = vmatpush1.msra.mxu0 0.0
        %4432 = vmatprep.subr.mxu0 0.0
        %4433 = vmatpush1.msra.mxu0 0.0
        %4434 = vmatprep.mubr.f32.mxu0 0.0
        %4435 = vmatmul.mubr.f32.gmra.mrb[0].mxu0 %v4368
        %v4436 = vpop.f32.mrb[0].mxu0
        %v4437 = vadd.f32 0.0, %v4436
        %v4438 = vpop.f32.mrb[0].mxu0
        %4439 = vdwg.mxu0
        %4441 = vrot.lane.b32.xlu0 %v4285, 8
        %v4442 = vpop.permute.xlu0 %4441
        %4445 = vrot.lane.b32.xlu0 %v4361, 16
        %v4446 = vpop.permute.xlu0 %4445
        %4449 = vrot.lane.b32.xlu0 %v4437, 24
        %v4450 = vpop.permute.xlu0 %4449
        %v4452 = vsel %vm576, %v4209, %v4442
        %v4453 = vsel %vm1250, %v4452, %v4446
        %v4454 = vsel %vm1252, %v4453, %v4450
        %4459 = vrot.lane.b32.xlu0 %v3695, 32
        %v4460 = vpop.permute.xlu0 %4459
        %4461 = vrot.lane.b32.xlu0 %v3696, 32
        %v4462 = vpop.permute.xlu0 %4461
        %4463 = vrot.lane.b32.xlu0 %v3697, 32
        %v4464 = vpop.permute.xlu0 %4463
        %4465 = vrot.lane.b32.xlu0 %v3698, 32
        %v4466 = vpop.permute.xlu0 %4465
        %4472 = vrot.lane.b32.xlu0 %v3703, 32
        %v4473 = vpop.permute.xlu0 %4472
        %v4476 = vsel %vm499, %v4454, 0
        %4478 = vmatprep.subr.mxu0 0.0
        %4479 = vmatpush1.msra.mxu0 %v4460
        %4480 = vmatprep.subr.mxu0 0.0
        %4481 = vmatpush1.msra.mxu0 %v4462
        %4482 = vmatprep.subr.mxu0 0.0
        %4483 = vmatpush1.msra.mxu0 %v4464
        %4484 = vmatprep.subr.mxu0 0.0
        %4485 = vmatpush1.msra.mxu0 %v4466
        %4486 = vmatprep.subr.mxu0 0.0
        %4487 = vmatpush1.msra.mxu0 0.0
        %4488 = vmatprep.subr.mxu0 0.0
        %4489 = vmatpush1.msra.mxu0 0.0
        %4490 = vmatprep.subr.mxu0 0.0
        %4491 = vmatpush1.msra.mxu0 0.0
        %4492 = vmatprep.subr.mxu0 0.0
        %4493 = vmatpush1.msra.mxu0 0.0
        %4494 = vmatprep.subr.mxu0 0.0
        %4495 = vmatpush1.msra.mxu0 0.0
        %4496 = vmatprep.subr.mxu0 0.0
        %4497 = vmatpush1.msra.mxu0 0.0
        %4498 = vmatprep.subr.mxu0 0.0
        %4499 = vmatpush1.msra.mxu0 0.0
        %4500 = vmatprep.subr.mxu0 0.0
        %4501 = vmatpush1.msra.mxu0 0.0
        %4502 = vmatprep.subr.mxu0 0.0
        %4503 = vmatpush1.msra.mxu0 0.0
        %4504 = vmatprep.subr.mxu0 0.0
        %4505 = vmatpush1.msra.mxu0 0.0
        %4506 = vmatprep.subr.mxu0 0.0
        %4507 = vmatpush1.msra.mxu0 0.0
        %4508 = vmatprep.subr.mxu0 0.0
        %4509 = vmatpush1.msra.mxu0 0.0
        %4510 = vmatprep.subr.mxu0 0.0
        %4511 = vmatpush1.msra.mxu0 0.0
        %4512 = vmatprep.subr.mxu0 0.0
        %4513 = vmatpush1.msra.mxu0 0.0
        %4514 = vmatprep.subr.mxu0 0.0
        %4515 = vmatpush1.msra.mxu0 0.0
        %4516 = vmatprep.subr.mxu0 0.0
        %4517 = vmatpush1.msra.mxu0 0.0
        %4518 = vmatprep.subr.mxu0 0.0
        %4519 = vmatpush1.msra.mxu0 0.0
        %4520 = vmatprep.subr.mxu0 0.0
        %4521 = vmatpush1.msra.mxu0 0.0
        %4522 = vmatprep.subr.mxu0 0.0
        %4523 = vmatpush1.msra.mxu0 0.0
        %4524 = vmatprep.subr.mxu0 0.0
        %4525 = vmatpush1.msra.mxu0 0.0
        %4526 = vmatprep.subr.mxu0 0.0
        %4527 = vmatpush1.msra.mxu0 0.0
        %4528 = vmatprep.subr.mxu0 0.0
        %4529 = vmatpush1.msra.mxu0 0.0
        %4530 = vmatprep.subr.mxu0 0.0
        %4531 = vmatpush1.msra.mxu0 0.0
        %4532 = vmatprep.subr.mxu0 0.0
        %4533 = vmatpush1.msra.mxu0 0.0
        %4534 = vmatprep.subr.mxu0 0.0
        %4535 = vmatpush1.msra.mxu0 0.0
        %4536 = vmatprep.subr.mxu0 0.0
        %4537 = vmatpush1.msra.mxu0 0.0
        %4538 = vmatprep.subr.mxu0 0.0
        %4539 = vmatpush1.msra.mxu0 0.0
        %4540 = vmatprep.subr.mxu0 0.0
        %4541 = vmatpush1.msra.mxu0 0.0
        %4542 = vmatprep.mubr.f32.mxu0 0.0
        %4543 = vmatmul.mubr.f32.gmra.mrb[0].mxu0 %v4476
        %v4544 = vpop.f32.mrb[0].mxu0
        %v4545 = vadd.f32 %v4473, %v4544
        %v4546 = vpop.f32.mrb[0].mxu0
        %4547 = vdwg.mxu0
        %v4548 = vld [vmem:[%s9 + $0x3] sm:$0x1]
        %v4549 = vadd.f32 %v3693, %v4545
        %v4550 = vsel %vm499, %v4549, 0.0
        %4551 = vadd.xlane.f32.xlu0 %v4550
        %v4552 = vpop.xlane.xlu0 %4551
        %v4553 = vmul.f32 %v4552, %v1352
        %v4554 = vsub.f32 %v4549, %v4553
        %v4555 = vmul.f32 %v4554, %v4554
        %v4556 = vsel %vm499, %v4555, 0.0
        %4557 = vadd.xlane.f32.xlu0 %v4556
        %v4558 = vpop.xlane.xlu0 %4557
        %v4559 = vmul.f32 %v4558, %v1352
        %v4560 = vadd.f32 %v4559, 1e-12
        %v4561 = vrsqrt.pop %v4560
        %v4562 = vmul.f32 %v4554, %v4561
        %v4563 = vlaneseq
        %v4564 = vshrl.u32 %v4563, 7
        %v4565 = vsub.s32 0, %v4564
        %v4566 = vrot.slane %v4548, %v4565
        %v4567 = vmul.f32 %v4562, %v4566
        %4569 = vrot.lane.b32.xlu0 %v4566, 96
        %v4570 = vpop.permute.xlu0 %4569
        %v4572 = vadd.f32 %v4567, %v4570
        %v4573 = vld [vmem:[%s3694 + $0x8] sm:$0xff]
        %v4574 = vld [vmem:[%s3694 + $0x28] sm:$0xff]
        %v4575 = vld [vmem:[%s3694 + $0x48] sm:$0xff]
        %v4576 = vld [vmem:[%s3694 + $0x68] sm:$0xff]
        %4577 = vrot.lane.b32.xlu0 %v4566, 64
        %v4578 = vpop.permute.xlu0 %4577
        %v4581 = vsel %vm499, %v4572, 0
        %4583 = vmatprep.subr.mxu0 0.0
        %4584 = vmatpush1.msra.mxu0 %v4573
        %4585 = vmatprep.subr.mxu0 0.0
        %4586 = vmatpush1.msra.mxu0 %v4574
        %4587 = vmatprep.subr.mxu0 0.0
        %4588 = vmatpush1.msra.mxu0 %v4575
        %4589 = vmatprep.subr.mxu0 0.0
        %4590 = vmatpush1.msra.mxu0 %v4576
        %4591 = vmatprep.subr.mxu0 0.0
        %4592 = vmatpush1.msra.mxu0 0.0
        %4593 = vmatprep.subr.mxu0 0.0
        %4594 = vmatpush1.msra.mxu0 0.0
        %4595 = vmatprep.subr.mxu0 0.0
        %4596 = vmatpush1.msra.mxu0 0.0
        %4597 = vmatprep.subr.mxu0 0.0
        %4598 = vmatpush1.msra.mxu0 0.0
        %4599 = vmatprep.subr.mxu0 0.0
        %4600 = vmatpush1.msra.mxu0 0.0
        %4601 = vmatprep.subr.mxu0 0.0
        %4602 = vmatpush1.msra.mxu0 0.0
        %4603 = vmatprep.subr.mxu0 0.0
        %4604 = vmatpush1.msra.mxu0 0.0
        %4605 = vmatprep.subr.mxu0 0.0
        %4606 = vmatpush1.msra.mxu0 0.0
        %4607 = vmatprep.subr.mxu0 0.0
        %4608 = vmatpush1.msra.mxu0 0.0
        %4609 = vmatprep.subr.mxu0 0.0
        %4610 = vmatpush1.msra.mxu0 0.0
        %4611 = vmatprep.subr.mxu0 0.0
        %4612 = vmatpush1.msra.mxu0 0.0
        %4613 = vmatprep.subr.mxu0 0.0
        %4614 = vmatpush1.msra.mxu0 0.0
        %4615 = vmatprep.subr.mxu0 0.0
        %4616 = vmatpush1.msra.mxu0 0.0
        %4617 = vmatprep.subr.mxu0 0.0
        %4618 = vmatpush1.msra.mxu0 0.0
        %4619 = vmatprep.subr.mxu0 0.0
        %4620 = vmatpush1.msra.mxu0 0.0
        %4621 = vmatprep.subr.mxu0 0.0
        %4622 = vmatpush1.msra.mxu0 0.0
        %4623 = vmatprep.subr.mxu0 0.0
        %4624 = vmatpush1.msra.mxu0 0.0
        %4625 = vmatprep.subr.mxu0 0.0
        %4626 = vmatpush1.msra.mxu0 0.0
        %4627 = vmatprep.subr.mxu0 0.0
        %4628 = vmatpush1.msra.mxu0 0.0
        %4629 = vmatprep.subr.mxu0 0.0
        %4630 = vmatpush1.msra.mxu0 0.0
        %4631 = vmatprep.subr.mxu0 0.0
        %4632 = vmatpush1.msra.mxu0 0.0
        %4633 = vmatprep.subr.mxu0 0.0
        %4634 = vmatpush1.msra.mxu0 0.0
        %4635 = vmatprep.subr.mxu0 0.0
        %4636 = vmatpush1.msra.mxu0 0.0
        %4637 = vmatprep.subr.mxu0 0.0
        %4638 = vmatpush1.msra.mxu0 0.0
        %4639 = vmatprep.subr.mxu0 0.0
        %4640 = vmatpush1.msra.mxu0 0.0
        %4641 = vmatprep.subr.mxu0 0.0
        %4642 = vmatpush1.msra.mxu0 0.0
        %4643 = vmatprep.subr.mxu0 0.0
        %4644 = vmatpush1.msra.mxu0 0.0
        %4645 = vmatprep.subr.mxu0 0.0
        %4646 = vmatpush1.msra.mxu0 0.0
        %4647 = vmatprep.mubr.f32.mxu0 0.0
        %4648 = vmatmul.mubr.f32.gmra.mrb[0].mxu0 %v4581
        %v4649 = vpop.f32.mrb[0].mxu0
        %v4650 = vadd.f32 %v4578, %v4649
        %v4651 = vpop.f32.mrb[0].mxu0
        %4652 = vdwg.mxu0
        %4657 = vrot.lane.b32.xlu0 %v4573, 96
        %v4658 = vpop.permute.xlu0 %4657
        %4659 = vrot.lane.b32.xlu0 %v4574, 96
        %v4660 = vpop.permute.xlu0 %4659
        %4661 = vrot.lane.b32.xlu0 %v4575, 96
        %v4662 = vpop.permute.xlu0 %4661
        %4663 = vrot.lane.b32.xlu0 %v4576, 96
        %v4664 = vpop.permute.xlu0 %4663
        %4669 = vrot.lane.b32.xlu0 %v4566, 32
        %v4670 = vpop.permute.xlu0 %4669
        %4672 = vmatprep.subr.mxu0 0.0
        %4673 = vmatpush1.msra.mxu0 %v4658
        %4674 = vmatprep.subr.mxu0 0.0
        %4675 = vmatpush1.msra.mxu0 %v4660
        %4676 = vmatprep.subr.mxu0 0.0
        %4677 = vmatpush1.msra.mxu0 %v4662
        %4678 = vmatprep.subr.mxu0 0.0
        %4679 = vmatpush1.msra.mxu0 %v4664
        %4680 = vmatprep.subr.mxu0 0.0
        %4681 = vmatpush1.msra.mxu0 0.0
        %4682 = vmatprep.subr.mxu0 0.0
        %4683 = vmatpush1.msra.mxu0 0.0
        %4684 = vmatprep.subr.mxu0 0.0
        %4685 = vmatpush1.msra.mxu0 0.0
        %4686 = vmatprep.subr.mxu0 0.0
        %4687 = vmatpush1.msra.mxu0 0.0
        %4688 = vmatprep.subr.mxu0 0.0
        %4689 = vmatpush1.msra.mxu0 0.0
        %4690 = vmatprep.subr.mxu0 0.0
        %4691 = vmatpush1.msra.mxu0 0.0
        %4692 = vmatprep.subr.mxu0 0.0
        %4693 = vmatpush1.msra.mxu0 0.0
        %4694 = vmatprep.subr.mxu0 0.0
        %4695 = vmatpush1.msra.mxu0 0.0
        %4696 = vmatprep.subr.mxu0 0.0
        %4697 = vmatpush1.msra.mxu0 0.0
        %4698 = vmatprep.subr.mxu0 0.0
        %4699 = vmatpush1.msra.mxu0 0.0
        %4700 = vmatprep.subr.mxu0 0.0
        %4701 = vmatpush1.msra.mxu0 0.0
        %4702 = vmatprep.subr.mxu0 0.0
        %4703 = vmatpush1.msra.mxu0 0.0
        %4704 = vmatprep.subr.mxu0 0.0
        %4705 = vmatpush1.msra.mxu0 0.0
        %4706 = vmatprep.subr.mxu0 0.0
        %4707 = vmatpush1.msra.mxu0 0.0
        %4708 = vmatprep.subr.mxu0 0.0
        %4709 = vmatpush1.msra.mxu0 0.0
        %4710 = vmatprep.subr.mxu0 0.0
        %4711 = vmatpush1.msra.mxu0 0.0
        %4712 = vmatprep.subr.mxu0 0.0
        %4713 = vmatpush1.msra.mxu0 0.0
        %4714 = vmatprep.subr.mxu0 0.0
        %4715 = vmatpush1.msra.mxu0 0.0
        %4716 = vmatprep.subr.mxu0 0.0
        %4717 = vmatpush1.msra.mxu0 0.0
        %4718 = vmatprep.subr.mxu0 0.0
        %4719 = vmatpush1.msra.mxu0 0.0
        %4720 = vmatprep.subr.mxu0 0.0
        %4721 = vmatpush1.msra.mxu0 0.0
        %4722 = vmatprep.subr.mxu0 0.0
        %4723 = vmatpush1.msra.mxu0 0.0
        %4724 = vmatprep.subr.mxu0 0.0
        %4725 = vmatpush1.msra.mxu0 0.0
        %4726 = vmatprep.subr.mxu0 0.0
        %4727 = vmatpush1.msra.mxu0 0.0
        %4728 = vmatprep.subr.mxu0 0.0
        %4729 = vmatpush1.msra.mxu0 0.0
        %4730 = vmatprep.subr.mxu0 0.0
        %4731 = vmatpush1.msra.mxu0 0.0
        %4732 = vmatprep.subr.mxu0 0.0
        %4733 = vmatpush1.msra.mxu0 0.0
        %4734 = vmatprep.subr.mxu0 0.0
        %4735 = vmatpush1.msra.mxu0 0.0
        %4736 = vmatprep.mubr.f32.mxu0 0.0
        %4737 = vmatmul.mubr.f32.gmra.mrb[0].mxu0 %v1473
        %v4738 = vpop.f32.mrb[0].mxu0
        %v4739 = vadd.f32 %v4670, %v4738
        %v4740 = vpop.f32.mrb[0].mxu0
        %4741 = vdwg.mxu0
        %v4742 = vld [vmem:[%s9 + $0x5] sm:$0x1]
        %v4743 = vlaneseq
        %v4744 = vshrl.u32 %v4743, 7
        %v4745 = vsub.s32 0, %v4744
        %v4746 = vrot.slane %v4742, %v4745
        %4747 = vrot.lane.b32.xlu0 %v4573, 64
        %v4748 = vpop.permute.xlu0 %4747
        %4749 = vrot.lane.b32.xlu0 %v4574, 64
        %v4750 = vpop.permute.xlu0 %4749
        %4751 = vrot.lane.b32.xlu0 %v4575, 64
        %v4752 = vpop.permute.xlu0 %4751
        %4753 = vrot.lane.b32.xlu0 %v4576, 64
        %v4754 = vpop.permute.xlu0 %4753
        %4759 = vmatprep.subr.mxu0 0.0
        %4760 = vmatpush1.msra.mxu0 %v4748
        %4761 = vmatprep.subr.mxu0 0.0
        %4762 = vmatpush1.msra.mxu0 %v4750
        %4763 = vmatprep.subr.mxu0 0.0
        %4764 = vmatpush1.msra.mxu0 %v4752
        %4765 = vmatprep.subr.mxu0 0.0
        %4766 = vmatpush1.msra.mxu0 %v4754
        %4767 = vmatprep.subr.mxu0 0.0
        %4768 = vmatpush1.msra.mxu0 0.0
        %4769 = vmatprep.subr.mxu0 0.0
        %4770 = vmatpush1.msra.mxu0 0.0
        %4771 = vmatprep.subr.mxu0 0.0
        %4772 = vmatpush1.msra.mxu0 0.0
        %4773 = vmatprep.subr.mxu0 0.0
        %4774 = vmatpush1.msra.mxu0 0.0
        %4775 = vmatprep.subr.mxu0 0.0
        %4776 = vmatpush1.msra.mxu0 0.0
        %4777 = vmatprep.subr.mxu0 0.0
        %4778 = vmatpush1.msra.mxu0 0.0
        %4779 = vmatprep.subr.mxu0 0.0
        %4780 = vmatpush1.msra.mxu0 0.0
        %4781 = vmatprep.subr.mxu0 0.0
        %4782 = vmatpush1.msra.mxu0 0.0
        %4783 = vmatprep.subr.mxu0 0.0
        %4784 = vmatpush1.msra.mxu0 0.0
        %4785 = vmatprep.subr.mxu0 0.0
        %4786 = vmatpush1.msra.mxu0 0.0
        %4787 = vmatprep.subr.mxu0 0.0
        %4788 = vmatpush1.msra.mxu0 0.0
        %4789 = vmatprep.subr.mxu0 0.0
        %4790 = vmatpush1.msra.mxu0 0.0
        %4791 = vmatprep.subr.mxu0 0.0
        %4792 = vmatpush1.msra.mxu0 0.0
        %4793 = vmatprep.subr.mxu0 0.0
        %4794 = vmatpush1.msra.mxu0 0.0
        %4795 = vmatprep.subr.mxu0 0.0
        %4796 = vmatpush1.msra.mxu0 0.0
        %4797 = vmatprep.subr.mxu0 0.0
        %4798 = vmatpush1.msra.mxu0 0.0
        %4799 = vmatprep.subr.mxu0 0.0
        %4800 = vmatpush1.msra.mxu0 0.0
        %4801 = vmatprep.subr.mxu0 0.0
        %4802 = vmatpush1.msra.mxu0 0.0
        %4803 = vmatprep.subr.mxu0 0.0
        %4804 = vmatpush1.msra.mxu0 0.0
        %4805 = vmatprep.subr.mxu0 0.0
        %4806 = vmatpush1.msra.mxu0 0.0
        %4807 = vmatprep.subr.mxu0 0.0
        %4808 = vmatpush1.msra.mxu0 0.0
        %4809 = vmatprep.subr.mxu0 0.0
        %4810 = vmatpush1.msra.mxu0 0.0
        %4811 = vmatprep.subr.mxu0 0.0
        %4812 = vmatpush1.msra.mxu0 0.0
        %4813 = vmatprep.subr.mxu0 0.0
        %4814 = vmatpush1.msra.mxu0 0.0
        %4815 = vmatprep.subr.mxu0 0.0
        %4816 = vmatpush1.msra.mxu0 0.0
        %4817 = vmatprep.subr.mxu0 0.0
        %4818 = vmatpush1.msra.mxu0 0.0
        %4819 = vmatprep.subr.mxu0 0.0
        %4820 = vmatpush1.msra.mxu0 0.0
        %4821 = vmatprep.subr.mxu0 0.0
        %4822 = vmatpush1.msra.mxu0 0.0
        %4823 = vmatprep.mubr.f32.mxu0 0.0
        %4824 = vmatmul.mubr.f32.gmra.mrb[0].mxu0 %v1563
        %v4825 = vpop.f32.mrb[0].mxu0
        %v4826 = vadd.f32 %v4746, %v4825
        %v4827 = vpop.f32.mrb[0].mxu0
        %4828 = vdwg.mxu0
        %v4830 = vsel %vm576, %v4650, 0
        %v4833 = vsel %vm576, %v4739, 0
        %4835 = vmatprep.subr.mxu0 0.0
        %4836 = vmatpush1.xpose.msra.mxu0 %v4833
        %4837 = vmatprep.subr.mxu0 0.0
        %4838 = vmatpush1.xpose.msra.mxu0 0.0
        %4839 = vmatprep.subr.mxu0 0.0
        %4840 = vmatpush1.xpose.msra.mxu0 0.0
        %4841 = vmatprep.subr.mxu0 0.0
        %4842 = vmatpush1.xpose.msra.mxu0 0.0
        %4843 = vmatprep.subr.mxu0 0.0
        %4844 = vmatpush1.xpose.msra.mxu0 0.0
        %4845 = vmatprep.subr.mxu0 0.0
        %4846 = vmatpush1.xpose.msra.mxu0 0.0
        %4847 = vmatprep.subr.mxu0 0.0
        %4848 = vmatpush1.xpose.msra.mxu0 0.0
        %4849 = vmatprep.subr.mxu0 0.0
        %4850 = vmatpush1.xpose.msra.mxu0 0.0
        %4851 = vmatprep.subr.mxu0 0.0
        %4852 = vmatpush1.xpose.msra.mxu0 0.0
        %4853 = vmatprep.subr.mxu0 0.0
        %4854 = vmatpush1.xpose.msra.mxu0 0.0
        %4855 = vmatprep.subr.mxu0 0.0
        %4856 = vmatpush1.xpose.msra.mxu0 0.0
        %4857 = vmatprep.subr.mxu0 0.0
        %4858 = vmatpush1.xpose.msra.mxu0 0.0
        %4859 = vmatprep.subr.mxu0 0.0
        %4860 = vmatpush1.xpose.msra.mxu0 0.0
        %4861 = vmatprep.subr.mxu0 0.0
        %4862 = vmatpush1.xpose.msra.mxu0 0.0
        %4863 = vmatprep.subr.mxu0 0.0
        %4864 = vmatpush1.xpose.msra.mxu0 0.0
        %4865 = vmatprep.subr.mxu0 0.0
        %4866 = vmatpush1.xpose.msra.mxu0 0.0
        %4867 = vmatprep.subr.mxu0 0.0
        %4868 = vmatpush1.xpose.msra.mxu0 0.0
        %4869 = vmatprep.subr.mxu0 0.0
        %4870 = vmatpush1.xpose.msra.mxu0 0.0
        %4871 = vmatprep.subr.mxu0 0.0
        %4872 = vmatpush1.xpose.msra.mxu0 0.0
        %4873 = vmatprep.subr.mxu0 0.0
        %4874 = vmatpush1.xpose.msra.mxu0 0.0
        %4875 = vmatprep.subr.mxu0 0.0
        %4876 = vmatpush1.xpose.msra.mxu0 0.0
        %4877 = vmatprep.subr.mxu0 0.0
        %4878 = vmatpush1.xpose.msra.mxu0 0.0
        %4879 = vmatprep.subr.mxu0 0.0
        %4880 = vmatpush1.xpose.msra.mxu0 0.0
        %4881 = vmatprep.subr.mxu0 0.0
        %4882 = vmatpush1.xpose.msra.mxu0 0.0
        %4883 = vmatprep.subr.mxu0 0.0
        %4884 = vmatpush1.xpose.msra.mxu0 0.0
        %4885 = vmatprep.subr.mxu0 0.0
        %4886 = vmatpush1.xpose.msra.mxu0 0.0
        %4887 = vmatprep.subr.mxu0 0.0
        %4888 = vmatpush1.xpose.msra.mxu0 0.0
        %4889 = vmatprep.subr.mxu0 0.0
        %4890 = vmatpush1.xpose.msra.mxu0 0.0
        %4891 = vmatprep.subr.mxu0 0.0
        %4892 = vmatpush1.xpose.msra.mxu0 0.0
        %4893 = vmatprep.subr.mxu0 0.0
        %4894 = vmatpush1.xpose.msra.mxu0 0.0
        %4895 = vmatprep.subr.mxu0 0.0
        %4896 = vmatpush1.xpose.msra.mxu0 0.0
        %4897 = vmatprep.subr.mxu0 0.0
        %4898 = vmatpush1.xpose.msra.mxu0 0.0
        %4899 = vmatprep.mubr.f32.mxu0 0.0
        %4900 = vmatmul.mubr.f32.gmra.mrb[0].mxu0 %v4830
        %v4901 = vpop.f32.mrb[0].mxu0
        %v4902 = vadd.f32 0.0, %v4901
        %v4903 = vpop.f32.mrb[0].mxu0
        %4904 = vdwg.mxu0
        %4905 = vrot.lane.b32.xlu0 %v4650, 120
        %v4906 = vpop.permute.xlu0 %4905
        %4907 = vrot.lane.b32.xlu0 %v4739, 120
        %v4908 = vpop.permute.xlu0 %4907
        %v4909 = vsel %vm576, %v4906, 0
        %v4911 = vsel %vm576, %v4908, 0
        %4913 = vmatprep.subr.mxu0 0.0
        %4914 = vmatpush1.xpose.msra.mxu0 %v4911
        %4915 = vmatprep.subr.mxu0 0.0
        %4916 = vmatpush1.xpose.msra.mxu0 0.0
        %4917 = vmatprep.subr.mxu0 0.0
        %4918 = vmatpush1.xpose.msra.mxu0 0.0
        %4919 = vmatprep.subr.mxu0 0.0
        %4920 = vmatpush1.xpose.msra.mxu0 0.0
        %4921 = vmatprep.subr.mxu0 0.0
        %4922 = vmatpush1.xpose.msra.mxu0 0.0
        %4923 = vmatprep.subr.mxu0 0.0
        %4924 = vmatpush1.xpose.msra.mxu0 0.0
        %4925 = vmatprep.subr.mxu0 0.0
        %4926 = vmatpush1.xpose.msra.mxu0 0.0
        %4927 = vmatprep.subr.mxu0 0.0
        %4928 = vmatpush1.xpose.msra.mxu0 0.0
        %4929 = vmatprep.subr.mxu0 0.0
        %4930 = vmatpush1.xpose.msra.mxu0 0.0
        %4931 = vmatprep.subr.mxu0 0.0
        %4932 = vmatpush1.xpose.msra.mxu0 0.0
        %4933 = vmatprep.subr.mxu0 0.0
        %4934 = vmatpush1.xpose.msra.mxu0 0.0
        %4935 = vmatprep.subr.mxu0 0.0
        %4936 = vmatpush1.xpose.msra.mxu0 0.0
        %4937 = vmatprep.subr.mxu0 0.0
        %4938 = vmatpush1.xpose.msra.mxu0 0.0
        %4939 = vmatprep.subr.mxu0 0.0
        %4940 = vmatpush1.xpose.msra.mxu0 0.0
        %4941 = vmatprep.subr.mxu0 0.0
        %4942 = vmatpush1.xpose.msra.mxu0 0.0
        %4943 = vmatprep.subr.mxu0 0.0
        %4944 = vmatpush1.xpose.msra.mxu0 0.0
        %4945 = vmatprep.subr.mxu0 0.0
        %4946 = vmatpush1.xpose.msra.mxu0 0.0
        %4947 = vmatprep.subr.mxu0 0.0
        %4948 = vmatpush1.xpose.msra.mxu0 0.0
        %4949 = vmatprep.subr.mxu0 0.0
        %4950 = vmatpush1.xpose.msra.mxu0 0.0
        %4951 = vmatprep.subr.mxu0 0.0
        %4952 = vmatpush1.xpose.msra.mxu0 0.0
        %4953 = vmatprep.subr.mxu0 0.0
        %4954 = vmatpush1.xpose.msra.mxu0 0.0
        %4955 = vmatprep.subr.mxu0 0.0
        %4956 = vmatpush1.xpose.msra.mxu0 0.0
        %4957 = vmatprep.subr.mxu0 0.0
        %4958 = vmatpush1.xpose.msra.mxu0 0.0
        %4959 = vmatprep.subr.mxu0 0.0
        %4960 = vmatpush1.xpose.msra.mxu0 0.0
        %4961 = vmatprep.subr.mxu0 0.0
        %4962 = vmatpush1.xpose.msra.mxu0 0.0
        %4963 = vmatprep.subr.mxu0 0.0
        %4964 = vmatpush1.xpose.msra.mxu0 0.0
        %4965 = vmatprep.subr.mxu0 0.0
        %4966 = vmatpush1.xpose.msra.mxu0 0.0
        %4967 = vmatprep.subr.mxu0 0.0
        %4968 = vmatpush1.xpose.msra.mxu0 0.0
        %4969 = vmatprep.subr.mxu0 0.0
        %4970 = vmatpush1.xpose.msra.mxu0 0.0
        %4971 = vmatprep.subr.mxu0 0.0
        %4972 = vmatpush1.xpose.msra.mxu0 0.0
        %4973 = vmatprep.subr.mxu0 0.0
        %4974 = vmatpush1.xpose.msra.mxu0 0.0
        %4975 = vmatprep.subr.mxu0 0.0
        %4976 = vmatpush1.xpose.msra.mxu0 0.0
        %4977 = vmatprep.mubr.f32.mxu0 0.0
        %4978 = vmatmul.mubr.f32.gmra.mrb[0].mxu0 %v4909
        %v4979 = vpop.f32.mrb[0].mxu0
        %v4980 = vadd.f32 0.0, %v4979
        %v4981 = vpop.f32.mrb[0].mxu0
        %4982 = vdwg.mxu0
        %4983 = vrot.lane.b32.xlu0 %v4650, 112
        %v4984 = vpop.permute.xlu0 %4983
        %4985 = vrot.lane.b32.xlu0 %v4739, 112
        %v4986 = vpop.permute.xlu0 %4985
        %v4987 = vsel %vm576, %v4984, 0
        %v4989 = vsel %vm576, %v4986, 0
        %4991 = vmatprep.subr.mxu0 0.0
        %4992 = vmatpush1.xpose.msra.mxu0 %v4989
        %4993 = vmatprep.subr.mxu0 0.0
        %4994 = vmatpush1.xpose.msra.mxu0 0.0
        %4995 = vmatprep.subr.mxu0 0.0
        %4996 = vmatpush1.xpose.msra.mxu0 0.0
        %4997 = vmatprep.subr.mxu0 0.0
        %4998 = vmatpush1.xpose.msra.mxu0 0.0
        %4999 = vmatprep.subr.mxu0 0.0
        %5000 = vmatpush1.xpose.msra.mxu0 0.0
        %5001 = vmatprep.subr.mxu0 0.0
        %5002 = vmatpush1.xpose.msra.mxu0 0.0
        %5003 = vmatprep.subr.mxu0 0.0
        %5004 = vmatpush1.xpose.msra.mxu0 0.0
        %5005 = vmatprep.subr.mxu0 0.0
        %5006 = vmatpush1.xpose.msra.mxu0 0.0
        %5007 = vmatprep.subr.mxu0 0.0
        %5008 = vmatpush1.xpose.msra.mxu0 0.0
        %5009 = vmatprep.subr.mxu0 0.0
        %5010 = vmatpush1.xpose.msra.mxu0 0.0
        %5011 = vmatprep.subr.mxu0 0.0
        %5012 = vmatpush1.xpose.msra.mxu0 0.0
        %5013 = vmatprep.subr.mxu0 0.0
        %5014 = vmatpush1.xpose.msra.mxu0 0.0
        %5015 = vmatprep.subr.mxu0 0.0
        %5016 = vmatpush1.xpose.msra.mxu0 0.0
        %5017 = vmatprep.subr.mxu0 0.0
        %5018 = vmatpush1.xpose.msra.mxu0 0.0
        %5019 = vmatprep.subr.mxu0 0.0
        %5020 = vmatpush1.xpose.msra.mxu0 0.0
        %5021 = vmatprep.subr.mxu0 0.0
        %5022 = vmatpush1.xpose.msra.mxu0 0.0
        %5023 = vmatprep.subr.mxu0 0.0
        %5024 = vmatpush1.xpose.msra.mxu0 0.0
        %5025 = vmatprep.subr.mxu0 0.0
        %5026 = vmatpush1.xpose.msra.mxu0 0.0
        %5027 = vmatprep.subr.mxu0 0.0
        %5028 = vmatpush1.xpose.msra.mxu0 0.0
        %5029 = vmatprep.subr.mxu0 0.0
        %5030 = vmatpush1.xpose.msra.mxu0 0.0
        %5031 = vmatprep.subr.mxu0 0.0
        %5032 = vmatpush1.xpose.msra.mxu0 0.0
        %5033 = vmatprep.subr.mxu0 0.0
        %5034 = vmatpush1.xpose.msra.mxu0 0.0
        %5035 = vmatprep.subr.mxu0 0.0
        %5036 = vmatpush1.xpose.msra.mxu0 0.0
        %5037 = vmatprep.subr.mxu0 0.0
        %5038 = vmatpush1.xpose.msra.mxu0 0.0
        %5039 = vmatprep.subr.mxu0 0.0
        %5040 = vmatpush1.xpose.msra.mxu0 0.0
        %5041 = vmatprep.subr.mxu0 0.0
        %5042 = vmatpush1.xpose.msra.mxu0 0.0
        %5043 = vmatprep.subr.mxu0 0.0
        %5044 = vmatpush1.xpose.msra.mxu0 0.0
        %5045 = vmatprep.subr.mxu0 0.0
        %5046 = vmatpush1.xpose.msra.mxu0 0.0
        %5047 = vmatprep.subr.mxu0 0.0
        %5048 = vmatpush1.xpose.msra.mxu0 0.0
        %5049 = vmatprep.subr.mxu0 0.0
        %5050 = vmatpush1.xpose.msra.mxu0 0.0
        %5051 = vmatprep.subr.mxu0 0.0
        %5052 = vmatpush1.xpose.msra.mxu0 0.0
        %5053 = vmatprep.subr.mxu0 0.0
        %5054 = vmatpush1.xpose.msra.mxu0 0.0
        %5055 = vmatprep.mubr.f32.mxu0 0.0
        %5056 = vmatmul.mubr.f32.gmra.mrb[0].mxu0 %v4987
        %v5057 = vpop.f32.mrb[0].mxu0
        %v5058 = vadd.f32 0.0, %v5057
        %v5059 = vpop.f32.mrb[0].mxu0
        %5060 = vdwg.mxu0
        %5061 = vrot.lane.b32.xlu0 %v4650, 104
        %v5062 = vpop.permute.xlu0 %5061
        %5063 = vrot.lane.b32.xlu0 %v4739, 104
        %v5064 = vpop.permute.xlu0 %5063
        %v5065 = vsel %vm576, %v5062, 0
        %v5067 = vsel %vm576, %v5064, 0
        %5069 = vmatprep.subr.mxu0 0.0
        %5070 = vmatpush1.xpose.msra.mxu0 %v5067
        %5071 = vmatprep.subr.mxu0 0.0
        %5072 = vmatpush1.xpose.msra.mxu0 0.0
        %5073 = vmatprep.subr.mxu0 0.0
        %5074 = vmatpush1.xpose.msra.mxu0 0.0
        %5075 = vmatprep.subr.mxu0 0.0
        %5076 = vmatpush1.xpose.msra.mxu0 0.0
        %5077 = vmatprep.subr.mxu0 0.0
        %5078 = vmatpush1.xpose.msra.mxu0 0.0
        %5079 = vmatprep.subr.mxu0 0.0
        %5080 = vmatpush1.xpose.msra.mxu0 0.0
        %5081 = vmatprep.subr.mxu0 0.0
        %5082 = vmatpush1.xpose.msra.mxu0 0.0
        %5083 = vmatprep.subr.mxu0 0.0
        %5084 = vmatpush1.xpose.msra.mxu0 0.0
        %5085 = vmatprep.subr.mxu0 0.0
        %5086 = vmatpush1.xpose.msra.mxu0 0.0
        %5087 = vmatprep.subr.mxu0 0.0
        %5088 = vmatpush1.xpose.msra.mxu0 0.0
        %5089 = vmatprep.subr.mxu0 0.0
        %5090 = vmatpush1.xpose.msra.mxu0 0.0
        %5091 = vmatprep.subr.mxu0 0.0
        %5092 = vmatpush1.xpose.msra.mxu0 0.0
        %5093 = vmatprep.subr.mxu0 0.0
        %5094 = vmatpush1.xpose.msra.mxu0 0.0
        %5095 = vmatprep.subr.mxu0 0.0
        %5096 = vmatpush1.xpose.msra.mxu0 0.0
        %5097 = vmatprep.subr.mxu0 0.0
        %5098 = vmatpush1.xpose.msra.mxu0 0.0
        %5099 = vmatprep.subr.mxu0 0.0
        %5100 = vmatpush1.xpose.msra.mxu0 0.0
        %5101 = vmatprep.subr.mxu0 0.0
        %5102 = vmatpush1.xpose.msra.mxu0 0.0
        %5103 = vmatprep.subr.mxu0 0.0
        %5104 = vmatpush1.xpose.msra.mxu0 0.0
        %5105 = vmatprep.subr.mxu0 0.0
        %5106 = vmatpush1.xpose.msra.mxu0 0.0
        %5107 = vmatprep.subr.mxu0 0.0
        %5108 = vmatpush1.xpose.msra.mxu0 0.0
        %5109 = vmatprep.subr.mxu0 0.0
        %5110 = vmatpush1.xpose.msra.mxu0 0.0
        %5111 = vmatprep.subr.mxu0 0.0
        %5112 = vmatpush1.xpose.msra.mxu0 0.0
        %5113 = vmatprep.subr.mxu0 0.0
        %5114 = vmatpush1.xpose.msra.mxu0 0.0
        %5115 = vmatprep.subr.mxu0 0.0
        %5116 = vmatpush1.xpose.msra.mxu0 0.0
        %5117 = vmatprep.subr.mxu0 0.0
        %5118 = vmatpush1.xpose.msra.mxu0 0.0
        %5119 = vmatprep.subr.mxu0 0.0
        %5120 = vmatpush1.xpose.msra.mxu0 0.0
        %5121 = vmatprep.subr.mxu0 0.0
        %5122 = vmatpush1.xpose.msra.mxu0 0.0
        %5123 = vmatprep.subr.mxu0 0.0
        %5124 = vmatpush1.xpose.msra.mxu0 0.0
        %5125 = vmatprep.subr.mxu0 0.0
        %5126 = vmatpush1.xpose.msra.mxu0 0.0
        %5127 = vmatprep.subr.mxu0 0.0
        %5128 = vmatpush1.xpose.msra.mxu0 0.0
        %5129 = vmatprep.subr.mxu0 0.0
        %5130 = vmatpush1.xpose.msra.mxu0 0.0
        %5131 = vmatprep.subr.mxu0 0.0
        %5132 = vmatpush1.xpose.msra.mxu0 0.0
        %5133 = vmatprep.mubr.f32.mxu0 0.0
        %5134 = vmatmul.mubr.f32.gmra.mrb[0].mxu0 %v5065
        %v5135 = vpop.f32.mrb[0].mxu0
        %v5136 = vadd.f32 0.0, %v5135
        %v5137 = vpop.f32.mrb[0].mxu0
        %5138 = vdwg.mxu0
        %v5139 = vadd.f32 %v4902, %v488
        %v5140 = vadd.f32 %v4980, %v488
        %v5141 = vadd.f32 %v5058, %v488
        %v5142 = vadd.f32 %v5136, %v488
        %v5143 = vsel %vm576, %v5139, -inf
        %5144 = vmax.xlane.f32.xlu0 %v5143
        %v5145 = vpop.xlane.xlu0 %5144
        %v5146 = vsel %vm576, %v5140, -inf
        %5147 = vmax.xlane.f32.xlu0 %v5146
        %v5148 = vpop.xlane.xlu0 %5147
        %v5149 = vsel %vm576, %v5141, -inf
        %5150 = vmax.xlane.f32.xlu0 %v5149
        %v5151 = vpop.xlane.xlu0 %5150
        %v5152 = vsel %vm576, %v5142, -inf
        %5153 = vmax.xlane.f32.xlu0 %v5152
        %v5154 = vpop.xlane.xlu0 %5153
        %v5155 = vsub.f32 %v5139, %v5145
        %v5156 = vsub.f32 %v5140, %v5148
        %v5157 = vsub.f32 %v5141, %v5151
        %v5158 = vsub.f32 %v5142, %v5154
        %v5159 = vmul.f32 %v5155, 1.442695
        %v5160 = vpow.pop %v5159
        %v5161 = vmul.f32 %v5156, 1.442695
        %v5162 = vpow.pop %v5161
        %v5163 = vmul.f32 %v5157, 1.442695
        %v5164 = vpow.pop %v5163
        %v5165 = vmul.f32 %v5158, 1.442695
        %v5166 = vpow.pop %v5165
        %v5167 = vsel %vm576, %v5160, 0.0
        %5168 = vadd.xlane.f32.xlu0 %v5167
        %v5169 = vpop.xlane.xlu0 %5168
        %v5170 = vsel %vm576, %v5162, 0.0
        %5171 = vadd.xlane.f32.xlu0 %v5170
        %v5172 = vpop.xlane.xlu0 %5171
        %v5173 = vsel %vm576, %v5164, 0.0
        %5174 = vadd.xlane.f32.xlu0 %v5173
        %v5175 = vpop.xlane.xlu0 %5174
        %v5176 = vsel %vm576, %v5166, 0.0
        %5177 = vadd.xlane.f32.xlu0 %v5176
        %v5178 = vpop.xlane.xlu0 %5177
        %v5179 = vrcp.pop %v5169
        %v5180 = vrcp.pop %v5172
        %v5181 = vrcp.pop %v5175
        %v5182 = vrcp.pop %v5178
        %v5183 = vmul.f32 %v5160, %v5179
        %v5184 = vmul.f32 %v5162, %v5180
        %v5185 = vmul.f32 %v5164, %v5181
        %v5186 = vmul.f32 %v5166, %v5182
        %v5188 = vsel %vm576, %v5183, 0
        %5190 = vmatprep.subr.mxu0 0.0
        %5191 = vmatpush1.msra.mxu0 %v4826
        %5192 = vmatprep.subr.mxu0 0.0
        %5193 = vmatpush1.msra.mxu0 0.0
        %5194 = vmatprep.subr.mxu0 0.0
        %5195 = vmatpush1.msra.mxu0 0.0
        %5196 = vmatprep.subr.mxu0 0.0
        %5197 = vmatpush1.msra.mxu0 0.0
        %5198 = vmatprep.subr.mxu0 0.0
        %5199 = vmatpush1.msra.mxu0 0.0
        %5200 = vmatprep.subr.mxu0 0.0
        %5201 = vmatpush1.msra.mxu0 0.0
        %5202 = vmatprep.subr.mxu0 0.0
        %5203 = vmatpush1.msra.mxu0 0.0
        %5204 = vmatprep.subr.mxu0 0.0
        %5205 = vmatpush1.msra.mxu0 0.0
        %5206 = vmatprep.subr.mxu0 0.0
        %5207 = vmatpush1.msra.mxu0 0.0
        %5208 = vmatprep.subr.mxu0 0.0
        %5209 = vmatpush1.msra.mxu0 0.0
        %5210 = vmatprep.subr.mxu0 0.0
        %5211 = vmatpush1.msra.mxu0 0.0
        %5212 = vmatprep.subr.mxu0 0.0
        %5213 = vmatpush1.msra.mxu0 0.0
        %5214 = vmatprep.subr.mxu0 0.0
        %5215 = vmatpush1.msra.mxu0 0.0
        %5216 = vmatprep.subr.mxu0 0.0
        %5217 = vmatpush1.msra.mxu0 0.0
        %5218 = vmatprep.subr.mxu0 0.0
        %5219 = vmatpush1.msra.mxu0 0.0
        %5220 = vmatprep.subr.mxu0 0.0
        %5221 = vmatpush1.msra.mxu0 0.0
        %5222 = vmatprep.subr.mxu0 0.0
        %5223 = vmatpush1.msra.mxu0 0.0
        %5224 = vmatprep.subr.mxu0 0.0
        %5225 = vmatpush1.msra.mxu0 0.0
        %5226 = vmatprep.subr.mxu0 0.0
        %5227 = vmatpush1.msra.mxu0 0.0
        %5228 = vmatprep.subr.mxu0 0.0
        %5229 = vmatpush1.msra.mxu0 0.0
        %5230 = vmatprep.subr.mxu0 0.0
        %5231 = vmatpush1.msra.mxu0 0.0
        %5232 = vmatprep.subr.mxu0 0.0
        %5233 = vmatpush1.msra.mxu0 0.0
        %5234 = vmatprep.subr.mxu0 0.0
        %5235 = vmatpush1.msra.mxu0 0.0
        %5236 = vmatprep.subr.mxu0 0.0
        %5237 = vmatpush1.msra.mxu0 0.0
        %5238 = vmatprep.subr.mxu0 0.0
        %5239 = vmatpush1.msra.mxu0 0.0
        %5240 = vmatprep.subr.mxu0 0.0
        %5241 = vmatpush1.msra.mxu0 0.0
        %5242 = vmatprep.subr.mxu0 0.0
        %5243 = vmatpush1.msra.mxu0 0.0
        %5244 = vmatprep.subr.mxu0 0.0
        %5245 = vmatpush1.msra.mxu0 0.0
        %5246 = vmatprep.subr.mxu0 0.0
        %5247 = vmatpush1.msra.mxu0 0.0
        %5248 = vmatprep.subr.mxu0 0.0
        %5249 = vmatpush1.msra.mxu0 0.0
        %5250 = vmatprep.subr.mxu0 0.0
        %5251 = vmatpush1.msra.mxu0 0.0
        %5252 = vmatprep.subr.mxu0 0.0
        %5253 = vmatpush1.msra.mxu0 0.0
        %5254 = vmatprep.mubr.f32.mxu0 0.0
        %5255 = vmatmul.mubr.f32.gmra.mrb[0].mxu0 %v5188
        %v5256 = vpop.f32.mrb[0].mxu0
        %v5257 = vadd.f32 0.0, %v5256
        %v5258 = vpop.f32.mrb[0].mxu0
        %5259 = vdwg.mxu0
        %5261 = vrot.lane.b32.xlu0 %v4826, 120
        %v5262 = vpop.permute.xlu0 %5261
        %v5265 = vsel %vm576, %v5184, 0
        %5267 = vmatprep.subr.mxu0 0.0
        %5268 = vmatpush1.msra.mxu0 %v5262
        %5269 = vmatprep.subr.mxu0 0.0
        %5270 = vmatpush1.msra.mxu0 0.0
        %5271 = vmatprep.subr.mxu0 0.0
        %5272 = vmatpush1.msra.mxu0 0.0
        %5273 = vmatprep.subr.mxu0 0.0
        %5274 = vmatpush1.msra.mxu0 0.0
        %5275 = vmatprep.subr.mxu0 0.0
        %5276 = vmatpush1.msra.mxu0 0.0
        %5277 = vmatprep.subr.mxu0 0.0
        %5278 = vmatpush1.msra.mxu0 0.0
        %5279 = vmatprep.subr.mxu0 0.0
        %5280 = vmatpush1.msra.mxu0 0.0
        %5281 = vmatprep.subr.mxu0 0.0
        %5282 = vmatpush1.msra.mxu0 0.0
        %5283 = vmatprep.subr.mxu0 0.0
        %5284 = vmatpush1.msra.mxu0 0.0
        %5285 = vmatprep.subr.mxu0 0.0
        %5286 = vmatpush1.msra.mxu0 0.0
        %5287 = vmatprep.subr.mxu0 0.0
        %5288 = vmatpush1.msra.mxu0 0.0
        %5289 = vmatprep.subr.mxu0 0.0
        %5290 = vmatpush1.msra.mxu0 0.0
        %5291 = vmatprep.subr.mxu0 0.0
        %5292 = vmatpush1.msra.mxu0 0.0
        %5293 = vmatprep.subr.mxu0 0.0
        %5294 = vmatpush1.msra.mxu0 0.0
        %5295 = vmatprep.subr.mxu0 0.0
        %5296 = vmatpush1.msra.mxu0 0.0
        %5297 = vmatprep.subr.mxu0 0.0
        %5298 = vmatpush1.msra.mxu0 0.0
        %5299 = vmatprep.subr.mxu0 0.0
        %5300 = vmatpush1.msra.mxu0 0.0
        %5301 = vmatprep.subr.mxu0 0.0
        %5302 = vmatpush1.msra.mxu0 0.0
        %5303 = vmatprep.subr.mxu0 0.0
        %5304 = vmatpush1.msra.mxu0 0.0
        %5305 = vmatprep.subr.mxu0 0.0
        %5306 = vmatpush1.msra.mxu0 0.0
        %5307 = vmatprep.subr.mxu0 0.0
        %5308 = vmatpush1.msra.mxu0 0.0
        %5309 = vmatprep.subr.mxu0 0.0
        %5310 = vmatpush1.msra.mxu0 0.0
        %5311 = vmatprep.subr.mxu0 0.0
        %5312 = vmatpush1.msra.mxu0 0.0
        %5313 = vmatprep.subr.mxu0 0.0
        %5314 = vmatpush1.msra.mxu0 0.0
        %5315 = vmatprep.subr.mxu0 0.0
        %5316 = vmatpush1.msra.mxu0 0.0
        %5317 = vmatprep.subr.mxu0 0.0
        %5318 = vmatpush1.msra.mxu0 0.0
        %5319 = vmatprep.subr.mxu0 0.0
        %5320 = vmatpush1.msra.mxu0 0.0
        %5321 = vmatprep.subr.mxu0 0.0
        %5322 = vmatpush1.msra.mxu0 0.0
        %5323 = vmatprep.subr.mxu0 0.0
        %5324 = vmatpush1.msra.mxu0 0.0
        %5325 = vmatprep.subr.mxu0 0.0
        %5326 = vmatpush1.msra.mxu0 0.0
        %5327 = vmatprep.subr.mxu0 0.0
        %5328 = vmatpush1.msra.mxu0 0.0
        %5329 = vmatprep.subr.mxu0 0.0
        %5330 = vmatpush1.msra.mxu0 0.0
        %5331 = vmatprep.mubr.f32.mxu0 0.0
        %5332 = vmatmul.mubr.f32.gmra.mrb[0].mxu0 %v5265
        %v5333 = vpop.f32.mrb[0].mxu0
        %v5334 = vadd.f32 0.0, %v5333
        %v5335 = vpop.f32.mrb[0].mxu0
        %5336 = vdwg.mxu0
        %5337 = vrot.lane.b32.xlu0 %v4826, 112
        %v5338 = vpop.permute.xlu0 %5337
        %v5341 = vsel %vm576, %v5185, 0
        %5343 = vmatprep.subr.mxu0 0.0
        %5344 = vmatpush1.msra.mxu0 %v5338
        %5345 = vmatprep.subr.mxu0 0.0
        %5346 = vmatpush1.msra.mxu0 0.0
        %5347 = vmatprep.subr.mxu0 0.0
        %5348 = vmatpush1.msra.mxu0 0.0
        %5349 = vmatprep.subr.mxu0 0.0
        %5350 = vmatpush1.msra.mxu0 0.0
        %5351 = vmatprep.subr.mxu0 0.0
        %5352 = vmatpush1.msra.mxu0 0.0
        %5353 = vmatprep.subr.mxu0 0.0
        %5354 = vmatpush1.msra.mxu0 0.0
        %5355 = vmatprep.subr.mxu0 0.0
        %5356 = vmatpush1.msra.mxu0 0.0
        %5357 = vmatprep.subr.mxu0 0.0
        %5358 = vmatpush1.msra.mxu0 0.0
        %5359 = vmatprep.subr.mxu0 0.0
        %5360 = vmatpush1.msra.mxu0 0.0
        %5361 = vmatprep.subr.mxu0 0.0
        %5362 = vmatpush1.msra.mxu0 0.0
        %5363 = vmatprep.subr.mxu0 0.0
        %5364 = vmatpush1.msra.mxu0 0.0
        %5365 = vmatprep.subr.mxu0 0.0
        %5366 = vmatpush1.msra.mxu0 0.0
        %5367 = vmatprep.subr.mxu0 0.0
        %5368 = vmatpush1.msra.mxu0 0.0
        %5369 = vmatprep.subr.mxu0 0.0
        %5370 = vmatpush1.msra.mxu0 0.0
        %5371 = vmatprep.subr.mxu0 0.0
        %5372 = vmatpush1.msra.mxu0 0.0
        %5373 = vmatprep.subr.mxu0 0.0
        %5374 = vmatpush1.msra.mxu0 0.0
        %5375 = vmatprep.subr.mxu0 0.0
        %5376 = vmatpush1.msra.mxu0 0.0
        %5377 = vmatprep.subr.mxu0 0.0
        %5378 = vmatpush1.msra.mxu0 0.0
        %5379 = vmatprep.subr.mxu0 0.0
        %5380 = vmatpush1.msra.mxu0 0.0
        %5381 = vmatprep.subr.mxu0 0.0
        %5382 = vmatpush1.msra.mxu0 0.0
        %5383 = vmatprep.subr.mxu0 0.0
        %5384 = vmatpush1.msra.mxu0 0.0
        %5385 = vmatprep.subr.mxu0 0.0
        %5386 = vmatpush1.msra.mxu0 0.0
        %5387 = vmatprep.subr.mxu0 0.0
        %5388 = vmatpush1.msra.mxu0 0.0
        %5389 = vmatprep.subr.mxu0 0.0
        %5390 = vmatpush1.msra.mxu0 0.0
        %5391 = vmatprep.subr.mxu0 0.0
        %5392 = vmatpush1.msra.mxu0 0.0
        %5393 = vmatprep.subr.mxu0 0.0
        %5394 = vmatpush1.msra.mxu0 0.0
        %5395 = vmatprep.subr.mxu0 0.0
        %5396 = vmatpush1.msra.mxu0 0.0
        %5397 = vmatprep.subr.mxu0 0.0
        %5398 = vmatpush1.msra.mxu0 0.0
        %5399 = vmatprep.subr.mxu0 0.0
        %5400 = vmatpush1.msra.mxu0 0.0
        %5401 = vmatprep.subr.mxu0 0.0
        %5402 = vmatpush1.msra.mxu0 0.0
        %5403 = vmatprep.subr.mxu0 0.0
        %5404 = vmatpush1.msra.mxu0 0.0
        %5405 = vmatprep.subr.mxu0 0.0
        %5406 = vmatpush1.msra.mxu0 0.0
        %5407 = vmatprep.mubr.f32.mxu0 0.0
        %5408 = vmatmul.mubr.f32.gmra.mrb[0].mxu0 %v5341
        %v5409 = vpop.f32.mrb[0].mxu0
        %v5410 = vadd.f32 0.0, %v5409
        %v5411 = vpop.f32.mrb[0].mxu0
        %5412 = vdwg.mxu0
        %5413 = vrot.lane.b32.xlu0 %v4826, 104
        %v5414 = vpop.permute.xlu0 %5413
        %v5417 = vsel %vm576, %v5186, 0
        %5419 = vmatprep.subr.mxu0 0.0
        %5420 = vmatpush1.msra.mxu0 %v5414
        %5421 = vmatprep.subr.mxu0 0.0
        %5422 = vmatpush1.msra.mxu0 0.0
        %5423 = vmatprep.subr.mxu0 0.0
        %5424 = vmatpush1.msra.mxu0 0.0
        %5425 = vmatprep.subr.mxu0 0.0
        %5426 = vmatpush1.msra.mxu0 0.0
        %5427 = vmatprep.subr.mxu0 0.0
        %5428 = vmatpush1.msra.mxu0 0.0
        %5429 = vmatprep.subr.mxu0 0.0
        %5430 = vmatpush1.msra.mxu0 0.0
        %5431 = vmatprep.subr.mxu0 0.0
        %5432 = vmatpush1.msra.mxu0 0.0
        %5433 = vmatprep.subr.mxu0 0.0
        %5434 = vmatpush1.msra.mxu0 0.0
        %5435 = vmatprep.subr.mxu0 0.0
        %5436 = vmatpush1.msra.mxu0 0.0
        %5437 = vmatprep.subr.mxu0 0.0
        %5438 = vmatpush1.msra.mxu0 0.0
        %5439 = vmatprep.subr.mxu0 0.0
        %5440 = vmatpush1.msra.mxu0 0.0
        %5441 = vmatprep.subr.mxu0 0.0
        %5442 = vmatpush1.msra.mxu0 0.0
        %5443 = vmatprep.subr.mxu0 0.0
        %5444 = vmatpush1.msra.mxu0 0.0
        %5445 = vmatprep.subr.mxu0 0.0
        %5446 = vmatpush1.msra.mxu0 0.0
        %5447 = vmatprep.subr.mxu0 0.0
        %5448 = vmatpush1.msra.mxu0 0.0
        %5449 = vmatprep.subr.mxu0 0.0
        %5450 = vmatpush1.msra.mxu0 0.0
        %5451 = vmatprep.subr.mxu0 0.0
        %5452 = vmatpush1.msra.mxu0 0.0
        %5453 = vmatprep.subr.mxu0 0.0
        %5454 = vmatpush1.msra.mxu0 0.0
        %5455 = vmatprep.subr.mxu0 0.0
        %5456 = vmatpush1.msra.mxu0 0.0
        %5457 = vmatprep.subr.mxu0 0.0
        %5458 = vmatpush1.msra.mxu0 0.0
        %5459 = vmatprep.subr.mxu0 0.0
        %5460 = vmatpush1.msra.mxu0 0.0
        %5461 = vmatprep.subr.mxu0 0.0
        %5462 = vmatpush1.msra.mxu0 0.0
        %5463 = vmatprep.subr.mxu0 0.0
        %5464 = vmatpush1.msra.mxu0 0.0
        %5465 = vmatprep.subr.mxu0 0.0
        %5466 = vmatpush1.msra.mxu0 0.0
        %5467 = vmatprep.subr.mxu0 0.0
        %5468 = vmatpush1.msra.mxu0 0.0
        %5469 = vmatprep.subr.mxu0 0.0
        %5470 = vmatpush1.msra.mxu0 0.0
        %5471 = vmatprep.subr.mxu0 0.0
        %5472 = vmatpush1.msra.mxu0 0.0
        %5473 = vmatprep.subr.mxu0 0.0
        %5474 = vmatpush1.msra.mxu0 0.0
        %5475 = vmatprep.subr.mxu0 0.0
        %5476 = vmatpush1.msra.mxu0 0.0
        %5477 = vmatprep.subr.mxu0 0.0
        %5478 = vmatpush1.msra.mxu0 0.0
        %5479 = vmatprep.subr.mxu0 0.0
        %5480 = vmatpush1.msra.mxu0 0.0
        %5481 = vmatprep.subr.mxu0 0.0
        %5482 = vmatpush1.msra.mxu0 0.0
        %5483 = vmatprep.mubr.f32.mxu0 0.0
        %5484 = vmatmul.mubr.f32.gmra.mrb[0].mxu0 %v5417
        %v5485 = vpop.f32.mrb[0].mxu0
        %v5486 = vadd.f32 0.0, %v5485
        %v5487 = vpop.f32.mrb[0].mxu0
        %5488 = vdwg.mxu0
        %5490 = vrot.lane.b32.xlu0 %v5334, 8
        %v5491 = vpop.permute.xlu0 %5490
        %5494 = vrot.lane.b32.xlu0 %v5410, 16
        %v5495 = vpop.permute.xlu0 %5494
        %5498 = vrot.lane.b32.xlu0 %v5486, 24
        %v5499 = vpop.permute.xlu0 %5498
        %v5501 = vsel %vm576, %v5257, %v5491
        %v5502 = vsel %vm1250, %v5501, %v5495
        %v5503 = vsel %vm1252, %v5502, %v5499
        %v5504 = vld [vmem:[%s3694 + $0x10] sm:$0xff]
        %v5505 = vld [vmem:[%s3694 + $0x30] sm:$0xff]
        %v5506 = vld [vmem:[%s3694 + $0x50] sm:$0xff]
        %v5507 = vld [vmem:[%s3694 + $0x70] sm:$0xff]
        %5509 = vrot.lane.b32.xlu0 %v4746, 96
        %v5510 = vpop.permute.xlu0 %5509
        %5512 = vmatprep.subr.mxu0 0.0
        %5513 = vmatpush1.msra.mxu0 %v5504
        %5514 = vmatprep.subr.mxu0 0.0
        %5515 = vmatpush1.msra.mxu0 %v5505
        %5516 = vmatprep.subr.mxu0 0.0
        %5517 = vmatpush1.msra.mxu0 %v5506
        %5518 = vmatprep.subr.mxu0 0.0
        %5519 = vmatpush1.msra.mxu0 %v5507
        %5520 = vmatprep.subr.mxu0 0.0
        %5521 = vmatpush1.msra.mxu0 0.0
        %5522 = vmatprep.subr.mxu0 0.0
        %5523 = vmatpush1.msra.mxu0 0.0
        %5524 = vmatprep.subr.mxu0 0.0
        %5525 = vmatpush1.msra.mxu0 0.0
        %5526 = vmatprep.subr.mxu0 0.0
        %5527 = vmatpush1.msra.mxu0 0.0
        %5528 = vmatprep.subr.mxu0 0.0
        %5529 = vmatpush1.msra.mxu0 0.0
        %5530 = vmatprep.subr.mxu0 0.0
        %5531 = vmatpush1.msra.mxu0 0.0
        %5532 = vmatprep.subr.mxu0 0.0
        %5533 = vmatpush1.msra.mxu0 0.0
        %5534 = vmatprep.subr.mxu0 0.0
        %5535 = vmatpush1.msra.mxu0 0.0
        %5536 = vmatprep.subr.mxu0 0.0
        %5537 = vmatpush1.msra.mxu0 0.0
        %5538 = vmatprep.subr.mxu0 0.0
        %5539 = vmatpush1.msra.mxu0 0.0
        %5540 = vmatprep.subr.mxu0 0.0
        %5541 = vmatpush1.msra.mxu0 0.0
        %5542 = vmatprep.subr.mxu0 0.0
        %5543 = vmatpush1.msra.mxu0 0.0
        %5544 = vmatprep.subr.mxu0 0.0
        %5545 = vmatpush1.msra.mxu0 0.0
        %5546 = vmatprep.subr.mxu0 0.0
        %5547 = vmatpush1.msra.mxu0 0.0
        %5548 = vmatprep.subr.mxu0 0.0
        %5549 = vmatpush1.msra.mxu0 0.0
        %5550 = vmatprep.subr.mxu0 0.0
        %5551 = vmatpush1.msra.mxu0 0.0
        %5552 = vmatprep.subr.mxu0 0.0
        %5553 = vmatpush1.msra.mxu0 0.0
        %5554 = vmatprep.subr.mxu0 0.0
        %5555 = vmatpush1.msra.mxu0 0.0
        %5556 = vmatprep.subr.mxu0 0.0
        %5557 = vmatpush1.msra.mxu0 0.0
        %5558 = vmatprep.subr.mxu0 0.0
        %5559 = vmatpush1.msra.mxu0 0.0
        %5560 = vmatprep.subr.mxu0 0.0
        %5561 = vmatpush1.msra.mxu0 0.0
        %5562 = vmatprep.subr.mxu0 0.0
        %5563 = vmatpush1.msra.mxu0 0.0
        %5564 = vmatprep.subr.mxu0 0.0
        %5565 = vmatpush1.msra.mxu0 0.0
        %5566 = vmatprep.subr.mxu0 0.0
        %5567 = vmatpush1.msra.mxu0 0.0
        %5568 = vmatprep.subr.mxu0 0.0
        %5569 = vmatpush1.msra.mxu0 0.0
        %5570 = vmatprep.subr.mxu0 0.0
        %5571 = vmatpush1.msra.mxu0 0.0
        %5572 = vmatprep.subr.mxu0 0.0
        %5573 = vmatpush1.msra.mxu0 0.0
        %5574 = vmatprep.subr.mxu0 0.0
        %5575 = vmatpush1.msra.mxu0 0.0
        %5576 = vmatprep.mubr.f32.mxu0 0.0
        %5577 = vmatmul.mubr.f32.gmra.mrb[0].mxu0 %v4581
        %v5578 = vpop.f32.mrb[0].mxu0
        %v5579 = vadd.f32 %v5510, %v5578
        %v5580 = vpop.f32.mrb[0].mxu0
        %5581 = vdwg.mxu0
        %5586 = vrot.lane.b32.xlu0 %v5504, 96
        %v5587 = vpop.permute.xlu0 %5586
        %5588 = vrot.lane.b32.xlu0 %v5505, 96
        %v5589 = vpop.permute.xlu0 %5588
        %5590 = vrot.lane.b32.xlu0 %v5506, 96
        %v5591 = vpop.permute.xlu0 %5590
        %5592 = vrot.lane.b32.xlu0 %v5507, 96
        %v5593 = vpop.permute.xlu0 %5592
        %5598 = vrot.lane.b32.xlu0 %v4746, 64
        %v5599 = vpop.permute.xlu0 %5598
        %5601 = vmatprep.subr.mxu0 0.0
        %5602 = vmatpush1.msra.mxu0 %v5587
        %5603 = vmatprep.subr.mxu0 0.0
        %5604 = vmatpush1.msra.mxu0 %v5589
        %5605 = vmatprep.subr.mxu0 0.0
        %5606 = vmatpush1.msra.mxu0 %v5591
        %5607 = vmatprep.subr.mxu0 0.0
        %5608 = vmatpush1.msra.mxu0 %v5593
        %5609 = vmatprep.subr.mxu0 0.0
        %5610 = vmatpush1.msra.mxu0 0.0
        %5611 = vmatprep.subr.mxu0 0.0
        %5612 = vmatpush1.msra.mxu0 0.0
        %5613 = vmatprep.subr.mxu0 0.0
        %5614 = vmatpush1.msra.mxu0 0.0
        %5615 = vmatprep.subr.mxu0 0.0
        %5616 = vmatpush1.msra.mxu0 0.0
        %5617 = vmatprep.subr.mxu0 0.0
        %5618 = vmatpush1.msra.mxu0 0.0
        %5619 = vmatprep.subr.mxu0 0.0
        %5620 = vmatpush1.msra.mxu0 0.0
        %5621 = vmatprep.subr.mxu0 0.0
        %5622 = vmatpush1.msra.mxu0 0.0
        %5623 = vmatprep.subr.mxu0 0.0
        %5624 = vmatpush1.msra.mxu0 0.0
        %5625 = vmatprep.subr.mxu0 0.0
        %5626 = vmatpush1.msra.mxu0 0.0
        %5627 = vmatprep.subr.mxu0 0.0
        %5628 = vmatpush1.msra.mxu0 0.0
        %5629 = vmatprep.subr.mxu0 0.0
        %5630 = vmatpush1.msra.mxu0 0.0
        %5631 = vmatprep.subr.mxu0 0.0
        %5632 = vmatpush1.msra.mxu0 0.0
        %5633 = vmatprep.subr.mxu0 0.0
        %5634 = vmatpush1.msra.mxu0 0.0
        %5635 = vmatprep.subr.mxu0 0.0
        %5636 = vmatpush1.msra.mxu0 0.0
        %5637 = vmatprep.subr.mxu0 0.0
        %5638 = vmatpush1.msra.mxu0 0.0
        %5639 = vmatprep.subr.mxu0 0.0
        %5640 = vmatpush1.msra.mxu0 0.0
        %5641 = vmatprep.subr.mxu0 0.0
        %5642 = vmatpush1.msra.mxu0 0.0
        %5643 = vmatprep.subr.mxu0 0.0
        %5644 = vmatpush1.msra.mxu0 0.0
        %5645 = vmatprep.subr.mxu0 0.0
        %5646 = vmatpush1.msra.mxu0 0.0
        %5647 = vmatprep.subr.mxu0 0.0
        %5648 = vmatpush1.msra.mxu0 0.0
        %5649 = vmatprep.subr.mxu0 0.0
        %5650 = vmatpush1.msra.mxu0 0.0
        %5651 = vmatprep.subr.mxu0 0.0
        %5652 = vmatpush1.msra.mxu0 0.0
        %5653 = vmatprep.subr.mxu0 0.0
        %5654 = vmatpush1.msra.mxu0 0.0
        %5655 = vmatprep.subr.mxu0 0.0
        %5656 = vmatpush1.msra.mxu0 0.0
        %5657 = vmatprep.subr.mxu0 0.0
        %5658 = vmatpush1.msra.mxu0 0.0
        %5659 = vmatprep.subr.mxu0 0.0
        %5660 = vmatpush1.msra.mxu0 0.0
        %5661 = vmatprep.subr.mxu0 0.0
        %5662 = vmatpush1.msra.mxu0 0.0
        %5663 = vmatprep.subr.mxu0 0.0
        %5664 = vmatpush1.msra.mxu0 0.0
        %5665 = vmatprep.mubr.f32.mxu0 0.0
        %5666 = vmatmul.mubr.f32.gmra.mrb[0].mxu0 %v2408
        %v5667 = vpop.f32.mrb[0].mxu0
        %v5668 = vadd.f32 %v5599, %v5667
        %v5669 = vpop.f32.mrb[0].mxu0
        %5670 = vmatprep.mubr.f32.mxu0 0.0
        %5671 = vmatmul.mubr.f32.gmra.mrb[0].mxu0 %v2411
        %v5672 = vpop.f32.mrb[0].mxu0
        %v5673 = vadd.f32 %v5599, %v5672
        %v5674 = vpop.f32.mrb[0].mxu0
        %5675 = vdwg.mxu0
        %5676 = vrot.lane.b32.xlu0 %v5504, 64
        %v5677 = vpop.permute.xlu0 %5676
        %5678 = vrot.lane.b32.xlu0 %v5505, 64
        %v5679 = vpop.permute.xlu0 %5678
        %5680 = vrot.lane.b32.xlu0 %v5506, 64
        %v5681 = vpop.permute.xlu0 %5680
        %5682 = vrot.lane.b32.xlu0 %v5507, 64
        %v5683 = vpop.permute.xlu0 %5682
        %5688 = vrot.lane.b32.xlu0 %v4746, 32
        %v5689 = vpop.permute.xlu0 %5688
        %5691 = vmatprep.subr.mxu0 0.0
        %5692 = vmatpush1.msra.mxu0 %v5677
        %5693 = vmatprep.subr.mxu0 0.0
        %5694 = vmatpush1.msra.mxu0 %v5679
        %5695 = vmatprep.subr.mxu0 0.0
        %5696 = vmatpush1.msra.mxu0 %v5681
        %5697 = vmatprep.subr.mxu0 0.0
        %5698 = vmatpush1.msra.mxu0 %v5683
        %5699 = vmatprep.subr.mxu0 0.0
        %5700 = vmatpush1.msra.mxu0 0.0
        %5701 = vmatprep.subr.mxu0 0.0
        %5702 = vmatpush1.msra.mxu0 0.0
        %5703 = vmatprep.subr.mxu0 0.0
        %5704 = vmatpush1.msra.mxu0 0.0
        %5705 = vmatprep.subr.mxu0 0.0
        %5706 = vmatpush1.msra.mxu0 0.0
        %5707 = vmatprep.subr.mxu0 0.0
        %5708 = vmatpush1.msra.mxu0 0.0
        %5709 = vmatprep.subr.mxu0 0.0
        %5710 = vmatpush1.msra.mxu0 0.0
        %5711 = vmatprep.subr.mxu0 0.0
        %5712 = vmatpush1.msra.mxu0 0.0
        %5713 = vmatprep.subr.mxu0 0.0
        %5714 = vmatpush1.msra.mxu0 0.0
        %5715 = vmatprep.subr.mxu0 0.0
        %5716 = vmatpush1.msra.mxu0 0.0
        %5717 = vmatprep.subr.mxu0 0.0
        %5718 = vmatpush1.msra.mxu0 0.0
        %5719 = vmatprep.subr.mxu0 0.0
        %5720 = vmatpush1.msra.mxu0 0.0
        %5721 = vmatprep.subr.mxu0 0.0
        %5722 = vmatpush1.msra.mxu0 0.0
        %5723 = vmatprep.subr.mxu0 0.0
        %5724 = vmatpush1.msra.mxu0 0.0
        %5725 = vmatprep.subr.mxu0 0.0
        %5726 = vmatpush1.msra.mxu0 0.0
        %5727 = vmatprep.subr.mxu0 0.0
        %5728 = vmatpush1.msra.mxu0 0.0
        %5729 = vmatprep.subr.mxu0 0.0
        %5730 = vmatpush1.msra.mxu0 0.0
        %5731 = vmatprep.subr.mxu0 0.0
        %5732 = vmatpush1.msra.mxu0 0.0
        %5733 = vmatprep.subr.mxu0 0.0
        %5734 = vmatpush1.msra.mxu0 0.0
        %5735 = vmatprep.subr.mxu0 0.0
        %5736 = vmatpush1.msra.mxu0 0.0
        %5737 = vmatprep.subr.mxu0 0.0
        %5738 = vmatpush1.msra.mxu0 0.0
        %5739 = vmatprep.subr.mxu0 0.0
        %5740 = vmatpush1.msra.mxu0 0.0
        %5741 = vmatprep.subr.mxu0 0.0
        %5742 = vmatpush1.msra.mxu0 0.0
        %5743 = vmatprep.subr.mxu0 0.0
        %5744 = vmatpush1.msra.mxu0 0.0
        %5745 = vmatprep.subr.mxu0 0.0
        %5746 = vmatpush1.msra.mxu0 0.0
        %5747 = vmatprep.subr.mxu0 0.0
        %5748 = vmatpush1.msra.mxu0 0.0
        %5749 = vmatprep.subr.mxu0 0.0
        %5750 = vmatpush1.msra.mxu0 0.0
        %5751 = vmatprep.subr.mxu0 0.0
        %5752 = vmatpush1.msra.mxu0 0.0
        %5753 = vmatprep.subr.mxu0 0.0
        %5754 = vmatpush1.msra.mxu0 0.0
        %5755 = vmatprep.mubr.f32.mxu0 0.0
        %5756 = vmatmul.mubr.f32.gmra.mrb[0].mxu0 %v2504
        %v5757 = vpop.f32.mrb[0].mxu0
        %v5758 = vadd.f32 %v5689, %v5757
        %v5759 = vpop.f32.mrb[0].mxu0
        %5760 = vmatprep.mubr.f32.mxu0 0.0
        %5761 = vmatmul.mubr.f32.gmra.mrb[0].mxu0 %v2507
        %v5762 = vpop.f32.mrb[0].mxu0
        %v5763 = vadd.f32 %v5689, %v5762
        %v5764 = vpop.f32.mrb[0].mxu0
        %5765 = vdwg.mxu0
        %v5767 = vsel %vm576, %v5579, 0
        %v5770 = vsel %vm576, %v5668, 0
        %v5773 = vsel %vm576, %v5673, 0
        %5775 = vmatprep.subr.mxu0 0.0
        %5776 = vmatpush1.xpose.msra.mxu0 %v5770
        %5777 = vmatprep.subr.mxu0 0.0
        %5778 = vmatpush1.xpose.msra.mxu0 %v5773
        %5779 = vmatprep.subr.mxu0 0.0
        %5780 = vmatpush1.xpose.msra.mxu0 0.0
        %5781 = vmatprep.subr.mxu0 0.0
        %5782 = vmatpush1.xpose.msra.mxu0 0.0
        %5783 = vmatprep.subr.mxu0 0.0
        %5784 = vmatpush1.xpose.msra.mxu0 0.0
        %5785 = vmatprep.subr.mxu0 0.0
        %5786 = vmatpush1.xpose.msra.mxu0 0.0
        %5787 = vmatprep.subr.mxu0 0.0
        %5788 = vmatpush1.xpose.msra.mxu0 0.0
        %5789 = vmatprep.subr.mxu0 0.0
        %5790 = vmatpush1.xpose.msra.mxu0 0.0
        %5791 = vmatprep.subr.mxu0 0.0
        %5792 = vmatpush1.xpose.msra.mxu0 0.0
        %5793 = vmatprep.subr.mxu0 0.0
        %5794 = vmatpush1.xpose.msra.mxu0 0.0
        %5795 = vmatprep.subr.mxu0 0.0
        %5796 = vmatpush1.xpose.msra.mxu0 0.0
        %5797 = vmatprep.subr.mxu0 0.0
        %5798 = vmatpush1.xpose.msra.mxu0 0.0
        %5799 = vmatprep.subr.mxu0 0.0
        %5800 = vmatpush1.xpose.msra.mxu0 0.0
        %5801 = vmatprep.subr.mxu0 0.0
        %5802 = vmatpush1.xpose.msra.mxu0 0.0
        %5803 = vmatprep.subr.mxu0 0.0
        %5804 = vmatpush1.xpose.msra.mxu0 0.0
        %5805 = vmatprep.subr.mxu0 0.0
        %5806 = vmatpush1.xpose.msra.mxu0 0.0
        %5807 = vmatprep.subr.mxu0 0.0
        %5808 = vmatpush1.xpose.msra.mxu0 0.0
        %5809 = vmatprep.subr.mxu0 0.0
        %5810 = vmatpush1.xpose.msra.mxu0 0.0
        %5811 = vmatprep.subr.mxu0 0.0
        %5812 = vmatpush1.xpose.msra.mxu0 0.0
        %5813 = vmatprep.subr.mxu0 0.0
        %5814 = vmatpush1.xpose.msra.mxu0 0.0
        %5815 = vmatprep.subr.mxu0 0.0
        %5816 = vmatpush1.xpose.msra.mxu0 0.0
        %5817 = vmatprep.subr.mxu0 0.0
        %5818 = vmatpush1.xpose.msra.mxu0 0.0
        %5819 = vmatprep.subr.mxu0 0.0
        %5820 = vmatpush1.xpose.msra.mxu0 0.0
        %5821 = vmatprep.subr.mxu0 0.0
        %5822 = vmatpush1.xpose.msra.mxu0 0.0
        %5823 = vmatprep.subr.mxu0 0.0
        %5824 = vmatpush1.xpose.msra.mxu0 0.0
        %5825 = vmatprep.subr.mxu0 0.0
        %5826 = vmatpush1.xpose.msra.mxu0 0.0
        %5827 = vmatprep.subr.mxu0 0.0
        %5828 = vmatpush1.xpose.msra.mxu0 0.0
        %5829 = vmatprep.subr.mxu0 0.0
        %5830 = vmatpush1.xpose.msra.mxu0 0.0
        %5831 = vmatprep.subr.mxu0 0.0
        %5832 = vmatpush1.xpose.msra.mxu0 0.0
        %5833 = vmatprep.subr.mxu0 0.0
        %5834 = vmatpush1.xpose.msra.mxu0 0.0
        %5835 = vmatprep.subr.mxu0 0.0
        %5836 = vmatpush1.xpose.msra.mxu0 0.0
        %5837 = vmatprep.subr.mxu0 0.0
        %5838 = vmatpush1.xpose.msra.mxu0 0.0
        %5839 = vmatprep.mubr.f32.mxu0 0.0
        %5840 = vmatmul.mubr.f32.gmra.mrb[0].mxu0 %v5767
        %v5841 = vpop.f32.mrb[0].mxu0
        %v5842 = vadd.f32 0.0, %v5841
        %v5843 = vpop.f32.mrb[0].mxu0
        %5844 = vdwg.mxu0
        %5845 = vrot.lane.b32.xlu0 %v5579, 120
        %v5846 = vpop.permute.xlu0 %5845
        %5847 = vrot.lane.b32.xlu0 %v5668, 120
        %v5848 = vpop.permute.xlu0 %5847
        %5849 = vrot.lane.b32.xlu0 %v5673, 120
        %v5850 = vpop.permute.xlu0 %5849
        %v5851 = vsel %vm576, %v5846, 0
        %v5853 = vsel %vm576, %v5848, 0
        %v5855 = vsel %vm576, %v5850, 0
        %5857 = vmatprep.subr.mxu0 0.0
        %5858 = vmatpush1.xpose.msra.mxu0 %v5853
        %5859 = vmatprep.subr.mxu0 0.0
        %5860 = vmatpush1.xpose.msra.mxu0 %v5855
        %5861 = vmatprep.subr.mxu0 0.0
        %5862 = vmatpush1.xpose.msra.mxu0 0.0
        %5863 = vmatprep.subr.mxu0 0.0
        %5864 = vmatpush1.xpose.msra.mxu0 0.0
        %5865 = vmatprep.subr.mxu0 0.0
        %5866 = vmatpush1.xpose.msra.mxu0 0.0
        %5867 = vmatprep.subr.mxu0 0.0
        %5868 = vmatpush1.xpose.msra.mxu0 0.0
        %5869 = vmatprep.subr.mxu0 0.0
        %5870 = vmatpush1.xpose.msra.mxu0 0.0
        %5871 = vmatprep.subr.mxu0 0.0
        %5872 = vmatpush1.xpose.msra.mxu0 0.0
        %5873 = vmatprep.subr.mxu0 0.0
        %5874 = vmatpush1.xpose.msra.mxu0 0.0
        %5875 = vmatprep.subr.mxu0 0.0
        %5876 = vmatpush1.xpose.msra.mxu0 0.0
        %5877 = vmatprep.subr.mxu0 0.0
        %5878 = vmatpush1.xpose.msra.mxu0 0.0
        %5879 = vmatprep.subr.mxu0 0.0
        %5880 = vmatpush1.xpose.msra.mxu0 0.0
        %5881 = vmatprep.subr.mxu0 0.0
        %5882 = vmatpush1.xpose.msra.mxu0 0.0
        %5883 = vmatprep.subr.mxu0 0.0
        %5884 = vmatpush1.xpose.msra.mxu0 0.0
        %5885 = vmatprep.subr.mxu0 0.0
        %5886 = vmatpush1.xpose.msra.mxu0 0.0
        %5887 = vmatprep.subr.mxu0 0.0
        %5888 = vmatpush1.xpose.msra.mxu0 0.0
        %5889 = vmatprep.subr.mxu0 0.0
        %5890 = vmatpush1.xpose.msra.mxu0 0.0
        %5891 = vmatprep.subr.mxu0 0.0
        %5892 = vmatpush1.xpose.msra.mxu0 0.0
        %5893 = vmatprep.subr.mxu0 0.0
        %5894 = vmatpush1.xpose.msra.mxu0 0.0
        %5895 = vmatprep.subr.mxu0 0.0
        %5896 = vmatpush1.xpose.msra.mxu0 0.0
        %5897 = vmatprep.subr.mxu0 0.0
        %5898 = vmatpush1.xpose.msra.mxu0 0.0
        %5899 = vmatprep.subr.mxu0 0.0
        %5900 = vmatpush1.xpose.msra.mxu0 0.0
        %5901 = vmatprep.subr.mxu0 0.0
        %5902 = vmatpush1.xpose.msra.mxu0 0.0
        %5903 = vmatprep.subr.mxu0 0.0
        %5904 = vmatpush1.xpose.msra.mxu0 0.0
        %5905 = vmatprep.subr.mxu0 0.0
        %5906 = vmatpush1.xpose.msra.mxu0 0.0
        %5907 = vmatprep.subr.mxu0 0.0
        %5908 = vmatpush1.xpose.msra.mxu0 0.0
        %5909 = vmatprep.subr.mxu0 0.0
        %5910 = vmatpush1.xpose.msra.mxu0 0.0
        %5911 = vmatprep.subr.mxu0 0.0
        %5912 = vmatpush1.xpose.msra.mxu0 0.0
        %5913 = vmatprep.subr.mxu0 0.0
        %5914 = vmatpush1.xpose.msra.mxu0 0.0
        %5915 = vmatprep.subr.mxu0 0.0
        %5916 = vmatpush1.xpose.msra.mxu0 0.0
        %5917 = vmatprep.subr.mxu0 0.0
        %5918 = vmatpush1.xpose.msra.mxu0 0.0
        %5919 = vmatprep.subr.mxu0 0.0
        %5920 = vmatpush1.xpose.msra.mxu0 0.0
        %5921 = vmatprep.mubr.f32.mxu0 0.0
        %5922 = vmatmul.mubr.f32.gmra.mrb[0].mxu0 %v5851
        %v5923 = vpop.f32.mrb[0].mxu0
        %v5924 = vadd.f32 0.0, %v5923
        %v5925 = vpop.f32.mrb[0].mxu0
        %5926 = vdwg.mxu0
        %5927 = vrot.lane.b32.xlu0 %v5579, 112
        %v5928 = vpop.permute.xlu0 %5927
        %5929 = vrot.lane.b32.xlu0 %v5668, 112
        %v5930 = vpop.permute.xlu0 %5929
        %5931 = vrot.lane.b32.xlu0 %v5673, 112
        %v5932 = vpop.permute.xlu0 %5931
        %v5933 = vsel %vm576, %v5928, 0
        %v5935 = vsel %vm576, %v5930, 0
        %v5937 = vsel %vm576, %v5932, 0
        %5939 = vmatprep.subr.mxu0 0.0
        %5940 = vmatpush1.xpose.msra.mxu0 %v5935
        %5941 = vmatprep.subr.mxu0 0.0
        %5942 = vmatpush1.xpose.msra.mxu0 %v5937
        %5943 = vmatprep.subr.mxu0 0.0
        %5944 = vmatpush1.xpose.msra.mxu0 0.0
        %5945 = vmatprep.subr.mxu0 0.0
        %5946 = vmatpush1.xpose.msra.mxu0 0.0
        %5947 = vmatprep.subr.mxu0 0.0
        %5948 = vmatpush1.xpose.msra.mxu0 0.0
        %5949 = vmatprep.subr.mxu0 0.0
        %5950 = vmatpush1.xpose.msra.mxu0 0.0
        %5951 = vmatprep.subr.mxu0 0.0
        %5952 = vmatpush1.xpose.msra.mxu0 0.0
        %5953 = vmatprep.subr.mxu0 0.0
        %5954 = vmatpush1.xpose.msra.mxu0 0.0
        %5955 = vmatprep.subr.mxu0 0.0
        %5956 = vmatpush1.xpose.msra.mxu0 0.0
        %5957 = vmatprep.subr.mxu0 0.0
        %5958 = vmatpush1.xpose.msra.mxu0 0.0
        %5959 = vmatprep.subr.mxu0 0.0
        %5960 = vmatpush1.xpose.msra.mxu0 0.0
        %5961 = vmatprep.subr.mxu0 0.0
        %5962 = vmatpush1.xpose.msra.mxu0 0.0
        %5963 = vmatprep.subr.mxu0 0.0
        %5964 = vmatpush1.xpose.msra.mxu0 0.0
        %5965 = vmatprep.subr.mxu0 0.0
        %5966 = vmatpush1.xpose.msra.mxu0 0.0
        %5967 = vmatprep.subr.mxu0 0.0
        %5968 = vmatpush1.xpose.msra.mxu0 0.0
        %5969 = vmatprep.subr.mxu0 0.0
        %5970 = vmatpush1.xpose.msra.mxu0 0.0
        %5971 = vmatprep.subr.mxu0 0.0
        %5972 = vmatpush1.xpose.msra.mxu0 0.0
        %5973 = vmatprep.subr.mxu0 0.0
        %5974 = vmatpush1.xpose.msra.mxu0 0.0
        %5975 = vmatprep.subr.mxu0 0.0
        %5976 = vmatpush1.xpose.msra.mxu0 0.0
        %5977 = vmatprep.subr.mxu0 0.0
        %5978 = vmatpush1.xpose.msra.mxu0 0.0
        %5979 = vmatprep.subr.mxu0 0.0
        %5980 = vmatpush1.xpose.msra.mxu0 0.0
        %5981 = vmatprep.subr.mxu0 0.0
        %5982 = vmatpush1.xpose.msra.mxu0 0.0
        %5983 = vmatprep.subr.mxu0 0.0
        %5984 = vmatpush1.xpose.msra.mxu0 0.0
        %5985 = vmatprep.subr.mxu0 0.0
        %5986 = vmatpush1.xpose.msra.mxu0 0.0
        %5987 = vmatprep.subr.mxu0 0.0
        %5988 = vmatpush1.xpose.msra.mxu0 0.0
        %5989 = vmatprep.subr.mxu0 0.0
        %5990 = vmatpush1.xpose.msra.mxu0 0.0
        %5991 = vmatprep.subr.mxu0 0.0
        %5992 = vmatpush1.xpose.msra.mxu0 0.0
        %5993 = vmatprep.subr.mxu0 0.0
        %5994 = vmatpush1.xpose.msra.mxu0 0.0
        %5995 = vmatprep.subr.mxu0 0.0
        %5996 = vmatpush1.xpose.msra.mxu0 0.0
        %5997 = vmatprep.subr.mxu0 0.0
        %5998 = vmatpush1.xpose.msra.mxu0 0.0
        %5999 = vmatprep.subr.mxu0 0.0
        %6000 = vmatpush1.xpose.msra.mxu0 0.0
        %6001 = vmatprep.subr.mxu0 0.0
        %6002 = vmatpush1.xpose.msra.mxu0 0.0
        %6003 = vmatprep.mubr.f32.mxu0 0.0
        %6004 = vmatmul.mubr.f32.gmra.mrb[0].mxu0 %v5933
        %v6005 = vpop.f32.mrb[0].mxu0
        %v6006 = vadd.f32 0.0, %v6005
        %v6007 = vpop.f32.mrb[0].mxu0
        %6008 = vdwg.mxu0
        %6009 = vrot.lane.b32.xlu0 %v5579, 104
        %v6010 = vpop.permute.xlu0 %6009
        %6011 = vrot.lane.b32.xlu0 %v5668, 104
        %v6012 = vpop.permute.xlu0 %6011
        %6013 = vrot.lane.b32.xlu0 %v5673, 104
        %v6014 = vpop.permute.xlu0 %6013
        %v6015 = vsel %vm576, %v6010, 0
        %v6017 = vsel %vm576, %v6012, 0
        %v6019 = vsel %vm576, %v6014, 0
        %6021 = vmatprep.subr.mxu0 0.0
        %6022 = vmatpush1.xpose.msra.mxu0 %v6017
        %6023 = vmatprep.subr.mxu0 0.0
        %6024 = vmatpush1.xpose.msra.mxu0 %v6019
        %6025 = vmatprep.subr.mxu0 0.0
        %6026 = vmatpush1.xpose.msra.mxu0 0.0
        %6027 = vmatprep.subr.mxu0 0.0
        %6028 = vmatpush1.xpose.msra.mxu0 0.0
        %6029 = vmatprep.subr.mxu0 0.0
        %6030 = vmatpush1.xpose.msra.mxu0 0.0
        %6031 = vmatprep.subr.mxu0 0.0
        %6032 = vmatpush1.xpose.msra.mxu0 0.0
        %6033 = vmatprep.subr.mxu0 0.0
        %6034 = vmatpush1.xpose.msra.mxu0 0.0
        %6035 = vmatprep.subr.mxu0 0.0
        %6036 = vmatpush1.xpose.msra.mxu0 0.0
        %6037 = vmatprep.subr.mxu0 0.0
        %6038 = vmatpush1.xpose.msra.mxu0 0.0
        %6039 = vmatprep.subr.mxu0 0.0
        %6040 = vmatpush1.xpose.msra.mxu0 0.0
        %6041 = vmatprep.subr.mxu0 0.0
        %6042 = vmatpush1.xpose.msra.mxu0 0.0
        %6043 = vmatprep.subr.mxu0 0.0
        %6044 = vmatpush1.xpose.msra.mxu0 0.0
        %6045 = vmatprep.subr.mxu0 0.0
        %6046 = vmatpush1.xpose.msra.mxu0 0.0
        %6047 = vmatprep.subr.mxu0 0.0
        %6048 = vmatpush1.xpose.msra.mxu0 0.0
        %6049 = vmatprep.subr.mxu0 0.0
        %6050 = vmatpush1.xpose.msra.mxu0 0.0
        %6051 = vmatprep.subr.mxu0 0.0
        %6052 = vmatpush1.xpose.msra.mxu0 0.0
        %6053 = vmatprep.subr.mxu0 0.0
        %6054 = vmatpush1.xpose.msra.mxu0 0.0
        %6055 = vmatprep.subr.mxu0 0.0
        %6056 = vmatpush1.xpose.msra.mxu0 0.0
        %6057 = vmatprep.subr.mxu0 0.0
        %6058 = vmatpush1.xpose.msra.mxu0 0.0
        %6059 = vmatprep.subr.mxu0 0.0
        %6060 = vmatpush1.xpose.msra.mxu0 0.0
        %6061 = vmatprep.subr.mxu0 0.0
        %6062 = vmatpush1.xpose.msra.mxu0 0.0
        %6063 = vmatprep.subr.mxu0 0.0
        %6064 = vmatpush1.xpose.msra.mxu0 0.0
        %6065 = vmatprep.subr.mxu0 0.0
        %6066 = vmatpush1.xpose.msra.mxu0 0.0
        %6067 = vmatprep.subr.mxu0 0.0
        %6068 = vmatpush1.xpose.msra.mxu0 0.0
        %6069 = vmatprep.subr.mxu0 0.0
        %6070 = vmatpush1.xpose.msra.mxu0 0.0
        %6071 = vmatprep.subr.mxu0 0.0
        %6072 = vmatpush1.xpose.msra.mxu0 0.0
        %6073 = vmatprep.subr.mxu0 0.0
        %6074 = vmatpush1.xpose.msra.mxu0 0.0
        %6075 = vmatprep.subr.mxu0 0.0
        %6076 = vmatpush1.xpose.msra.mxu0 0.0
        %6077 = vmatprep.subr.mxu0 0.0
        %6078 = vmatpush1.xpose.msra.mxu0 0.0
        %6079 = vmatprep.subr.mxu0 0.0
        %6080 = vmatpush1.xpose.msra.mxu0 0.0
        %6081 = vmatprep.subr.mxu0 0.0
        %6082 = vmatpush1.xpose.msra.mxu0 0.0
        %6083 = vmatprep.subr.mxu0 0.0
        %6084 = vmatpush1.xpose.msra.mxu0 0.0
        %6085 = vmatprep.mubr.f32.mxu0 0.0
        %6086 = vmatmul.mubr.f32.gmra.mrb[0].mxu0 %v6015
        %v6087 = vpop.f32.mrb[0].mxu0
        %v6088 = vadd.f32 0.0, %v6087
        %v6089 = vpop.f32.mrb[0].mxu0
        %6090 = vdwg.mxu0
        %v6091 = vadd.f32 %v5842, %v489
        %v6092 = vadd.f32 %v5924, %v489
        %v6093 = vadd.f32 %v6006, %v489
        %v6094 = vadd.f32 %v6088, %v489
        %v6095 = vsel %vm1250, %v6091, -inf
        %6096 = vmax.xlane.f32.xlu0 %v6095
        %v6097 = vpop.xlane.xlu0 %6096
        %v6098 = vsel %vm1250, %v6092, -inf
        %6099 = vmax.xlane.f32.xlu0 %v6098
        %v6100 = vpop.xlane.xlu0 %6099
        %v6101 = vsel %vm1250, %v6093, -inf
        %6102 = vmax.xlane.f32.xlu0 %v6101
        %v6103 = vpop.xlane.xlu0 %6102
        %v6104 = vsel %vm1250, %v6094, -inf
        %6105 = vmax.xlane.f32.xlu0 %v6104
        %v6106 = vpop.xlane.xlu0 %6105
        %v6107 = vsub.f32 %v6091, %v6097
        %v6108 = vsub.f32 %v6092, %v6100
        %v6109 = vsub.f32 %v6093, %v6103
        %v6110 = vsub.f32 %v6094, %v6106
        %v6111 = vmul.f32 %v6107, 1.442695
        %v6112 = vpow.pop %v6111
        %v6113 = vmul.f32 %v6108, 1.442695
        %v6114 = vpow.pop %v6113
        %v6115 = vmul.f32 %v6109, 1.442695
        %v6116 = vpow.pop %v6115
        %v6117 = vmul.f32 %v6110, 1.442695
        %v6118 = vpow.pop %v6117
        %v6119 = vsel %vm1250, %v6112, 0.0
        %6120 = vadd.xlane.f32.xlu0 %v6119
        %v6121 = vpop.xlane.xlu0 %6120
        %v6122 = vsel %vm1250, %v6114, 0.0
        %6123 = vadd.xlane.f32.xlu0 %v6122
        %v6124 = vpop.xlane.xlu0 %6123
        %v6125 = vsel %vm1250, %v6116, 0.0
        %6126 = vadd.xlane.f32.xlu0 %v6125
        %v6127 = vpop.xlane.xlu0 %6126
        %v6128 = vsel %vm1250, %v6118, 0.0
        %6129 = vadd.xlane.f32.xlu0 %v6128
        %v6130 = vpop.xlane.xlu0 %6129
        %v6131 = vrcp.pop %v6121
        %v6132 = vrcp.pop %v6124
        %v6133 = vrcp.pop %v6127
        %v6134 = vrcp.pop %v6130
        %v6135 = vmul.f32 %v6112, %v6131
        %v6136 = vmul.f32 %v6114, %v6132
        %v6137 = vmul.f32 %v6116, %v6133
        %v6138 = vmul.f32 %v6118, %v6134
        %v6140 = vsel %vm1250, %v6135, 0
        %6142 = vmatprep.subr.mxu0 0.0
        %6143 = vmatpush1.msra.mxu0 %v5758
        %6144 = vmatprep.subr.mxu0 0.0
        %6145 = vmatpush1.msra.mxu0 %v5763
        %6146 = vmatprep.subr.mxu0 0.0
        %6147 = vmatpush1.msra.mxu0 0.0
        %6148 = vmatprep.subr.mxu0 0.0
        %6149 = vmatpush1.msra.mxu0 0.0
        %6150 = vmatprep.subr.mxu0 0.0
        %6151 = vmatpush1.msra.mxu0 0.0
        %6152 = vmatprep.subr.mxu0 0.0
        %6153 = vmatpush1.msra.mxu0 0.0
        %6154 = vmatprep.subr.mxu0 0.0
        %6155 = vmatpush1.msra.mxu0 0.0
        %6156 = vmatprep.subr.mxu0 0.0
        %6157 = vmatpush1.msra.mxu0 0.0
        %6158 = vmatprep.subr.mxu0 0.0
        %6159 = vmatpush1.msra.mxu0 0.0
        %6160 = vmatprep.subr.mxu0 0.0
        %6161 = vmatpush1.msra.mxu0 0.0
        %6162 = vmatprep.subr.mxu0 0.0
        %6163 = vmatpush1.msra.mxu0 0.0
        %6164 = vmatprep.subr.mxu0 0.0
        %6165 = vmatpush1.msra.mxu0 0.0
        %6166 = vmatprep.subr.mxu0 0.0
        %6167 = vmatpush1.msra.mxu0 0.0
        %6168 = vmatprep.subr.mxu0 0.0
        %6169 = vmatpush1.msra.mxu0 0.0
        %6170 = vmatprep.subr.mxu0 0.0
        %6171 = vmatpush1.msra.mxu0 0.0
        %6172 = vmatprep.subr.mxu0 0.0
        %6173 = vmatpush1.msra.mxu0 0.0
        %6174 = vmatprep.subr.mxu0 0.0
        %6175 = vmatpush1.msra.mxu0 0.0
        %6176 = vmatprep.subr.mxu0 0.0
        %6177 = vmatpush1.msra.mxu0 0.0
        %6178 = vmatprep.subr.mxu0 0.0
        %6179 = vmatpush1.msra.mxu0 0.0
        %6180 = vmatprep.subr.mxu0 0.0
        %6181 = vmatpush1.msra.mxu0 0.0
        %6182 = vmatprep.subr.mxu0 0.0
        %6183 = vmatpush1.msra.mxu0 0.0
        %6184 = vmatprep.subr.mxu0 0.0
        %6185 = vmatpush1.msra.mxu0 0.0
        %6186 = vmatprep.subr.mxu0 0.0
        %6187 = vmatpush1.msra.mxu0 0.0
        %6188 = vmatprep.subr.mxu0 0.0
        %6189 = vmatpush1.msra.mxu0 0.0
        %6190 = vmatprep.subr.mxu0 0.0
        %6191 = vmatpush1.msra.mxu0 0.0
        %6192 = vmatprep.subr.mxu0 0.0
        %6193 = vmatpush1.msra.mxu0 0.0
        %6194 = vmatprep.subr.mxu0 0.0
        %6195 = vmatpush1.msra.mxu0 0.0
        %6196 = vmatprep.subr.mxu0 0.0
        %6197 = vmatpush1.msra.mxu0 0.0
        %6198 = vmatprep.subr.mxu0 0.0
        %6199 = vmatpush1.msra.mxu0 0.0
        %6200 = vmatprep.subr.mxu0 0.0
        %6201 = vmatpush1.msra.mxu0 0.0
        %6202 = vmatprep.subr.mxu0 0.0
        %6203 = vmatpush1.msra.mxu0 0.0
        %6204 = vmatprep.subr.mxu0 0.0
        %6205 = vmatpush1.msra.mxu0 0.0
        %6206 = vmatprep.mubr.f32.mxu0 0.0
        %6207 = vmatmul.mubr.f32.gmra.mrb[0].mxu0 %v6140
        %v6208 = vpop.f32.mrb[0].mxu0
        %v6209 = vadd.f32 0.0, %v6208
        %v6210 = vpop.f32.mrb[0].mxu0
        %6211 = vdwg.mxu0
        %6214 = vrot.lane.b32.xlu0 %v5758, 120
        %v6215 = vpop.permute.xlu0 %6214
        %6216 = vrot.lane.b32.xlu0 %v5763, 120
        %v6217 = vpop.permute.xlu0 %6216
        %v6221 = vsel %vm1250, %v6136, 0
        %6223 = vmatprep.subr.mxu0 0.0
        %6224 = vmatpush1.msra.mxu0 %v6215
        %6225 = vmatprep.subr.mxu0 0.0
        %6226 = vmatpush1.msra.mxu0 %v6217
        %6227 = vmatprep.subr.mxu0 0.0
        %6228 = vmatpush1.msra.mxu0 0.0
        %6229 = vmatprep.subr.mxu0 0.0
        %6230 = vmatpush1.msra.mxu0 0.0
        %6231 = vmatprep.subr.mxu0 0.0
        %6232 = vmatpush1.msra.mxu0 0.0
        %6233 = vmatprep.subr.mxu0 0.0
        %6234 = vmatpush1.msra.mxu0 0.0
        %6235 = vmatprep.subr.mxu0 0.0
        %6236 = vmatpush1.msra.mxu0 0.0
        %6237 = vmatprep.subr.mxu0 0.0
        %6238 = vmatpush1.msra.mxu0 0.0
        %6239 = vmatprep.subr.mxu0 0.0
        %6240 = vmatpush1.msra.mxu0 0.0
        %6241 = vmatprep.subr.mxu0 0.0
        %6242 = vmatpush1.msra.mxu0 0.0
        %6243 = vmatprep.subr.mxu0 0.0
        %6244 = vmatpush1.msra.mxu0 0.0
        %6245 = vmatprep.subr.mxu0 0.0
        %6246 = vmatpush1.msra.mxu0 0.0
        %6247 = vmatprep.subr.mxu0 0.0
        %6248 = vmatpush1.msra.mxu0 0.0
        %6249 = vmatprep.subr.mxu0 0.0
        %6250 = vmatpush1.msra.mxu0 0.0
        %6251 = vmatprep.subr.mxu0 0.0
        %6252 = vmatpush1.msra.mxu0 0.0
        %6253 = vmatprep.subr.mxu0 0.0
        %6254 = vmatpush1.msra.mxu0 0.0
        %6255 = vmatprep.subr.mxu0 0.0
        %6256 = vmatpush1.msra.mxu0 0.0
        %6257 = vmatprep.subr.mxu0 0.0
        %6258 = vmatpush1.msra.mxu0 0.0
        %6259 = vmatprep.subr.mxu0 0.0
        %6260 = vmatpush1.msra.mxu0 0.0
        %6261 = vmatprep.subr.mxu0 0.0
        %6262 = vmatpush1.msra.mxu0 0.0
        %6263 = vmatprep.subr.mxu0 0.0
        %6264 = vmatpush1.msra.mxu0 0.0
        %6265 = vmatprep.subr.mxu0 0.0
        %6266 = vmatpush1.msra.mxu0 0.0
        %6267 = vmatprep.subr.mxu0 0.0
        %6268 = vmatpush1.msra.mxu0 0.0
        %6269 = vmatprep.subr.mxu0 0.0
        %6270 = vmatpush1.msra.mxu0 0.0
        %6271 = vmatprep.subr.mxu0 0.0
        %6272 = vmatpush1.msra.mxu0 0.0
        %6273 = vmatprep.subr.mxu0 0.0
        %6274 = vmatpush1.msra.mxu0 0.0
        %6275 = vmatprep.subr.mxu0 0.0
        %6276 = vmatpush1.msra.mxu0 0.0
        %6277 = vmatprep.subr.mxu0 0.0
        %6278 = vmatpush1.msra.mxu0 0.0
        %6279 = vmatprep.subr.mxu0 0.0
        %6280 = vmatpush1.msra.mxu0 0.0
        %6281 = vmatprep.subr.mxu0 0.0
        %6282 = vmatpush1.msra.mxu0 0.0
        %6283 = vmatprep.subr.mxu0 0.0
        %6284 = vmatpush1.msra.mxu0 0.0
        %6285 = vmatprep.subr.mxu0 0.0
        %6286 = vmatpush1.msra.mxu0 0.0
        %6287 = vmatprep.mubr.f32.mxu0 0.0
        %6288 = vmatmul.mubr.f32.gmra.mrb[0].mxu0 %v6221
        %v6289 = vpop.f32.mrb[0].mxu0
        %v6290 = vadd.f32 0.0, %v6289
        %v6291 = vpop.f32.mrb[0].mxu0
        %6292 = vdwg.mxu0
        %6293 = vrot.lane.b32.xlu0 %v5758, 112
        %v6294 = vpop.permute.xlu0 %6293
        %6295 = vrot.lane.b32.xlu0 %v5763, 112
        %v6296 = vpop.permute.xlu0 %6295
        %v6300 = vsel %vm1250, %v6137, 0
        %6302 = vmatprep.subr.mxu0 0.0
        %6303 = vmatpush1.msra.mxu0 %v6294
        %6304 = vmatprep.subr.mxu0 0.0
        %6305 = vmatpush1.msra.mxu0 %v6296
        %6306 = vmatprep.subr.mxu0 0.0
        %6307 = vmatpush1.msra.mxu0 0.0
        %6308 = vmatprep.subr.mxu0 0.0
        %6309 = vmatpush1.msra.mxu0 0.0
        %6310 = vmatprep.subr.mxu0 0.0
        %6311 = vmatpush1.msra.mxu0 0.0
        %6312 = vmatprep.subr.mxu0 0.0
        %6313 = vmatpush1.msra.mxu0 0.0
        %6314 = vmatprep.subr.mxu0 0.0
        %6315 = vmatpush1.msra.mxu0 0.0
        %6316 = vmatprep.subr.mxu0 0.0
        %6317 = vmatpush1.msra.mxu0 0.0
        %6318 = vmatprep.subr.mxu0 0.0
        %6319 = vmatpush1.msra.mxu0 0.0
        %6320 = vmatprep.subr.mxu0 0.0
        %6321 = vmatpush1.msra.mxu0 0.0
        %6322 = vmatprep.subr.mxu0 0.0
        %6323 = vmatpush1.msra.mxu0 0.0
        %6324 = vmatprep.subr.mxu0 0.0
        %6325 = vmatpush1.msra.mxu0 0.0
        %6326 = vmatprep.subr.mxu0 0.0
        %6327 = vmatpush1.msra.mxu0 0.0
        %6328 = vmatprep.subr.mxu0 0.0
        %6329 = vmatpush1.msra.mxu0 0.0
        %6330 = vmatprep.subr.mxu0 0.0
        %6331 = vmatpush1.msra.mxu0 0.0
        %6332 = vmatprep.subr.mxu0 0.0
        %6333 = vmatpush1.msra.mxu0 0.0
        %6334 = vmatprep.subr.mxu0 0.0
        %6335 = vmatpush1.msra.mxu0 0.0
        %6336 = vmatprep.subr.mxu0 0.0
        %6337 = vmatpush1.msra.mxu0 0.0
        %6338 = vmatprep.subr.mxu0 0.0
        %6339 = vmatpush1.msra.mxu0 0.0
        %6340 = vmatprep.subr.mxu0 0.0
        %6341 = vmatpush1.msra.mxu0 0.0
        %6342 = vmatprep.subr.mxu0 0.0
        %6343 = vmatpush1.msra.mxu0 0.0
        %6344 = vmatprep.subr.mxu0 0.0
        %6345 = vmatpush1.msra.mxu0 0.0
        %6346 = vmatprep.subr.mxu0 0.0
        %6347 = vmatpush1.msra.mxu0 0.0
        %6348 = vmatprep.subr.mxu0 0.0
        %6349 = vmatpush1.msra.mxu0 0.0
        %6350 = vmatprep.subr.mxu0 0.0
        %6351 = vmatpush1.msra.mxu0 0.0
        %6352 = vmatprep.subr.mxu0 0.0
        %6353 = vmatpush1.msra.mxu0 0.0
        %6354 = vmatprep.subr.mxu0 0.0
        %6355 = vmatpush1.msra.mxu0 0.0
        %6356 = vmatprep.subr.mxu0 0.0
        %6357 = vmatpush1.msra.mxu0 0.0
        %6358 = vmatprep.subr.mxu0 0.0
        %6359 = vmatpush1.msra.mxu0 0.0
        %6360 = vmatprep.subr.mxu0 0.0
        %6361 = vmatpush1.msra.mxu0 0.0
        %6362 = vmatprep.subr.mxu0 0.0
        %6363 = vmatpush1.msra.mxu0 0.0
        %6364 = vmatprep.subr.mxu0 0.0
        %6365 = vmatpush1.msra.mxu0 0.0
        %6366 = vmatprep.mubr.f32.mxu0 0.0
        %6367 = vmatmul.mubr.f32.gmra.mrb[0].mxu0 %v6300
        %v6368 = vpop.f32.mrb[0].mxu0
        %v6369 = vadd.f32 0.0, %v6368
        %v6370 = vpop.f32.mrb[0].mxu0
        %6371 = vdwg.mxu0
        %6372 = vrot.lane.b32.xlu0 %v5758, 104
        %v6373 = vpop.permute.xlu0 %6372
        %6374 = vrot.lane.b32.xlu0 %v5763, 104
        %v6375 = vpop.permute.xlu0 %6374
        %v6379 = vsel %vm1250, %v6138, 0
        %6381 = vmatprep.subr.mxu0 0.0
        %6382 = vmatpush1.msra.mxu0 %v6373
        %6383 = vmatprep.subr.mxu0 0.0
        %6384 = vmatpush1.msra.mxu0 %v6375
        %6385 = vmatprep.subr.mxu0 0.0
        %6386 = vmatpush1.msra.mxu0 0.0
        %6387 = vmatprep.subr.mxu0 0.0
        %6388 = vmatpush1.msra.mxu0 0.0
        %6389 = vmatprep.subr.mxu0 0.0
        %6390 = vmatpush1.msra.mxu0 0.0
        %6391 = vmatprep.subr.mxu0 0.0
        %6392 = vmatpush1.msra.mxu0 0.0
        %6393 = vmatprep.subr.mxu0 0.0
        %6394 = vmatpush1.msra.mxu0 0.0
        %6395 = vmatprep.subr.mxu0 0.0
        %6396 = vmatpush1.msra.mxu0 0.0
        %6397 = vmatprep.subr.mxu0 0.0
        %6398 = vmatpush1.msra.mxu0 0.0
        %6399 = vmatprep.subr.mxu0 0.0
        %6400 = vmatpush1.msra.mxu0 0.0
        %6401 = vmatprep.subr.mxu0 0.0
        %6402 = vmatpush1.msra.mxu0 0.0
        %6403 = vmatprep.subr.mxu0 0.0
        %6404 = vmatpush1.msra.mxu0 0.0
        %6405 = vmatprep.subr.mxu0 0.0
        %6406 = vmatpush1.msra.mxu0 0.0
        %6407 = vmatprep.subr.mxu0 0.0
        %6408 = vmatpush1.msra.mxu0 0.0
        %6409 = vmatprep.subr.mxu0 0.0
        %6410 = vmatpush1.msra.mxu0 0.0
        %6411 = vmatprep.subr.mxu0 0.0
        %6412 = vmatpush1.msra.mxu0 0.0
        %6413 = vmatprep.subr.mxu0 0.0
        %6414 = vmatpush1.msra.mxu0 0.0
        %6415 = vmatprep.subr.mxu0 0.0
        %6416 = vmatpush1.msra.mxu0 0.0
        %6417 = vmatprep.subr.mxu0 0.0
        %6418 = vmatpush1.msra.mxu0 0.0
        %6419 = vmatprep.subr.mxu0 0.0
        %6420 = vmatpush1.msra.mxu0 0.0
        %6421 = vmatprep.subr.mxu0 0.0
        %6422 = vmatpush1.msra.mxu0 0.0
        %6423 = vmatprep.subr.mxu0 0.0
        %6424 = vmatpush1.msra.mxu0 0.0
        %6425 = vmatprep.subr.mxu0 0.0
        %6426 = vmatpush1.msra.mxu0 0.0
        %6427 = vmatprep.subr.mxu0 0.0
        %6428 = vmatpush1.msra.mxu0 0.0
        %6429 = vmatprep.subr.mxu0 0.0
        %6430 = vmatpush1.msra.mxu0 0.0
        %6431 = vmatprep.subr.mxu0 0.0
        %6432 = vmatpush1.msra.mxu0 0.0
        %6433 = vmatprep.subr.mxu0 0.0
        %6434 = vmatpush1.msra.mxu0 0.0
        %6435 = vmatprep.subr.mxu0 0.0
        %6436 = vmatpush1.msra.mxu0 0.0
        %6437 = vmatprep.subr.mxu0 0.0
        %6438 = vmatpush1.msra.mxu0 0.0
        %6439 = vmatprep.subr.mxu0 0.0
        %6440 = vmatpush1.msra.mxu0 0.0
        %6441 = vmatprep.subr.mxu0 0.0
        %6442 = vmatpush1.msra.mxu0 0.0
        %6443 = vmatprep.subr.mxu0 0.0
        %6444 = vmatpush1.msra.mxu0 0.0
        %6445 = vmatprep.mubr.f32.mxu0 0.0
        %6446 = vmatmul.mubr.f32.gmra.mrb[0].mxu0 %v6379
        %v6447 = vpop.f32.mrb[0].mxu0
        %v6448 = vadd.f32 0.0, %v6447
        %v6449 = vpop.f32.mrb[0].mxu0
        %6450 = vdwg.mxu0
        %6452 = vrot.lane.b32.xlu0 %v6290, 8
        %v6453 = vpop.permute.xlu0 %6452
        %6456 = vrot.lane.b32.xlu0 %v6369, 16
        %v6457 = vpop.permute.xlu0 %6456
        %6460 = vrot.lane.b32.xlu0 %v6448, 24
        %v6461 = vpop.permute.xlu0 %6460
        %v6463 = vsel %vm576, %v6209, %v6453
        %v6464 = vsel %vm1250, %v6463, %v6457
        %v6465 = vsel %vm1252, %v6464, %v6461
        %6466 = vrot.lane.b32.xlu0 %v5504, 32
        %v6467 = vpop.permute.xlu0 %6466
        %6468 = vrot.lane.b32.xlu0 %v5505, 32
        %v6469 = vpop.permute.xlu0 %6468
        %6470 = vrot.lane.b32.xlu0 %v5506, 32
        %v6471 = vpop.permute.xlu0 %6470
        %6472 = vrot.lane.b32.xlu0 %v5507, 32
        %v6473 = vpop.permute.xlu0 %6472
        %v6479 = vsel %vm499, %v6465, 0
        %6481 = vmatprep.subr.mxu0 0.0
        %6482 = vmatpush1.msra.mxu0 %v6467
        %6483 = vmatprep.subr.mxu0 0.0
        %6484 = vmatpush1.msra.mxu0 %v6469
        %6485 = vmatprep.subr.mxu0 0.0
        %6486 = vmatpush1.msra.mxu0 %v6471
        %6487 = vmatprep.subr.mxu0 0.0
        %6488 = vmatpush1.msra.mxu0 %v6473
        %6489 = vmatprep.subr.mxu0 0.0
        %6490 = vmatpush1.msra.mxu0 0.0
        %6491 = vmatprep.subr.mxu0 0.0
        %6492 = vmatpush1.msra.mxu0 0.0
        %6493 = vmatprep.subr.mxu0 0.0
        %6494 = vmatpush1.msra.mxu0 0.0
        %6495 = vmatprep.subr.mxu0 0.0
        %6496 = vmatpush1.msra.mxu0 0.0
        %6497 = vmatprep.subr.mxu0 0.0
        %6498 = vmatpush1.msra.mxu0 0.0
        %6499 = vmatprep.subr.mxu0 0.0
        %6500 = vmatpush1.msra.mxu0 0.0
        %6501 = vmatprep.subr.mxu0 0.0
        %6502 = vmatpush1.msra.mxu0 0.0
        %6503 = vmatprep.subr.mxu0 0.0
        %6504 = vmatpush1.msra.mxu0 0.0
        %6505 = vmatprep.subr.mxu0 0.0
        %6506 = vmatpush1.msra.mxu0 0.0
        %6507 = vmatprep.subr.mxu0 0.0
        %6508 = vmatpush1.msra.mxu0 0.0
        %6509 = vmatprep.subr.mxu0 0.0
        %6510 = vmatpush1.msra.mxu0 0.0
        %6511 = vmatprep.subr.mxu0 0.0
        %6512 = vmatpush1.msra.mxu0 0.0
        %6513 = vmatprep.subr.mxu0 0.0
        %6514 = vmatpush1.msra.mxu0 0.0
        %6515 = vmatprep.subr.mxu0 0.0
        %6516 = vmatpush1.msra.mxu0 0.0
        %6517 = vmatprep.subr.mxu0 0.0
        %6518 = vmatpush1.msra.mxu0 0.0
        %6519 = vmatprep.subr.mxu0 0.0
        %6520 = vmatpush1.msra.mxu0 0.0
        %6521 = vmatprep.subr.mxu0 0.0
        %6522 = vmatpush1.msra.mxu0 0.0
        %6523 = vmatprep.subr.mxu0 0.0
        %6524 = vmatpush1.msra.mxu0 0.0
        %6525 = vmatprep.subr.mxu0 0.0
        %6526 = vmatpush1.msra.mxu0 0.0
        %6527 = vmatprep.subr.mxu0 0.0
        %6528 = vmatpush1.msra.mxu0 0.0
        %6529 = vmatprep.subr.mxu0 0.0
        %6530 = vmatpush1.msra.mxu0 0.0
        %6531 = vmatprep.subr.mxu0 0.0
        %6532 = vmatpush1.msra.mxu0 0.0
        %6533 = vmatprep.subr.mxu0 0.0
        %6534 = vmatpush1.msra.mxu0 0.0
        %6535 = vmatprep.subr.mxu0 0.0
        %6536 = vmatpush1.msra.mxu0 0.0
        %6537 = vmatprep.subr.mxu0 0.0
        %6538 = vmatpush1.msra.mxu0 0.0
        %6539 = vmatprep.subr.mxu0 0.0
        %6540 = vmatpush1.msra.mxu0 0.0
        %6541 = vmatprep.subr.mxu0 0.0
        %6542 = vmatpush1.msra.mxu0 0.0
        %6543 = vmatprep.subr.mxu0 0.0
        %6544 = vmatpush1.msra.mxu0 0.0
        %6545 = vmatprep.mubr.f32.mxu0 0.0
        %6546 = vmatmul.mubr.f32.gmra.mrb[0].mxu0 %v6479
        %v6547 = vpop.f32.mrb[0].mxu0
        %v6548 = vadd.f32 0.0, %v6547
        %v6549 = vpop.f32.mrb[0].mxu0
        %6550 = vdwg.mxu0
        %6551 = vrot.lane.b32.xlu0 %v4573, 32
        %v6552 = vpop.permute.xlu0 %6551
        %6553 = vrot.lane.b32.xlu0 %v4574, 32
        %v6554 = vpop.permute.xlu0 %6553
        %6555 = vrot.lane.b32.xlu0 %v4575, 32
        %v6556 = vpop.permute.xlu0 %6555
        %6557 = vrot.lane.b32.xlu0 %v4576, 32
        %v6558 = vpop.permute.xlu0 %6557
        %v6564 = vsel %vm499, %v5503, 0
        %6566 = vmatprep.subr.mxu0 0.0
        %6567 = vmatpush1.msra.mxu0 %v6552
        %6568 = vmatprep.subr.mxu0 0.0
        %6569 = vmatpush1.msra.mxu0 %v6554
        %6570 = vmatprep.subr.mxu0 0.0
        %6571 = vmatpush1.msra.mxu0 %v6556
        %6572 = vmatprep.subr.mxu0 0.0
        %6573 = vmatpush1.msra.mxu0 %v6558
        %6574 = vmatprep.subr.mxu0 0.0
        %6575 = vmatpush1.msra.mxu0 0.0
        %6576 = vmatprep.subr.mxu0 0.0
        %6577 = vmatpush1.msra.mxu0 0.0
        %6578 = vmatprep.subr.mxu0 0.0
        %6579 = vmatpush1.msra.mxu0 0.0
        %6580 = vmatprep.subr.mxu0 0.0
        %6581 = vmatpush1.msra.mxu0 0.0
        %6582 = vmatprep.subr.mxu0 0.0
        %6583 = vmatpush1.msra.mxu0 0.0
        %6584 = vmatprep.subr.mxu0 0.0
        %6585 = vmatpush1.msra.mxu0 0.0
        %6586 = vmatprep.subr.mxu0 0.0
        %6587 = vmatpush1.msra.mxu0 0.0
        %6588 = vmatprep.subr.mxu0 0.0
        %6589 = vmatpush1.msra.mxu0 0.0
        %6590 = vmatprep.subr.mxu0 0.0
        %6591 = vmatpush1.msra.mxu0 0.0
        %6592 = vmatprep.subr.mxu0 0.0
        %6593 = vmatpush1.msra.mxu0 0.0
        %6594 = vmatprep.subr.mxu0 0.0
        %6595 = vmatpush1.msra.mxu0 0.0
        %6596 = vmatprep.subr.mxu0 0.0
        %6597 = vmatpush1.msra.mxu0 0.0
        %6598 = vmatprep.subr.mxu0 0.0
        %6599 = vmatpush1.msra.mxu0 0.0
        %6600 = vmatprep.subr.mxu0 0.0
        %6601 = vmatpush1.msra.mxu0 0.0
        %6602 = vmatprep.subr.mxu0 0.0
        %6603 = vmatpush1.msra.mxu0 0.0
        %6604 = vmatprep.subr.mxu0 0.0
        %6605 = vmatpush1.msra.mxu0 0.0
        %6606 = vmatprep.subr.mxu0 0.0
        %6607 = vmatpush1.msra.mxu0 0.0
        %6608 = vmatprep.subr.mxu0 0.0
        %6609 = vmatpush1.msra.mxu0 0.0
        %6610 = vmatprep.subr.mxu0 0.0
        %6611 = vmatpush1.msra.mxu0 0.0
        %6612 = vmatprep.subr.mxu0 0.0
        %6613 = vmatpush1.msra.mxu0 0.0
        %6614 = vmatprep.subr.mxu0 0.0
        %6615 = vmatpush1.msra.mxu0 0.0
        %6616 = vmatprep.subr.mxu0 0.0
        %6617 = vmatpush1.msra.mxu0 0.0
        %6618 = vmatprep.subr.mxu0 0.0
        %6619 = vmatpush1.msra.mxu0 0.0
        %6620 = vmatprep.subr.mxu0 0.0
        %6621 = vmatpush1.msra.mxu0 0.0
        %6622 = vmatprep.subr.mxu0 0.0
        %6623 = vmatpush1.msra.mxu0 0.0
        %6624 = vmatprep.subr.mxu0 0.0
        %6625 = vmatpush1.msra.mxu0 0.0
        %6626 = vmatprep.subr.mxu0 0.0
        %6627 = vmatpush1.msra.mxu0 0.0
        %6628 = vmatprep.subr.mxu0 0.0
        %6629 = vmatpush1.msra.mxu0 0.0
        %6630 = vmatprep.mubr.f32.mxu0 0.0
        %6631 = vmatmul.mubr.f32.gmra.mrb[0].mxu0 %v6564
        %v6632 = vpop.f32.mrb[0].mxu0
        %v6633 = vadd.f32 %v6548, %v6632
        %v6634 = vpop.f32.mrb[0].mxu0
        %6635 = vdwg.mxu0
        %v6636 = vld [vmem:[%s9 + $0x7] sm:$0x1]
        %v6637 = vlaneseq
        %v6638 = vshrl.u32 %v6637, 7
        %v6639 = vsub.s32 0, %v6638
        %v6640 = vrot.slane %v6636, %v6639
        %v6641 = vadd.f32 %v6633, %v6640
        %v6642 = vadd.f32 %v4572, %v6641
        %v6643 = vsel %vm499, %v6642, 0.0
        %6644 = vadd.xlane.f32.xlu0 %v6643
        %v6645 = vpop.xlane.xlu0 %6644
        %v6646 = vmul.f32 %v6645, %v1352
        %v6647 = vsub.f32 %v6642, %v6646
        %v6648 = vmul.f32 %v6647, %v6647
        %v6649 = vsel %vm499, %v6648, 0.0
        %6650 = vadd.xlane.f32.xlu0 %v6649
        %v6651 = vpop.xlane.xlu0 %6650
        %v6652 = vmul.f32 %v6651, %v1352
        %v6653 = vadd.f32 %v6652, 1e-12
        %v6654 = vrsqrt.pop %v6653
        %v6655 = vmul.f32 %v6647, %v6654
        %6657 = vrot.lane.b32.xlu0 %v6640, 96
        %v6658 = vpop.permute.xlu0 %6657
        %v6660 = vmul.f32 %v6655, %v6658
        %6661 = vrot.lane.b32.xlu0 %v6640, 64
        %v6662 = vpop.permute.xlu0 %6661
        %v6664 = vadd.f32 %v6660, %v6662
        %v6665 = vld [vmem:[%s3694 + $0x18] sm:$0xff]
        %v6666 = vld [vmem:[%s3694 + $0x38] sm:$0xff]
        %v6667 = vld [vmem:[%s3694 + $0x58] sm:$0xff]
        %v6668 = vld [vmem:[%s3694 + $0x78] sm:$0xff]
        %v6669 = vld [vmem:[%s9 + $0x9] sm:$0x1]
        %v6670 = vlaneseq
        %v6671 = vshrl.u32 %v6670, 7
        %v6672 = vsub.s32 0, %v6671
        %v6673 = vrot.slane %v6669, %v6672
        %v6675 = vsel %vm499, %v6664, 0
        %6677 = vmatprep.subr.mxu0 0.0
        %6678 = vmatpush1.msra.mxu0 %v6665
        %6679 = vmatprep.subr.mxu0 0.0
        %6680 = vmatpush1.msra.mxu0 %v6666
        %6681 = vmatprep.subr.mxu0 0.0
        %6682 = vmatpush1.msra.mxu0 %v6667
        %6683 = vmatprep.subr.mxu0 0.0
        %6684 = vmatpush1.msra.mxu0 %v6668
        %6685 = vmatprep.subr.mxu0 0.0
        %6686 = vmatpush1.msra.mxu0 0.0
        %6687 = vmatprep.subr.mxu0 0.0
        %6688 = vmatpush1.msra.mxu0 0.0
        %6689 = vmatprep.subr.mxu0 0.0
        %6690 = vmatpush1.msra.mxu0 0.0
        %6691 = vmatprep.subr.mxu0 0.0
        %6692 = vmatpush1.msra.mxu0 0.0
        %6693 = vmatprep.subr.mxu0 0.0
        %6694 = vmatpush1.msra.mxu0 0.0
        %6695 = vmatprep.subr.mxu0 0.0
        %6696 = vmatpush1.msra.mxu0 0.0
        %6697 = vmatprep.subr.mxu0 0.0
        %6698 = vmatpush1.msra.mxu0 0.0
        %6699 = vmatprep.subr.mxu0 0.0
        %6700 = vmatpush1.msra.mxu0 0.0
        %6701 = vmatprep.subr.mxu0 0.0
        %6702 = vmatpush1.msra.mxu0 0.0
        %6703 = vmatprep.subr.mxu0 0.0
        %6704 = vmatpush1.msra.mxu0 0.0
        %6705 = vmatprep.subr.mxu0 0.0
        %6706 = vmatpush1.msra.mxu0 0.0
        %6707 = vmatprep.subr.mxu0 0.0
        %6708 = vmatpush1.msra.mxu0 0.0
        %6709 = vmatprep.subr.mxu0 0.0
        %6710 = vmatpush1.msra.mxu0 0.0
        %6711 = vmatprep.subr.mxu0 0.0
        %6712 = vmatpush1.msra.mxu0 0.0
        %6713 = vmatprep.subr.mxu0 0.0
        %6714 = vmatpush1.msra.mxu0 0.0
        %6715 = vmatprep.subr.mxu0 0.0
        %6716 = vmatpush1.msra.mxu0 0.0
        %6717 = vmatprep.subr.mxu0 0.0
        %6718 = vmatpush1.msra.mxu0 0.0
        %6719 = vmatprep.subr.mxu0 0.0
        %6720 = vmatpush1.msra.mxu0 0.0
        %6721 = vmatprep.subr.mxu0 0.0
        %6722 = vmatpush1.msra.mxu0 0.0
        %6723 = vmatprep.subr.mxu0 0.0
        %6724 = vmatpush1.msra.mxu0 0.0
        %6725 = vmatprep.subr.mxu0 0.0
        %6726 = vmatpush1.msra.mxu0 0.0
        %6727 = vmatprep.subr.mxu0 0.0
        %6728 = vmatpush1.msra.mxu0 0.0
        %6729 = vmatprep.subr.mxu0 0.0
        %6730 = vmatpush1.msra.mxu0 0.0
        %6731 = vmatprep.subr.mxu0 0.0
        %6732 = vmatpush1.msra.mxu0 0.0
        %6733 = vmatprep.subr.mxu0 0.0
        %6734 = vmatpush1.msra.mxu0 0.0
        %6735 = vmatprep.subr.mxu0 0.0
        %6736 = vmatpush1.msra.mxu0 0.0
        %6737 = vmatprep.subr.mxu0 0.0
        %6738 = vmatpush1.msra.mxu0 0.0
        %6739 = vmatprep.subr.mxu0 0.0
        %6740 = vmatpush1.msra.mxu0 0.0
        %6741 = vmatprep.mubr.f32.mxu0 0.0
        %6742 = vmatmul.mubr.f32.gmra.mrb[0].mxu0 %v6675
        %v6743 = vpop.f32.mrb[0].mxu0
        %v6744 = vadd.f32 %v6673, %v6743
        %v6745 = vpop.f32.mrb[0].mxu0
        %6746 = vdwg.mxu0
        %v6747 = vmul.f32 %v6744, %v6744
        %v6748 = vmul.f32 %v6744, %v6747
        %v6749 = vmul.f32 %v6748, 0.044715
        %v6750 = vadd.f32 %v6744, %v6749
        %v6751 = vmul.f32 %v6750, 0.7978846
        %v6752 = vtanh.pop %v6751
        %v6753 = vadd.f32 %v6752, 1.0
        %v6754 = vmul.f32 %v6753, 0.5
        %v6755 = vmul.f32 %v6744, %v6754
        %6760 = vrot.lane.b32.xlu0 %v6665, 64
        %v6761 = vpop.permute.xlu0 %6760
        %6762 = vrot.lane.b32.xlu0 %v6666, 64
        %v6763 = vpop.permute.xlu0 %6762
        %6764 = vrot.lane.b32.xlu0 %v6667, 64
        %v6765 = vpop.permute.xlu0 %6764
        %6766 = vrot.lane.b32.xlu0 %v6668, 64
        %v6767 = vpop.permute.xlu0 %6766
        %6768 = vrot.lane.b32.xlu0 %v6640, 32
        %v6769 = vpop.permute.xlu0 %6768
        %v6772 = vsel %vm3589, %v6755, 0
        %v6774 = vsel %vm3589, %v6761, 0
        %v6776 = vsel %vm3589, %v6763, 0
        %v6778 = vsel %vm3589, %v6765, 0
        %v6780 = vsel %vm3589, %v6767, 0
        %6782 = vmatprep.subr.mxu0 0.0
        %6783 = vmatpush1.xpose.msra.mxu0 %v6774
        %6784 = vmatprep.subr.mxu0 0.0
        %6785 = vmatpush1.xpose.msra.mxu0 %v6776
        %6786 = vmatprep.subr.mxu0 0.0
        %6787 = vmatpush1.xpose.msra.mxu0 %v6778
        %6788 = vmatprep.subr.mxu0 0.0
        %6789 = vmatpush1.xpose.msra.mxu0 %v6780
        %6790 = vmatprep.subr.mxu0 0.0
        %6791 = vmatpush1.xpose.msra.mxu0 0.0
        %6792 = vmatprep.subr.mxu0 0.0
        %6793 = vmatpush1.xpose.msra.mxu0 0.0
        %6794 = vmatprep.subr.mxu0 0.0
        %6795 = vmatpush1.xpose.msra.mxu0 0.0
        %6796 = vmatprep.subr.mxu0 0.0
        %6797 = vmatpush1.xpose.msra.mxu0 0.0
        %6798 = vmatprep.subr.mxu0 0.0
        %6799 = vmatpush1.xpose.msra.mxu0 0.0
        %6800 = vmatprep.subr.mxu0 0.0
        %6801 = vmatpush1.xpose.msra.mxu0 0.0
        %6802 = vmatprep.subr.mxu0 0.0
        %6803 = vmatpush1.xpose.msra.mxu0 0.0
        %6804 = vmatprep.subr.mxu0 0.0
        %6805 = vmatpush1.xpose.msra.mxu0 0.0
        %6806 = vmatprep.subr.mxu0 0.0
        %6807 = vmatpush1.xpose.msra.mxu0 0.0
        %6808 = vmatprep.subr.mxu0 0.0
        %6809 = vmatpush1.xpose.msra.mxu0 0.0
        %6810 = vmatprep.subr.mxu0 0.0
        %6811 = vmatpush1.xpose.msra.mxu0 0.0
        %6812 = vmatprep.subr.mxu0 0.0
        %6813 = vmatpush1.xpose.msra.mxu0 0.0
        %6814 = vmatprep.subr.mxu0 0.0
        %6815 = vmatpush1.xpose.msra.mxu0 0.0
        %6816 = vmatprep.subr.mxu0 0.0
        %6817 = vmatpush1.xpose.msra.mxu0 0.0
        %6818 = vmatprep.subr.mxu0 0.0
        %6819 = vmatpush1.xpose.msra.mxu0 0.0
        %6820 = vmatprep.subr.mxu0 0.0
        %6821 = vmatpush1.xpose.msra.mxu0 0.0
        %6822 = vmatprep.subr.mxu0 0.0
        %6823 = vmatpush1.xpose.msra.mxu0 0.0
        %6824 = vmatprep.subr.mxu0 0.0
        %6825 = vmatpush1.xpose.msra.mxu0 0.0
        %6826 = vmatprep.subr.mxu0 0.0
        %6827 = vmatpush1.xpose.msra.mxu0 0.0
        %6828 = vmatprep.subr.mxu0 0.0
        %6829 = vmatpush1.xpose.msra.mxu0 0.0
        %6830 = vmatprep.subr.mxu0 0.0
        %6831 = vmatpush1.xpose.msra.mxu0 0.0
        %6832 = vmatprep.subr.mxu0 0.0
        %6833 = vmatpush1.xpose.msra.mxu0 0.0
        %6834 = vmatprep.subr.mxu0 0.0
        %6835 = vmatpush1.xpose.msra.mxu0 0.0
        %6836 = vmatprep.subr.mxu0 0.0
        %6837 = vmatpush1.xpose.msra.mxu0 0.0
        %6838 = vmatprep.subr.mxu0 0.0
        %6839 = vmatpush1.xpose.msra.mxu0 0.0
        %6840 = vmatprep.subr.mxu0 0.0
        %6841 = vmatpush1.xpose.msra.mxu0 0.0
        %6842 = vmatprep.subr.mxu0 0.0
        %6843 = vmatpush1.xpose.msra.mxu0 0.0
        %6844 = vmatprep.subr.mxu0 0.0
        %6845 = vmatpush1.xpose.msra.mxu0 0.0
        %6846 = vmatprep.mubr.f32.mxu0 0.0
        %6847 = vmatmul.mubr.f32.gmra.mrb[0].mxu0 %v6772
        %v6848 = vpop.f32.mrb[0].mxu0
        %v6849 = vadd.f32 %v6769, %v6848
        %v6850 = vpop.f32.mrb[0].mxu0
        %6851 = vdwg.mxu0
        %v6852 = vadd.f32 %v6664, %v6849
        %v6853 = vsel %vm499, %v6852, 0.0
        %6854 = vadd.xlane.f32.xlu0 %v6853
        %v6855 = vpop.xlane.xlu0 %6854
        %v6856 = vmul.f32 %v6855, %v1352
        %v6857 = vsub.f32 %v6852, %v6856
        %v6858 = vmul.f32 %v6857, %v6857
        %v6859 = vsel %vm499, %v6858, 0.0
        %6860 = vadd.xlane.f32.xlu0 %v6859
        %v6861 = vpop.xlane.xlu0 %6860
        %v6862 = vmul.f32 %v6861, %v1352
        %v6863 = vadd.f32 %v6862, 1e-12
        %v6864 = vrsqrt.pop %v6863
        %v6865 = vmul.f32 %v6857, %v6864
        %6867 = vrot.lane.b32.xlu0 %v6673, 64
        %v6868 = vpop.permute.xlu0 %6867
        %v6870 = vmul.f32 %v6865, %v6868
        %6871 = vrot.lane.b32.xlu0 %v6673, 32
        %v6872 = vpop.permute.xlu0 %6871
        %v6874 = vadd.f32 %v6870, %v6872
        %6875 = vst.msk [vmem:[%s445] sm:$0xff] %vm499, %v6874
        %s6876 = sand.u32 %s282, 1
        %s6877 = scalar_lea.sflag [#allocation3], %s6876
        %s6878 = sand.u32 %s282, 1
        %s6879 = smul.addr %s6878, 8
        %s6880 = scalar_lea.vmem [#allocation2], %s6879
        // Predicated region
        $region61: #{multimodal_transformer_decoder_forward.1} parent=59 // pred_check
          %p6881 = pneg %p292
        $region62: #{multimodal_transformer_decoder_forward.1} parent=59 // pred_check_branch
          %6883 = sbr.rel (%p6881) target = $region64
        $region63: #{multimodal_transformer_decoder_forward.1} parent=59 // pred_region
          %s6885 = ssub.s32 128, 128
          %6886 = vsyncadd %s6877, %s6885
          %s6887 = smul.addr %s24, 128
          %s6888 = scalar_lea.hbm %s10, %s6887
          %s6890 = sshll.u32 %s6880, 4
          %s6891 = int_to_ptr.vmem [resolvable:$true] %s6890
          %6893 = dma.vmem_to_hbm [thread:$0]  %s6891, 128, %s6888, %s6877
        $region64: #{multimodal_transformer_decoder_forward.1} parent=59 // pred_fallthru
          _
      $region60: #{multimodal_transformer_decoder_forward.1} parent=5 // pred_fallthru
        _
      %p6894 = scmp.le.s32.totalorder 2, %s19
      // Predicated region
      $region65: #{multimodal_transformer_decoder_forward.1} parent=5 // pred_check
        %p6895 = pneg %p6894
      $region66: #{multimodal_transformer_decoder_forward.1} parent=5 // pred_check_branch
        %6897 = sbr.rel (%p6895) target = $region68
      $region67: #{multimodal_transformer_decoder_forward.1} parent=5 // pred_region
        %s6898 = ssub.s32 %s19, 2
        // Predicated region
        $region69: #{multimodal_transformer_decoder_forward.1} parent=67 // pred_check
          %p6899 = pneg %p298
        $region70: #{multimodal_transformer_decoder_forward.1} parent=67 // pred_check_branch
          %6901 = sbr.rel (%p6899) target = $region72
        $region71: #{multimodal_transformer_decoder_forward.1} parent=67 // pred_region
          %s6902 = sand.u32 %s283, 1
          %s6903 = scalar_lea.sflag [#allocation3], %s6902
          %s6904 = sand.u32 %s283, 1
          %s6905 = smul.addr %s6904, 8
          %s6906 = scalar_lea.vmem [#allocation2], %s6905
          %6907 = dma.done %s6903, 128
        $region72: #{multimodal_transformer_decoder_forward.1} parent=67 // pred_fallthru
          _
      $region68: #{multimodal_transformer_decoder_forward.1} parent=5 // pred_fallthru
        _
    $region6: #{multimodal_transformer_decoder_forward.1} parent=1 // loop_footer
      %s23 = sadd.s32 1, %s19
    $region7: #{multimodal_transformer_decoder_forward.1} parent=1 // loop_footer_branch
      %18 = sbr.rel target = $region3
    $region8: #{multimodal_transformer_decoder_forward.1} parent=1 // loop_exit
      _
    %6908 = vsyncpa [#allocation3], 1
    %s6909 = scalar_lea.sflag [#allocation3], 1
    %6910 = vsyncpa %s6909, 1

</llo_original>
